<compile_context>
chip_gen: v7x
topology: tpu7x:2x2x1
jax: 0.10.0
libtpu: 0.0.40
codegen_flags: <defaults>
</compile_context>

<pallas_src>
import jax
import jax.numpy as jnp
from jax.experimental import pallas as pl
from jax.experimental import pallas as pl  # noqa: F811 (kept single import path clear)
from jax.experimental.pallas import tpu as pltpu


# ----------------------------------------------------------------------------
# Single fused kernel
# ----------------------------------------------------------------------------
def _egnn_kernel(x_ref, qhat_ref, src_oh_ref, dst_oh_ref,
                 w1ab_ref, w1b_ref, b1_ref,
                 w2ab_ref, w2b_ref, b2_ref,
                 sq_ref, wf_ref, bf_ref,
                 o_ref):
    f32 = jnp.float32
    bf16 = jnp.bfloat16

    def bdot(a, b):
        # bf16 MXU operands, f32 accumulation.
        return jnp.dot(a.astype(bf16), b.astype(bf16), preferred_element_type=f32)

    src_oh = src_oh_ref[...]              # (E, N) bf16 one-hot of edge sources j
    dst_oh = dst_oh_ref[...]              # (E, N) bf16 one-hot of edge targets i
    dst_mask = dst_oh.astype(f32)         # f32 mask for the scatter-max

    # superpixels_flatten = Q_Hat_T @ x_flatten  -> (N, C)
    sp = bdot(qhat_ref[...], x_ref[...])

    def edge_conv(nodes, wab, wb, b):
        # Hoisted edge MLP:
        #   msg_e = ReLU(x_i@Wa + (x_j - x_i)@Wb + b)
        #         = ReLU(dst_oh @ (nodes @ (Wa - Wb)) + src_oh @ (nodes @ Wb) + b)
        ta = bdot(nodes, wab)                              # (N, F)
        tb = bdot(nodes, wb)                               # (N, F)
        msg = bdot(dst_oh, ta) + bdot(src_oh, tb) + b      # (E, F)
        msg = jnp.maximum(msg, 0.0)                        # >= 0
        # Vectorized scatter-max over edge targets: valid because msg >= 0
        # (post-ReLU) and PyG 'max' aggregation fills isolated nodes with 0.
        masked = dst_mask[:, :, None] * msg[:, None, :]    # (E, N, F)
        return jnp.max(masked, axis=0)                     # (N, F)

    h1 = edge_conv(sp, w1ab_ref[...], w1b_ref[...], b1_ref[...])
    h2 = edge_conv(h1, w2ab_ref[...], w2b_ref[...], b2_ref[...])
    # NOTE: matches the torch forward exactly, which reuses GNN2 for H3.
    h3 = edge_conv(h2, w2ab_ref[...], w2b_ref[...], b2_ref[...])
    h4 = h1 + h2 + h3                                      # (N, F)

    # Fused  Qmatrix@H4 -> Conv2d(3x3, pad=1) -> classifier Linear:
    #   out = sum_k (S_k @ Q) @ H4 @ (W_k @ W_lin)  +  (conv_b@W_lin + b_lin)
    out = bf_ref[...]                                      # (1, n_pad) f32
    for k in range(9):                                     # static unrolled taps
        u = bdot(h4, wf_ref[k])                            # (N, n_pad)
        out = out + bdot(sq_ref[k], u)                     # (hw, n_pad)
    o_ref[...] = out                                       # lane-dense store


# ----------------------------------------------------------------------------
# One-time preparation (outside jit): one-hots, hoisted / fused weights,
# shifted assignment matrices.
# ----------------------------------------------------------------------------
def prepare_egnn(params, Q, Q_hat_T, src, dst, h, w):
    f32, bf16 = jnp.float32, jnp.bfloat16
    hw, n_sp = Q.shape
    c = params["gnn1_w"].shape[0] // 2
    f = params["gnn1_w"].shape[1]
    n_cls = params["lin_w"].shape[1]
    n_pad = ((n_cls + 127) // 128) * 128                   # lane-dense output width

    # Static edge incidence one-hots (bf16 is exact for {0,1}).
    src_oh = jax.nn.one_hot(src, n_sp, dtype=bf16)         # (E, N)
    dst_oh = jax.nn.one_hot(dst, n_sp, dtype=bf16)         # (E, N)

    # Hoisted EdgeConv weights: x_i@Wa + (x_j-x_i)@Wb = x_i@(Wa-Wb) + x_j@Wb
    w1, w2 = params["gnn1_w"], params["gnn2_w"]
    w1ab, w1b = (w1[:c] - w1[c:]).astype(bf16), w1[c:].astype(bf16)
    w2ab, w2b = (w2[:f] - w2[f:]).astype(bf16), w2[f:].astype(bf16)
    b1 = params["gnn1_b"].reshape(1, f).astype(f32)
    b2 = params["gnn2_b"].reshape(1, f).astype(f32)

    # Shifted assignment matrices SQ[k] = S_{ky,kx} @ Q  (zero-padded 3x3 shifts).
    Qimg = Q.reshape(h, w, n_sp)
    sq = []
    for ky in range(3):
        for kx in range(3):
            dy, dx = ky - 1, kx - 1
            sh = jnp.zeros((h, w, n_sp), Q.dtype)
            ys0, ys1 = max(0, -dy), min(h, h - dy)
            xs0, xs1 = max(0, -dx), min(w, w - dx)
            sh = sh.at[ys0:ys1, xs0:xs1, :].set(
                Qimg[ys0 + dy:ys1 + dy, xs0 + dx:xs1 + dx, :])
            sq.append(sh.reshape(hw, n_sp))
    sq = jnp.stack(sq).astype(bf16)                        # (9, hw, N)

    # Pre-fuse Conv2d taps with the classifier Linear (no activation between).
    wl_pad = jnp.zeros((f, n_pad), f32).at[:, :n_cls].set(params["lin_w"])
    bl_pad = jnp.zeros((1, n_pad), f32).at[:, :n_cls].set(params["lin_b"])
    w_conv = params["conv_w"].reshape(9, f, f)             # HWIO -> (tap, Cin, Cout)
    wf = jnp.einsum("kio,op->kip", w_conv, wl_pad).astype(bf16)        # (9, F, n_pad)
    bf = (params["conv_b"].reshape(1, f) @ wl_pad + bl_pad).astype(f32)  # (1, n_pad)

    return dict(qhat=Q_hat_T.astype(bf16), src_oh=src_oh, dst_oh=dst_oh,
                w1ab=w1ab, w1b=w1b, b1=b1, w2ab=w2ab, w2b=w2b, b2=b2,
                sq=sq, wf=wf, bf=bf)


# ----------------------------------------------------------------------------
# Full EGNN forward: a single pallas_call + one output slice.
# ----------------------------------------------------------------------------
def egnn_forward(x, prep, n_classes):
    h, w, c = x.shape
    hw = h * w
    x_flat = x.reshape(hw, c).astype(jnp.bfloat16)
    n_pad = prep["bf"].shape[1]

    args = (x_flat, prep["qhat"], prep["src_oh"], prep["dst_oh"],
            prep["w1ab"], prep["w1b"], prep["b1"],
            prep["w2ab"], prep["w2b"], prep["b2"],
            prep["sq"], prep["wf"], prep["bf"])

    in_specs = [pl.BlockSpec(a.shape, lambda i, _nd=a.ndim: (0,) * _nd)
                for a in args]

    out = pl.pallas_call(
        _egnn_kernel,
        out_shape=jax.ShapeDtypeStruct((hw, n_pad), jnp.float32),
        grid=(1,),
        in_specs=in_specs,
        out_specs=pl.BlockSpec((hw, n_pad), lambda i: (0, 0)),
        compiler_params=pltpu.CompilerParams(
            dimension_semantics=("arbitrary",)),
    )(*args)
    return out[:, :n_classes]


# ----------------------------------------------------------------------------
if __name__ == "__main__":
    H, W, C = 16, 16, 4        # height, width, channel
    N_SP = 32                  # number of superpixels / graph nodes
    OUT = 32                   # out_channel
    NCLASS = 8                 # class_count

    key = jax.random.PRNGKey(0)
    ks = jax.random.split(key, 12)

    x = jax.random.normal(ks[0], (H, W, C), jnp.float32)

    # Deterministic dense stand-ins for the sparse Qmatrix / Q_Hat_T.
    assign = jnp.arange(H * W) % N_SP
    Q = jax.nn.one_hot(assign, N_SP, dtype=jnp.float32)                # (h*w, N)
    Qt = Q.T
    Q_hat_T = Qt / jnp.maximum(Qt.sum(axis=1, keepdims=True), 1.0)     # (N, h*w)

    # edge_index: bidirectional ring over the superpixel nodes (E = 2*N).
    idx = jnp.arange(N_SP, dtype=jnp.int32)
    src = jnp.concatenate([idx, (idx + 1) % N_SP])
    dst = jnp.concatenate([(idx + 1) % N_SP, idx])

    def init(k, shape, scale=0.1):
        return scale * jax.random.normal(k, shape, jnp.float32)

    params = dict(
        gnn1_w=init(ks[1], (2 * C, OUT)),
        gnn1_b=init(ks[2], (OUT,)),
        gnn2_w=init(ks[3], (2 * OUT, OUT)),
        gnn2_b=init(ks[4], (OUT,)),
        gnn3_w=init(ks[5], (2 * OUT, OUT)),   # declared (like torch __init__) but unused in forward
        gnn3_b=init(ks[6], (OUT,)),
        conv_w=init(ks[7], (3, 3, OUT, OUT)),  # HWIO ( == torch (O,I,3,3).transpose(2,3,1,0) )
        conv_b=init(ks[8], (OUT,)),
        lin_w=init(ks[9], (OUT, NCLASS)),
        lin_b=init(ks[10], (NCLASS,)),
    )

    # Static preprocessing once, outside jit (graph / weights do not change).
    prep = prepare_egnn(params, Q, Q_hat_T, src, dst, H, W)

    fwd = jax.jit(egnn_forward, static_argnums=(2,))
    out = fwd(x, prep, NCLASS)
    jax.block_until_ready(out)
    assert out.shape == (H * W, NCLASS)
    assert bool(jnp.all(jnp.isfinite(out)))
    print("KERNEL_OK")
</pallas_src>

<mosaic_0001>
module attributes {stable_mosaic.version = 11 : i64} {
  func.func @_egnn_kernel(%arg0: i32, %arg1: memref<256x4xbf16, #tpu.memory_space<vmem>>, %arg2: memref<32x256xbf16, #tpu.memory_space<vmem>>, %arg3: memref<64x32xbf16, #tpu.memory_space<vmem>>, %arg4: memref<64x32xbf16, #tpu.memory_space<vmem>>, %arg5: memref<4x32xbf16, #tpu.memory_space<vmem>>, %arg6: memref<4x32xbf16, #tpu.memory_space<vmem>>, %arg7: memref<1x32xf32, #tpu.memory_space<vmem>>, %arg8: memref<32x32xbf16, #tpu.memory_space<vmem>>, %arg9: memref<32x32xbf16, #tpu.memory_space<vmem>>, %arg10: memref<1x32xf32, #tpu.memory_space<vmem>>, %arg11: memref<9x256x32xbf16, #tpu.memory_space<vmem>>, %arg12: memref<9x32x128xbf16, #tpu.memory_space<vmem>>, %arg13: memref<1x128xf32, #tpu.memory_space<vmem>>, %arg14: memref<256x128xf32, #tpu.memory_space<vmem>>) attributes {dimension_semantics = [#tpu.dimension_semantics<arbitrary>], iteration_bounds = array<i64: 1>, scalar_prefetch = 0 : i64, scratch_operands = 0 : i64, tpu.core_type = #tpu.core_type<tc>, window_params = [{pipeline_mode = #tpu.pipeline_mode<synchronous>, transform_indices = @transform_0, window_bounds = array<i64: 256, 4>}, {pipeline_mode = #tpu.pipeline_mode<synchronous>, transform_indices = @transform_1, window_bounds = array<i64: 32, 256>}, {pipeline_mode = #tpu.pipeline_mode<synchronous>, transform_indices = @transform_2, window_bounds = array<i64: 64, 32>}, {pipeline_mode = #tpu.pipeline_mode<synchronous>, transform_indices = @transform_3, window_bounds = array<i64: 64, 32>}, {pipeline_mode = #tpu.pipeline_mode<synchronous>, transform_indices = @transform_4, window_bounds = array<i64: 4, 32>}, {pipeline_mode = #tpu.pipeline_mode<synchronous>, transform_indices = @transform_5, window_bounds = array<i64: 4, 32>}, {pipeline_mode = #tpu.pipeline_mode<synchronous>, transform_indices = @transform_6, window_bounds = array<i64: 1, 32>}, {pipeline_mode = #tpu.pipeline_mode<synchronous>, transform_indices = @transform_7, window_bounds = array<i64: 32, 32>}, {pipeline_mode = #tpu.pipeline_mode<synchronous>, transform_indices = @transform_8, window_bounds = array<i64: 32, 32>}, {pipeline_mode = #tpu.pipeline_mode<synchronous>, transform_indices = @transform_9, window_bounds = array<i64: 1, 32>}, {pipeline_mode = #tpu.pipeline_mode<synchronous>, transform_indices = @transform_10, window_bounds = array<i64: 9, 256, 32>}, {pipeline_mode = #tpu.pipeline_mode<synchronous>, transform_indices = @transform_11, window_bounds = array<i64: 9, 32, 128>}, {pipeline_mode = #tpu.pipeline_mode<synchronous>, transform_indices = @transform_12, window_bounds = array<i64: 1, 128>}, {pipeline_mode = #tpu.pipeline_mode<synchronous>, transform_indices = @transform_13, window_bounds = array<i64: 256, 128>}]} {
    %c0 = arith.constant 0 : index
    %c0_0 = arith.constant 0 : index
    %0 = vector.load %arg3[%c0, %c0_0] : memref<64x32xbf16, #tpu.memory_space<vmem>>, vector<64x32xbf16>
    %c0_1 = arith.constant 0 : index
    %c0_2 = arith.constant 0 : index
    %1 = vector.load %arg4[%c0_1, %c0_2] : memref<64x32xbf16, #tpu.memory_space<vmem>>, vector<64x32xbf16>
    %2 = arith.extf %1 : vector<64x32xbf16> to vector<64x32xf32>
    %c0_3 = arith.constant 0 : index
    %c0_4 = arith.constant 0 : index
    %3 = vector.load %arg2[%c0_3, %c0_4] : memref<32x256xbf16, #tpu.memory_space<vmem>>, vector<32x256xbf16>
    %c0_5 = arith.constant 0 : index
    %c0_6 = arith.constant 0 : index
    %4 = vector.load %arg1[%c0_5, %c0_6] : memref<256x4xbf16, #tpu.memory_space<vmem>>, vector<256x4xbf16>
    %cst = arith.constant dense<0.000000e+00> : vector<32x4xf32>
    %5 = tpu.matmul %3, %4, %cst {dimension_numbers = #tpu.dot_dimension_numbers<[1], [0], [0], [1], [0, 0, 1, 1], [], []>} : vector<32x256xbf16>, vector<256x4xbf16>, vector<32x4xf32> -> vector<32x4xf32>
    %c0_7 = arith.constant 0 : index
    %c0_8 = arith.constant 0 : index
    %6 = vector.load %arg5[%c0_7, %c0_8] : memref<4x32xbf16, #tpu.memory_space<vmem>>, vector<4x32xbf16>
    %c0_9 = arith.constant 0 : index
    %c0_10 = arith.constant 0 : index
    %7 = vector.load %arg6[%c0_9, %c0_10] : memref<4x32xbf16, #tpu.memory_space<vmem>>, vector<4x32xbf16>
    %c0_11 = arith.constant 0 : index
    %c0_12 = arith.constant 0 : index
    %8 = vector.load %arg7[%c0_11, %c0_12] : memref<1x32xf32, #tpu.memory_space<vmem>>, vector<1x32xf32>
    %9 = arith.truncf %5 : vector<32x4xf32> to vector<32x4xbf16>
    %cst_13 = arith.constant dense<0.000000e+00> : vector<32x32xf32>
    %10 = tpu.matmul %9, %6, %cst_13 {dimension_numbers = #tpu.dot_dimension_numbers<[1], [0], [0], [1], [0, 0, 1, 1], [], []>} : vector<32x4xbf16>, vector<4x32xbf16>, vector<32x32xf32> -> vector<32x32xf32>
    %11 = arith.truncf %5 : vector<32x4xf32> to vector<32x4xbf16>
    %cst_14 = arith.constant dense<0.000000e+00> : vector<32x32xf32>
    %12 = tpu.matmul %11, %7, %cst_14 {dimension_numbers = #tpu.dot_dimension_numbers<[1], [0], [0], [1], [0, 0, 1, 1], [], []>} : vector<32x4xbf16>, vector<4x32xbf16>, vector<32x32xf32> -> vector<32x32xf32>
    %13 = arith.truncf %10 : vector<32x32xf32> to vector<32x32xbf16>
    %cst_15 = arith.constant dense<0.000000e+00> : vector<64x32xf32>
    %14 = tpu.matmul %1, %13, %cst_15 {dimension_numbers = #tpu.dot_dimension_numbers<[1], [0], [0], [1], [0, 0, 1, 1], [], []>} : vector<64x32xbf16>, vector<32x32xbf16>, vector<64x32xf32> -> vector<64x32xf32>
    %15 = arith.truncf %12 : vector<32x32xf32> to vector<32x32xbf16>
    %cst_16 = arith.constant dense<0.000000e+00> : vector<64x32xf32>
    %16 = tpu.matmul %0, %15, %cst_16 {dimension_numbers = #tpu.dot_dimension_numbers<[1], [0], [0], [1], [0, 0, 1, 1], [], []>} : vector<64x32xbf16>, vector<32x32xbf16>, vector<64x32xf32> -> vector<64x32xf32>
    %17 = arith.addf %14, %16 : vector<64x32xf32>
    %18 = vector.broadcast %8 : vector<1x32xf32> to vector<64x32xf32>
    %19 = arith.addf %17, %18 : vector<64x32xf32>
    %cst_17 = arith.constant 0.000000e+00 : f32
    %20 = vector.broadcast %cst_17 : f32 to vector<64x32xf32>
    %21 = arith.maximumf %19, %20 : vector<64x32xf32>
    %22 = vector.shape_cast %2 : vector<64x32xf32> to vector<64x32x1xf32>
    %23 = vector.shape_cast %21 : vector<64x32xf32> to vector<64x1x32xf32>
    %24 = vector.broadcast %22 : vector<64x32x1xf32> to vector<64x32x32xf32>
    %25 = vector.broadcast %23 : vector<64x1x32xf32> to vector<64x32x32xf32>
    %26 = arith.mulf %24, %25 : vector<64x32x32xf32>
    %cst_18 = arith.constant dense<0xFF800000> : vector<32x32xf32>
    %27 = vector.multi_reduction <maximumf>, %26, %cst_18 [0] : vector<64x32x32xf32> to vector<32x32xf32>
    %c0_19 = arith.constant 0 : index
    %c0_20 = arith.constant 0 : index
    %28 = vector.load %arg8[%c0_19, %c0_20] : memref<32x32xbf16, #tpu.memory_space<vmem>>, vector<32x32xbf16>
    %c0_21 = arith.constant 0 : index
    %c0_22 = arith.constant 0 : index
    %29 = vector.load %arg9[%c0_21, %c0_22] : memref<32x32xbf16, #tpu.memory_space<vmem>>, vector<32x32xbf16>
    %c0_23 = arith.constant 0 : index
    %c0_24 = arith.constant 0 : index
    %30 = vector.load %arg10[%c0_23, %c0_24] : memref<1x32xf32, #tpu.memory_space<vmem>>, vector<1x32xf32>
    %31 = arith.truncf %27 : vector<32x32xf32> to vector<32x32xbf16>
    %cst_25 = arith.constant dense<0.000000e+00> : vector<32x32xf32>
    %32 = tpu.matmul %31, %28, %cst_25 {dimension_numbers = #tpu.dot_dimension_numbers<[1], [0], [0], [1], [0, 0, 1, 1], [], []>} : vector<32x32xbf16>, vector<32x32xbf16>, vector<32x32xf32> -> vector<32x32xf32>
    %33 = arith.truncf %27 : vector<32x32xf32> to vector<32x32xbf16>
    %cst_26 = arith.constant dense<0.000000e+00> : vector<32x32xf32>
    %34 = tpu.matmul %33, %29, %cst_26 {dimension_numbers = #tpu.dot_dimension_numbers<[1], [0], [0], [1], [0, 0, 1, 1], [], []>} : vector<32x32xbf16>, vector<32x32xbf16>, vector<32x32xf32> -> vector<32x32xf32>
    %35 = arith.truncf %32 : vector<32x32xf32> to vector<32x32xbf16>
    %cst_27 = arith.constant dense<0.000000e+00> : vector<64x32xf32>
    %36 = tpu.matmul %1, %35, %cst_27 {dimension_numbers = #tpu.dot_dimension_numbers<[1], [0], [0], [1], [0, 0, 1, 1], [], []>} : vector<64x32xbf16>, vector<32x32xbf16>, vector<64x32xf32> -> vector<64x32xf32>
    %37 = arith.truncf %34 : vector<32x32xf32> to vector<32x32xbf16>
    %cst_28 = arith.constant dense<0.000000e+00> : vector<64x32xf32>
    %38 = tpu.matmul %0, %37, %cst_28 {dimension_numbers = #tpu.dot_dimension_numbers<[1], [0], [0], [1], [0, 0, 1, 1], [], []>} : vector<64x32xbf16>, vector<32x32xbf16>, vector<64x32xf32> -> vector<64x32xf32>
    %39 = arith.addf %36, %38 : vector<64x32xf32>
    %40 = vector.broadcast %30 : vector<1x32xf32> to vector<64x32xf32>
    %41 = arith.addf %39, %40 : vector<64x32xf32>
    %cst_29 = arith.constant 0.000000e+00 : f32
    %42 = vector.broadcast %cst_29 : f32 to vector<64x32xf32>
    %43 = arith.maximumf %41, %42 : vector<64x32xf32>
    %44 = vector.shape_cast %2 : vector<64x32xf32> to vector<64x32x1xf32>
    %45 = vector.shape_cast %43 : vector<64x32xf32> to vector<64x1x32xf32>
    %46 = vector.broadcast %44 : vector<64x32x1xf32> to vector<64x32x32xf32>
    %47 = vector.broadcast %45 : vector<64x1x32xf32> to vector<64x32x32xf32>
    %48 = arith.mulf %46, %47 : vector<64x32x32xf32>
    %cst_30 = arith.constant dense<0xFF800000> : vector<32x32xf32>
    %49 = vector.multi_reduction <maximumf>, %48, %cst_30 [0] : vector<64x32x32xf32> to vector<32x32xf32>
    %c0_31 = arith.constant 0 : index
    %c0_32 = arith.constant 0 : index
    %50 = vector.load %arg8[%c0_31, %c0_32] : memref<32x32xbf16, #tpu.memory_space<vmem>>, vector<32x32xbf16>
    %c0_33 = arith.constant 0 : index
    %c0_34 = arith.constant 0 : index
    %51 = vector.load %arg9[%c0_33, %c0_34] : memref<32x32xbf16, #tpu.memory_space<vmem>>, vector<32x32xbf16>
    %c0_35 = arith.constant 0 : index
    %c0_36 = arith.constant 0 : index
    %52 = vector.load %arg10[%c0_35, %c0_36] : memref<1x32xf32, #tpu.memory_space<vmem>>, vector<1x32xf32>
    %53 = arith.truncf %49 : vector<32x32xf32> to vector<32x32xbf16>
    %cst_37 = arith.constant dense<0.000000e+00> : vector<32x32xf32>
    %54 = tpu.matmul %53, %50, %cst_37 {dimension_numbers = #tpu.dot_dimension_numbers<[1], [0], [0], [1], [0, 0, 1, 1], [], []>} : vector<32x32xbf16>, vector<32x32xbf16>, vector<32x32xf32> -> vector<32x32xf32>
    %55 = arith.truncf %49 : vector<32x32xf32> to vector<32x32xbf16>
    %cst_38 = arith.constant dense<0.000000e+00> : vector<32x32xf32>
    %56 = tpu.matmul %55, %51, %cst_38 {dimension_numbers = #tpu.dot_dimension_numbers<[1], [0], [0], [1], [0, 0, 1, 1], [], []>} : vector<32x32xbf16>, vector<32x32xbf16>, vector<32x32xf32> -> vector<32x32xf32>
    %57 = arith.truncf %54 : vector<32x32xf32> to vector<32x32xbf16>
    %cst_39 = arith.constant dense<0.000000e+00> : vector<64x32xf32>
    %58 = tpu.matmul %1, %57, %cst_39 {dimension_numbers = #tpu.dot_dimension_numbers<[1], [0], [0], [1], [0, 0, 1, 1], [], []>} : vector<64x32xbf16>, vector<32x32xbf16>, vector<64x32xf32> -> vector<64x32xf32>
    %59 = arith.truncf %56 : vector<32x32xf32> to vector<32x32xbf16>
    %cst_40 = arith.constant dense<0.000000e+00> : vector<64x32xf32>
    %60 = tpu.matmul %0, %59, %cst_40 {dimension_numbers = #tpu.dot_dimension_numbers<[1], [0], [0], [1], [0, 0, 1, 1], [], []>} : vector<64x32xbf16>, vector<32x32xbf16>, vector<64x32xf32> -> vector<64x32xf32>
    %61 = arith.addf %58, %60 : vector<64x32xf32>
    %62 = vector.broadcast %52 : vector<1x32xf32> to vector<64x32xf32>
    %63 = arith.addf %61, %62 : vector<64x32xf32>
    %cst_41 = arith.constant 0.000000e+00 : f32
    %64 = vector.broadcast %cst_41 : f32 to vector<64x32xf32>
    %65 = arith.maximumf %63, %64 : vector<64x32xf32>
    %66 = vector.shape_cast %2 : vector<64x32xf32> to vector<64x32x1xf32>
    %67 = vector.shape_cast %65 : vector<64x32xf32> to vector<64x1x32xf32>
    %68 = vector.broadcast %66 : vector<64x32x1xf32> to vector<64x32x32xf32>
    %69 = vector.broadcast %67 : vector<64x1x32xf32> to vector<64x32x32xf32>
    %70 = arith.mulf %68, %69 : vector<64x32x32xf32>
    %cst_42 = arith.constant dense<0xFF800000> : vector<32x32xf32>
    %71 = vector.multi_reduction <maximumf>, %70, %cst_42 [0] : vector<64x32x32xf32> to vector<32x32xf32>
    %72 = arith.addf %27, %49 : vector<32x32xf32>
    %73 = arith.addf %72, %71 : vector<32x32xf32>
    %c0_43 = arith.constant 0 : index
    %c0_44 = arith.constant 0 : index
    %74 = vector.load %arg13[%c0_43, %c0_44] : memref<1x128xf32, #tpu.memory_space<vmem>>, vector<1x128xf32>
    %c0_45 = arith.constant 0 : index
    %c0_46 = arith.constant 0 : index
    %c0_47 = arith.constant 0 : index
    %75 = vector.load %arg12[%c0_45, %c0_46, %c0_47] : memref<9x32x128xbf16, #tpu.memory_space<vmem>>, vector<1x32x128xbf16>
    %76 = vector.shape_cast %75 : vector<1x32x128xbf16> to vector<32x128xbf16>
    %77 = arith.truncf %73 : vector<32x32xf32> to vector<32x32xbf16>
    %cst_48 = arith.constant dense<0.000000e+00> : vector<32x128xf32>
    %78 = tpu.matmul %77, %76, %cst_48 {dimension_numbers = #tpu.dot_dimension_numbers<[1], [0], [0], [1], [0, 0, 1, 1], [], []>} : vector<32x32xbf16>, vector<32x128xbf16>, vector<32x128xf32> -> vector<32x128xf32>
    %c0_49 = arith.constant 0 : index
    %c0_50 = arith.constant 0 : index
    %c0_51 = arith.constant 0 : index
    %79 = vector.load %arg11[%c0_49, %c0_50, %c0_51] : memref<9x256x32xbf16, #tpu.memory_space<vmem>>, vector<1x256x32xbf16>
    %80 = vector.shape_cast %79 : vector<1x256x32xbf16> to vector<256x32xbf16>
    %81 = arith.truncf %78 : vector<32x128xf32> to vector<32x128xbf16>
    %cst_52 = arith.constant dense<0.000000e+00> : vector<256x128xf32>
    %82 = tpu.matmul %80, %81, %cst_52 {dimension_numbers = #tpu.dot_dimension_numbers<[1], [0], [0], [1], [0, 0, 1, 1], [], []>} : vector<256x32xbf16>, vector<32x128xbf16>, vector<256x128xf32> -> vector<256x128xf32>
    %83 = vector.broadcast %74 : vector<1x128xf32> to vector<256x128xf32>
    %84 = arith.addf %83, %82 : vector<256x128xf32>
    %c1 = arith.constant 1 : index
    %c0_53 = arith.constant 0 : index
    %c0_54 = arith.constant 0 : index
    %85 = vector.load %arg12[%c1, %c0_53, %c0_54] : memref<9x32x128xbf16, #tpu.memory_space<vmem>>, vector<1x32x128xbf16>
    %86 = vector.shape_cast %85 : vector<1x32x128xbf16> to vector<32x128xbf16>
    %87 = arith.truncf %73 : vector<32x32xf32> to vector<32x32xbf16>
    %cst_55 = arith.constant dense<0.000000e+00> : vector<32x128xf32>
    %88 = tpu.matmul %87, %86, %cst_55 {dimension_numbers = #tpu.dot_dimension_numbers<[1], [0], [0], [1], [0, 0, 1, 1], [], []>} : vector<32x32xbf16>, vector<32x128xbf16>, vector<32x128xf32> -> vector<32x128xf32>
    %c1_56 = arith.constant 1 : index
    %c0_57 = arith.constant 0 : index
    %c0_58 = arith.constant 0 : index
    %89 = vector.load %arg11[%c1_56, %c0_57, %c0_58] : memref<9x256x32xbf16, #tpu.memory_space<vmem>>, vector<1x256x32xbf16>
    %90 = vector.shape_cast %89 : vector<1x256x32xbf16> to vector<256x32xbf16>
    %91 = arith.truncf %88 : vector<32x128xf32> to vector<32x128xbf16>
    %cst_59 = arith.constant dense<0.000000e+00> : vector<256x128xf32>
    %92 = tpu.matmul %90, %91, %cst_59 {dimension_numbers = #tpu.dot_dimension_numbers<[1], [0], [0], [1], [0, 0, 1, 1], [], []>} : vector<256x32xbf16>, vector<32x128xbf16>, vector<256x128xf32> -> vector<256x128xf32>
    %93 = arith.addf %84, %92 : vector<256x128xf32>
    %c2 = arith.constant 2 : index
    %c0_60 = arith.constant 0 : index
    %c0_61 = arith.constant 0 : index
    %94 = vector.load %arg12[%c2, %c0_60, %c0_61] : memref<9x32x128xbf16, #tpu.memory_space<vmem>>, vector<1x32x128xbf16>
    %95 = vector.shape_cast %94 : vector<1x32x128xbf16> to vector<32x128xbf16>
    %96 = arith.truncf %73 : vector<32x32xf32> to vector<32x32xbf16>
    %cst_62 = arith.constant dense<0.000000e+00> : vector<32x128xf32>
    %97 = tpu.matmul %96, %95, %cst_62 {dimension_numbers = #tpu.dot_dimension_numbers<[1], [0], [0], [1], [0, 0, 1, 1], [], []>} : vector<32x32xbf16>, vector<32x128xbf16>, vector<32x128xf32> -> vector<32x128xf32>
    %c2_63 = arith.constant 2 : index
    %c0_64 = arith.constant 0 : index
    %c0_65 = arith.constant 0 : index
    %98 = vector.load %arg11[%c2_63, %c0_64, %c0_65] : memref<9x256x32xbf16, #tpu.memory_space<vmem>>, vector<1x256x32xbf16>
    %99 = vector.shape_cast %98 : vector<1x256x32xbf16> to vector<256x32xbf16>
    %100 = arith.truncf %97 : vector<32x128xf32> to vector<32x128xbf16>
    %cst_66 = arith.constant dense<0.000000e+00> : vector<256x128xf32>
    %101 = tpu.matmul %99, %100, %cst_66 {dimension_numbers = #tpu.dot_dimension_numbers<[1], [0], [0], [1], [0, 0, 1, 1], [], []>} : vector<256x32xbf16>, vector<32x128xbf16>, vector<256x128xf32> -> vector<256x128xf32>
    %102 = arith.addf %93, %101 : vector<256x128xf32>
    %c3 = arith.constant 3 : index
    %c0_67 = arith.constant 0 : index
    %c0_68 = arith.constant 0 : index
    %103 = vector.load %arg12[%c3, %c0_67, %c0_68] : memref<9x32x128xbf16, #tpu.memory_space<vmem>>, vector<1x32x128xbf16>
    %104 = vector.shape_cast %103 : vector<1x32x128xbf16> to vector<32x128xbf16>
    %105 = arith.truncf %73 : vector<32x32xf32> to vector<32x32xbf16>
    %cst_69 = arith.constant dense<0.000000e+00> : vector<32x128xf32>
    %106 = tpu.matmul %105, %104, %cst_69 {dimension_numbers = #tpu.dot_dimension_numbers<[1], [0], [0], [1], [0, 0, 1, 1], [], []>} : vector<32x32xbf16>, vector<32x128xbf16>, vector<32x128xf32> -> vector<32x128xf32>
    %c3_70 = arith.constant 3 : index
    %c0_71 = arith.constant 0 : index
    %c0_72 = arith.constant 0 : index
    %107 = vector.load %arg11[%c3_70, %c0_71, %c0_72] : memref<9x256x32xbf16, #tpu.memory_space<vmem>>, vector<1x256x32xbf16>
    %108 = vector.shape_cast %107 : vector<1x256x32xbf16> to vector<256x32xbf16>
    %109 = arith.truncf %106 : vector<32x128xf32> to vector<32x128xbf16>
    %cst_73 = arith.constant dense<0.000000e+00> : vector<256x128xf32>
    %110 = tpu.matmul %108, %109, %cst_73 {dimension_numbers = #tpu.dot_dimension_numbers<[1], [0], [0], [1], [0, 0, 1, 1], [], []>} : vector<256x32xbf16>, vector<32x128xbf16>, vector<256x128xf32> -> vector<256x128xf32>
    %111 = arith.addf %102, %110 : vector<256x128xf32>
    %c4 = arith.constant 4 : index
    %c0_74 = arith.constant 0 : index
    %c0_75 = arith.constant 0 : index
    %112 = vector.load %arg12[%c4, %c0_74, %c0_75] : memref<9x32x128xbf16, #tpu.memory_space<vmem>>, vector<1x32x128xbf16>
    %113 = vector.shape_cast %112 : vector<1x32x128xbf16> to vector<32x128xbf16>
    %114 = arith.truncf %73 : vector<32x32xf32> to vector<32x32xbf16>
    %cst_76 = arith.constant dense<0.000000e+00> : vector<32x128xf32>
    %115 = tpu.matmul %114, %113, %cst_76 {dimension_numbers = #tpu.dot_dimension_numbers<[1], [0], [0], [1], [0, 0, 1, 1], [], []>} : vector<32x32xbf16>, vector<32x128xbf16>, vector<32x128xf32> -> vector<32x128xf32>
    %c4_77 = arith.constant 4 : index
    %c0_78 = arith.constant 0 : index
    %c0_79 = arith.constant 0 : index
    %116 = vector.load %arg11[%c4_77, %c0_78, %c0_79] : memref<9x256x32xbf16, #tpu.memory_space<vmem>>, vector<1x256x32xbf16>
    %117 = vector.shape_cast %116 : vector<1x256x32xbf16> to vector<256x32xbf16>
    %118 = arith.truncf %115 : vector<32x128xf32> to vector<32x128xbf16>
    %cst_80 = arith.constant dense<0.000000e+00> : vector<256x128xf32>
    %119 = tpu.matmul %117, %118, %cst_80 {dimension_numbers = #tpu.dot_dimension_numbers<[1], [0], [0], [1], [0, 0, 1, 1], [], []>} : vector<256x32xbf16>, vector<32x128xbf16>, vector<256x128xf32> -> vector<256x128xf32>
    %120 = arith.addf %111, %119 : vector<256x128xf32>
    %c5 = arith.constant 5 : index
    %c0_81 = arith.constant 0 : index
    %c0_82 = arith.constant 0 : index
    %121 = vector.load %arg12[%c5, %c0_81, %c0_82] : memref<9x32x128xbf16, #tpu.memory_space<vmem>>, vector<1x32x128xbf16>
    %122 = vector.shape_cast %121 : vector<1x32x128xbf16> to vector<32x128xbf16>
    %123 = arith.truncf %73 : vector<32x32xf32> to vector<32x32xbf16>
    %cst_83 = arith.constant dense<0.000000e+00> : vector<32x128xf32>
    %124 = tpu.matmul %123, %122, %cst_83 {dimension_numbers = #tpu.dot_dimension_numbers<[1], [0], [0], [1], [0, 0, 1, 1], [], []>} : vector<32x32xbf16>, vector<32x128xbf16>, vector<32x128xf32> -> vector<32x128xf32>
    %c5_84 = arith.constant 5 : index
    %c0_85 = arith.constant 0 : index
    %c0_86 = arith.constant 0 : index
    %125 = vector.load %arg11[%c5_84, %c0_85, %c0_86] : memref<9x256x32xbf16, #tpu.memory_space<vmem>>, vector<1x256x32xbf16>
    %126 = vector.shape_cast %125 : vector<1x256x32xbf16> to vector<256x32xbf16>
    %127 = arith.truncf %124 : vector<32x128xf32> to vector<32x128xbf16>
    %cst_87 = arith.constant dense<0.000000e+00> : vector<256x128xf32>
    %128 = tpu.matmul %126, %127, %cst_87 {dimension_numbers = #tpu.dot_dimension_numbers<[1], [0], [0], [1], [0, 0, 1, 1], [], []>} : vector<256x32xbf16>, vector<32x128xbf16>, vector<256x128xf32> -> vector<256x128xf32>
    %129 = arith.addf %120, %128 : vector<256x128xf32>
    %c6 = arith.constant 6 : index
    %c0_88 = arith.constant 0 : index
    %c0_89 = arith.constant 0 : index
    %130 = vector.load %arg12[%c6, %c0_88, %c0_89] : memref<9x32x128xbf16, #tpu.memory_space<vmem>>, vector<1x32x128xbf16>
    %131 = vector.shape_cast %130 : vector<1x32x128xbf16> to vector<32x128xbf16>
    %132 = arith.truncf %73 : vector<32x32xf32> to vector<32x32xbf16>
    %cst_90 = arith.constant dense<0.000000e+00> : vector<32x128xf32>
    %133 = tpu.matmul %132, %131, %cst_90 {dimension_numbers = #tpu.dot_dimension_numbers<[1], [0], [0], [1], [0, 0, 1, 1], [], []>} : vector<32x32xbf16>, vector<32x128xbf16>, vector<32x128xf32> -> vector<32x128xf32>
    %c6_91 = arith.constant 6 : index
    %c0_92 = arith.constant 0 : index
    %c0_93 = arith.constant 0 : index
    %134 = vector.load %arg11[%c6_91, %c0_92, %c0_93] : memref<9x256x32xbf16, #tpu.memory_space<vmem>>, vector<1x256x32xbf16>
    %135 = vector.shape_cast %134 : vector<1x256x32xbf16> to vector<256x32xbf16>
    %136 = arith.truncf %133 : vector<32x128xf32> to vector<32x128xbf16>
    %cst_94 = arith.constant dense<0.000000e+00> : vector<256x128xf32>
    %137 = tpu.matmul %135, %136, %cst_94 {dimension_numbers = #tpu.dot_dimension_numbers<[1], [0], [0], [1], [0, 0, 1, 1], [], []>} : vector<256x32xbf16>, vector<32x128xbf16>, vector<256x128xf32> -> vector<256x128xf32>
    %138 = arith.addf %129, %137 : vector<256x128xf32>
    %c7 = arith.constant 7 : index
    %c0_95 = arith.constant 0 : index
    %c0_96 = arith.constant 0 : index
    %139 = vector.load %arg12[%c7, %c0_95, %c0_96] : memref<9x32x128xbf16, #tpu.memory_space<vmem>>, vector<1x32x128xbf16>
    %140 = vector.shape_cast %139 : vector<1x32x128xbf16> to vector<32x128xbf16>
    %141 = arith.truncf %73 : vector<32x32xf32> to vector<32x32xbf16>
    %cst_97 = arith.constant dense<0.000000e+00> : vector<32x128xf32>
    %142 = tpu.matmul %141, %140, %cst_97 {dimension_numbers = #tpu.dot_dimension_numbers<[1], [0], [0], [1], [0, 0, 1, 1], [], []>} : vector<32x32xbf16>, vector<32x128xbf16>, vector<32x128xf32> -> vector<32x128xf32>
    %c7_98 = arith.constant 7 : index
    %c0_99 = arith.constant 0 : index
    %c0_100 = arith.constant 0 : index
    %143 = vector.load %arg11[%c7_98, %c0_99, %c0_100] : memref<9x256x32xbf16, #tpu.memory_space<vmem>>, vector<1x256x32xbf16>
    %144 = vector.shape_cast %143 : vector<1x256x32xbf16> to vector<256x32xbf16>
    %145 = arith.truncf %142 : vector<32x128xf32> to vector<32x128xbf16>
    %cst_101 = arith.constant dense<0.000000e+00> : vector<256x128xf32>
    %146 = tpu.matmul %144, %145, %cst_101 {dimension_numbers = #tpu.dot_dimension_numbers<[1], [0], [0], [1], [0, 0, 1, 1], [], []>} : vector<256x32xbf16>, vector<32x128xbf16>, vector<256x128xf32> -> vector<256x128xf32>
    %147 = arith.addf %138, %146 : vector<256x128xf32>
    %c8 = arith.constant 8 : index
    %c0_102 = arith.constant 0 : index
    %c0_103 = arith.constant 0 : index
    %148 = vector.load %arg12[%c8, %c0_102, %c0_103] : memref<9x32x128xbf16, #tpu.memory_space<vmem>>, vector<1x32x128xbf16>
    %149 = vector.shape_cast %148 : vector<1x32x128xbf16> to vector<32x128xbf16>
    %150 = arith.truncf %73 : vector<32x32xf32> to vector<32x32xbf16>
    %cst_104 = arith.constant dense<0.000000e+00> : vector<32x128xf32>
    %151 = tpu.matmul %150, %149, %cst_104 {dimension_numbers = #tpu.dot_dimension_numbers<[1], [0], [0], [1], [0, 0, 1, 1], [], []>} : vector<32x32xbf16>, vector<32x128xbf16>, vector<32x128xf32> -> vector<32x128xf32>
    %c8_105 = arith.constant 8 : index
    %c0_106 = arith.constant 0 : index
    %c0_107 = arith.constant 0 : index
    %152 = vector.load %arg11[%c8_105, %c0_106, %c0_107] : memref<9x256x32xbf16, #tpu.memory_space<vmem>>, vector<1x256x32xbf16>
    %153 = vector.shape_cast %152 : vector<1x256x32xbf16> to vector<256x32xbf16>
    %154 = arith.truncf %151 : vector<32x128xf32> to vector<32x128xbf16>
    %cst_108 = arith.constant dense<0.000000e+00> : vector<256x128xf32>
    %155 = tpu.matmul %153, %154, %cst_108 {dimension_numbers = #tpu.dot_dimension_numbers<[1], [0], [0], [1], [0, 0, 1, 1], [], []>} : vector<256x32xbf16>, vector<32x128xbf16>, vector<256x128xf32> -> vector<256x128xf32>
    %156 = arith.addf %147, %155 : vector<256x128xf32>
    %c0_109 = arith.constant 0 : index
    %c0_110 = arith.constant 0 : index
    %157 = vector.load %arg14[%c0_109, %c0_110] : memref<256x128xf32, #tpu.memory_space<vmem>>, vector<256x128xf32>
    tpu.vector_store %arg14[%c0_109, %c0_110], %156 {strides = array<i32>} : memref<256x128xf32, #tpu.memory_space<vmem>>, vector<256x128xf32>,
    return
  }
  func.func @transform_0(%arg0: i32) -> (i32, i32) {
    %c0_i32 = arith.constant 0 : i32
    %c0_i32_0 = arith.constant 0 : i32
    %c0_i32_1 = arith.constant 0 : i32
    return %c0_i32, %c0_i32_0 : i32, i32
  }
  func.func @transform_1(%arg0: i32) -> (i32, i32) {
    %c0_i32 = arith.constant 0 : i32
    %c0_i32_0 = arith.constant 0 : i32
    %c0_i32_1 = arith.constant 0 : i32
    return %c0_i32, %c0_i32_0 : i32, i32
  }
  func.func @transform_2(%arg0: i32) -> (i32, i32) {
    %c0_i32 = arith.constant 0 : i32
    %c0_i32_0 = arith.constant 0 : i32
    %c0_i32_1 = arith.constant 0 : i32
    return %c0_i32, %c0_i32_0 : i32, i32
  }
  func.func @transform_3(%arg0: i32) -> (i32, i32) {
    %c0_i32 = arith.constant 0 : i32
    %c0_i32_0 = arith.constant 0 : i32
    %c0_i32_1 = arith.constant 0 : i32
    return %c0_i32, %c0_i32_0 : i32, i32
  }
  func.func @transform_4(%arg0: i32) -> (i32, i32) {
    %c0_i32 = arith.constant 0 : i32
    %c0_i32_0 = arith.constant 0 : i32
    %c0_i32_1 = arith.constant 0 : i32
    return %c0_i32, %c0_i32_0 : i32, i32
  }
  func.func @transform_5(%arg0: i32) -> (i32, i32) {
    %c0_i32 = arith.constant 0 : i32
    %c0_i32_0 = arith.constant 0 : i32
    %c0_i32_1 = arith.constant 0 : i32
    return %c0_i32, %c0_i32_0 : i32, i32
  }
  func.func @transform_6(%arg0: i32) -> (i32, i32) {
    %c0_i32 = arith.constant 0 : i32
    %c0_i32_0 = arith.constant 0 : i32
    %c0_i32_1 = arith.constant 0 : i32
    return %c0_i32, %c0_i32_0 : i32, i32
  }
  func.func @transform_7(%arg0: i32) -> (i32, i32) {
    %c0_i32 = arith.constant 0 : i32
    %c0_i32_0 = arith.constant 0 : i32
    %c0_i32_1 = arith.constant 0 : i32
    return %c0_i32, %c0_i32_0 : i32, i32
  }
  func.func @transform_8(%arg0: i32) -> (i32, i32) {
    %c0_i32 = arith.constant 0 : i32
    %c0_i32_0 = arith.constant 0 : i32
    %c0_i32_1 = arith.constant 0 : i32
    return %c0_i32, %c0_i32_0 : i32, i32
  }
  func.func @transform_9(%arg0: i32) -> (i32, i32) {
    %c0_i32 = arith.constant 0 : i32
    %c0_i32_0 = arith.constant 0 : i32
    %c0_i32_1 = arith.constant 0 : i32
    return %c0_i32, %c0_i32_0 : i32, i32
  }
  func.func @transform_10(%arg0: i32) -> (i32, i32, i32) {
    %c0_i32 = arith.constant 0 : i32
    %c0_i32_0 = arith.constant 0 : i32
    %c0_i32_1 = arith.constant 0 : i32
    %c0_i32_2 = arith.constant 0 : i32
    return %c0_i32, %c0_i32_0, %c0_i32_1 : i32, i32, i32
  }
  func.func @transform_11(%arg0: i32) -> (i32, i32, i32) {
    %c0_i32 = arith.constant 0 : i32
    %c0_i32_0 = arith.constant 0 : i32
    %c0_i32_1 = arith.constant 0 : i32
    %c0_i32_2 = arith.constant 0 : i32
    return %c0_i32, %c0_i32_0, %c0_i32_1 : i32, i32, i32
  }
  func.func @transform_12(%arg0: i32) -> (i32, i32) {
    %c0_i32 = arith.constant 0 : i32
    %c0_i32_0 = arith.constant 0 : i32
    %c0_i32_1 = arith.constant 0 : i32
    return %c0_i32, %c0_i32_0 : i32, i32
  }
  func.func @transform_13(%arg0: i32) -> (i32, i32) {
    %c0_i32 = arith.constant 0 : i32
    %c0_i32_0 = arith.constant 0 : i32
    %c0_i32_1 = arith.constant 0 : i32
    return %c0_i32, %c0_i32_0 : i32, i32
  }
}

</mosaic_0001>

<llo_original>
// kernel: egnn_forward.1
$region0: #{egnn_forward.1}
  #allocation0 [shape = 'u32[]', space=smem, size = 0x4, offset = 0x4, fixed_abs, tag = 'smem constant byte address 0x4 - core index']
  #allocation1 [shape = 'u32[144,128]{1,0:T(1,128)}', space=vmem, size = 0x12000, scoped, tag = 'internal scratch']
  %s0 = inlined_call_operand.vmem [shape: bf16[256,4], index: 0, kind: input, shape index: {}]
  %s1 = inlined_call_operand.vmem [shape: bf16[32,256], index: 1, kind: input, shape index: {}]
  %s2 = inlined_call_operand.vmem [shape: bf16[64,32], index: 2, kind: input, shape index: {}]
  %s3 = inlined_call_operand.vmem [shape: bf16[64,32], index: 3, kind: input, shape index: {}]
  %s4 = inlined_call_operand.vmem [shape: bf16[4,32], index: 4, kind: input, shape index: {}]
  %s5 = inlined_call_operand.vmem [shape: bf16[4,32], index: 5, kind: input, shape index: {}]
  %s6 = inlined_call_operand.vmem [shape: f32[1,32], index: 6, kind: input, shape index: {}]
  %s7 = inlined_call_operand.vmem [shape: bf16[32,32], index: 7, kind: input, shape index: {}]
  %s8 = inlined_call_operand.vmem [shape: bf16[32,32], index: 8, kind: input, shape index: {}]
  %s9 = inlined_call_operand.vmem [shape: f32[1,32], index: 9, kind: input, shape index: {}]
  %s10 = inlined_call_operand.vmem [shape: bf16[9,256,32], index: 10, kind: input, shape index: {}]
  %s11 = inlined_call_operand.vmem [shape: bf16[9,32,128], index: 11, kind: input, shape index: {}]
  %s12 = inlined_call_operand.vmem [shape: f32[1,128], index: 12, kind: input, shape index: {}]
  %s13 = inlined_call_operand.vmem [shape: f32[256,128], index: 13, kind: output, shape index: {}]
  %s14 = sld [smem:[#allocation0]]
  $region62: #{egnn_forward.1} parent=0
    _
  %s16 = ssub.s32 1, %s14
  %s17 = scalar_select 0, %s16, %s14
  // Predicated region
  $region2: #{egnn_forward.1} parent=0 // pred_check
    _
  $region3: #{egnn_forward.1} parent=0 // pred_check_branch
    %19 = sbr.rel (0) target = $region5
  $region4: #{egnn_forward.1} parent=0 // pred_region
    _
  $region5: #{egnn_forward.1} parent=0 // pred_fallthru
    _
  // Predicated region
  $region6: #{egnn_forward.1} parent=0 // pred_check
    _
  $region7: #{egnn_forward.1} parent=0 // pred_check_branch
    %21 = sbr.rel (0) target = $region9
  $region8: #{egnn_forward.1} parent=0 // pred_region
    _
  $region9: #{egnn_forward.1} parent=0 // pred_fallthru
    _
  // Predicated region
  $region10: #{egnn_forward.1} parent=0 // pred_check
    _
  $region11: #{egnn_forward.1} parent=0 // pred_check_branch
    %23 = sbr.rel (0) target = $region13
  $region12: #{egnn_forward.1} parent=0 // pred_region
    _
  $region13: #{egnn_forward.1} parent=0 // pred_fallthru
    _
  // Predicated region
  $region14: #{egnn_forward.1} parent=0 // pred_check
    _
  $region15: #{egnn_forward.1} parent=0 // pred_check_branch
    %25 = sbr.rel (0) target = $region17
  $region16: #{egnn_forward.1} parent=0 // pred_region
    _
  $region17: #{egnn_forward.1} parent=0 // pred_fallthru
    _
  // Predicated region
  $region18: #{egnn_forward.1} parent=0 // pred_check
    _
  $region19: #{egnn_forward.1} parent=0 // pred_check_branch
    %27 = sbr.rel (0) target = $region21
  $region20: #{egnn_forward.1} parent=0 // pred_region
    _
  $region21: #{egnn_forward.1} parent=0 // pred_fallthru
    _
  // Predicated region
  $region22: #{egnn_forward.1} parent=0 // pred_check
    _
  $region23: #{egnn_forward.1} parent=0 // pred_check_branch
    %29 = sbr.rel (0) target = $region25
  $region24: #{egnn_forward.1} parent=0 // pred_region
    _
  $region25: #{egnn_forward.1} parent=0 // pred_fallthru
    _
  // Predicated region
  $region26: #{egnn_forward.1} parent=0 // pred_check
    _
  $region27: #{egnn_forward.1} parent=0 // pred_check_branch
    %31 = sbr.rel (0) target = $region29
  $region28: #{egnn_forward.1} parent=0 // pred_region
    _
  $region29: #{egnn_forward.1} parent=0 // pred_fallthru
    _
  // Predicated region
  $region30: #{egnn_forward.1} parent=0 // pred_check
    _
  $region31: #{egnn_forward.1} parent=0 // pred_check_branch
    %33 = sbr.rel (0) target = $region33
  $region32: #{egnn_forward.1} parent=0 // pred_region
    _
  $region33: #{egnn_forward.1} parent=0 // pred_fallthru
    _
  // Predicated region
  $region34: #{egnn_forward.1} parent=0 // pred_check
    _
  $region35: #{egnn_forward.1} parent=0 // pred_check_branch
    %35 = sbr.rel (0) target = $region37
  $region36: #{egnn_forward.1} parent=0 // pred_region
    _
  $region37: #{egnn_forward.1} parent=0 // pred_fallthru
    _
  // Predicated region
  $region38: #{egnn_forward.1} parent=0 // pred_check
    _
  $region39: #{egnn_forward.1} parent=0 // pred_check_branch
    %37 = sbr.rel (0) target = $region41
  $region40: #{egnn_forward.1} parent=0 // pred_region
    _
  $region41: #{egnn_forward.1} parent=0 // pred_fallthru
    _
  // Predicated region
  $region42: #{egnn_forward.1} parent=0 // pred_check
    _
  $region43: #{egnn_forward.1} parent=0 // pred_check_branch
    %39 = sbr.rel (0) target = $region45
  $region44: #{egnn_forward.1} parent=0 // pred_region
    _
  $region45: #{egnn_forward.1} parent=0 // pred_fallthru
    _
  // Predicated region
  $region46: #{egnn_forward.1} parent=0 // pred_check
    _
  $region47: #{egnn_forward.1} parent=0 // pred_check_branch
    %41 = sbr.rel (0) target = $region49
  $region48: #{egnn_forward.1} parent=0 // pred_region
    _
  $region49: #{egnn_forward.1} parent=0 // pred_fallthru
    _
  // Predicated region
  $region50: #{egnn_forward.1} parent=0 // pred_check
    _
  $region51: #{egnn_forward.1} parent=0 // pred_check_branch
    %43 = sbr.rel (0) target = $region53
  $region52: #{egnn_forward.1} parent=0 // pred_region
    _
  $region53: #{egnn_forward.1} parent=0 // pred_fallthru
    _
  %v45 = vld [vmem:[%s2] sm:$0xf]
  %v46 = vld [vmem:[%s2 + $0x4] sm:$0xf]
  %v47 = vld [vmem:[%s2 + $0x8] sm:$0xf]
  %v48 = vld [vmem:[%s2 + $0xc] sm:$0xf]
  %v49 = vld [vmem:[%s2 + $0x10] sm:$0xf]
  %v50 = vld [vmem:[%s2 + $0x14] sm:$0xf]
  %v51 = vld [vmem:[%s2 + $0x18] sm:$0xf]
  %v52 = vld [vmem:[%s2 + $0x1c] sm:$0xf]
  %v53 = vld [vmem:[%s3] sm:$0xf]
  %v54 = vld [vmem:[%s3 + $0x4] sm:$0xf]
  %v55 = vld [vmem:[%s3 + $0x8] sm:$0xf]
  %v56 = vld [vmem:[%s3 + $0xc] sm:$0xf]
  %v57 = vld [vmem:[%s3 + $0x10] sm:$0xf]
  %v58 = vld [vmem:[%s3 + $0x14] sm:$0xf]
  %v59 = vld [vmem:[%s3 + $0x18] sm:$0xf]
  %v60 = vld [vmem:[%s3 + $0x1c] sm:$0xf]
  %v61 = vunpack.c.l.bf16 %v53
  %v62 = vunpack.c.l.bf16 %v54
  %v63 = vunpack.c.l.bf16 %v55
  %v64 = vunpack.c.l.bf16 %v56
  %v65 = vunpack.c.l.bf16 %v57
  %v66 = vunpack.c.l.bf16 %v58
  %v67 = vunpack.c.l.bf16 %v59
  %v68 = vunpack.c.l.bf16 %v60
  %v69 = vld [vmem:[%s1] sm:$0xff]
  %v70 = vld [vmem:[%s1 + $0x8] sm:$0xff]
  %v71 = vld [vmem:[%s1 + $0x10] sm:$0xff]
  %v72 = vld [vmem:[%s1 + $0x18] sm:$0xff]
  %v73 = vld [vmem:[%s0] sm:$0xf]
  %v74 = vld [vmem:[%s0 + $0x4] sm:$0xf]
  %v75 = vld [vmem:[%s0 + $0x8] sm:$0xf]
  %v76 = vld [vmem:[%s0 + $0xc] sm:$0xf]
  %v77 = vld [vmem:[%s0 + $0x10] sm:$0xf]
  %v78 = vld [vmem:[%s0 + $0x14] sm:$0xf]
  %v79 = vld [vmem:[%s0 + $0x18] sm:$0xf]
  %v80 = vld [vmem:[%s0 + $0x1c] sm:$0xf]
  %v81 = vld [vmem:[%s0 + $0x20] sm:$0xf]
  %v82 = vld [vmem:[%s0 + $0x24] sm:$0xf]
  %v83 = vld [vmem:[%s0 + $0x28] sm:$0xf]
  %v84 = vld [vmem:[%s0 + $0x2c] sm:$0xf]
  %v85 = vld [vmem:[%s0 + $0x30] sm:$0xf]
  %v86 = vld [vmem:[%s0 + $0x34] sm:$0xf]
  %v87 = vld [vmem:[%s0 + $0x38] sm:$0xf]
  %v88 = vld [vmem:[%s0 + $0x3c] sm:$0xf]
  %v89 = vld [vmem:[%s0 + $0x40] sm:$0xf]
  %v90 = vld [vmem:[%s0 + $0x44] sm:$0xf]
  %v91 = vld [vmem:[%s0 + $0x48] sm:$0xf]
  %v92 = vld [vmem:[%s0 + $0x4c] sm:$0xf]
  %v93 = vld [vmem:[%s0 + $0x50] sm:$0xf]
  %v94 = vld [vmem:[%s0 + $0x54] sm:$0xf]
  %v95 = vld [vmem:[%s0 + $0x58] sm:$0xf]
  %v96 = vld [vmem:[%s0 + $0x5c] sm:$0xf]
  %v97 = vld [vmem:[%s0 + $0x60] sm:$0xf]
  %v98 = vld [vmem:[%s0 + $0x64] sm:$0xf]
  %v99 = vld [vmem:[%s0 + $0x68] sm:$0xf]
  %v100 = vld [vmem:[%s0 + $0x6c] sm:$0xf]
  %v101 = vld [vmem:[%s0 + $0x70] sm:$0xf]
  %v102 = vld [vmem:[%s0 + $0x74] sm:$0xf]
  %v103 = vld [vmem:[%s0 + $0x78] sm:$0xf]
  %v104 = vld [vmem:[%s0 + $0x7c] sm:$0xf]
  %v109 = vunpack.c.l.b16 %v69
  %v110 = vunpack.c.h.b16 %v69
  %v111 = vunpack.c.l.b16 %v70
  %v112 = vunpack.c.h.b16 %v70
  %v113 = vunpack.c.l.b16 %v71
  %v114 = vunpack.c.h.b16 %v71
  %v115 = vunpack.c.l.b16 %v72
  %v116 = vunpack.c.h.b16 %v72
  %v117 = vpack.c.b16 %v111, %v109
  %v118 = vpack.c.b16 %v112, %v110
  %v119 = vpack.c.b16 %v115, %v113
  %v120 = vpack.c.b16 %v116, %v114
  %v157 = vunpack.c.l.b16 %v73
  %v158 = vunpack.c.l.b16 %v74
  %v159 = vunpack.c.l.b16 %v75
  %v160 = vunpack.c.l.b16 %v76
  %v161 = vunpack.c.l.b16 %v77
  %v162 = vunpack.c.l.b16 %v78
  %v163 = vunpack.c.l.b16 %v79
  %v164 = vunpack.c.l.b16 %v80
  %v165 = vunpack.c.l.b16 %v81
  %v166 = vunpack.c.l.b16 %v82
  %v167 = vunpack.c.l.b16 %v83
  %v168 = vunpack.c.l.b16 %v84
  %v169 = vunpack.c.l.b16 %v85
  %v170 = vunpack.c.l.b16 %v86
  %v171 = vunpack.c.l.b16 %v87
  %v172 = vunpack.c.l.b16 %v88
  %v173 = vunpack.c.l.b16 %v89
  %v174 = vunpack.c.l.b16 %v90
  %v175 = vunpack.c.l.b16 %v91
  %v176 = vunpack.c.l.b16 %v92
  %v177 = vunpack.c.l.b16 %v93
  %v178 = vunpack.c.l.b16 %v94
  %v179 = vunpack.c.l.b16 %v95
  %v180 = vunpack.c.l.b16 %v96
  %v181 = vunpack.c.l.b16 %v97
  %v182 = vunpack.c.l.b16 %v98
  %v183 = vunpack.c.l.b16 %v99
  %v184 = vunpack.c.l.b16 %v100
  %v185 = vunpack.c.l.b16 %v101
  %v186 = vunpack.c.l.b16 %v102
  %v187 = vunpack.c.l.b16 %v103
  %v188 = vunpack.c.l.b16 %v104
  %v189 = vpack.c.b16 %v158, %v157
  %v190 = vpack.c.b16 %v160, %v159
  %v191 = vpack.c.b16 %v162, %v161
  %v192 = vpack.c.b16 %v164, %v163
  %v193 = vpack.c.b16 %v166, %v165
  %v194 = vpack.c.b16 %v168, %v167
  %v195 = vpack.c.b16 %v170, %v169
  %v196 = vpack.c.b16 %v172, %v171
  %v197 = vpack.c.b16 %v174, %v173
  %v198 = vpack.c.b16 %v176, %v175
  %v199 = vpack.c.b16 %v178, %v177
  %v200 = vpack.c.b16 %v180, %v179
  %v201 = vpack.c.b16 %v182, %v181
  %v202 = vpack.c.b16 %v184, %v183
  %v203 = vpack.c.b16 %v186, %v185
  %v204 = vpack.c.b16 %v188, %v187
  %221 = vmatprep.subr.bf16.mxu0 0
  %222 = vmatpush1.bf16.msra.mxu0 %v189
  %223 = vmatprep.subr.bf16.mxu0 0
  %224 = vmatpush1.bf16.msra.mxu0 %v190
  %225 = vmatprep.subr.bf16.mxu0 0
  %226 = vmatpush1.bf16.msra.mxu0 %v191
  %227 = vmatprep.subr.bf16.mxu0 0
  %228 = vmatpush1.bf16.msra.mxu0 %v192
  %229 = vmatprep.subr.bf16.mxu0 0
  %230 = vmatpush1.bf16.msra.mxu0 %v193
  %231 = vmatprep.subr.bf16.mxu0 0
  %232 = vmatpush1.bf16.msra.mxu0 %v194
  %233 = vmatprep.subr.bf16.mxu0 0
  %234 = vmatpush1.bf16.msra.mxu0 %v195
  %235 = vmatprep.subr.bf16.mxu0 0
  %236 = vmatpush1.bf16.msra.mxu0 %v196
  %237 = vmatprep.subr.bf16.mxu0 0
  %238 = vmatpush1.bf16.msra.mxu0 %v197
  %239 = vmatprep.subr.bf16.mxu0 0
  %240 = vmatpush1.bf16.msra.mxu0 %v198
  %241 = vmatprep.subr.bf16.mxu0 0
  %242 = vmatpush1.bf16.msra.mxu0 %v199
  %243 = vmatprep.subr.bf16.mxu0 0
  %244 = vmatpush1.bf16.msra.mxu0 %v200
  %245 = vmatprep.subr.bf16.mxu0 0
  %246 = vmatpush1.bf16.msra.mxu0 %v201
  %247 = vmatprep.subr.bf16.mxu0 0
  %248 = vmatpush1.bf16.msra.mxu0 %v202
  %249 = vmatprep.subr.bf16.mxu0 0
  %250 = vmatpush1.bf16.msra.mxu0 %v203
  %251 = vmatprep.subr.bf16.mxu0 0
  %252 = vmatpush1.bf16.msra.mxu0 %v204
  %253 = vmatprep.mubr.bf16.mxu0 %v118
  %254 = vmatmul.mubr.bf16.gmra.mrb[0].mxu0 %v117
  %v255 = vpop.f32.mrb[0].mxu0
  %v256 = vadd.f32 0.0, %v255
  %v257 = vpop.f32.mrb[0].mxu0
  %v258 = vpop.f32.mrb[0].mxu0
  %v259 = vadd.f32 0.0, %v258
  %v260 = vpop.f32.mrb[0].mxu0
  %261 = vmatprep.mubr.bf16.mxu0 %v120
  %262 = vmatmul.mubr.bf16.gmra.mrb[0].mxu0 %v119
  %v263 = vpop.f32.mrb[0].mxu0
  %v264 = vadd.f32 0.0, %v263
  %v265 = vpop.f32.mrb[0].mxu0
  %v266 = vpop.f32.mrb[0].mxu0
  %v267 = vadd.f32 0.0, %v266
  %v268 = vpop.f32.mrb[0].mxu0
  %269 = vdwg.mxu0
  %v270 = vld [vmem:[%s4] sm:$0x3]
  %v271 = vld [vmem:[%s5] sm:$0x3]
  %v272 = vld [vmem:[%s6] sm:$0x1]
  %v273 = vpack.c.bf16 %v259, %v256
  %v274 = vpack.c.bf16 %v267, %v264
  %vm275 = vcmask 31744
  %v277 = vsel %vm275, %v273, 0
  %v280 = vsel %vm275, %v274, 0
  %vm282 = vcmask 1041408
  %v284 = vsel %vm282, %v270, 0
  %286 = vmatprep.subr.bf16.mxu0 0
  %287 = vmatpush1.bf16.msra.mxu0 %v284
  %288 = vmatprep.subr.bf16.mxu0 0
  %289 = vmatpush1.bf16.msra.mxu0 0
  %290 = vmatprep.subr.bf16.mxu0 0
  %291 = vmatpush1.bf16.msra.mxu0 0
  %292 = vmatprep.subr.bf16.mxu0 0
  %293 = vmatpush1.bf16.msra.mxu0 0
  %294 = vmatprep.subr.bf16.mxu0 0
  %295 = vmatpush1.bf16.msra.mxu0 0
  %296 = vmatprep.subr.bf16.mxu0 0
  %297 = vmatpush1.bf16.msra.mxu0 0
  %298 = vmatprep.subr.bf16.mxu0 0
  %299 = vmatpush1.bf16.msra.mxu0 0
  %300 = vmatprep.subr.bf16.mxu0 0
  %301 = vmatpush1.bf16.msra.mxu0 0
  %302 = vmatprep.subr.bf16.mxu0 0
  %303 = vmatpush1.bf16.msra.mxu0 0
  %304 = vmatprep.subr.bf16.mxu0 0
  %305 = vmatpush1.bf16.msra.mxu0 0
  %306 = vmatprep.subr.bf16.mxu0 0
  %307 = vmatpush1.bf16.msra.mxu0 0
  %308 = vmatprep.subr.bf16.mxu0 0
  %309 = vmatpush1.bf16.msra.mxu0 0
  %310 = vmatprep.subr.bf16.mxu0 0
  %311 = vmatpush1.bf16.msra.mxu0 0
  %312 = vmatprep.subr.bf16.mxu0 0
  %313 = vmatpush1.bf16.msra.mxu0 0
  %314 = vmatprep.subr.bf16.mxu0 0
  %315 = vmatpush1.bf16.msra.mxu0 0
  %316 = vmatprep.subr.bf16.mxu0 0
  %317 = vmatpush1.bf16.msra.mxu0 0
  %318 = vmatprep.mubr.bf16.mxu0 0
  %319 = vmatmul.mubr.bf16.gmra.mrb[0].mxu0 %v277
  %v320 = vpop.f32.mrb[0].mxu0
  %v321 = vadd.f32 0.0, %v320
  %v322 = vpop.f32.mrb[0].mxu0
  %v323 = vpop.f32.mrb[0].mxu0
  %v324 = vadd.f32 0.0, %v323
  %v325 = vpop.f32.mrb[0].mxu0
  %326 = vmatprep.mubr.bf16.mxu0 0
  %327 = vmatmul.mubr.bf16.gmra.mrb[0].mxu0 %v280
  %v328 = vpop.f32.mrb[0].mxu0
  %v329 = vadd.f32 0.0, %v328
  %v330 = vpop.f32.mrb[0].mxu0
  %v331 = vpop.f32.mrb[0].mxu0
  %v332 = vadd.f32 0.0, %v331
  %v333 = vpop.f32.mrb[0].mxu0
  %334 = vdwg.mxu0
  %v336 = vsel %vm282, %v271, 0
  %338 = vmatprep.subr.bf16.mxu0 0
  %339 = vmatpush1.bf16.msra.mxu0 %v336
  %340 = vmatprep.subr.bf16.mxu0 0
  %341 = vmatpush1.bf16.msra.mxu0 0
  %342 = vmatprep.subr.bf16.mxu0 0
  %343 = vmatpush1.bf16.msra.mxu0 0
  %344 = vmatprep.subr.bf16.mxu0 0
  %345 = vmatpush1.bf16.msra.mxu0 0
  %346 = vmatprep.subr.bf16.mxu0 0
  %347 = vmatpush1.bf16.msra.mxu0 0
  %348 = vmatprep.subr.bf16.mxu0 0
  %349 = vmatpush1.bf16.msra.mxu0 0
  %350 = vmatprep.subr.bf16.mxu0 0
  %351 = vmatpush1.bf16.msra.mxu0 0
  %352 = vmatprep.subr.bf16.mxu0 0
  %353 = vmatpush1.bf16.msra.mxu0 0
  %354 = vmatprep.subr.bf16.mxu0 0
  %355 = vmatpush1.bf16.msra.mxu0 0
  %356 = vmatprep.subr.bf16.mxu0 0
  %357 = vmatpush1.bf16.msra.mxu0 0
  %358 = vmatprep.subr.bf16.mxu0 0
  %359 = vmatpush1.bf16.msra.mxu0 0
  %360 = vmatprep.subr.bf16.mxu0 0
  %361 = vmatpush1.bf16.msra.mxu0 0
  %362 = vmatprep.subr.bf16.mxu0 0
  %363 = vmatpush1.bf16.msra.mxu0 0
  %364 = vmatprep.subr.bf16.mxu0 0
  %365 = vmatpush1.bf16.msra.mxu0 0
  %366 = vmatprep.subr.bf16.mxu0 0
  %367 = vmatpush1.bf16.msra.mxu0 0
  %368 = vmatprep.subr.bf16.mxu0 0
  %369 = vmatpush1.bf16.msra.mxu0 0
  %370 = vmatprep.mubr.bf16.mxu0 0
  %371 = vmatmul.mubr.bf16.gmra.mrb[0].mxu0 %v277
  %v372 = vpop.f32.mrb[0].mxu0
  %v373 = vadd.f32 0.0, %v372
  %v374 = vpop.f32.mrb[0].mxu0
  %v375 = vpop.f32.mrb[0].mxu0
  %v376 = vadd.f32 0.0, %v375
  %v377 = vpop.f32.mrb[0].mxu0
  %378 = vmatprep.mubr.bf16.mxu0 0
  %379 = vmatmul.mubr.bf16.gmra.mrb[0].mxu0 %v280
  %v380 = vpop.f32.mrb[0].mxu0
  %v381 = vadd.f32 0.0, %v380
  %v382 = vpop.f32.mrb[0].mxu0
  %v383 = vpop.f32.mrb[0].mxu0
  %v384 = vadd.f32 0.0, %v383
  %v385 = vpop.f32.mrb[0].mxu0
  %386 = vdwg.mxu0
  %v387 = vpack.c.bf16 %v324, %v321
  %v388 = vpack.c.bf16 %v332, %v329
  %v389 = vpack.c.bf16 %v376, %v373
  %v390 = vpack.c.bf16 %v384, %v381
  %v399 = vunpack.c.l.b16 %v45
  %v400 = vunpack.c.l.b16 %v46
  %v401 = vunpack.c.l.b16 %v47
  %v402 = vunpack.c.l.b16 %v48
  %v403 = vunpack.c.l.b16 %v49
  %v404 = vunpack.c.l.b16 %v50
  %v405 = vunpack.c.l.b16 %v51
  %v406 = vunpack.c.l.b16 %v52
  %v407 = vpack.c.b16 %v400, %v399
  %v408 = vpack.c.b16 %v402, %v401
  %v409 = vpack.c.b16 %v404, %v403
  %v410 = vpack.c.b16 %v406, %v405
  %vm411 = vcmask 261120
  %v413 = vsel %vm411, %v407, 0
  %v416 = vsel %vm411, %v408, 0
  %v419 = vsel %vm411, %v409, 0
  %v422 = vsel %vm411, %v410, 0
  %424 = vmatprep.subr.bf16.mxu0 0
  %425 = vmatpush1.bf16.msra.mxu0 %v389
  %426 = vmatprep.subr.bf16.mxu0 0
  %427 = vmatpush1.bf16.msra.mxu0 %v390
  %428 = vmatprep.subr.bf16.mxu0 0
  %429 = vmatpush1.bf16.msra.mxu0 0
  %430 = vmatprep.subr.bf16.mxu0 0
  %431 = vmatpush1.bf16.msra.mxu0 0
  %432 = vmatprep.subr.bf16.mxu0 0
  %433 = vmatpush1.bf16.msra.mxu0 0
  %434 = vmatprep.subr.bf16.mxu0 0
  %435 = vmatpush1.bf16.msra.mxu0 0
  %436 = vmatprep.subr.bf16.mxu0 0
  %437 = vmatpush1.bf16.msra.mxu0 0
  %438 = vmatprep.subr.bf16.mxu0 0
  %439 = vmatpush1.bf16.msra.mxu0 0
  %440 = vmatprep.subr.bf16.mxu0 0
  %441 = vmatpush1.bf16.msra.mxu0 0
  %442 = vmatprep.subr.bf16.mxu0 0
  %443 = vmatpush1.bf16.msra.mxu0 0
  %444 = vmatprep.subr.bf16.mxu0 0
  %445 = vmatpush1.bf16.msra.mxu0 0
  %446 = vmatprep.subr.bf16.mxu0 0
  %447 = vmatpush1.bf16.msra.mxu0 0
  %448 = vmatprep.subr.bf16.mxu0 0
  %449 = vmatpush1.bf16.msra.mxu0 0
  %450 = vmatprep.subr.bf16.mxu0 0
  %451 = vmatpush1.bf16.msra.mxu0 0
  %452 = vmatprep.subr.bf16.mxu0 0
  %453 = vmatpush1.bf16.msra.mxu0 0
  %454 = vmatprep.subr.bf16.mxu0 0
  %455 = vmatpush1.bf16.msra.mxu0 0
  %456 = vmatprep.mubr.bf16.mxu0 0
  %457 = vmatmul.mubr.bf16.gmra.mrb[0].mxu0 %v413
  %v458 = vpop.f32.mrb[0].mxu0
  %v459 = vadd.f32 0.0, %v458
  %v460 = vpop.f32.mrb[0].mxu0
  %v461 = vpop.f32.mrb[0].mxu0
  %v462 = vadd.f32 0.0, %v461
  %v463 = vpop.f32.mrb[0].mxu0
  %464 = vmatprep.mubr.bf16.mxu0 0
  %465 = vmatmul.mubr.bf16.gmra.mrb[0].mxu0 %v416
  %v466 = vpop.f32.mrb[0].mxu0
  %v467 = vadd.f32 0.0, %v466
  %v468 = vpop.f32.mrb[0].mxu0
  %v469 = vpop.f32.mrb[0].mxu0
  %v470 = vadd.f32 0.0, %v469
  %v471 = vpop.f32.mrb[0].mxu0
  %472 = vmatprep.mubr.bf16.mxu0 0
  %473 = vmatmul.mubr.bf16.gmra.mrb[0].mxu0 %v419
  %v474 = vpop.f32.mrb[0].mxu0
  %v475 = vadd.f32 0.0, %v474
  %v476 = vpop.f32.mrb[0].mxu0
  %v477 = vpop.f32.mrb[0].mxu0
  %v478 = vadd.f32 0.0, %v477
  %v479 = vpop.f32.mrb[0].mxu0
  %480 = vmatprep.mubr.bf16.mxu0 0
  %481 = vmatmul.mubr.bf16.gmra.mrb[0].mxu0 %v422
  %v482 = vpop.f32.mrb[0].mxu0
  %v483 = vadd.f32 0.0, %v482
  %v484 = vpop.f32.mrb[0].mxu0
  %v485 = vpop.f32.mrb[0].mxu0
  %v486 = vadd.f32 0.0, %v485
  %v487 = vpop.f32.mrb[0].mxu0
  %488 = vdwg.mxu0
  %v497 = vunpack.c.l.b16 %v53
  %v498 = vunpack.c.l.b16 %v54
  %v499 = vunpack.c.l.b16 %v55
  %v500 = vunpack.c.l.b16 %v56
  %v501 = vunpack.c.l.b16 %v57
  %v502 = vunpack.c.l.b16 %v58
  %v503 = vunpack.c.l.b16 %v59
  %v504 = vunpack.c.l.b16 %v60
  %v505 = vpack.c.b16 %v498, %v497
  %v506 = vpack.c.b16 %v500, %v499
  %v507 = vpack.c.b16 %v502, %v501
  %v508 = vpack.c.b16 %v504, %v503
  %v510 = vsel %vm411, %v505, 0
  %v513 = vsel %vm411, %v506, 0
  %v516 = vsel %vm411, %v507, 0
  %v519 = vsel %vm411, %v508, 0
  %521 = vmatprep.subr.bf16.mxu0 0
  %522 = vmatpush1.bf16.msra.mxu0 %v387
  %523 = vmatprep.subr.bf16.mxu0 0
  %524 = vmatpush1.bf16.msra.mxu0 %v388
  %525 = vmatprep.subr.bf16.mxu0 0
  %526 = vmatpush1.bf16.msra.mxu0 0
  %527 = vmatprep.subr.bf16.mxu0 0
  %528 = vmatpush1.bf16.msra.mxu0 0
  %529 = vmatprep.subr.bf16.mxu0 0
  %530 = vmatpush1.bf16.msra.mxu0 0
  %531 = vmatprep.subr.bf16.mxu0 0
  %532 = vmatpush1.bf16.msra.mxu0 0
  %533 = vmatprep.subr.bf16.mxu0 0
  %534 = vmatpush1.bf16.msra.mxu0 0
  %535 = vmatprep.subr.bf16.mxu0 0
  %536 = vmatpush1.bf16.msra.mxu0 0
  %537 = vmatprep.subr.bf16.mxu0 0
  %538 = vmatpush1.bf16.msra.mxu0 0
  %539 = vmatprep.subr.bf16.mxu0 0
  %540 = vmatpush1.bf16.msra.mxu0 0
  %541 = vmatprep.subr.bf16.mxu0 0
  %542 = vmatpush1.bf16.msra.mxu0 0
  %543 = vmatprep.subr.bf16.mxu0 0
  %544 = vmatpush1.bf16.msra.mxu0 0
  %545 = vmatprep.subr.bf16.mxu0 0
  %546 = vmatpush1.bf16.msra.mxu0 0
  %547 = vmatprep.subr.bf16.mxu0 0
  %548 = vmatpush1.bf16.msra.mxu0 0
  %549 = vmatprep.subr.bf16.mxu0 0
  %550 = vmatpush1.bf16.msra.mxu0 0
  %551 = vmatprep.subr.bf16.mxu0 0
  %552 = vmatpush1.bf16.msra.mxu0 0
  %553 = vmatprep.mubr.bf16.mxu0 0
  %554 = vmatmul.mubr.bf16.gmra.mrb[0].mxu0 %v510
  %v555 = vpop.f32.mrb[0].mxu0
  %v556 = vadd.f32 %v459, %v555
  %v557 = vpop.f32.mrb[0].mxu0
  %v558 = vpop.f32.mrb[0].mxu0
  %v559 = vadd.f32 %v462, %v558
  %v560 = vpop.f32.mrb[0].mxu0
  %561 = vmatprep.mubr.bf16.mxu0 0
  %562 = vmatmul.mubr.bf16.gmra.mrb[0].mxu0 %v513
  %v563 = vpop.f32.mrb[0].mxu0
  %v564 = vadd.f32 %v467, %v563
  %v565 = vpop.f32.mrb[0].mxu0
  %v566 = vpop.f32.mrb[0].mxu0
  %v567 = vadd.f32 %v470, %v566
  %v568 = vpop.f32.mrb[0].mxu0
  %569 = vmatprep.mubr.bf16.mxu0 0
  %570 = vmatmul.mubr.bf16.gmra.mrb[0].mxu0 %v516
  %v571 = vpop.f32.mrb[0].mxu0
  %v572 = vadd.f32 %v475, %v571
  %v573 = vpop.f32.mrb[0].mxu0
  %v574 = vpop.f32.mrb[0].mxu0
  %v575 = vadd.f32 %v478, %v574
  %v576 = vpop.f32.mrb[0].mxu0
  %577 = vmatprep.mubr.bf16.mxu0 0
  %578 = vmatmul.mubr.bf16.gmra.mrb[0].mxu0 %v519
  %v579 = vpop.f32.mrb[0].mxu0
  %v580 = vadd.f32 %v483, %v579
  %v581 = vpop.f32.mrb[0].mxu0
  %v582 = vpop.f32.mrb[0].mxu0
  %v583 = vadd.f32 %v486, %v582
  %v584 = vpop.f32.mrb[0].mxu0
  %585 = vdwg.mxu0
  %v587 = vlaneseq
  %v588 = vshrl.u32 %v587, 7
  %v589 = vsub.s32 0, %v588
  %v590 = vrot.slane %v272, %v589
  %v592 = vadd.f32 %v556, %v590
  %v593 = vadd.f32 %v559, %v590
  %v594 = vadd.f32 %v564, %v590
  %v595 = vadd.f32 %v567, %v590
  %v596 = vadd.f32 %v572, %v590
  %v597 = vadd.f32 %v575, %v590
  %v598 = vadd.f32 %v580, %v590
  %v599 = vadd.f32 %v583, %v590
  %v600 = vmax.f32 %v592, 0.0
  %v601 = vmax.f32 %v593, 0.0
  %v602 = vmax.f32 %v594, 0.0
  %v603 = vmax.f32 %v595, 0.0
  %v604 = vmax.f32 %v596, 0.0
  %v605 = vmax.f32 %v597, 0.0
  %v606 = vmax.f32 %v598, 0.0
  %v607 = vmax.f32 %v599, 0.0
  %v608 = vlaneseq
  %v609 = vshrl.u32 %v608, 7
  %v610 = vsub.s32 0, %v609
  %v611 = vrot.slane %v61, %v610
  %613 = vbcast.lane.b32.xlu0 %v611, 256
  %v614 = vpop.permute.xlu0 %613
  %s616 = sor.u32 256, 8
  %617 = vbcast.lane.b32.xlu0 %v611, %s616
  %v618 = vpop.permute.xlu0 %617
  %s620 = sor.u32 256, 16
  %621 = vbcast.lane.b32.xlu0 %v611, %s620
  %v622 = vpop.permute.xlu0 %621
  %s624 = sor.u32 256, 24
  %625 = vbcast.lane.b32.xlu0 %v611, %s624
  %v626 = vpop.permute.xlu0 %625
  %v627 = vlaneseq
  %v628 = vshrl.u32 %v627, 7
  %v629 = vsub.s32 1, %v628
  %v630 = vrot.slane %v61, %v629
  %632 = vbcast.lane.b32.xlu0 %v630, 256
  %v633 = vpop.permute.xlu0 %632
  %s635 = sor.u32 256, 8
  %636 = vbcast.lane.b32.xlu0 %v630, %s635
  %v637 = vpop.permute.xlu0 %636
  %s639 = sor.u32 256, 16
  %640 = vbcast.lane.b32.xlu0 %v630, %s639
  %v641 = vpop.permute.xlu0 %640
  %s643 = sor.u32 256, 24
  %644 = vbcast.lane.b32.xlu0 %v630, %s643
  %v645 = vpop.permute.xlu0 %644
  %v646 = vlaneseq
  %v647 = vshrl.u32 %v646, 7
  %v648 = vsub.s32 2, %v647
  %v649 = vrot.slane %v61, %v648
  %651 = vbcast.lane.b32.xlu0 %v649, 256
  %v652 = vpop.permute.xlu0 %651
  %s654 = sor.u32 256, 8
  %655 = vbcast.lane.b32.xlu0 %v649, %s654
  %v656 = vpop.permute.xlu0 %655
  %s658 = sor.u32 256, 16
  %659 = vbcast.lane.b32.xlu0 %v649, %s658
  %v660 = vpop.permute.xlu0 %659
  %s662 = sor.u32 256, 24
  %663 = vbcast.lane.b32.xlu0 %v649, %s662
  %v664 = vpop.permute.xlu0 %663
  %v665 = vlaneseq
  %v666 = vshrl.u32 %v665, 7
  %v667 = vsub.s32 3, %v666
  %v668 = vrot.slane %v61, %v667
  %670 = vbcast.lane.b32.xlu0 %v668, 256
  %v671 = vpop.permute.xlu0 %670
  %s673 = sor.u32 256, 8
  %674 = vbcast.lane.b32.xlu0 %v668, %s673
  %v675 = vpop.permute.xlu0 %674
  %s677 = sor.u32 256, 16
  %678 = vbcast.lane.b32.xlu0 %v668, %s677
  %v679 = vpop.permute.xlu0 %678
  %s681 = sor.u32 256, 24
  %682 = vbcast.lane.b32.xlu0 %v668, %s681
  %v683 = vpop.permute.xlu0 %682
  %v684 = vlaneseq
  %v685 = vshrl.u32 %v684, 7
  %v686 = vsub.s32 4, %v685
  %v687 = vrot.slane %v61, %v686
  %689 = vbcast.lane.b32.xlu0 %v687, 256
  %v690 = vpop.permute.xlu0 %689
  %s692 = sor.u32 256, 8
  %693 = vbcast.lane.b32.xlu0 %v687, %s692
  %v694 = vpop.permute.xlu0 %693
  %s696 = sor.u32 256, 16
  %697 = vbcast.lane.b32.xlu0 %v687, %s696
  %v698 = vpop.permute.xlu0 %697
  %s700 = sor.u32 256, 24
  %701 = vbcast.lane.b32.xlu0 %v687, %s700
  %v702 = vpop.permute.xlu0 %701
  %v703 = vlaneseq
  %v704 = vshrl.u32 %v703, 7
  %v705 = vsub.s32 5, %v704
  %v706 = vrot.slane %v61, %v705
  %708 = vbcast.lane.b32.xlu0 %v706, 256
  %v709 = vpop.permute.xlu0 %708
  %s711 = sor.u32 256, 8
  %712 = vbcast.lane.b32.xlu0 %v706, %s711
  %v713 = vpop.permute.xlu0 %712
  %s715 = sor.u32 256, 16
  %716 = vbcast.lane.b32.xlu0 %v706, %s715
  %v717 = vpop.permute.xlu0 %716
  %s719 = sor.u32 256, 24
  %720 = vbcast.lane.b32.xlu0 %v706, %s719
  %v721 = vpop.permute.xlu0 %720
  %v722 = vlaneseq
  %v723 = vshrl.u32 %v722, 7
  %v724 = vsub.s32 6, %v723
  %v725 = vrot.slane %v61, %v724
  %727 = vbcast.lane.b32.xlu0 %v725, 256
  %v728 = vpop.permute.xlu0 %727
  %s730 = sor.u32 256, 8
  %731 = vbcast.lane.b32.xlu0 %v725, %s730
  %v732 = vpop.permute.xlu0 %731
  %s734 = sor.u32 256, 16
  %735 = vbcast.lane.b32.xlu0 %v725, %s734
  %v736 = vpop.permute.xlu0 %735
  %s738 = sor.u32 256, 24
  %739 = vbcast.lane.b32.xlu0 %v725, %s738
  %v740 = vpop.permute.xlu0 %739
  %v741 = vlaneseq
  %v742 = vshrl.u32 %v741, 7
  %v743 = vsub.s32 7, %v742
  %v744 = vrot.slane %v61, %v743
  %746 = vbcast.lane.b32.xlu0 %v744, 256
  %v747 = vpop.permute.xlu0 %746
  %s749 = sor.u32 256, 8
  %750 = vbcast.lane.b32.xlu0 %v744, %s749
  %v751 = vpop.permute.xlu0 %750
  %s753 = sor.u32 256, 16
  %754 = vbcast.lane.b32.xlu0 %v744, %s753
  %v755 = vpop.permute.xlu0 %754
  %s757 = sor.u32 256, 24
  %758 = vbcast.lane.b32.xlu0 %v744, %s757
  %v759 = vpop.permute.xlu0 %758
  %v760 = vlaneseq
  %v761 = vshrl.u32 %v760, 7
  %v762 = vsub.s32 0, %v761
  %v763 = vrot.slane %v62, %v762
  %765 = vbcast.lane.b32.xlu0 %v763, 256
  %v766 = vpop.permute.xlu0 %765
  %s768 = sor.u32 256, 8
  %769 = vbcast.lane.b32.xlu0 %v763, %s768
  %v770 = vpop.permute.xlu0 %769
  %s772 = sor.u32 256, 16
  %773 = vbcast.lane.b32.xlu0 %v763, %s772
  %v774 = vpop.permute.xlu0 %773
  %s776 = sor.u32 256, 24
  %777 = vbcast.lane.b32.xlu0 %v763, %s776
  %v778 = vpop.permute.xlu0 %777
  %v779 = vlaneseq
  %v780 = vshrl.u32 %v779, 7
  %v781 = vsub.s32 1, %v780
  %v782 = vrot.slane %v62, %v781
  %784 = vbcast.lane.b32.xlu0 %v782, 256
  %v785 = vpop.permute.xlu0 %784
  %s787 = sor.u32 256, 8
  %788 = vbcast.lane.b32.xlu0 %v782, %s787
  %v789 = vpop.permute.xlu0 %788
  %s791 = sor.u32 256, 16
  %792 = vbcast.lane.b32.xlu0 %v782, %s791
  %v793 = vpop.permute.xlu0 %792
  %s795 = sor.u32 256, 24
  %796 = vbcast.lane.b32.xlu0 %v782, %s795
  %v797 = vpop.permute.xlu0 %796
  %v798 = vlaneseq
  %v799 = vshrl.u32 %v798, 7
  %v800 = vsub.s32 2, %v799
  %v801 = vrot.slane %v62, %v800
  %803 = vbcast.lane.b32.xlu0 %v801, 256
  %v804 = vpop.permute.xlu0 %803
  %s806 = sor.u32 256, 8
  %807 = vbcast.lane.b32.xlu0 %v801, %s806
  %v808 = vpop.permute.xlu0 %807
  %s810 = sor.u32 256, 16
  %811 = vbcast.lane.b32.xlu0 %v801, %s810
  %v812 = vpop.permute.xlu0 %811
  %s814 = sor.u32 256, 24
  %815 = vbcast.lane.b32.xlu0 %v801, %s814
  %v816 = vpop.permute.xlu0 %815
  %v817 = vlaneseq
  %v818 = vshrl.u32 %v817, 7
  %v819 = vsub.s32 3, %v818
  %v820 = vrot.slane %v62, %v819
  %822 = vbcast.lane.b32.xlu0 %v820, 256
  %v823 = vpop.permute.xlu0 %822
  %s825 = sor.u32 256, 8
  %826 = vbcast.lane.b32.xlu0 %v820, %s825
  %v827 = vpop.permute.xlu0 %826
  %s829 = sor.u32 256, 16
  %830 = vbcast.lane.b32.xlu0 %v820, %s829
  %v831 = vpop.permute.xlu0 %830
  %s833 = sor.u32 256, 24
  %834 = vbcast.lane.b32.xlu0 %v820, %s833
  %v835 = vpop.permute.xlu0 %834
  %v836 = vlaneseq
  %v837 = vshrl.u32 %v836, 7
  %v838 = vsub.s32 4, %v837
  %v839 = vrot.slane %v62, %v838
  %841 = vbcast.lane.b32.xlu0 %v839, 256
  %v842 = vpop.permute.xlu0 %841
  %s844 = sor.u32 256, 8
  %845 = vbcast.lane.b32.xlu0 %v839, %s844
  %v846 = vpop.permute.xlu0 %845
  %s848 = sor.u32 256, 16
  %849 = vbcast.lane.b32.xlu0 %v839, %s848
  %v850 = vpop.permute.xlu0 %849
  %s852 = sor.u32 256, 24
  %853 = vbcast.lane.b32.xlu0 %v839, %s852
  %v854 = vpop.permute.xlu0 %853
  %v855 = vlaneseq
  %v856 = vshrl.u32 %v855, 7
  %v857 = vsub.s32 5, %v856
  %v858 = vrot.slane %v62, %v857
  %860 = vbcast.lane.b32.xlu0 %v858, 256
  %v861 = vpop.permute.xlu0 %860
  %s863 = sor.u32 256, 8
  %864 = vbcast.lane.b32.xlu0 %v858, %s863
  %v865 = vpop.permute.xlu0 %864
  %s867 = sor.u32 256, 16
  %868 = vbcast.lane.b32.xlu0 %v858, %s867
  %v869 = vpop.permute.xlu0 %868
  %s871 = sor.u32 256, 24
  %872 = vbcast.lane.b32.xlu0 %v858, %s871
  %v873 = vpop.permute.xlu0 %872
  %v874 = vlaneseq
  %v875 = vshrl.u32 %v874, 7
  %v876 = vsub.s32 6, %v875
  %v877 = vrot.slane %v62, %v876
  %879 = vbcast.lane.b32.xlu0 %v877, 256
  %v880 = vpop.permute.xlu0 %879
  %s882 = sor.u32 256, 8
  %883 = vbcast.lane.b32.xlu0 %v877, %s882
  %v884 = vpop.permute.xlu0 %883
  %s886 = sor.u32 256, 16
  %887 = vbcast.lane.b32.xlu0 %v877, %s886
  %v888 = vpop.permute.xlu0 %887
  %s890 = sor.u32 256, 24
  %891 = vbcast.lane.b32.xlu0 %v877, %s890
  %v892 = vpop.permute.xlu0 %891
  %v893 = vlaneseq
  %v894 = vshrl.u32 %v893, 7
  %v895 = vsub.s32 7, %v894
  %v896 = vrot.slane %v62, %v895
  %898 = vbcast.lane.b32.xlu0 %v896, 256
  %v899 = vpop.permute.xlu0 %898
  %s901 = sor.u32 256, 8
  %902 = vbcast.lane.b32.xlu0 %v896, %s901
  %v903 = vpop.permute.xlu0 %902
  %s905 = sor.u32 256, 16
  %906 = vbcast.lane.b32.xlu0 %v896, %s905
  %v907 = vpop.permute.xlu0 %906
  %s909 = sor.u32 256, 24
  %910 = vbcast.lane.b32.xlu0 %v896, %s909
  %v911 = vpop.permute.xlu0 %910
  %v912 = vlaneseq
  %v913 = vshrl.u32 %v912, 7
  %v914 = vsub.s32 0, %v913
  %v915 = vrot.slane %v63, %v914
  %917 = vbcast.lane.b32.xlu0 %v915, 256
  %v918 = vpop.permute.xlu0 %917
  %s920 = sor.u32 256, 8
  %921 = vbcast.lane.b32.xlu0 %v915, %s920
  %v922 = vpop.permute.xlu0 %921
  %s924 = sor.u32 256, 16
  %925 = vbcast.lane.b32.xlu0 %v915, %s924
  %v926 = vpop.permute.xlu0 %925
  %s928 = sor.u32 256, 24
  %929 = vbcast.lane.b32.xlu0 %v915, %s928
  %v930 = vpop.permute.xlu0 %929
  %v931 = vlaneseq
  %v932 = vshrl.u32 %v931, 7
  %v933 = vsub.s32 1, %v932
  %v934 = vrot.slane %v63, %v933
  %936 = vbcast.lane.b32.xlu0 %v934, 256
  %v937 = vpop.permute.xlu0 %936
  %s939 = sor.u32 256, 8
  %940 = vbcast.lane.b32.xlu0 %v934, %s939
  %v941 = vpop.permute.xlu0 %940
  %s943 = sor.u32 256, 16
  %944 = vbcast.lane.b32.xlu0 %v934, %s943
  %v945 = vpop.permute.xlu0 %944
  %s947 = sor.u32 256, 24
  %948 = vbcast.lane.b32.xlu0 %v934, %s947
  %v949 = vpop.permute.xlu0 %948
  %v950 = vlaneseq
  %v951 = vshrl.u32 %v950, 7
  %v952 = vsub.s32 2, %v951
  %v953 = vrot.slane %v63, %v952
  %955 = vbcast.lane.b32.xlu0 %v953, 256
  %v956 = vpop.permute.xlu0 %955
  %s958 = sor.u32 256, 8
  %959 = vbcast.lane.b32.xlu0 %v953, %s958
  %v960 = vpop.permute.xlu0 %959
  %s962 = sor.u32 256, 16
  %963 = vbcast.lane.b32.xlu0 %v953, %s962
  %v964 = vpop.permute.xlu0 %963
  %s966 = sor.u32 256, 24
  %967 = vbcast.lane.b32.xlu0 %v953, %s966
  %v968 = vpop.permute.xlu0 %967
  %v969 = vlaneseq
  %v970 = vshrl.u32 %v969, 7
  %v971 = vsub.s32 3, %v970
  %v972 = vrot.slane %v63, %v971
  %974 = vbcast.lane.b32.xlu0 %v972, 256
  %v975 = vpop.permute.xlu0 %974
  %s977 = sor.u32 256, 8
  %978 = vbcast.lane.b32.xlu0 %v972, %s977
  %v979 = vpop.permute.xlu0 %978
  %s981 = sor.u32 256, 16
  %982 = vbcast.lane.b32.xlu0 %v972, %s981
  %v983 = vpop.permute.xlu0 %982
  %s985 = sor.u32 256, 24
  %986 = vbcast.lane.b32.xlu0 %v972, %s985
  %v987 = vpop.permute.xlu0 %986
  %v988 = vlaneseq
  %v989 = vshrl.u32 %v988, 7
  %v990 = vsub.s32 4, %v989
  %v991 = vrot.slane %v63, %v990
  %993 = vbcast.lane.b32.xlu0 %v991, 256
  %v994 = vpop.permute.xlu0 %993
  %s996 = sor.u32 256, 8
  %997 = vbcast.lane.b32.xlu0 %v991, %s996
  %v998 = vpop.permute.xlu0 %997
  %s1000 = sor.u32 256, 16
  %1001 = vbcast.lane.b32.xlu0 %v991, %s1000
  %v1002 = vpop.permute.xlu0 %1001
  %s1004 = sor.u32 256, 24
  %1005 = vbcast.lane.b32.xlu0 %v991, %s1004
  %v1006 = vpop.permute.xlu0 %1005
  %v1007 = vlaneseq
  %v1008 = vshrl.u32 %v1007, 7
  %v1009 = vsub.s32 5, %v1008
  %v1010 = vrot.slane %v63, %v1009
  %1012 = vbcast.lane.b32.xlu0 %v1010, 256
  %v1013 = vpop.permute.xlu0 %1012
  %s1015 = sor.u32 256, 8
  %1016 = vbcast.lane.b32.xlu0 %v1010, %s1015
  %v1017 = vpop.permute.xlu0 %1016
  %s1019 = sor.u32 256, 16
  %1020 = vbcast.lane.b32.xlu0 %v1010, %s1019
  %v1021 = vpop.permute.xlu0 %1020
  %s1023 = sor.u32 256, 24
  %1024 = vbcast.lane.b32.xlu0 %v1010, %s1023
  %v1025 = vpop.permute.xlu0 %1024
  %v1026 = vlaneseq
  %v1027 = vshrl.u32 %v1026, 7
  %v1028 = vsub.s32 6, %v1027
  %v1029 = vrot.slane %v63, %v1028
  %1031 = vbcast.lane.b32.xlu0 %v1029, 256
  %v1032 = vpop.permute.xlu0 %1031
  %s1034 = sor.u32 256, 8
  %1035 = vbcast.lane.b32.xlu0 %v1029, %s1034
  %v1036 = vpop.permute.xlu0 %1035
  %s1038 = sor.u32 256, 16
  %1039 = vbcast.lane.b32.xlu0 %v1029, %s1038
  %v1040 = vpop.permute.xlu0 %1039
  %s1042 = sor.u32 256, 24
  %1043 = vbcast.lane.b32.xlu0 %v1029, %s1042
  %v1044 = vpop.permute.xlu0 %1043
  %v1045 = vlaneseq
  %v1046 = vshrl.u32 %v1045, 7
  %v1047 = vsub.s32 7, %v1046
  %v1048 = vrot.slane %v63, %v1047
  %1050 = vbcast.lane.b32.xlu0 %v1048, 256
  %v1051 = vpop.permute.xlu0 %1050
  %s1053 = sor.u32 256, 8
  %1054 = vbcast.lane.b32.xlu0 %v1048, %s1053
  %v1055 = vpop.permute.xlu0 %1054
  %s1057 = sor.u32 256, 16
  %1058 = vbcast.lane.b32.xlu0 %v1048, %s1057
  %v1059 = vpop.permute.xlu0 %1058
  %s1061 = sor.u32 256, 24
  %1062 = vbcast.lane.b32.xlu0 %v1048, %s1061
  %v1063 = vpop.permute.xlu0 %1062
  %v1064 = vlaneseq
  %v1065 = vshrl.u32 %v1064, 7
  %v1066 = vsub.s32 0, %v1065
  %v1067 = vrot.slane %v64, %v1066
  %1069 = vbcast.lane.b32.xlu0 %v1067, 256
  %v1070 = vpop.permute.xlu0 %1069
  %s1072 = sor.u32 256, 8
  %1073 = vbcast.lane.b32.xlu0 %v1067, %s1072
  %v1074 = vpop.permute.xlu0 %1073
  %s1076 = sor.u32 256, 16
  %1077 = vbcast.lane.b32.xlu0 %v1067, %s1076
  %v1078 = vpop.permute.xlu0 %1077
  %s1080 = sor.u32 256, 24
  %1081 = vbcast.lane.b32.xlu0 %v1067, %s1080
  %v1082 = vpop.permute.xlu0 %1081
  %v1083 = vlaneseq
  %v1084 = vshrl.u32 %v1083, 7
  %v1085 = vsub.s32 1, %v1084
  %v1086 = vrot.slane %v64, %v1085
  %1088 = vbcast.lane.b32.xlu0 %v1086, 256
  %v1089 = vpop.permute.xlu0 %1088
  %s1091 = sor.u32 256, 8
  %1092 = vbcast.lane.b32.xlu0 %v1086, %s1091
  %v1093 = vpop.permute.xlu0 %1092
  %s1095 = sor.u32 256, 16
  %1096 = vbcast.lane.b32.xlu0 %v1086, %s1095
  %v1097 = vpop.permute.xlu0 %1096
  %s1099 = sor.u32 256, 24
  %1100 = vbcast.lane.b32.xlu0 %v1086, %s1099
  %v1101 = vpop.permute.xlu0 %1100
  %v1102 = vlaneseq
  %v1103 = vshrl.u32 %v1102, 7
  %v1104 = vsub.s32 2, %v1103
  %v1105 = vrot.slane %v64, %v1104
  %1107 = vbcast.lane.b32.xlu0 %v1105, 256
  %v1108 = vpop.permute.xlu0 %1107
  %s1110 = sor.u32 256, 8
  %1111 = vbcast.lane.b32.xlu0 %v1105, %s1110
  %v1112 = vpop.permute.xlu0 %1111
  %s1114 = sor.u32 256, 16
  %1115 = vbcast.lane.b32.xlu0 %v1105, %s1114
  %v1116 = vpop.permute.xlu0 %1115
  %s1118 = sor.u32 256, 24
  %1119 = vbcast.lane.b32.xlu0 %v1105, %s1118
  %v1120 = vpop.permute.xlu0 %1119
  %v1121 = vlaneseq
  %v1122 = vshrl.u32 %v1121, 7
  %v1123 = vsub.s32 3, %v1122
  %v1124 = vrot.slane %v64, %v1123
  %1126 = vbcast.lane.b32.xlu0 %v1124, 256
  %v1127 = vpop.permute.xlu0 %1126
  %s1129 = sor.u32 256, 8
  %1130 = vbcast.lane.b32.xlu0 %v1124, %s1129
  %v1131 = vpop.permute.xlu0 %1130
  %s1133 = sor.u32 256, 16
  %1134 = vbcast.lane.b32.xlu0 %v1124, %s1133
  %v1135 = vpop.permute.xlu0 %1134
  %s1137 = sor.u32 256, 24
  %1138 = vbcast.lane.b32.xlu0 %v1124, %s1137
  %v1139 = vpop.permute.xlu0 %1138
  %v1140 = vlaneseq
  %v1141 = vshrl.u32 %v1140, 7
  %v1142 = vsub.s32 4, %v1141
  %v1143 = vrot.slane %v64, %v1142
  %1145 = vbcast.lane.b32.xlu0 %v1143, 256
  %v1146 = vpop.permute.xlu0 %1145
  %s1148 = sor.u32 256, 8
  %1149 = vbcast.lane.b32.xlu0 %v1143, %s1148
  %v1150 = vpop.permute.xlu0 %1149
  %s1152 = sor.u32 256, 16
  %1153 = vbcast.lane.b32.xlu0 %v1143, %s1152
  %v1154 = vpop.permute.xlu0 %1153
  %s1156 = sor.u32 256, 24
  %1157 = vbcast.lane.b32.xlu0 %v1143, %s1156
  %v1158 = vpop.permute.xlu0 %1157
  %v1159 = vlaneseq
  %v1160 = vshrl.u32 %v1159, 7
  %v1161 = vsub.s32 5, %v1160
  %v1162 = vrot.slane %v64, %v1161
  %1164 = vbcast.lane.b32.xlu0 %v1162, 256
  %v1165 = vpop.permute.xlu0 %1164
  %s1167 = sor.u32 256, 8
  %1168 = vbcast.lane.b32.xlu0 %v1162, %s1167
  %v1169 = vpop.permute.xlu0 %1168
  %s1171 = sor.u32 256, 16
  %1172 = vbcast.lane.b32.xlu0 %v1162, %s1171
  %v1173 = vpop.permute.xlu0 %1172
  %s1175 = sor.u32 256, 24
  %1176 = vbcast.lane.b32.xlu0 %v1162, %s1175
  %v1177 = vpop.permute.xlu0 %1176
  %v1178 = vlaneseq
  %v1179 = vshrl.u32 %v1178, 7
  %v1180 = vsub.s32 6, %v1179
  %v1181 = vrot.slane %v64, %v1180
  %1183 = vbcast.lane.b32.xlu0 %v1181, 256
  %v1184 = vpop.permute.xlu0 %1183
  %s1186 = sor.u32 256, 8
  %1187 = vbcast.lane.b32.xlu0 %v1181, %s1186
  %v1188 = vpop.permute.xlu0 %1187
  %s1190 = sor.u32 256, 16
  %1191 = vbcast.lane.b32.xlu0 %v1181, %s1190
  %v1192 = vpop.permute.xlu0 %1191
  %s1194 = sor.u32 256, 24
  %1195 = vbcast.lane.b32.xlu0 %v1181, %s1194
  %v1196 = vpop.permute.xlu0 %1195
  %v1197 = vlaneseq
  %v1198 = vshrl.u32 %v1197, 7
  %v1199 = vsub.s32 7, %v1198
  %v1200 = vrot.slane %v64, %v1199
  %1202 = vbcast.lane.b32.xlu0 %v1200, 256
  %v1203 = vpop.permute.xlu0 %1202
  %s1205 = sor.u32 256, 8
  %1206 = vbcast.lane.b32.xlu0 %v1200, %s1205
  %v1207 = vpop.permute.xlu0 %1206
  %s1209 = sor.u32 256, 16
  %1210 = vbcast.lane.b32.xlu0 %v1200, %s1209
  %v1211 = vpop.permute.xlu0 %1210
  %s1213 = sor.u32 256, 24
  %1214 = vbcast.lane.b32.xlu0 %v1200, %s1213
  %v1215 = vpop.permute.xlu0 %1214
  %v1216 = vlaneseq
  %v1217 = vshrl.u32 %v1216, 7
  %v1218 = vsub.s32 0, %v1217
  %v1219 = vrot.slane %v65, %v1218
  %1221 = vbcast.lane.b32.xlu0 %v1219, 256
  %v1222 = vpop.permute.xlu0 %1221
  %s1224 = sor.u32 256, 8
  %1225 = vbcast.lane.b32.xlu0 %v1219, %s1224
  %v1226 = vpop.permute.xlu0 %1225
  %s1228 = sor.u32 256, 16
  %1229 = vbcast.lane.b32.xlu0 %v1219, %s1228
  %v1230 = vpop.permute.xlu0 %1229
  %s1232 = sor.u32 256, 24
  %1233 = vbcast.lane.b32.xlu0 %v1219, %s1232
  %v1234 = vpop.permute.xlu0 %1233
  %v1235 = vlaneseq
  %v1236 = vshrl.u32 %v1235, 7
  %v1237 = vsub.s32 1, %v1236
  %v1238 = vrot.slane %v65, %v1237
  %1240 = vbcast.lane.b32.xlu0 %v1238, 256
  %v1241 = vpop.permute.xlu0 %1240
  %s1243 = sor.u32 256, 8
  %1244 = vbcast.lane.b32.xlu0 %v1238, %s1243
  %v1245 = vpop.permute.xlu0 %1244
  %s1247 = sor.u32 256, 16
  %1248 = vbcast.lane.b32.xlu0 %v1238, %s1247
  %v1249 = vpop.permute.xlu0 %1248
  %s1251 = sor.u32 256, 24
  %1252 = vbcast.lane.b32.xlu0 %v1238, %s1251
  %v1253 = vpop.permute.xlu0 %1252
  %v1254 = vlaneseq
  %v1255 = vshrl.u32 %v1254, 7
  %v1256 = vsub.s32 2, %v1255
  %v1257 = vrot.slane %v65, %v1256
  %1259 = vbcast.lane.b32.xlu0 %v1257, 256
  %v1260 = vpop.permute.xlu0 %1259
  %s1262 = sor.u32 256, 8
  %1263 = vbcast.lane.b32.xlu0 %v1257, %s1262
  %v1264 = vpop.permute.xlu0 %1263
  %s1266 = sor.u32 256, 16
  %1267 = vbcast.lane.b32.xlu0 %v1257, %s1266
  %v1268 = vpop.permute.xlu0 %1267
  %s1270 = sor.u32 256, 24
  %1271 = vbcast.lane.b32.xlu0 %v1257, %s1270
  %v1272 = vpop.permute.xlu0 %1271
  %v1273 = vlaneseq
  %v1274 = vshrl.u32 %v1273, 7
  %v1275 = vsub.s32 3, %v1274
  %v1276 = vrot.slane %v65, %v1275
  %1278 = vbcast.lane.b32.xlu0 %v1276, 256
  %v1279 = vpop.permute.xlu0 %1278
  %s1281 = sor.u32 256, 8
  %1282 = vbcast.lane.b32.xlu0 %v1276, %s1281
  %v1283 = vpop.permute.xlu0 %1282
  %s1285 = sor.u32 256, 16
  %1286 = vbcast.lane.b32.xlu0 %v1276, %s1285
  %v1287 = vpop.permute.xlu0 %1286
  %s1289 = sor.u32 256, 24
  %1290 = vbcast.lane.b32.xlu0 %v1276, %s1289
  %v1291 = vpop.permute.xlu0 %1290
  %v1292 = vlaneseq
  %v1293 = vshrl.u32 %v1292, 7
  %v1294 = vsub.s32 4, %v1293
  %v1295 = vrot.slane %v65, %v1294
  %1297 = vbcast.lane.b32.xlu0 %v1295, 256
  %v1298 = vpop.permute.xlu0 %1297
  %s1300 = sor.u32 256, 8
  %1301 = vbcast.lane.b32.xlu0 %v1295, %s1300
  %v1302 = vpop.permute.xlu0 %1301
  %s1304 = sor.u32 256, 16
  %1305 = vbcast.lane.b32.xlu0 %v1295, %s1304
  %v1306 = vpop.permute.xlu0 %1305
  %s1308 = sor.u32 256, 24
  %1309 = vbcast.lane.b32.xlu0 %v1295, %s1308
  %v1310 = vpop.permute.xlu0 %1309
  %v1311 = vlaneseq
  %v1312 = vshrl.u32 %v1311, 7
  %v1313 = vsub.s32 5, %v1312
  %v1314 = vrot.slane %v65, %v1313
  %1316 = vbcast.lane.b32.xlu0 %v1314, 256
  %v1317 = vpop.permute.xlu0 %1316
  %s1319 = sor.u32 256, 8
  %1320 = vbcast.lane.b32.xlu0 %v1314, %s1319
  %v1321 = vpop.permute.xlu0 %1320
  %s1323 = sor.u32 256, 16
  %1324 = vbcast.lane.b32.xlu0 %v1314, %s1323
  %v1325 = vpop.permute.xlu0 %1324
  %s1327 = sor.u32 256, 24
  %1328 = vbcast.lane.b32.xlu0 %v1314, %s1327
  %v1329 = vpop.permute.xlu0 %1328
  %v1330 = vlaneseq
  %v1331 = vshrl.u32 %v1330, 7
  %v1332 = vsub.s32 6, %v1331
  %v1333 = vrot.slane %v65, %v1332
  %1335 = vbcast.lane.b32.xlu0 %v1333, 256
  %v1336 = vpop.permute.xlu0 %1335
  %s1338 = sor.u32 256, 8
  %1339 = vbcast.lane.b32.xlu0 %v1333, %s1338
  %v1340 = vpop.permute.xlu0 %1339
  %s1342 = sor.u32 256, 16
  %1343 = vbcast.lane.b32.xlu0 %v1333, %s1342
  %v1344 = vpop.permute.xlu0 %1343
  %s1346 = sor.u32 256, 24
  %1347 = vbcast.lane.b32.xlu0 %v1333, %s1346
  %v1348 = vpop.permute.xlu0 %1347
  %v1349 = vlaneseq
  %v1350 = vshrl.u32 %v1349, 7
  %v1351 = vsub.s32 7, %v1350
  %v1352 = vrot.slane %v65, %v1351
  %1354 = vbcast.lane.b32.xlu0 %v1352, 256
  %v1355 = vpop.permute.xlu0 %1354
  %s1357 = sor.u32 256, 8
  %1358 = vbcast.lane.b32.xlu0 %v1352, %s1357
  %v1359 = vpop.permute.xlu0 %1358
  %s1361 = sor.u32 256, 16
  %1362 = vbcast.lane.b32.xlu0 %v1352, %s1361
  %v1363 = vpop.permute.xlu0 %1362
  %s1365 = sor.u32 256, 24
  %1366 = vbcast.lane.b32.xlu0 %v1352, %s1365
  %v1367 = vpop.permute.xlu0 %1366
  %v1368 = vlaneseq
  %v1369 = vshrl.u32 %v1368, 7
  %v1370 = vsub.s32 0, %v1369
  %v1371 = vrot.slane %v66, %v1370
  %1373 = vbcast.lane.b32.xlu0 %v1371, 256
  %v1374 = vpop.permute.xlu0 %1373
  %s1376 = sor.u32 256, 8
  %1377 = vbcast.lane.b32.xlu0 %v1371, %s1376
  %v1378 = vpop.permute.xlu0 %1377
  %s1380 = sor.u32 256, 16
  %1381 = vbcast.lane.b32.xlu0 %v1371, %s1380
  %v1382 = vpop.permute.xlu0 %1381
  %s1384 = sor.u32 256, 24
  %1385 = vbcast.lane.b32.xlu0 %v1371, %s1384
  %v1386 = vpop.permute.xlu0 %1385
  %v1387 = vlaneseq
  %v1388 = vshrl.u32 %v1387, 7
  %v1389 = vsub.s32 1, %v1388
  %v1390 = vrot.slane %v66, %v1389
  %1392 = vbcast.lane.b32.xlu0 %v1390, 256
  %v1393 = vpop.permute.xlu0 %1392
  %s1395 = sor.u32 256, 8
  %1396 = vbcast.lane.b32.xlu0 %v1390, %s1395
  %v1397 = vpop.permute.xlu0 %1396
  %s1399 = sor.u32 256, 16
  %1400 = vbcast.lane.b32.xlu0 %v1390, %s1399
  %v1401 = vpop.permute.xlu0 %1400
  %s1403 = sor.u32 256, 24
  %1404 = vbcast.lane.b32.xlu0 %v1390, %s1403
  %v1405 = vpop.permute.xlu0 %1404
  %v1406 = vlaneseq
  %v1407 = vshrl.u32 %v1406, 7
  %v1408 = vsub.s32 2, %v1407
  %v1409 = vrot.slane %v66, %v1408
  %1411 = vbcast.lane.b32.xlu0 %v1409, 256
  %v1412 = vpop.permute.xlu0 %1411
  %s1414 = sor.u32 256, 8
  %1415 = vbcast.lane.b32.xlu0 %v1409, %s1414
  %v1416 = vpop.permute.xlu0 %1415
  %s1418 = sor.u32 256, 16
  %1419 = vbcast.lane.b32.xlu0 %v1409, %s1418
  %v1420 = vpop.permute.xlu0 %1419
  %s1422 = sor.u32 256, 24
  %1423 = vbcast.lane.b32.xlu0 %v1409, %s1422
  %v1424 = vpop.permute.xlu0 %1423
  %v1425 = vlaneseq
  %v1426 = vshrl.u32 %v1425, 7
  %v1427 = vsub.s32 3, %v1426
  %v1428 = vrot.slane %v66, %v1427
  %1430 = vbcast.lane.b32.xlu0 %v1428, 256
  %v1431 = vpop.permute.xlu0 %1430
  %s1433 = sor.u32 256, 8
  %1434 = vbcast.lane.b32.xlu0 %v1428, %s1433
  %v1435 = vpop.permute.xlu0 %1434
  %s1437 = sor.u32 256, 16
  %1438 = vbcast.lane.b32.xlu0 %v1428, %s1437
  %v1439 = vpop.permute.xlu0 %1438
  %s1441 = sor.u32 256, 24
  %1442 = vbcast.lane.b32.xlu0 %v1428, %s1441
  %v1443 = vpop.permute.xlu0 %1442
  %v1444 = vlaneseq
  %v1445 = vshrl.u32 %v1444, 7
  %v1446 = vsub.s32 4, %v1445
  %v1447 = vrot.slane %v66, %v1446
  %1449 = vbcast.lane.b32.xlu0 %v1447, 256
  %v1450 = vpop.permute.xlu0 %1449
  %s1452 = sor.u32 256, 8
  %1453 = vbcast.lane.b32.xlu0 %v1447, %s1452
  %v1454 = vpop.permute.xlu0 %1453
  %s1456 = sor.u32 256, 16
  %1457 = vbcast.lane.b32.xlu0 %v1447, %s1456
  %v1458 = vpop.permute.xlu0 %1457
  %s1460 = sor.u32 256, 24
  %1461 = vbcast.lane.b32.xlu0 %v1447, %s1460
  %v1462 = vpop.permute.xlu0 %1461
  %v1463 = vlaneseq
  %v1464 = vshrl.u32 %v1463, 7
  %v1465 = vsub.s32 5, %v1464
  %v1466 = vrot.slane %v66, %v1465
  %1468 = vbcast.lane.b32.xlu0 %v1466, 256
  %v1469 = vpop.permute.xlu0 %1468
  %s1471 = sor.u32 256, 8
  %1472 = vbcast.lane.b32.xlu0 %v1466, %s1471
  %v1473 = vpop.permute.xlu0 %1472
  %s1475 = sor.u32 256, 16
  %1476 = vbcast.lane.b32.xlu0 %v1466, %s1475
  %v1477 = vpop.permute.xlu0 %1476
  %s1479 = sor.u32 256, 24
  %1480 = vbcast.lane.b32.xlu0 %v1466, %s1479
  %v1481 = vpop.permute.xlu0 %1480
  %v1482 = vlaneseq
  %v1483 = vshrl.u32 %v1482, 7
  %v1484 = vsub.s32 6, %v1483
  %v1485 = vrot.slane %v66, %v1484
  %1487 = vbcast.lane.b32.xlu0 %v1485, 256
  %v1488 = vpop.permute.xlu0 %1487
  %s1490 = sor.u32 256, 8
  %1491 = vbcast.lane.b32.xlu0 %v1485, %s1490
  %v1492 = vpop.permute.xlu0 %1491
  %s1494 = sor.u32 256, 16
  %1495 = vbcast.lane.b32.xlu0 %v1485, %s1494
  %v1496 = vpop.permute.xlu0 %1495
  %s1498 = sor.u32 256, 24
  %1499 = vbcast.lane.b32.xlu0 %v1485, %s1498
  %v1500 = vpop.permute.xlu0 %1499
  %v1501 = vlaneseq
  %v1502 = vshrl.u32 %v1501, 7
  %v1503 = vsub.s32 7, %v1502
  %v1504 = vrot.slane %v66, %v1503
  %1506 = vbcast.lane.b32.xlu0 %v1504, 256
  %v1507 = vpop.permute.xlu0 %1506
  %s1509 = sor.u32 256, 8
  %1510 = vbcast.lane.b32.xlu0 %v1504, %s1509
  %v1511 = vpop.permute.xlu0 %1510
  %s1513 = sor.u32 256, 16
  %1514 = vbcast.lane.b32.xlu0 %v1504, %s1513
  %v1515 = vpop.permute.xlu0 %1514
  %s1517 = sor.u32 256, 24
  %1518 = vbcast.lane.b32.xlu0 %v1504, %s1517
  %v1519 = vpop.permute.xlu0 %1518
  %v1520 = vlaneseq
  %v1521 = vshrl.u32 %v1520, 7
  %v1522 = vsub.s32 0, %v1521
  %v1523 = vrot.slane %v67, %v1522
  %1525 = vbcast.lane.b32.xlu0 %v1523, 256
  %v1526 = vpop.permute.xlu0 %1525
  %s1528 = sor.u32 256, 8
  %1529 = vbcast.lane.b32.xlu0 %v1523, %s1528
  %v1530 = vpop.permute.xlu0 %1529
  %s1532 = sor.u32 256, 16
  %1533 = vbcast.lane.b32.xlu0 %v1523, %s1532
  %v1534 = vpop.permute.xlu0 %1533
  %s1536 = sor.u32 256, 24
  %1537 = vbcast.lane.b32.xlu0 %v1523, %s1536
  %v1538 = vpop.permute.xlu0 %1537
  %v1539 = vlaneseq
  %v1540 = vshrl.u32 %v1539, 7
  %v1541 = vsub.s32 1, %v1540
  %v1542 = vrot.slane %v67, %v1541
  %1544 = vbcast.lane.b32.xlu0 %v1542, 256
  %v1545 = vpop.permute.xlu0 %1544
  %s1547 = sor.u32 256, 8
  %1548 = vbcast.lane.b32.xlu0 %v1542, %s1547
  %v1549 = vpop.permute.xlu0 %1548
  %s1551 = sor.u32 256, 16
  %1552 = vbcast.lane.b32.xlu0 %v1542, %s1551
  %v1553 = vpop.permute.xlu0 %1552
  %s1555 = sor.u32 256, 24
  %1556 = vbcast.lane.b32.xlu0 %v1542, %s1555
  %v1557 = vpop.permute.xlu0 %1556
  %v1558 = vlaneseq
  %v1559 = vshrl.u32 %v1558, 7
  %v1560 = vsub.s32 2, %v1559
  %v1561 = vrot.slane %v67, %v1560
  %1563 = vbcast.lane.b32.xlu0 %v1561, 256
  %v1564 = vpop.permute.xlu0 %1563
  %s1566 = sor.u32 256, 8
  %1567 = vbcast.lane.b32.xlu0 %v1561, %s1566
  %v1568 = vpop.permute.xlu0 %1567
  %s1570 = sor.u32 256, 16
  %1571 = vbcast.lane.b32.xlu0 %v1561, %s1570
  %v1572 = vpop.permute.xlu0 %1571
  %s1574 = sor.u32 256, 24
  %1575 = vbcast.lane.b32.xlu0 %v1561, %s1574
  %v1576 = vpop.permute.xlu0 %1575
  %v1577 = vlaneseq
  %v1578 = vshrl.u32 %v1577, 7
  %v1579 = vsub.s32 3, %v1578
  %v1580 = vrot.slane %v67, %v1579
  %1582 = vbcast.lane.b32.xlu0 %v1580, 256
  %v1583 = vpop.permute.xlu0 %1582
  %s1585 = sor.u32 256, 8
  %1586 = vbcast.lane.b32.xlu0 %v1580, %s1585
  %v1587 = vpop.permute.xlu0 %1586
  %s1589 = sor.u32 256, 16
  %1590 = vbcast.lane.b32.xlu0 %v1580, %s1589
  %v1591 = vpop.permute.xlu0 %1590
  %s1593 = sor.u32 256, 24
  %1594 = vbcast.lane.b32.xlu0 %v1580, %s1593
  %v1595 = vpop.permute.xlu0 %1594
  %v1596 = vlaneseq
  %v1597 = vshrl.u32 %v1596, 7
  %v1598 = vsub.s32 4, %v1597
  %v1599 = vrot.slane %v67, %v1598
  %1601 = vbcast.lane.b32.xlu0 %v1599, 256
  %v1602 = vpop.permute.xlu0 %1601
  %s1604 = sor.u32 256, 8
  %1605 = vbcast.lane.b32.xlu0 %v1599, %s1604
  %v1606 = vpop.permute.xlu0 %1605
  %s1608 = sor.u32 256, 16
  %1609 = vbcast.lane.b32.xlu0 %v1599, %s1608
  %v1610 = vpop.permute.xlu0 %1609
  %s1612 = sor.u32 256, 24
  %1613 = vbcast.lane.b32.xlu0 %v1599, %s1612
  %v1614 = vpop.permute.xlu0 %1613
  %v1615 = vlaneseq
  %v1616 = vshrl.u32 %v1615, 7
  %v1617 = vsub.s32 5, %v1616
  %v1618 = vrot.slane %v67, %v1617
  %1620 = vbcast.lane.b32.xlu0 %v1618, 256
  %v1621 = vpop.permute.xlu0 %1620
  %s1623 = sor.u32 256, 8
  %1624 = vbcast.lane.b32.xlu0 %v1618, %s1623
  %v1625 = vpop.permute.xlu0 %1624
  %s1627 = sor.u32 256, 16
  %1628 = vbcast.lane.b32.xlu0 %v1618, %s1627
  %v1629 = vpop.permute.xlu0 %1628
  %s1631 = sor.u32 256, 24
  %1632 = vbcast.lane.b32.xlu0 %v1618, %s1631
  %v1633 = vpop.permute.xlu0 %1632
  %v1634 = vlaneseq
  %v1635 = vshrl.u32 %v1634, 7
  %v1636 = vsub.s32 6, %v1635
  %v1637 = vrot.slane %v67, %v1636
  %1639 = vbcast.lane.b32.xlu0 %v1637, 256
  %v1640 = vpop.permute.xlu0 %1639
  %s1642 = sor.u32 256, 8
  %1643 = vbcast.lane.b32.xlu0 %v1637, %s1642
  %v1644 = vpop.permute.xlu0 %1643
  %s1646 = sor.u32 256, 16
  %1647 = vbcast.lane.b32.xlu0 %v1637, %s1646
  %v1648 = vpop.permute.xlu0 %1647
  %s1650 = sor.u32 256, 24
  %1651 = vbcast.lane.b32.xlu0 %v1637, %s1650
  %v1652 = vpop.permute.xlu0 %1651
  %v1653 = vlaneseq
  %v1654 = vshrl.u32 %v1653, 7
  %v1655 = vsub.s32 7, %v1654
  %v1656 = vrot.slane %v67, %v1655
  %1658 = vbcast.lane.b32.xlu0 %v1656, 256
  %v1659 = vpop.permute.xlu0 %1658
  %s1661 = sor.u32 256, 8
  %1662 = vbcast.lane.b32.xlu0 %v1656, %s1661
  %v1663 = vpop.permute.xlu0 %1662
  %s1665 = sor.u32 256, 16
  %1666 = vbcast.lane.b32.xlu0 %v1656, %s1665
  %v1667 = vpop.permute.xlu0 %1666
  %s1669 = sor.u32 256, 24
  %1670 = vbcast.lane.b32.xlu0 %v1656, %s1669
  %v1671 = vpop.permute.xlu0 %1670
  %v1672 = vlaneseq
  %v1673 = vshrl.u32 %v1672, 7
  %v1674 = vsub.s32 0, %v1673
  %v1675 = vrot.slane %v68, %v1674
  %1677 = vbcast.lane.b32.xlu0 %v1675, 256
  %v1678 = vpop.permute.xlu0 %1677
  %s1680 = sor.u32 256, 8
  %1681 = vbcast.lane.b32.xlu0 %v1675, %s1680
  %v1682 = vpop.permute.xlu0 %1681
  %s1684 = sor.u32 256, 16
  %1685 = vbcast.lane.b32.xlu0 %v1675, %s1684
  %v1686 = vpop.permute.xlu0 %1685
  %s1688 = sor.u32 256, 24
  %1689 = vbcast.lane.b32.xlu0 %v1675, %s1688
  %v1690 = vpop.permute.xlu0 %1689
  %v1691 = vlaneseq
  %v1692 = vshrl.u32 %v1691, 7
  %v1693 = vsub.s32 1, %v1692
  %v1694 = vrot.slane %v68, %v1693
  %1696 = vbcast.lane.b32.xlu0 %v1694, 256
  %v1697 = vpop.permute.xlu0 %1696
  %s1699 = sor.u32 256, 8
  %1700 = vbcast.lane.b32.xlu0 %v1694, %s1699
  %v1701 = vpop.permute.xlu0 %1700
  %s1703 = sor.u32 256, 16
  %1704 = vbcast.lane.b32.xlu0 %v1694, %s1703
  %v1705 = vpop.permute.xlu0 %1704
  %s1707 = sor.u32 256, 24
  %1708 = vbcast.lane.b32.xlu0 %v1694, %s1707
  %v1709 = vpop.permute.xlu0 %1708
  %v1710 = vlaneseq
  %v1711 = vshrl.u32 %v1710, 7
  %v1712 = vsub.s32 2, %v1711
  %v1713 = vrot.slane %v68, %v1712
  %1715 = vbcast.lane.b32.xlu0 %v1713, 256
  %v1716 = vpop.permute.xlu0 %1715
  %s1718 = sor.u32 256, 8
  %1719 = vbcast.lane.b32.xlu0 %v1713, %s1718
  %v1720 = vpop.permute.xlu0 %1719
  %s1722 = sor.u32 256, 16
  %1723 = vbcast.lane.b32.xlu0 %v1713, %s1722
  %v1724 = vpop.permute.xlu0 %1723
  %s1726 = sor.u32 256, 24
  %1727 = vbcast.lane.b32.xlu0 %v1713, %s1726
  %v1728 = vpop.permute.xlu0 %1727
  %v1729 = vlaneseq
  %v1730 = vshrl.u32 %v1729, 7
  %v1731 = vsub.s32 3, %v1730
  %v1732 = vrot.slane %v68, %v1731
  %1734 = vbcast.lane.b32.xlu0 %v1732, 256
  %v1735 = vpop.permute.xlu0 %1734
  %s1737 = sor.u32 256, 8
  %1738 = vbcast.lane.b32.xlu0 %v1732, %s1737
  %v1739 = vpop.permute.xlu0 %1738
  %s1741 = sor.u32 256, 16
  %1742 = vbcast.lane.b32.xlu0 %v1732, %s1741
  %v1743 = vpop.permute.xlu0 %1742
  %s1745 = sor.u32 256, 24
  %1746 = vbcast.lane.b32.xlu0 %v1732, %s1745
  %v1747 = vpop.permute.xlu0 %1746
  %v1748 = vlaneseq
  %v1749 = vshrl.u32 %v1748, 7
  %v1750 = vsub.s32 4, %v1749
  %v1751 = vrot.slane %v68, %v1750
  %1753 = vbcast.lane.b32.xlu0 %v1751, 256
  %v1754 = vpop.permute.xlu0 %1753
  %s1756 = sor.u32 256, 8
  %1757 = vbcast.lane.b32.xlu0 %v1751, %s1756
  %v1758 = vpop.permute.xlu0 %1757
  %s1760 = sor.u32 256, 16
  %1761 = vbcast.lane.b32.xlu0 %v1751, %s1760
  %v1762 = vpop.permute.xlu0 %1761
  %s1764 = sor.u32 256, 24
  %1765 = vbcast.lane.b32.xlu0 %v1751, %s1764
  %v1766 = vpop.permute.xlu0 %1765
  %v1767 = vlaneseq
  %v1768 = vshrl.u32 %v1767, 7
  %v1769 = vsub.s32 5, %v1768
  %v1770 = vrot.slane %v68, %v1769
  %1772 = vbcast.lane.b32.xlu0 %v1770, 256
  %v1773 = vpop.permute.xlu0 %1772
  %s1775 = sor.u32 256, 8
  %1776 = vbcast.lane.b32.xlu0 %v1770, %s1775
  %v1777 = vpop.permute.xlu0 %1776
  %s1779 = sor.u32 256, 16
  %1780 = vbcast.lane.b32.xlu0 %v1770, %s1779
  %v1781 = vpop.permute.xlu0 %1780
  %s1783 = sor.u32 256, 24
  %1784 = vbcast.lane.b32.xlu0 %v1770, %s1783
  %v1785 = vpop.permute.xlu0 %1784
  %v1786 = vlaneseq
  %v1787 = vshrl.u32 %v1786, 7
  %v1788 = vsub.s32 6, %v1787
  %v1789 = vrot.slane %v68, %v1788
  %1791 = vbcast.lane.b32.xlu0 %v1789, 256
  %v1792 = vpop.permute.xlu0 %1791
  %s1794 = sor.u32 256, 8
  %1795 = vbcast.lane.b32.xlu0 %v1789, %s1794
  %v1796 = vpop.permute.xlu0 %1795
  %s1798 = sor.u32 256, 16
  %1799 = vbcast.lane.b32.xlu0 %v1789, %s1798
  %v1800 = vpop.permute.xlu0 %1799
  %s1802 = sor.u32 256, 24
  %1803 = vbcast.lane.b32.xlu0 %v1789, %s1802
  %v1804 = vpop.permute.xlu0 %1803
  %v1805 = vlaneseq
  %v1806 = vshrl.u32 %v1805, 7
  %v1807 = vsub.s32 7, %v1806
  %v1808 = vrot.slane %v68, %v1807
  %1810 = vbcast.lane.b32.xlu0 %v1808, 256
  %v1811 = vpop.permute.xlu0 %1810
  %s1813 = sor.u32 256, 8
  %1814 = vbcast.lane.b32.xlu0 %v1808, %s1813
  %v1815 = vpop.permute.xlu0 %1814
  %s1817 = sor.u32 256, 16
  %1818 = vbcast.lane.b32.xlu0 %v1808, %s1817
  %v1819 = vpop.permute.xlu0 %1818
  %s1821 = sor.u32 256, 24
  %1822 = vbcast.lane.b32.xlu0 %v1808, %s1821
  %v1823 = vpop.permute.xlu0 %1822
  %v1832 = vcombine.high %v600, %v600
  %v1834 = vunpack.c.l.s4 1966171168
  %v1835 = vunpack.c.0.s8 %v1834
  %v1836 = vlaneseq
  %v1837 = vshrl.u32 %v1836, 7
  %v1838 = vsub.s32 %v1835, %v1837
  %v1839 = vrot.slane %v600, %v1838
  %v1841 = vunpack.c.l.s4 1966171168
  %v1842 = vunpack.c.0.s8 %v1841
  %v1843 = vlaneseq
  %v1844 = vshrl.u32 %v1843, 7
  %v1845 = vsub.s32 %v1842, %v1844
  %v1846 = vrot.slane %v1832, %v1845
  %v1847 = vcombine.high %v1839, %v1839
  %v1848 = vcombine.high %v1846, %v1846
  %v1850 = vunpack.c.l.s4 1966171168
  %v1851 = vunpack.c.0.s8 %v1850
  %v1852 = vlaneseq
  %v1853 = vshrl.u32 %v1852, 7
  %v1854 = vsub.s32 %v1851, %v1853
  %v1855 = vrot.slane %v1839, %v1854
  %v1857 = vunpack.c.l.s4 1966171168
  %v1858 = vunpack.c.0.s8 %v1857
  %v1859 = vlaneseq
  %v1860 = vshrl.u32 %v1859, 7
  %v1861 = vsub.s32 %v1858, %v1860
  %v1862 = vrot.slane %v1846, %v1861
  %v1864 = vunpack.c.l.s4 1966171168
  %v1865 = vunpack.c.0.s8 %v1864
  %v1866 = vlaneseq
  %v1867 = vshrl.u32 %v1866, 7
  %v1868 = vsub.s32 %v1865, %v1867
  %v1869 = vrot.slane %v1847, %v1868
  %v1871 = vunpack.c.l.s4 1966171168
  %v1872 = vunpack.c.0.s8 %v1871
  %v1873 = vlaneseq
  %v1874 = vshrl.u32 %v1873, 7
  %v1875 = vsub.s32 %v1872, %v1874
  %v1876 = vrot.slane %v1848, %v1875
  %v1877 = vcombine.high %v1855, %v1855
  %v1878 = vcombine.high %v1862, %v1862
  %v1879 = vcombine.high %v1869, %v1869
  %v1880 = vcombine.high %v1876, %v1876
  %v1881 = vcombine.high %v601, %v601
  %v1883 = vunpack.c.l.s4 1966171168
  %v1884 = vunpack.c.0.s8 %v1883
  %v1885 = vlaneseq
  %v1886 = vshrl.u32 %v1885, 7
  %v1887 = vsub.s32 %v1884, %v1886
  %v1888 = vrot.slane %v601, %v1887
  %v1890 = vunpack.c.l.s4 1966171168
  %v1891 = vunpack.c.0.s8 %v1890
  %v1892 = vlaneseq
  %v1893 = vshrl.u32 %v1892, 7
  %v1894 = vsub.s32 %v1891, %v1893
  %v1895 = vrot.slane %v1881, %v1894
  %v1896 = vcombine.high %v1888, %v1888
  %v1897 = vcombine.high %v1895, %v1895
  %v1899 = vunpack.c.l.s4 1966171168
  %v1900 = vunpack.c.0.s8 %v1899
  %v1901 = vlaneseq
  %v1902 = vshrl.u32 %v1901, 7
  %v1903 = vsub.s32 %v1900, %v1902
  %v1904 = vrot.slane %v1888, %v1903
  %v1906 = vunpack.c.l.s4 1966171168
  %v1907 = vunpack.c.0.s8 %v1906
  %v1908 = vlaneseq
  %v1909 = vshrl.u32 %v1908, 7
  %v1910 = vsub.s32 %v1907, %v1909
  %v1911 = vrot.slane %v1895, %v1910
  %v1913 = vunpack.c.l.s4 1966171168
  %v1914 = vunpack.c.0.s8 %v1913
  %v1915 = vlaneseq
  %v1916 = vshrl.u32 %v1915, 7
  %v1917 = vsub.s32 %v1914, %v1916
  %v1918 = vrot.slane %v1896, %v1917
  %v1920 = vunpack.c.l.s4 1966171168
  %v1921 = vunpack.c.0.s8 %v1920
  %v1922 = vlaneseq
  %v1923 = vshrl.u32 %v1922, 7
  %v1924 = vsub.s32 %v1921, %v1923
  %v1925 = vrot.slane %v1897, %v1924
  %v1926 = vcombine.high %v1904, %v1904
  %v1927 = vcombine.high %v1911, %v1911
  %v1928 = vcombine.high %v1918, %v1918
  %v1929 = vcombine.high %v1925, %v1925
  %v1930 = vcombine.high %v602, %v602
  %v1932 = vunpack.c.l.s4 1966171168
  %v1933 = vunpack.c.0.s8 %v1932
  %v1934 = vlaneseq
  %v1935 = vshrl.u32 %v1934, 7
  %v1936 = vsub.s32 %v1933, %v1935
  %v1937 = vrot.slane %v602, %v1936
  %v1939 = vunpack.c.l.s4 1966171168
  %v1940 = vunpack.c.0.s8 %v1939
  %v1941 = vlaneseq
  %v1942 = vshrl.u32 %v1941, 7
  %v1943 = vsub.s32 %v1940, %v1942
  %v1944 = vrot.slane %v1930, %v1943
  %v1945 = vcombine.high %v1937, %v1937
  %v1946 = vcombine.high %v1944, %v1944
  %v1948 = vunpack.c.l.s4 1966171168
  %v1949 = vunpack.c.0.s8 %v1948
  %v1950 = vlaneseq
  %v1951 = vshrl.u32 %v1950, 7
  %v1952 = vsub.s32 %v1949, %v1951
  %v1953 = vrot.slane %v1937, %v1952
  %v1955 = vunpack.c.l.s4 1966171168
  %v1956 = vunpack.c.0.s8 %v1955
  %v1957 = vlaneseq
  %v1958 = vshrl.u32 %v1957, 7
  %v1959 = vsub.s32 %v1956, %v1958
  %v1960 = vrot.slane %v1944, %v1959
  %v1962 = vunpack.c.l.s4 1966171168
  %v1963 = vunpack.c.0.s8 %v1962
  %v1964 = vlaneseq
  %v1965 = vshrl.u32 %v1964, 7
  %v1966 = vsub.s32 %v1963, %v1965
  %v1967 = vrot.slane %v1945, %v1966
  %v1969 = vunpack.c.l.s4 1966171168
  %v1970 = vunpack.c.0.s8 %v1969
  %v1971 = vlaneseq
  %v1972 = vshrl.u32 %v1971, 7
  %v1973 = vsub.s32 %v1970, %v1972
  %v1974 = vrot.slane %v1946, %v1973
  %v1975 = vcombine.high %v1953, %v1953
  %v1976 = vcombine.high %v1960, %v1960
  %v1977 = vcombine.high %v1967, %v1967
  %v1978 = vcombine.high %v1974, %v1974
  %v1979 = vcombine.high %v603, %v603
  %v1981 = vunpack.c.l.s4 1966171168
  %v1982 = vunpack.c.0.s8 %v1981
  %v1983 = vlaneseq
  %v1984 = vshrl.u32 %v1983, 7
  %v1985 = vsub.s32 %v1982, %v1984
  %v1986 = vrot.slane %v603, %v1985
  %v1988 = vunpack.c.l.s4 1966171168
  %v1989 = vunpack.c.0.s8 %v1988
  %v1990 = vlaneseq
  %v1991 = vshrl.u32 %v1990, 7
  %v1992 = vsub.s32 %v1989, %v1991
  %v1993 = vrot.slane %v1979, %v1992
  %v1994 = vcombine.high %v1986, %v1986
  %v1995 = vcombine.high %v1993, %v1993
  %v1997 = vunpack.c.l.s4 1966171168
  %v1998 = vunpack.c.0.s8 %v1997
  %v1999 = vlaneseq
  %v2000 = vshrl.u32 %v1999, 7
  %v2001 = vsub.s32 %v1998, %v2000
  %v2002 = vrot.slane %v1986, %v2001
  %v2004 = vunpack.c.l.s4 1966171168
  %v2005 = vunpack.c.0.s8 %v2004
  %v2006 = vlaneseq
  %v2007 = vshrl.u32 %v2006, 7
  %v2008 = vsub.s32 %v2005, %v2007
  %v2009 = vrot.slane %v1993, %v2008
  %v2011 = vunpack.c.l.s4 1966171168
  %v2012 = vunpack.c.0.s8 %v2011
  %v2013 = vlaneseq
  %v2014 = vshrl.u32 %v2013, 7
  %v2015 = vsub.s32 %v2012, %v2014
  %v2016 = vrot.slane %v1994, %v2015
  %v2018 = vunpack.c.l.s4 1966171168
  %v2019 = vunpack.c.0.s8 %v2018
  %v2020 = vlaneseq
  %v2021 = vshrl.u32 %v2020, 7
  %v2022 = vsub.s32 %v2019, %v2021
  %v2023 = vrot.slane %v1995, %v2022
  %v2024 = vcombine.high %v2002, %v2002
  %v2025 = vcombine.high %v2009, %v2009
  %v2026 = vcombine.high %v2016, %v2016
  %v2027 = vcombine.high %v2023, %v2023
  %v2028 = vcombine.high %v604, %v604
  %v2030 = vunpack.c.l.s4 1966171168
  %v2031 = vunpack.c.0.s8 %v2030
  %v2032 = vlaneseq
  %v2033 = vshrl.u32 %v2032, 7
  %v2034 = vsub.s32 %v2031, %v2033
  %v2035 = vrot.slane %v604, %v2034
  %v2037 = vunpack.c.l.s4 1966171168
  %v2038 = vunpack.c.0.s8 %v2037
  %v2039 = vlaneseq
  %v2040 = vshrl.u32 %v2039, 7
  %v2041 = vsub.s32 %v2038, %v2040
  %v2042 = vrot.slane %v2028, %v2041
  %v2043 = vcombine.high %v2035, %v2035
  %v2044 = vcombine.high %v2042, %v2042
  %v2046 = vunpack.c.l.s4 1966171168
  %v2047 = vunpack.c.0.s8 %v2046
  %v2048 = vlaneseq
  %v2049 = vshrl.u32 %v2048, 7
  %v2050 = vsub.s32 %v2047, %v2049
  %v2051 = vrot.slane %v2035, %v2050
  %v2053 = vunpack.c.l.s4 1966171168
  %v2054 = vunpack.c.0.s8 %v2053
  %v2055 = vlaneseq
  %v2056 = vshrl.u32 %v2055, 7
  %v2057 = vsub.s32 %v2054, %v2056
  %v2058 = vrot.slane %v2042, %v2057
  %v2060 = vunpack.c.l.s4 1966171168
  %v2061 = vunpack.c.0.s8 %v2060
  %v2062 = vlaneseq
  %v2063 = vshrl.u32 %v2062, 7
  %v2064 = vsub.s32 %v2061, %v2063
  %v2065 = vrot.slane %v2043, %v2064
  %v2067 = vunpack.c.l.s4 1966171168
  %v2068 = vunpack.c.0.s8 %v2067
  %v2069 = vlaneseq
  %v2070 = vshrl.u32 %v2069, 7
  %v2071 = vsub.s32 %v2068, %v2070
  %v2072 = vrot.slane %v2044, %v2071
  %v2073 = vcombine.high %v2051, %v2051
  %v2074 = vcombine.high %v2058, %v2058
  %v2075 = vcombine.high %v2065, %v2065
  %v2076 = vcombine.high %v2072, %v2072
  %v2077 = vcombine.high %v605, %v605
  %v2079 = vunpack.c.l.s4 1966171168
  %v2080 = vunpack.c.0.s8 %v2079
  %v2081 = vlaneseq
  %v2082 = vshrl.u32 %v2081, 7
  %v2083 = vsub.s32 %v2080, %v2082
  %v2084 = vrot.slane %v605, %v2083
  %v2086 = vunpack.c.l.s4 1966171168
  %v2087 = vunpack.c.0.s8 %v2086
  %v2088 = vlaneseq
  %v2089 = vshrl.u32 %v2088, 7
  %v2090 = vsub.s32 %v2087, %v2089
  %v2091 = vrot.slane %v2077, %v2090
  %v2092 = vcombine.high %v2084, %v2084
  %v2093 = vcombine.high %v2091, %v2091
  %v2095 = vunpack.c.l.s4 1966171168
  %v2096 = vunpack.c.0.s8 %v2095
  %v2097 = vlaneseq
  %v2098 = vshrl.u32 %v2097, 7
  %v2099 = vsub.s32 %v2096, %v2098
  %v2100 = vrot.slane %v2084, %v2099
  %v2102 = vunpack.c.l.s4 1966171168
  %v2103 = vunpack.c.0.s8 %v2102
  %v2104 = vlaneseq
  %v2105 = vshrl.u32 %v2104, 7
  %v2106 = vsub.s32 %v2103, %v2105
  %v2107 = vrot.slane %v2091, %v2106
  %v2109 = vunpack.c.l.s4 1966171168
  %v2110 = vunpack.c.0.s8 %v2109
  %v2111 = vlaneseq
  %v2112 = vshrl.u32 %v2111, 7
  %v2113 = vsub.s32 %v2110, %v2112
  %v2114 = vrot.slane %v2092, %v2113
  %v2116 = vunpack.c.l.s4 1966171168
  %v2117 = vunpack.c.0.s8 %v2116
  %v2118 = vlaneseq
  %v2119 = vshrl.u32 %v2118, 7
  %v2120 = vsub.s32 %v2117, %v2119
  %v2121 = vrot.slane %v2093, %v2120
  %v2122 = vcombine.high %v2100, %v2100
  %v2123 = vcombine.high %v2107, %v2107
  %v2124 = vcombine.high %v2114, %v2114
  %v2125 = vcombine.high %v2121, %v2121
  %v2126 = vcombine.high %v606, %v606
  %v2128 = vunpack.c.l.s4 1966171168
  %v2129 = vunpack.c.0.s8 %v2128
  %v2130 = vlaneseq
  %v2131 = vshrl.u32 %v2130, 7
  %v2132 = vsub.s32 %v2129, %v2131
  %v2133 = vrot.slane %v606, %v2132
  %v2135 = vunpack.c.l.s4 1966171168
  %v2136 = vunpack.c.0.s8 %v2135
  %v2137 = vlaneseq
  %v2138 = vshrl.u32 %v2137, 7
  %v2139 = vsub.s32 %v2136, %v2138
  %v2140 = vrot.slane %v2126, %v2139
  %v2141 = vcombine.high %v2133, %v2133
  %v2142 = vcombine.high %v2140, %v2140
  %v2144 = vunpack.c.l.s4 1966171168
  %v2145 = vunpack.c.0.s8 %v2144
  %v2146 = vlaneseq
  %v2147 = vshrl.u32 %v2146, 7
  %v2148 = vsub.s32 %v2145, %v2147
  %v2149 = vrot.slane %v2133, %v2148
  %v2151 = vunpack.c.l.s4 1966171168
  %v2152 = vunpack.c.0.s8 %v2151
  %v2153 = vlaneseq
  %v2154 = vshrl.u32 %v2153, 7
  %v2155 = vsub.s32 %v2152, %v2154
  %v2156 = vrot.slane %v2140, %v2155
  %v2158 = vunpack.c.l.s4 1966171168
  %v2159 = vunpack.c.0.s8 %v2158
  %v2160 = vlaneseq
  %v2161 = vshrl.u32 %v2160, 7
  %v2162 = vsub.s32 %v2159, %v2161
  %v2163 = vrot.slane %v2141, %v2162
  %v2165 = vunpack.c.l.s4 1966171168
  %v2166 = vunpack.c.0.s8 %v2165
  %v2167 = vlaneseq
  %v2168 = vshrl.u32 %v2167, 7
  %v2169 = vsub.s32 %v2166, %v2168
  %v2170 = vrot.slane %v2142, %v2169
  %v2171 = vcombine.high %v2149, %v2149
  %v2172 = vcombine.high %v2156, %v2156
  %v2173 = vcombine.high %v2163, %v2163
  %v2174 = vcombine.high %v2170, %v2170
  %v2175 = vcombine.high %v607, %v607
  %v2177 = vunpack.c.l.s4 1966171168
  %v2178 = vunpack.c.0.s8 %v2177
  %v2179 = vlaneseq
  %v2180 = vshrl.u32 %v2179, 7
  %v2181 = vsub.s32 %v2178, %v2180
  %v2182 = vrot.slane %v607, %v2181
  %v2184 = vunpack.c.l.s4 1966171168
  %v2185 = vunpack.c.0.s8 %v2184
  %v2186 = vlaneseq
  %v2187 = vshrl.u32 %v2186, 7
  %v2188 = vsub.s32 %v2185, %v2187
  %v2189 = vrot.slane %v2175, %v2188
  %v2190 = vcombine.high %v2182, %v2182
  %v2191 = vcombine.high %v2189, %v2189
  %v2193 = vunpack.c.l.s4 1966171168
  %v2194 = vunpack.c.0.s8 %v2193
  %v2195 = vlaneseq
  %v2196 = vshrl.u32 %v2195, 7
  %v2197 = vsub.s32 %v2194, %v2196
  %v2198 = vrot.slane %v2182, %v2197
  %v2200 = vunpack.c.l.s4 1966171168
  %v2201 = vunpack.c.0.s8 %v2200
  %v2202 = vlaneseq
  %v2203 = vshrl.u32 %v2202, 7
  %v2204 = vsub.s32 %v2201, %v2203
  %v2205 = vrot.slane %v2189, %v2204
  %v2207 = vunpack.c.l.s4 1966171168
  %v2208 = vunpack.c.0.s8 %v2207
  %v2209 = vlaneseq
  %v2210 = vshrl.u32 %v2209, 7
  %v2211 = vsub.s32 %v2208, %v2210
  %v2212 = vrot.slane %v2190, %v2211
  %v2214 = vunpack.c.l.s4 1966171168
  %v2215 = vunpack.c.0.s8 %v2214
  %v2216 = vlaneseq
  %v2217 = vshrl.u32 %v2216, 7
  %v2218 = vsub.s32 %v2215, %v2217
  %v2219 = vrot.slane %v2191, %v2218
  %v2220 = vcombine.high %v2198, %v2198
  %v2221 = vcombine.high %v2205, %v2205
  %v2222 = vcombine.high %v2212, %v2212
  %v2223 = vcombine.high %v2219, %v2219
  %v2224 = vlaneseq
  %v2225 = vshrl.u32 %v2224, 7
  %v2226 = vsub.s32 0, %v2225
  %v2227 = vrot.slane %v1855, %v2226
  %v2228 = vlaneseq
  %v2229 = vshrl.u32 %v2228, 7
  %v2230 = vsub.s32 0, %v2229
  %v2231 = vrot.slane %v1869, %v2230
  %v2232 = vlaneseq
  %v2233 = vshrl.u32 %v2232, 7
  %v2234 = vsub.s32 0, %v2233
  %v2235 = vrot.slane %v1877, %v2234
  %v2236 = vlaneseq
  %v2237 = vshrl.u32 %v2236, 7
  %v2238 = vsub.s32 0, %v2237
  %v2239 = vrot.slane %v1879, %v2238
  %v2240 = vlaneseq
  %v2241 = vshrl.u32 %v2240, 7
  %v2242 = vsub.s32 0, %v2241
  %v2243 = vrot.slane %v1862, %v2242
  %v2244 = vlaneseq
  %v2245 = vshrl.u32 %v2244, 7
  %v2246 = vsub.s32 0, %v2245
  %v2247 = vrot.slane %v1876, %v2246
  %v2248 = vlaneseq
  %v2249 = vshrl.u32 %v2248, 7
  %v2250 = vsub.s32 0, %v2249
  %v2251 = vrot.slane %v1878, %v2250
  %v2252 = vlaneseq
  %v2253 = vshrl.u32 %v2252, 7
  %v2254 = vsub.s32 0, %v2253
  %v2255 = vrot.slane %v1880, %v2254
  %v2256 = vlaneseq
  %v2257 = vshrl.u32 %v2256, 7
  %v2258 = vsub.s32 0, %v2257
  %v2259 = vrot.slane %v1904, %v2258
  %v2260 = vlaneseq
  %v2261 = vshrl.u32 %v2260, 7
  %v2262 = vsub.s32 0, %v2261
  %v2263 = vrot.slane %v1918, %v2262
  %v2264 = vlaneseq
  %v2265 = vshrl.u32 %v2264, 7
  %v2266 = vsub.s32 0, %v2265
  %v2267 = vrot.slane %v1926, %v2266
  %v2268 = vlaneseq
  %v2269 = vshrl.u32 %v2268, 7
  %v2270 = vsub.s32 0, %v2269
  %v2271 = vrot.slane %v1928, %v2270
  %v2272 = vlaneseq
  %v2273 = vshrl.u32 %v2272, 7
  %v2274 = vsub.s32 0, %v2273
  %v2275 = vrot.slane %v1911, %v2274
  %v2276 = vlaneseq
  %v2277 = vshrl.u32 %v2276, 7
  %v2278 = vsub.s32 0, %v2277
  %v2279 = vrot.slane %v1925, %v2278
  %v2280 = vlaneseq
  %v2281 = vshrl.u32 %v2280, 7
  %v2282 = vsub.s32 0, %v2281
  %v2283 = vrot.slane %v1927, %v2282
  %v2284 = vlaneseq
  %v2285 = vshrl.u32 %v2284, 7
  %v2286 = vsub.s32 0, %v2285
  %v2287 = vrot.slane %v1929, %v2286
  %v2288 = vlaneseq
  %v2289 = vshrl.u32 %v2288, 7
  %v2290 = vsub.s32 0, %v2289
  %v2291 = vrot.slane %v1953, %v2290
  %v2292 = vlaneseq
  %v2293 = vshrl.u32 %v2292, 7
  %v2294 = vsub.s32 0, %v2293
  %v2295 = vrot.slane %v1967, %v2294
  %v2296 = vlaneseq
  %v2297 = vshrl.u32 %v2296, 7
  %v2298 = vsub.s32 0, %v2297
  %v2299 = vrot.slane %v1975, %v2298
  %v2300 = vlaneseq
  %v2301 = vshrl.u32 %v2300, 7
  %v2302 = vsub.s32 0, %v2301
  %v2303 = vrot.slane %v1977, %v2302
  %v2304 = vlaneseq
  %v2305 = vshrl.u32 %v2304, 7
  %v2306 = vsub.s32 0, %v2305
  %v2307 = vrot.slane %v1960, %v2306
  %v2308 = vlaneseq
  %v2309 = vshrl.u32 %v2308, 7
  %v2310 = vsub.s32 0, %v2309
  %v2311 = vrot.slane %v1974, %v2310
  %v2312 = vlaneseq
  %v2313 = vshrl.u32 %v2312, 7
  %v2314 = vsub.s32 0, %v2313
  %v2315 = vrot.slane %v1976, %v2314
  %v2316 = vlaneseq
  %v2317 = vshrl.u32 %v2316, 7
  %v2318 = vsub.s32 0, %v2317
  %v2319 = vrot.slane %v1978, %v2318
  %v2320 = vlaneseq
  %v2321 = vshrl.u32 %v2320, 7
  %v2322 = vsub.s32 0, %v2321
  %v2323 = vrot.slane %v2002, %v2322
  %v2324 = vlaneseq
  %v2325 = vshrl.u32 %v2324, 7
  %v2326 = vsub.s32 0, %v2325
  %v2327 = vrot.slane %v2016, %v2326
  %v2328 = vlaneseq
  %v2329 = vshrl.u32 %v2328, 7
  %v2330 = vsub.s32 0, %v2329
  %v2331 = vrot.slane %v2024, %v2330
  %v2332 = vlaneseq
  %v2333 = vshrl.u32 %v2332, 7
  %v2334 = vsub.s32 0, %v2333
  %v2335 = vrot.slane %v2026, %v2334
  %v2336 = vlaneseq
  %v2337 = vshrl.u32 %v2336, 7
  %v2338 = vsub.s32 0, %v2337
  %v2339 = vrot.slane %v2009, %v2338
  %v2340 = vlaneseq
  %v2341 = vshrl.u32 %v2340, 7
  %v2342 = vsub.s32 0, %v2341
  %v2343 = vrot.slane %v2023, %v2342
  %v2344 = vlaneseq
  %v2345 = vshrl.u32 %v2344, 7
  %v2346 = vsub.s32 0, %v2345
  %v2347 = vrot.slane %v2025, %v2346
  %v2348 = vlaneseq
  %v2349 = vshrl.u32 %v2348, 7
  %v2350 = vsub.s32 0, %v2349
  %v2351 = vrot.slane %v2027, %v2350
  %v2352 = vlaneseq
  %v2353 = vshrl.u32 %v2352, 7
  %v2354 = vsub.s32 0, %v2353
  %v2355 = vrot.slane %v2051, %v2354
  %v2356 = vlaneseq
  %v2357 = vshrl.u32 %v2356, 7
  %v2358 = vsub.s32 0, %v2357
  %v2359 = vrot.slane %v2065, %v2358
  %v2360 = vlaneseq
  %v2361 = vshrl.u32 %v2360, 7
  %v2362 = vsub.s32 0, %v2361
  %v2363 = vrot.slane %v2073, %v2362
  %v2364 = vlaneseq
  %v2365 = vshrl.u32 %v2364, 7
  %v2366 = vsub.s32 0, %v2365
  %v2367 = vrot.slane %v2075, %v2366
  %v2368 = vlaneseq
  %v2369 = vshrl.u32 %v2368, 7
  %v2370 = vsub.s32 0, %v2369
  %v2371 = vrot.slane %v2058, %v2370
  %v2372 = vlaneseq
  %v2373 = vshrl.u32 %v2372, 7
  %v2374 = vsub.s32 0, %v2373
  %v2375 = vrot.slane %v2072, %v2374
  %v2376 = vlaneseq
  %v2377 = vshrl.u32 %v2376, 7
  %v2378 = vsub.s32 0, %v2377
  %v2379 = vrot.slane %v2074, %v2378
  %v2380 = vlaneseq
  %v2381 = vshrl.u32 %v2380, 7
  %v2382 = vsub.s32 0, %v2381
  %v2383 = vrot.slane %v2076, %v2382
  %v2384 = vlaneseq
  %v2385 = vshrl.u32 %v2384, 7
  %v2386 = vsub.s32 0, %v2385
  %v2387 = vrot.slane %v2100, %v2386
  %v2388 = vlaneseq
  %v2389 = vshrl.u32 %v2388, 7
  %v2390 = vsub.s32 0, %v2389
  %v2391 = vrot.slane %v2114, %v2390
  %v2392 = vlaneseq
  %v2393 = vshrl.u32 %v2392, 7
  %v2394 = vsub.s32 0, %v2393
  %v2395 = vrot.slane %v2122, %v2394
  %v2396 = vlaneseq
  %v2397 = vshrl.u32 %v2396, 7
  %v2398 = vsub.s32 0, %v2397
  %v2399 = vrot.slane %v2124, %v2398
  %v2400 = vlaneseq
  %v2401 = vshrl.u32 %v2400, 7
  %v2402 = vsub.s32 0, %v2401
  %v2403 = vrot.slane %v2107, %v2402
  %v2404 = vlaneseq
  %v2405 = vshrl.u32 %v2404, 7
  %v2406 = vsub.s32 0, %v2405
  %v2407 = vrot.slane %v2121, %v2406
  %v2408 = vlaneseq
  %v2409 = vshrl.u32 %v2408, 7
  %v2410 = vsub.s32 0, %v2409
  %v2411 = vrot.slane %v2123, %v2410
  %v2412 = vlaneseq
  %v2413 = vshrl.u32 %v2412, 7
  %v2414 = vsub.s32 0, %v2413
  %v2415 = vrot.slane %v2125, %v2414
  %v2416 = vlaneseq
  %v2417 = vshrl.u32 %v2416, 7
  %v2418 = vsub.s32 0, %v2417
  %v2419 = vrot.slane %v2149, %v2418
  %v2420 = vlaneseq
  %v2421 = vshrl.u32 %v2420, 7
  %v2422 = vsub.s32 0, %v2421
  %v2423 = vrot.slane %v2163, %v2422
  %v2424 = vlaneseq
  %v2425 = vshrl.u32 %v2424, 7
  %v2426 = vsub.s32 0, %v2425
  %v2427 = vrot.slane %v2171, %v2426
  %v2428 = vlaneseq
  %v2429 = vshrl.u32 %v2428, 7
  %v2430 = vsub.s32 0, %v2429
  %v2431 = vrot.slane %v2173, %v2430
  %v2432 = vlaneseq
  %v2433 = vshrl.u32 %v2432, 7
  %v2434 = vsub.s32 0, %v2433
  %v2435 = vrot.slane %v2156, %v2434
  %v2436 = vlaneseq
  %v2437 = vshrl.u32 %v2436, 7
  %v2438 = vsub.s32 0, %v2437
  %v2439 = vrot.slane %v2170, %v2438
  %v2440 = vlaneseq
  %v2441 = vshrl.u32 %v2440, 7
  %v2442 = vsub.s32 0, %v2441
  %v2443 = vrot.slane %v2172, %v2442
  %v2444 = vlaneseq
  %v2445 = vshrl.u32 %v2444, 7
  %v2446 = vsub.s32 0, %v2445
  %v2447 = vrot.slane %v2174, %v2446
  %v2448 = vlaneseq
  %v2449 = vshrl.u32 %v2448, 7
  %v2450 = vsub.s32 0, %v2449
  %v2451 = vrot.slane %v2198, %v2450
  %v2452 = vlaneseq
  %v2453 = vshrl.u32 %v2452, 7
  %v2454 = vsub.s32 0, %v2453
  %v2455 = vrot.slane %v2212, %v2454
  %v2456 = vlaneseq
  %v2457 = vshrl.u32 %v2456, 7
  %v2458 = vsub.s32 0, %v2457
  %v2459 = vrot.slane %v2220, %v2458
  %v2460 = vlaneseq
  %v2461 = vshrl.u32 %v2460, 7
  %v2462 = vsub.s32 0, %v2461
  %v2463 = vrot.slane %v2222, %v2462
  %v2464 = vlaneseq
  %v2465 = vshrl.u32 %v2464, 7
  %v2466 = vsub.s32 0, %v2465
  %v2467 = vrot.slane %v2205, %v2466
  %v2468 = vlaneseq
  %v2469 = vshrl.u32 %v2468, 7
  %v2470 = vsub.s32 0, %v2469
  %v2471 = vrot.slane %v2219, %v2470
  %v2472 = vlaneseq
  %v2473 = vshrl.u32 %v2472, 7
  %v2474 = vsub.s32 0, %v2473
  %v2475 = vrot.slane %v2221, %v2474
  %v2476 = vlaneseq
  %v2477 = vshrl.u32 %v2476, 7
  %v2478 = vsub.s32 0, %v2477
  %v2479 = vrot.slane %v2223, %v2478
  %v2544 = vmul.f32 %v614, %v2227
  %v2545 = vmul.f32 %v618, %v2227
  %v2546 = vmul.f32 %v622, %v2227
  %v2547 = vmul.f32 %v626, %v2227
  %v2548 = vmul.f32 %v633, %v2231
  %v2549 = vmul.f32 %v637, %v2231
  %v2550 = vmul.f32 %v641, %v2231
  %v2551 = vmul.f32 %v645, %v2231
  %v2552 = vmul.f32 %v652, %v2235
  %v2553 = vmul.f32 %v656, %v2235
  %v2554 = vmul.f32 %v660, %v2235
  %v2555 = vmul.f32 %v664, %v2235
  %v2556 = vmul.f32 %v671, %v2239
  %v2557 = vmul.f32 %v675, %v2239
  %v2558 = vmul.f32 %v679, %v2239
  %v2559 = vmul.f32 %v683, %v2239
  %v2560 = vmul.f32 %v690, %v2243
  %v2561 = vmul.f32 %v694, %v2243
  %v2562 = vmul.f32 %v698, %v2243
  %v2563 = vmul.f32 %v702, %v2243
  %v2564 = vmul.f32 %v709, %v2247
  %v2565 = vmul.f32 %v713, %v2247
  %v2566 = vmul.f32 %v717, %v2247
  %v2567 = vmul.f32 %v721, %v2247
  %v2568 = vmul.f32 %v728, %v2251
  %v2569 = vmul.f32 %v732, %v2251
  %v2570 = vmul.f32 %v736, %v2251
  %v2571 = vmul.f32 %v740, %v2251
  %v2572 = vmul.f32 %v747, %v2255
  %v2573 = vmul.f32 %v751, %v2255
  %v2574 = vmul.f32 %v755, %v2255
  %v2575 = vmul.f32 %v759, %v2255
  %v2576 = vmul.f32 %v766, %v2259
  %v2577 = vmul.f32 %v770, %v2259
  %v2578 = vmul.f32 %v774, %v2259
  %v2579 = vmul.f32 %v778, %v2259
  %v2580 = vmul.f32 %v785, %v2263
  %v2581 = vmul.f32 %v789, %v2263
  %v2582 = vmul.f32 %v793, %v2263
  %v2583 = vmul.f32 %v797, %v2263
  %v2584 = vmul.f32 %v804, %v2267
  %v2585 = vmul.f32 %v808, %v2267
  %v2586 = vmul.f32 %v812, %v2267
  %v2587 = vmul.f32 %v816, %v2267
  %v2588 = vmul.f32 %v823, %v2271
  %v2589 = vmul.f32 %v827, %v2271
  %v2590 = vmul.f32 %v831, %v2271
  %v2591 = vmul.f32 %v835, %v2271
  %v2592 = vmul.f32 %v842, %v2275
  %v2593 = vmul.f32 %v846, %v2275
  %v2594 = vmul.f32 %v850, %v2275
  %v2595 = vmul.f32 %v854, %v2275
  %v2596 = vmul.f32 %v861, %v2279
  %v2597 = vmul.f32 %v865, %v2279
  %v2598 = vmul.f32 %v869, %v2279
  %v2599 = vmul.f32 %v873, %v2279
  %v2600 = vmul.f32 %v880, %v2283
  %v2601 = vmul.f32 %v884, %v2283
  %v2602 = vmul.f32 %v888, %v2283
  %v2603 = vmul.f32 %v892, %v2283
  %v2604 = vmul.f32 %v899, %v2287
  %v2605 = vmul.f32 %v903, %v2287
  %v2606 = vmul.f32 %v907, %v2287
  %v2607 = vmul.f32 %v911, %v2287
  %v2608 = vmul.f32 %v918, %v2291
  %v2609 = vmul.f32 %v922, %v2291
  %v2610 = vmul.f32 %v926, %v2291
  %v2611 = vmul.f32 %v930, %v2291
  %v2612 = vmul.f32 %v937, %v2295
  %v2613 = vmul.f32 %v941, %v2295
  %v2614 = vmul.f32 %v945, %v2295
  %v2615 = vmul.f32 %v949, %v2295
  %v2616 = vmul.f32 %v956, %v2299
  %v2617 = vmul.f32 %v960, %v2299
  %v2618 = vmul.f32 %v964, %v2299
  %v2619 = vmul.f32 %v968, %v2299
  %v2620 = vmul.f32 %v975, %v2303
  %v2621 = vmul.f32 %v979, %v2303
  %v2622 = vmul.f32 %v983, %v2303
  %v2623 = vmul.f32 %v987, %v2303
  %v2624 = vmul.f32 %v994, %v2307
  %v2625 = vmul.f32 %v998, %v2307
  %v2626 = vmul.f32 %v1002, %v2307
  %v2627 = vmul.f32 %v1006, %v2307
  %v2628 = vmul.f32 %v1013, %v2311
  %v2629 = vmul.f32 %v1017, %v2311
  %v2630 = vmul.f32 %v1021, %v2311
  %v2631 = vmul.f32 %v1025, %v2311
  %v2632 = vmul.f32 %v1032, %v2315
  %v2633 = vmul.f32 %v1036, %v2315
  %v2634 = vmul.f32 %v1040, %v2315
  %v2635 = vmul.f32 %v1044, %v2315
  %v2636 = vmul.f32 %v1051, %v2319
  %v2637 = vmul.f32 %v1055, %v2319
  %v2638 = vmul.f32 %v1059, %v2319
  %v2639 = vmul.f32 %v1063, %v2319
  %v2640 = vmul.f32 %v1070, %v2323
  %v2641 = vmul.f32 %v1074, %v2323
  %v2642 = vmul.f32 %v1078, %v2323
  %v2643 = vmul.f32 %v1082, %v2323
  %v2644 = vmul.f32 %v1089, %v2327
  %v2645 = vmul.f32 %v1093, %v2327
  %v2646 = vmul.f32 %v1097, %v2327
  %v2647 = vmul.f32 %v1101, %v2327
  %v2648 = vmul.f32 %v1108, %v2331
  %v2649 = vmul.f32 %v1112, %v2331
  %v2650 = vmul.f32 %v1116, %v2331
  %v2651 = vmul.f32 %v1120, %v2331
  %v2652 = vmul.f32 %v1127, %v2335
  %v2653 = vmul.f32 %v1131, %v2335
  %v2654 = vmul.f32 %v1135, %v2335
  %v2655 = vmul.f32 %v1139, %v2335
  %v2656 = vmul.f32 %v1146, %v2339
  %v2657 = vmul.f32 %v1150, %v2339
  %v2658 = vmul.f32 %v1154, %v2339
  %v2659 = vmul.f32 %v1158, %v2339
  %v2660 = vmul.f32 %v1165, %v2343
  %v2661 = vmul.f32 %v1169, %v2343
  %v2662 = vmul.f32 %v1173, %v2343
  %v2663 = vmul.f32 %v1177, %v2343
  %v2664 = vmul.f32 %v1184, %v2347
  %v2665 = vmul.f32 %v1188, %v2347
  %v2666 = vmul.f32 %v1192, %v2347
  %v2667 = vmul.f32 %v1196, %v2347
  %v2668 = vmul.f32 %v1203, %v2351
  %v2669 = vmul.f32 %v1207, %v2351
  %v2670 = vmul.f32 %v1211, %v2351
  %v2671 = vmul.f32 %v1215, %v2351
  %v2672 = vmul.f32 %v1222, %v2355
  %v2673 = vmul.f32 %v1226, %v2355
  %v2674 = vmul.f32 %v1230, %v2355
  %v2675 = vmul.f32 %v1234, %v2355
  %v2676 = vmul.f32 %v1241, %v2359
  %v2677 = vmul.f32 %v1245, %v2359
  %v2678 = vmul.f32 %v1249, %v2359
  %v2679 = vmul.f32 %v1253, %v2359
  %v2680 = vmul.f32 %v1260, %v2363
  %v2681 = vmul.f32 %v1264, %v2363
  %v2682 = vmul.f32 %v1268, %v2363
  %v2683 = vmul.f32 %v1272, %v2363
  %v2684 = vmul.f32 %v1279, %v2367
  %v2685 = vmul.f32 %v1283, %v2367
  %v2686 = vmul.f32 %v1287, %v2367
  %v2687 = vmul.f32 %v1291, %v2367
  %v2688 = vmul.f32 %v1298, %v2371
  %v2689 = vmul.f32 %v1302, %v2371
  %v2690 = vmul.f32 %v1306, %v2371
  %v2691 = vmul.f32 %v1310, %v2371
  %v2692 = vmul.f32 %v1317, %v2375
  %v2693 = vmul.f32 %v1321, %v2375
  %v2694 = vmul.f32 %v1325, %v2375
  %v2695 = vmul.f32 %v1329, %v2375
  %v2696 = vmul.f32 %v1336, %v2379
  %v2697 = vmul.f32 %v1340, %v2379
  %v2698 = vmul.f32 %v1344, %v2379
  %v2699 = vmul.f32 %v1348, %v2379
  %v2700 = vmul.f32 %v1355, %v2383
  %v2701 = vmul.f32 %v1359, %v2383
  %v2702 = vmul.f32 %v1363, %v2383
  %v2703 = vmul.f32 %v1367, %v2383
  %v2704 = vmul.f32 %v1374, %v2387
  %v2705 = vmul.f32 %v1378, %v2387
  %v2706 = vmul.f32 %v1382, %v2387
  %v2707 = vmul.f32 %v1386, %v2387
  %v2708 = vmul.f32 %v1393, %v2391
  %v2709 = vmul.f32 %v1397, %v2391
  %v2710 = vmul.f32 %v1401, %v2391
  %v2711 = vmul.f32 %v1405, %v2391
  %v2712 = vmul.f32 %v1412, %v2395
  %v2713 = vmul.f32 %v1416, %v2395
  %v2714 = vmul.f32 %v1420, %v2395
  %v2715 = vmul.f32 %v1424, %v2395
  %v2716 = vmul.f32 %v1431, %v2399
  %v2717 = vmul.f32 %v1435, %v2399
  %v2718 = vmul.f32 %v1439, %v2399
  %v2719 = vmul.f32 %v1443, %v2399
  %v2720 = vmul.f32 %v1450, %v2403
  %v2721 = vmul.f32 %v1454, %v2403
  %v2722 = vmul.f32 %v1458, %v2403
  %v2723 = vmul.f32 %v1462, %v2403
  %v2724 = vmul.f32 %v1469, %v2407
  %v2725 = vmul.f32 %v1473, %v2407
  %v2726 = vmul.f32 %v1477, %v2407
  %v2727 = vmul.f32 %v1481, %v2407
  %v2728 = vmul.f32 %v1488, %v2411
  %v2729 = vmul.f32 %v1492, %v2411
  %v2730 = vmul.f32 %v1496, %v2411
  %v2731 = vmul.f32 %v1500, %v2411
  %v2732 = vmul.f32 %v1507, %v2415
  %v2733 = vmul.f32 %v1511, %v2415
  %v2734 = vmul.f32 %v1515, %v2415
  %v2735 = vmul.f32 %v1519, %v2415
  %v2736 = vmul.f32 %v1526, %v2419
  %v2737 = vmul.f32 %v1530, %v2419
  %v2738 = vmul.f32 %v1534, %v2419
  %v2739 = vmul.f32 %v1538, %v2419
  %v2740 = vmul.f32 %v1545, %v2423
  %v2741 = vmul.f32 %v1549, %v2423
  %v2742 = vmul.f32 %v1553, %v2423
  %v2743 = vmul.f32 %v1557, %v2423
  %v2744 = vmul.f32 %v1564, %v2427
  %v2745 = vmul.f32 %v1568, %v2427
  %v2746 = vmul.f32 %v1572, %v2427
  %v2747 = vmul.f32 %v1576, %v2427
  %v2748 = vmul.f32 %v1583, %v2431
  %v2749 = vmul.f32 %v1587, %v2431
  %v2750 = vmul.f32 %v1591, %v2431
  %v2751 = vmul.f32 %v1595, %v2431
  %v2752 = vmul.f32 %v1602, %v2435
  %v2753 = vmul.f32 %v1606, %v2435
  %v2754 = vmul.f32 %v1610, %v2435
  %v2755 = vmul.f32 %v1614, %v2435
  %v2756 = vmul.f32 %v1621, %v2439
  %v2757 = vmul.f32 %v1625, %v2439
  %v2758 = vmul.f32 %v1629, %v2439
  %v2759 = vmul.f32 %v1633, %v2439
  %v2760 = vmul.f32 %v1640, %v2443
  %v2761 = vmul.f32 %v1644, %v2443
  %v2762 = vmul.f32 %v1648, %v2443
  %v2763 = vmul.f32 %v1652, %v2443
  %v2764 = vmul.f32 %v1659, %v2447
  %v2765 = vmul.f32 %v1663, %v2447
  %v2766 = vmul.f32 %v1667, %v2447
  %v2767 = vmul.f32 %v1671, %v2447
  %v2768 = vmul.f32 %v1678, %v2451
  %v2769 = vmul.f32 %v1682, %v2451
  %v2770 = vmul.f32 %v1686, %v2451
  %v2771 = vmul.f32 %v1690, %v2451
  %v2772 = vmul.f32 %v1697, %v2455
  %v2773 = vmul.f32 %v1701, %v2455
  %v2774 = vmul.f32 %v1705, %v2455
  %v2775 = vmul.f32 %v1709, %v2455
  %v2776 = vmul.f32 %v1716, %v2459
  %v2777 = vmul.f32 %v1720, %v2459
  %v2778 = vmul.f32 %v1724, %v2459
  %v2779 = vmul.f32 %v1728, %v2459
  %v2780 = vmul.f32 %v1735, %v2463
  %v2781 = vmul.f32 %v1739, %v2463
  %v2782 = vmul.f32 %v1743, %v2463
  %v2783 = vmul.f32 %v1747, %v2463
  %v2784 = vmul.f32 %v1754, %v2467
  %v2785 = vmul.f32 %v1758, %v2467
  %v2786 = vmul.f32 %v1762, %v2467
  %v2787 = vmul.f32 %v1766, %v2467
  %v2788 = vmul.f32 %v1773, %v2471
  %v2789 = vmul.f32 %v1777, %v2471
  %v2790 = vmul.f32 %v1781, %v2471
  %v2791 = vmul.f32 %v1785, %v2471
  %v2792 = vmul.f32 %v1792, %v2475
  %v2793 = vmul.f32 %v1796, %v2475
  %v2794 = vmul.f32 %v1800, %v2475
  %v2795 = vmul.f32 %v1804, %v2475
  %v2796 = vmul.f32 %v1811, %v2479
  %v2797 = vmul.f32 %v1815, %v2479
  %v2798 = vmul.f32 %v1819, %v2479
  %v2799 = vmul.f32 %v1823, %v2479
  %v2800 = vsel %vm411, %v2544, -inf
  %v2801 = vsel %vm411, %v2548, -inf
  %v2802 = vmax.f32 %v2800, %v2801
  %v2803 = vsel %vm411, %v2552, -inf
  %v2804 = vmax.f32 %v2802, %v2803
  %v2805 = vsel %vm411, %v2556, -inf
  %v2806 = vmax.f32 %v2804, %v2805
  %v2807 = vsel %vm411, %v2560, -inf
  %v2808 = vmax.f32 %v2806, %v2807
  %v2809 = vsel %vm411, %v2564, -inf
  %v2810 = vmax.f32 %v2808, %v2809
  %v2811 = vsel %vm411, %v2568, -inf
  %v2812 = vmax.f32 %v2810, %v2811
  %v2813 = vsel %vm411, %v2572, -inf
  %v2814 = vmax.f32 %v2812, %v2813
  %v2815 = vsel %vm411, %v2576, -inf
  %v2816 = vmax.f32 %v2814, %v2815
  %v2817 = vsel %vm411, %v2580, -inf
  %v2818 = vmax.f32 %v2816, %v2817
  %v2819 = vsel %vm411, %v2584, -inf
  %v2820 = vmax.f32 %v2818, %v2819
  %v2821 = vsel %vm411, %v2588, -inf
  %v2822 = vmax.f32 %v2820, %v2821
  %v2823 = vsel %vm411, %v2592, -inf
  %v2824 = vmax.f32 %v2822, %v2823
  %v2825 = vsel %vm411, %v2596, -inf
  %v2826 = vmax.f32 %v2824, %v2825
  %v2827 = vsel %vm411, %v2600, -inf
  %v2828 = vmax.f32 %v2826, %v2827
  %v2829 = vsel %vm411, %v2604, -inf
  %v2830 = vmax.f32 %v2828, %v2829
  %v2831 = vsel %vm411, %v2608, -inf
  %v2832 = vmax.f32 %v2830, %v2831
  %v2833 = vsel %vm411, %v2612, -inf
  %v2834 = vmax.f32 %v2832, %v2833
  %v2835 = vsel %vm411, %v2616, -inf
  %v2836 = vmax.f32 %v2834, %v2835
  %v2837 = vsel %vm411, %v2620, -inf
  %v2838 = vmax.f32 %v2836, %v2837
  %v2839 = vsel %vm411, %v2624, -inf
  %v2840 = vmax.f32 %v2838, %v2839
  %v2841 = vsel %vm411, %v2628, -inf
  %v2842 = vmax.f32 %v2840, %v2841
  %v2843 = vsel %vm411, %v2632, -inf
  %v2844 = vmax.f32 %v2842, %v2843
  %v2845 = vsel %vm411, %v2636, -inf
  %v2846 = vmax.f32 %v2844, %v2845
  %v2847 = vsel %vm411, %v2640, -inf
  %v2848 = vmax.f32 %v2846, %v2847
  %v2849 = vsel %vm411, %v2644, -inf
  %v2850 = vmax.f32 %v2848, %v2849
  %v2851 = vsel %vm411, %v2648, -inf
  %v2852 = vmax.f32 %v2850, %v2851
  %v2853 = vsel %vm411, %v2652, -inf
  %v2854 = vmax.f32 %v2852, %v2853
  %v2855 = vsel %vm411, %v2656, -inf
  %v2856 = vmax.f32 %v2854, %v2855
  %v2857 = vsel %vm411, %v2660, -inf
  %v2858 = vmax.f32 %v2856, %v2857
  %v2859 = vsel %vm411, %v2664, -inf
  %v2860 = vmax.f32 %v2858, %v2859
  %v2861 = vsel %vm411, %v2668, -inf
  %v2862 = vmax.f32 %v2860, %v2861
  %v2863 = vsel %vm411, %v2672, -inf
  %v2864 = vmax.f32 %v2862, %v2863
  %v2865 = vsel %vm411, %v2676, -inf
  %v2866 = vmax.f32 %v2864, %v2865
  %v2867 = vsel %vm411, %v2680, -inf
  %v2868 = vmax.f32 %v2866, %v2867
  %v2869 = vsel %vm411, %v2684, -inf
  %v2870 = vmax.f32 %v2868, %v2869
  %v2871 = vsel %vm411, %v2688, -inf
  %v2872 = vmax.f32 %v2870, %v2871
  %v2873 = vsel %vm411, %v2692, -inf
  %v2874 = vmax.f32 %v2872, %v2873
  %v2875 = vsel %vm411, %v2696, -inf
  %v2876 = vmax.f32 %v2874, %v2875
  %v2877 = vsel %vm411, %v2700, -inf
  %v2878 = vmax.f32 %v2876, %v2877
  %v2879 = vsel %vm411, %v2704, -inf
  %v2880 = vmax.f32 %v2878, %v2879
  %v2881 = vsel %vm411, %v2708, -inf
  %v2882 = vmax.f32 %v2880, %v2881
  %v2883 = vsel %vm411, %v2712, -inf
  %v2884 = vmax.f32 %v2882, %v2883
  %v2885 = vsel %vm411, %v2716, -inf
  %v2886 = vmax.f32 %v2884, %v2885
  %v2887 = vsel %vm411, %v2720, -inf
  %v2888 = vmax.f32 %v2886, %v2887
  %v2889 = vsel %vm411, %v2724, -inf
  %v2890 = vmax.f32 %v2888, %v2889
  %v2891 = vsel %vm411, %v2728, -inf
  %v2892 = vmax.f32 %v2890, %v2891
  %v2893 = vsel %vm411, %v2732, -inf
  %v2894 = vmax.f32 %v2892, %v2893
  %v2895 = vsel %vm411, %v2736, -inf
  %v2896 = vmax.f32 %v2894, %v2895
  %v2897 = vsel %vm411, %v2740, -inf
  %v2898 = vmax.f32 %v2896, %v2897
  %v2899 = vsel %vm411, %v2744, -inf
  %v2900 = vmax.f32 %v2898, %v2899
  %v2901 = vsel %vm411, %v2748, -inf
  %v2902 = vmax.f32 %v2900, %v2901
  %v2903 = vsel %vm411, %v2752, -inf
  %v2904 = vmax.f32 %v2902, %v2903
  %v2905 = vsel %vm411, %v2756, -inf
  %v2906 = vmax.f32 %v2904, %v2905
  %v2907 = vsel %vm411, %v2760, -inf
  %v2908 = vmax.f32 %v2906, %v2907
  %v2909 = vsel %vm411, %v2764, -inf
  %v2910 = vmax.f32 %v2908, %v2909
  %v2911 = vsel %vm411, %v2768, -inf
  %v2912 = vmax.f32 %v2910, %v2911
  %v2913 = vsel %vm411, %v2772, -inf
  %v2914 = vmax.f32 %v2912, %v2913
  %v2915 = vsel %vm411, %v2776, -inf
  %v2916 = vmax.f32 %v2914, %v2915
  %v2917 = vsel %vm411, %v2780, -inf
  %v2918 = vmax.f32 %v2916, %v2917
  %v2919 = vsel %vm411, %v2784, -inf
  %v2920 = vmax.f32 %v2918, %v2919
  %v2921 = vsel %vm411, %v2788, -inf
  %v2922 = vmax.f32 %v2920, %v2921
  %v2923 = vsel %vm411, %v2792, -inf
  %v2924 = vmax.f32 %v2922, %v2923
  %v2925 = vsel %vm411, %v2796, -inf
  %v2926 = vmax.f32 %v2924, %v2925
  %v2927 = vsel %vm411, %v2545, -inf
  %v2928 = vsel %vm411, %v2549, -inf
  %v2929 = vmax.f32 %v2927, %v2928
  %v2930 = vsel %vm411, %v2553, -inf
  %v2931 = vmax.f32 %v2929, %v2930
  %v2932 = vsel %vm411, %v2557, -inf
  %v2933 = vmax.f32 %v2931, %v2932
  %v2934 = vsel %vm411, %v2561, -inf
  %v2935 = vmax.f32 %v2933, %v2934
  %v2936 = vsel %vm411, %v2565, -inf
  %v2937 = vmax.f32 %v2935, %v2936
  %v2938 = vsel %vm411, %v2569, -inf
  %v2939 = vmax.f32 %v2937, %v2938
  %v2940 = vsel %vm411, %v2573, -inf
  %v2941 = vmax.f32 %v2939, %v2940
  %v2942 = vsel %vm411, %v2577, -inf
  %v2943 = vmax.f32 %v2941, %v2942
  %v2944 = vsel %vm411, %v2581, -inf
  %v2945 = vmax.f32 %v2943, %v2944
  %v2946 = vsel %vm411, %v2585, -inf
  %v2947 = vmax.f32 %v2945, %v2946
  %v2948 = vsel %vm411, %v2589, -inf
  %v2949 = vmax.f32 %v2947, %v2948
  %v2950 = vsel %vm411, %v2593, -inf
  %v2951 = vmax.f32 %v2949, %v2950
  %v2952 = vsel %vm411, %v2597, -inf
  %v2953 = vmax.f32 %v2951, %v2952
  %v2954 = vsel %vm411, %v2601, -inf
  %v2955 = vmax.f32 %v2953, %v2954
  %v2956 = vsel %vm411, %v2605, -inf
  %v2957 = vmax.f32 %v2955, %v2956
  %v2958 = vsel %vm411, %v2609, -inf
  %v2959 = vmax.f32 %v2957, %v2958
  %v2960 = vsel %vm411, %v2613, -inf
  %v2961 = vmax.f32 %v2959, %v2960
  %v2962 = vsel %vm411, %v2617, -inf
  %v2963 = vmax.f32 %v2961, %v2962
  %v2964 = vsel %vm411, %v2621, -inf
  %v2965 = vmax.f32 %v2963, %v2964
  %v2966 = vsel %vm411, %v2625, -inf
  %v2967 = vmax.f32 %v2965, %v2966
  %v2968 = vsel %vm411, %v2629, -inf
  %v2969 = vmax.f32 %v2967, %v2968
  %v2970 = vsel %vm411, %v2633, -inf
  %v2971 = vmax.f32 %v2969, %v2970
  %v2972 = vsel %vm411, %v2637, -inf
  %v2973 = vmax.f32 %v2971, %v2972
  %v2974 = vsel %vm411, %v2641, -inf
  %v2975 = vmax.f32 %v2973, %v2974
  %v2976 = vsel %vm411, %v2645, -inf
  %v2977 = vmax.f32 %v2975, %v2976
  %v2978 = vsel %vm411, %v2649, -inf
  %v2979 = vmax.f32 %v2977, %v2978
  %v2980 = vsel %vm411, %v2653, -inf
  %v2981 = vmax.f32 %v2979, %v2980
  %v2982 = vsel %vm411, %v2657, -inf
  %v2983 = vmax.f32 %v2981, %v2982
  %v2984 = vsel %vm411, %v2661, -inf
  %v2985 = vmax.f32 %v2983, %v2984
  %v2986 = vsel %vm411, %v2665, -inf
  %v2987 = vmax.f32 %v2985, %v2986
  %v2988 = vsel %vm411, %v2669, -inf
  %v2989 = vmax.f32 %v2987, %v2988
  %v2990 = vsel %vm411, %v2673, -inf
  %v2991 = vmax.f32 %v2989, %v2990
  %v2992 = vsel %vm411, %v2677, -inf
  %v2993 = vmax.f32 %v2991, %v2992
  %v2994 = vsel %vm411, %v2681, -inf
  %v2995 = vmax.f32 %v2993, %v2994
  %v2996 = vsel %vm411, %v2685, -inf
  %v2997 = vmax.f32 %v2995, %v2996
  %v2998 = vsel %vm411, %v2689, -inf
  %v2999 = vmax.f32 %v2997, %v2998
  %v3000 = vsel %vm411, %v2693, -inf
  %v3001 = vmax.f32 %v2999, %v3000
  %v3002 = vsel %vm411, %v2697, -inf
  %v3003 = vmax.f32 %v3001, %v3002
  %v3004 = vsel %vm411, %v2701, -inf
  %v3005 = vmax.f32 %v3003, %v3004
  %v3006 = vsel %vm411, %v2705, -inf
  %v3007 = vmax.f32 %v3005, %v3006
  %v3008 = vsel %vm411, %v2709, -inf
  %v3009 = vmax.f32 %v3007, %v3008
  %v3010 = vsel %vm411, %v2713, -inf
  %v3011 = vmax.f32 %v3009, %v3010
  %v3012 = vsel %vm411, %v2717, -inf
  %v3013 = vmax.f32 %v3011, %v3012
  %v3014 = vsel %vm411, %v2721, -inf
  %v3015 = vmax.f32 %v3013, %v3014
  %v3016 = vsel %vm411, %v2725, -inf
  %v3017 = vmax.f32 %v3015, %v3016
  %v3018 = vsel %vm411, %v2729, -inf
  %v3019 = vmax.f32 %v3017, %v3018
  %v3020 = vsel %vm411, %v2733, -inf
  %v3021 = vmax.f32 %v3019, %v3020
  %v3022 = vsel %vm411, %v2737, -inf
  %v3023 = vmax.f32 %v3021, %v3022
  %v3024 = vsel %vm411, %v2741, -inf
  %v3025 = vmax.f32 %v3023, %v3024
  %v3026 = vsel %vm411, %v2745, -inf
  %v3027 = vmax.f32 %v3025, %v3026
  %v3028 = vsel %vm411, %v2749, -inf
  %v3029 = vmax.f32 %v3027, %v3028
  %v3030 = vsel %vm411, %v2753, -inf
  %v3031 = vmax.f32 %v3029, %v3030
  %v3032 = vsel %vm411, %v2757, -inf
  %v3033 = vmax.f32 %v3031, %v3032
  %v3034 = vsel %vm411, %v2761, -inf
  %v3035 = vmax.f32 %v3033, %v3034
  %v3036 = vsel %vm411, %v2765, -inf
  %v3037 = vmax.f32 %v3035, %v3036
  %v3038 = vsel %vm411, %v2769, -inf
  %v3039 = vmax.f32 %v3037, %v3038
  %v3040 = vsel %vm411, %v2773, -inf
  %v3041 = vmax.f32 %v3039, %v3040
  %v3042 = vsel %vm411, %v2777, -inf
  %v3043 = vmax.f32 %v3041, %v3042
  %v3044 = vsel %vm411, %v2781, -inf
  %v3045 = vmax.f32 %v3043, %v3044
  %v3046 = vsel %vm411, %v2785, -inf
  %v3047 = vmax.f32 %v3045, %v3046
  %v3048 = vsel %vm411, %v2789, -inf
  %v3049 = vmax.f32 %v3047, %v3048
  %v3050 = vsel %vm411, %v2793, -inf
  %v3051 = vmax.f32 %v3049, %v3050
  %v3052 = vsel %vm411, %v2797, -inf
  %v3053 = vmax.f32 %v3051, %v3052
  %v3054 = vsel %vm411, %v2546, -inf
  %v3055 = vsel %vm411, %v2550, -inf
  %v3056 = vmax.f32 %v3054, %v3055
  %v3057 = vsel %vm411, %v2554, -inf
  %v3058 = vmax.f32 %v3056, %v3057
  %v3059 = vsel %vm411, %v2558, -inf
  %v3060 = vmax.f32 %v3058, %v3059
  %v3061 = vsel %vm411, %v2562, -inf
  %v3062 = vmax.f32 %v3060, %v3061
  %v3063 = vsel %vm411, %v2566, -inf
  %v3064 = vmax.f32 %v3062, %v3063
  %v3065 = vsel %vm411, %v2570, -inf
  %v3066 = vmax.f32 %v3064, %v3065
  %v3067 = vsel %vm411, %v2574, -inf
  %v3068 = vmax.f32 %v3066, %v3067
  %v3069 = vsel %vm411, %v2578, -inf
  %v3070 = vmax.f32 %v3068, %v3069
  %v3071 = vsel %vm411, %v2582, -inf
  %v3072 = vmax.f32 %v3070, %v3071
  %v3073 = vsel %vm411, %v2586, -inf
  %v3074 = vmax.f32 %v3072, %v3073
  %v3075 = vsel %vm411, %v2590, -inf
  %v3076 = vmax.f32 %v3074, %v3075
  %v3077 = vsel %vm411, %v2594, -inf
  %v3078 = vmax.f32 %v3076, %v3077
  %v3079 = vsel %vm411, %v2598, -inf
  %v3080 = vmax.f32 %v3078, %v3079
  %v3081 = vsel %vm411, %v2602, -inf
  %v3082 = vmax.f32 %v3080, %v3081
  %v3083 = vsel %vm411, %v2606, -inf
  %v3084 = vmax.f32 %v3082, %v3083
  %v3085 = vsel %vm411, %v2610, -inf
  %v3086 = vmax.f32 %v3084, %v3085
  %v3087 = vsel %vm411, %v2614, -inf
  %v3088 = vmax.f32 %v3086, %v3087
  %v3089 = vsel %vm411, %v2618, -inf
  %v3090 = vmax.f32 %v3088, %v3089
  %v3091 = vsel %vm411, %v2622, -inf
  %v3092 = vmax.f32 %v3090, %v3091
  %v3093 = vsel %vm411, %v2626, -inf
  %v3094 = vmax.f32 %v3092, %v3093
  %v3095 = vsel %vm411, %v2630, -inf
  %v3096 = vmax.f32 %v3094, %v3095
  %v3097 = vsel %vm411, %v2634, -inf
  %v3098 = vmax.f32 %v3096, %v3097
  %v3099 = vsel %vm411, %v2638, -inf
  %v3100 = vmax.f32 %v3098, %v3099
  %v3101 = vsel %vm411, %v2642, -inf
  %v3102 = vmax.f32 %v3100, %v3101
  %v3103 = vsel %vm411, %v2646, -inf
  %v3104 = vmax.f32 %v3102, %v3103
  %v3105 = vsel %vm411, %v2650, -inf
  %v3106 = vmax.f32 %v3104, %v3105
  %v3107 = vsel %vm411, %v2654, -inf
  %v3108 = vmax.f32 %v3106, %v3107
  %v3109 = vsel %vm411, %v2658, -inf
  %v3110 = vmax.f32 %v3108, %v3109
  %v3111 = vsel %vm411, %v2662, -inf
  %v3112 = vmax.f32 %v3110, %v3111
  %v3113 = vsel %vm411, %v2666, -inf
  %v3114 = vmax.f32 %v3112, %v3113
  %v3115 = vsel %vm411, %v2670, -inf
  %v3116 = vmax.f32 %v3114, %v3115
  %v3117 = vsel %vm411, %v2674, -inf
  %v3118 = vmax.f32 %v3116, %v3117
  %v3119 = vsel %vm411, %v2678, -inf
  %v3120 = vmax.f32 %v3118, %v3119
  %v3121 = vsel %vm411, %v2682, -inf
  %v3122 = vmax.f32 %v3120, %v3121
  %v3123 = vsel %vm411, %v2686, -inf
  %v3124 = vmax.f32 %v3122, %v3123
  %v3125 = vsel %vm411, %v2690, -inf
  %v3126 = vmax.f32 %v3124, %v3125
  %v3127 = vsel %vm411, %v2694, -inf
  %v3128 = vmax.f32 %v3126, %v3127
  %v3129 = vsel %vm411, %v2698, -inf
  %v3130 = vmax.f32 %v3128, %v3129
  %v3131 = vsel %vm411, %v2702, -inf
  %v3132 = vmax.f32 %v3130, %v3131
  %v3133 = vsel %vm411, %v2706, -inf
  %v3134 = vmax.f32 %v3132, %v3133
  %v3135 = vsel %vm411, %v2710, -inf
  %v3136 = vmax.f32 %v3134, %v3135
  %v3137 = vsel %vm411, %v2714, -inf
  %v3138 = vmax.f32 %v3136, %v3137
  %v3139 = vsel %vm411, %v2718, -inf
  %v3140 = vmax.f32 %v3138, %v3139
  %v3141 = vsel %vm411, %v2722, -inf
  %v3142 = vmax.f32 %v3140, %v3141
  %v3143 = vsel %vm411, %v2726, -inf
  %v3144 = vmax.f32 %v3142, %v3143
  %v3145 = vsel %vm411, %v2730, -inf
  %v3146 = vmax.f32 %v3144, %v3145
  %v3147 = vsel %vm411, %v2734, -inf
  %v3148 = vmax.f32 %v3146, %v3147
  %v3149 = vsel %vm411, %v2738, -inf
  %v3150 = vmax.f32 %v3148, %v3149
  %v3151 = vsel %vm411, %v2742, -inf
  %v3152 = vmax.f32 %v3150, %v3151
  %v3153 = vsel %vm411, %v2746, -inf
  %v3154 = vmax.f32 %v3152, %v3153
  %v3155 = vsel %vm411, %v2750, -inf
  %v3156 = vmax.f32 %v3154, %v3155
  %v3157 = vsel %vm411, %v2754, -inf
  %v3158 = vmax.f32 %v3156, %v3157
  %v3159 = vsel %vm411, %v2758, -inf
  %v3160 = vmax.f32 %v3158, %v3159
  %v3161 = vsel %vm411, %v2762, -inf
  %v3162 = vmax.f32 %v3160, %v3161
  %v3163 = vsel %vm411, %v2766, -inf
  %v3164 = vmax.f32 %v3162, %v3163
  %v3165 = vsel %vm411, %v2770, -inf
  %v3166 = vmax.f32 %v3164, %v3165
  %v3167 = vsel %vm411, %v2774, -inf
  %v3168 = vmax.f32 %v3166, %v3167
  %v3169 = vsel %vm411, %v2778, -inf
  %v3170 = vmax.f32 %v3168, %v3169
  %v3171 = vsel %vm411, %v2782, -inf
  %v3172 = vmax.f32 %v3170, %v3171
  %v3173 = vsel %vm411, %v2786, -inf
  %v3174 = vmax.f32 %v3172, %v3173
  %v3175 = vsel %vm411, %v2790, -inf
  %v3176 = vmax.f32 %v3174, %v3175
  %v3177 = vsel %vm411, %v2794, -inf
  %v3178 = vmax.f32 %v3176, %v3177
  %v3179 = vsel %vm411, %v2798, -inf
  %v3180 = vmax.f32 %v3178, %v3179
  %v3181 = vsel %vm411, %v2547, -inf
  %v3182 = vsel %vm411, %v2551, -inf
  %v3183 = vmax.f32 %v3181, %v3182
  %v3184 = vsel %vm411, %v2555, -inf
  %v3185 = vmax.f32 %v3183, %v3184
  %v3186 = vsel %vm411, %v2559, -inf
  %v3187 = vmax.f32 %v3185, %v3186
  %v3188 = vsel %vm411, %v2563, -inf
  %v3189 = vmax.f32 %v3187, %v3188
  %v3190 = vsel %vm411, %v2567, -inf
  %v3191 = vmax.f32 %v3189, %v3190
  %v3192 = vsel %vm411, %v2571, -inf
  %v3193 = vmax.f32 %v3191, %v3192
  %v3194 = vsel %vm411, %v2575, -inf
  %v3195 = vmax.f32 %v3193, %v3194
  %v3196 = vsel %vm411, %v2579, -inf
  %v3197 = vmax.f32 %v3195, %v3196
  %v3198 = vsel %vm411, %v2583, -inf
  %v3199 = vmax.f32 %v3197, %v3198
  %v3200 = vsel %vm411, %v2587, -inf
  %v3201 = vmax.f32 %v3199, %v3200
  %v3202 = vsel %vm411, %v2591, -inf
  %v3203 = vmax.f32 %v3201, %v3202
  %v3204 = vsel %vm411, %v2595, -inf
  %v3205 = vmax.f32 %v3203, %v3204
  %v3206 = vsel %vm411, %v2599, -inf
  %v3207 = vmax.f32 %v3205, %v3206
  %v3208 = vsel %vm411, %v2603, -inf
  %v3209 = vmax.f32 %v3207, %v3208
  %v3210 = vsel %vm411, %v2607, -inf
  %v3211 = vmax.f32 %v3209, %v3210
  %v3212 = vsel %vm411, %v2611, -inf
  %v3213 = vmax.f32 %v3211, %v3212
  %v3214 = vsel %vm411, %v2615, -inf
  %v3215 = vmax.f32 %v3213, %v3214
  %v3216 = vsel %vm411, %v2619, -inf
  %v3217 = vmax.f32 %v3215, %v3216
  %v3218 = vsel %vm411, %v2623, -inf
  %v3219 = vmax.f32 %v3217, %v3218
  %v3220 = vsel %vm411, %v2627, -inf
  %v3221 = vmax.f32 %v3219, %v3220
  %v3222 = vsel %vm411, %v2631, -inf
  %v3223 = vmax.f32 %v3221, %v3222
  %v3224 = vsel %vm411, %v2635, -inf
  %v3225 = vmax.f32 %v3223, %v3224
  %v3226 = vsel %vm411, %v2639, -inf
  %v3227 = vmax.f32 %v3225, %v3226
  %v3228 = vsel %vm411, %v2643, -inf
  %v3229 = vmax.f32 %v3227, %v3228
  %v3230 = vsel %vm411, %v2647, -inf
  %v3231 = vmax.f32 %v3229, %v3230
  %v3232 = vsel %vm411, %v2651, -inf
  %v3233 = vmax.f32 %v3231, %v3232
  %v3234 = vsel %vm411, %v2655, -inf
  %v3235 = vmax.f32 %v3233, %v3234
  %v3236 = vsel %vm411, %v2659, -inf
  %v3237 = vmax.f32 %v3235, %v3236
  %v3238 = vsel %vm411, %v2663, -inf
  %v3239 = vmax.f32 %v3237, %v3238
  %v3240 = vsel %vm411, %v2667, -inf
  %v3241 = vmax.f32 %v3239, %v3240
  %v3242 = vsel %vm411, %v2671, -inf
  %v3243 = vmax.f32 %v3241, %v3242
  %v3244 = vsel %vm411, %v2675, -inf
  %v3245 = vmax.f32 %v3243, %v3244
  %v3246 = vsel %vm411, %v2679, -inf
  %v3247 = vmax.f32 %v3245, %v3246
  %v3248 = vsel %vm411, %v2683, -inf
  %v3249 = vmax.f32 %v3247, %v3248
  %v3250 = vsel %vm411, %v2687, -inf
  %v3251 = vmax.f32 %v3249, %v3250
  %v3252 = vsel %vm411, %v2691, -inf
  %v3253 = vmax.f32 %v3251, %v3252
  %v3254 = vsel %vm411, %v2695, -inf
  %v3255 = vmax.f32 %v3253, %v3254
  %v3256 = vsel %vm411, %v2699, -inf
  %v3257 = vmax.f32 %v3255, %v3256
  %v3258 = vsel %vm411, %v2703, -inf
  %v3259 = vmax.f32 %v3257, %v3258
  %v3260 = vsel %vm411, %v2707, -inf
  %v3261 = vmax.f32 %v3259, %v3260
  %v3262 = vsel %vm411, %v2711, -inf
  %v3263 = vmax.f32 %v3261, %v3262
  %v3264 = vsel %vm411, %v2715, -inf
  %v3265 = vmax.f32 %v3263, %v3264
  %v3266 = vsel %vm411, %v2719, -inf
  %v3267 = vmax.f32 %v3265, %v3266
  %v3268 = vsel %vm411, %v2723, -inf
  %v3269 = vmax.f32 %v3267, %v3268
  %v3270 = vsel %vm411, %v2727, -inf
  %v3271 = vmax.f32 %v3269, %v3270
  %v3272 = vsel %vm411, %v2731, -inf
  %v3273 = vmax.f32 %v3271, %v3272
  %v3274 = vsel %vm411, %v2735, -inf
  %v3275 = vmax.f32 %v3273, %v3274
  %v3276 = vsel %vm411, %v2739, -inf
  %v3277 = vmax.f32 %v3275, %v3276
  %v3278 = vsel %vm411, %v2743, -inf
  %v3279 = vmax.f32 %v3277, %v3278
  %v3280 = vsel %vm411, %v2747, -inf
  %v3281 = vmax.f32 %v3279, %v3280
  %v3282 = vsel %vm411, %v2751, -inf
  %v3283 = vmax.f32 %v3281, %v3282
  %v3284 = vsel %vm411, %v2755, -inf
  %v3285 = vmax.f32 %v3283, %v3284
  %v3286 = vsel %vm411, %v2759, -inf
  %v3287 = vmax.f32 %v3285, %v3286
  %v3288 = vsel %vm411, %v2763, -inf
  %v3289 = vmax.f32 %v3287, %v3288
  %v3290 = vsel %vm411, %v2767, -inf
  %v3291 = vmax.f32 %v3289, %v3290
  %v3292 = vsel %vm411, %v2771, -inf
  %v3293 = vmax.f32 %v3291, %v3292
  %v3294 = vsel %vm411, %v2775, -inf
  %v3295 = vmax.f32 %v3293, %v3294
  %v3296 = vsel %vm411, %v2779, -inf
  %v3297 = vmax.f32 %v3295, %v3296
  %v3298 = vsel %vm411, %v2783, -inf
  %v3299 = vmax.f32 %v3297, %v3298
  %v3300 = vsel %vm411, %v2787, -inf
  %v3301 = vmax.f32 %v3299, %v3300
  %v3302 = vsel %vm411, %v2791, -inf
  %v3303 = vmax.f32 %v3301, %v3302
  %v3304 = vsel %vm411, %v2795, -inf
  %v3305 = vmax.f32 %v3303, %v3304
  %v3306 = vsel %vm411, %v2799, -inf
  %v3307 = vmax.f32 %v3305, %v3306
  %v3308 = vld [vmem:[%s7] sm:$0xf]
  %v3309 = vld [vmem:[%s7 + $0x4] sm:$0xf]
  %v3310 = vld [vmem:[%s7 + $0x8] sm:$0xf]
  %v3311 = vld [vmem:[%s7 + $0xc] sm:$0xf]
  %v3312 = vld [vmem:[%s8] sm:$0xf]
  %v3313 = vld [vmem:[%s8 + $0x4] sm:$0xf]
  %v3314 = vld [vmem:[%s8 + $0x8] sm:$0xf]
  %v3315 = vld [vmem:[%s8 + $0xc] sm:$0xf]
  %v3316 = vld [vmem:[%s9] sm:$0x1]
  %v3317 = vpack.c.bf16 %v3053, %v2926
  %v3318 = vpack.c.bf16 %v3307, %v3180
  %v3323 = vunpack.c.l.b16 %v3308
  %v3324 = vunpack.c.l.b16 %v3309
  %v3325 = vunpack.c.l.b16 %v3310
  %v3326 = vunpack.c.l.b16 %v3311
  %v3327 = vpack.c.b16 %v3324, %v3323
  %v3328 = vpack.c.b16 %v3326, %v3325
  %v3332 = vsel %vm411, %v3317, 0
  %v3335 = vsel %vm411, %v3318, 0
  %3337 = vmatprep.subr.bf16.mxu0 0
  %3338 = vmatpush1.bf16.msra.mxu0 %v3327
  %3339 = vmatprep.subr.bf16.mxu0 0
  %3340 = vmatpush1.bf16.msra.mxu0 %v3328
  %3341 = vmatprep.subr.bf16.mxu0 0
  %3342 = vmatpush1.bf16.msra.mxu0 0
  %3343 = vmatprep.subr.bf16.mxu0 0
  %3344 = vmatpush1.bf16.msra.mxu0 0
  %3345 = vmatprep.subr.bf16.mxu0 0
  %3346 = vmatpush1.bf16.msra.mxu0 0
  %3347 = vmatprep.subr.bf16.mxu0 0
  %3348 = vmatpush1.bf16.msra.mxu0 0
  %3349 = vmatprep.subr.bf16.mxu0 0
  %3350 = vmatpush1.bf16.msra.mxu0 0
  %3351 = vmatprep.subr.bf16.mxu0 0
  %3352 = vmatpush1.bf16.msra.mxu0 0
  %3353 = vmatprep.subr.bf16.mxu0 0
  %3354 = vmatpush1.bf16.msra.mxu0 0
  %3355 = vmatprep.subr.bf16.mxu0 0
  %3356 = vmatpush1.bf16.msra.mxu0 0
  %3357 = vmatprep.subr.bf16.mxu0 0
  %3358 = vmatpush1.bf16.msra.mxu0 0
  %3359 = vmatprep.subr.bf16.mxu0 0
  %3360 = vmatpush1.bf16.msra.mxu0 0
  %3361 = vmatprep.subr.bf16.mxu0 0
  %3362 = vmatpush1.bf16.msra.mxu0 0
  %3363 = vmatprep.subr.bf16.mxu0 0
  %3364 = vmatpush1.bf16.msra.mxu0 0
  %3365 = vmatprep.subr.bf16.mxu0 0
  %3366 = vmatpush1.bf16.msra.mxu0 0
  %3367 = vmatprep.subr.bf16.mxu0 0
  %3368 = vmatpush1.bf16.msra.mxu0 0
  %3369 = vmatprep.mubr.bf16.mxu0 0
  %3370 = vmatmul.mubr.bf16.gmra.mrb[0].mxu0 %v3332
  %v3371 = vpop.f32.mrb[0].mxu0
  %v3372 = vadd.f32 0.0, %v3371
  %v3373 = vpop.f32.mrb[0].mxu0
  %v3374 = vpop.f32.mrb[0].mxu0
  %v3375 = vadd.f32 0.0, %v3374
  %v3376 = vpop.f32.mrb[0].mxu0
  %3377 = vmatprep.mubr.bf16.mxu0 0
  %3378 = vmatmul.mubr.bf16.gmra.mrb[0].mxu0 %v3335
  %v3379 = vpop.f32.mrb[0].mxu0
  %v3380 = vadd.f32 0.0, %v3379
  %v3381 = vpop.f32.mrb[0].mxu0
  %v3382 = vpop.f32.mrb[0].mxu0
  %v3383 = vadd.f32 0.0, %v3382
  %v3384 = vpop.f32.mrb[0].mxu0
  %3385 = vdwg.mxu0
  %v3390 = vunpack.c.l.b16 %v3312
  %v3391 = vunpack.c.l.b16 %v3313
  %v3392 = vunpack.c.l.b16 %v3314
  %v3393 = vunpack.c.l.b16 %v3315
  %v3394 = vpack.c.b16 %v3391, %v3390
  %v3395 = vpack.c.b16 %v3393, %v3392
  %3398 = vmatprep.subr.bf16.mxu0 0
  %3399 = vmatpush1.bf16.msra.mxu0 %v3394
  %3400 = vmatprep.subr.bf16.mxu0 0
  %3401 = vmatpush1.bf16.msra.mxu0 %v3395
  %3402 = vmatprep.subr.bf16.mxu0 0
  %3403 = vmatpush1.bf16.msra.mxu0 0
  %3404 = vmatprep.subr.bf16.mxu0 0
  %3405 = vmatpush1.bf16.msra.mxu0 0
  %3406 = vmatprep.subr.bf16.mxu0 0
  %3407 = vmatpush1.bf16.msra.mxu0 0
  %3408 = vmatprep.subr.bf16.mxu0 0
  %3409 = vmatpush1.bf16.msra.mxu0 0
  %3410 = vmatprep.subr.bf16.mxu0 0
  %3411 = vmatpush1.bf16.msra.mxu0 0
  %3412 = vmatprep.subr.bf16.mxu0 0
  %3413 = vmatpush1.bf16.msra.mxu0 0
  %3414 = vmatprep.subr.bf16.mxu0 0
  %3415 = vmatpush1.bf16.msra.mxu0 0
  %3416 = vmatprep.subr.bf16.mxu0 0
  %3417 = vmatpush1.bf16.msra.mxu0 0
  %3418 = vmatprep.subr.bf16.mxu0 0
  %3419 = vmatpush1.bf16.msra.mxu0 0
  %3420 = vmatprep.subr.bf16.mxu0 0
  %3421 = vmatpush1.bf16.msra.mxu0 0
  %3422 = vmatprep.subr.bf16.mxu0 0
  %3423 = vmatpush1.bf16.msra.mxu0 0
  %3424 = vmatprep.subr.bf16.mxu0 0
  %3425 = vmatpush1.bf16.msra.mxu0 0
  %3426 = vmatprep.subr.bf16.mxu0 0
  %3427 = vmatpush1.bf16.msra.mxu0 0
  %3428 = vmatprep.subr.bf16.mxu0 0
  %3429 = vmatpush1.bf16.msra.mxu0 0
  %3430 = vmatprep.mubr.bf16.mxu0 0
  %3431 = vmatmul.mubr.bf16.gmra.mrb[0].mxu0 %v3332
  %v3432 = vpop.f32.mrb[0].mxu0
  %v3433 = vadd.f32 0.0, %v3432
  %v3434 = vpop.f32.mrb[0].mxu0
  %v3435 = vpop.f32.mrb[0].mxu0
  %v3436 = vadd.f32 0.0, %v3435
  %v3437 = vpop.f32.mrb[0].mxu0
  %3438 = vmatprep.mubr.bf16.mxu0 0
  %3439 = vmatmul.mubr.bf16.gmra.mrb[0].mxu0 %v3335
  %v3440 = vpop.f32.mrb[0].mxu0
  %v3441 = vadd.f32 0.0, %v3440
  %v3442 = vpop.f32.mrb[0].mxu0
  %v3443 = vpop.f32.mrb[0].mxu0
  %v3444 = vadd.f32 0.0, %v3443
  %v3445 = vpop.f32.mrb[0].mxu0
  %3446 = vdwg.mxu0
  %v3447 = vpack.c.bf16 %v3375, %v3372
  %v3448 = vpack.c.bf16 %v3383, %v3380
  %v3449 = vpack.c.bf16 %v3436, %v3433
  %v3450 = vpack.c.bf16 %v3444, %v3441
  %3451 = vmatprep.subr.bf16.mxu0 0
  %3452 = vmatpush1.bf16.msra.mxu0 %v3449
  %3453 = vmatprep.subr.bf16.mxu0 0
  %3454 = vmatpush1.bf16.msra.mxu0 %v3450
  %3455 = vmatprep.subr.bf16.mxu0 0
  %3456 = vmatpush1.bf16.msra.mxu0 0
  %3457 = vmatprep.subr.bf16.mxu0 0
  %3458 = vmatpush1.bf16.msra.mxu0 0
  %3459 = vmatprep.subr.bf16.mxu0 0
  %3460 = vmatpush1.bf16.msra.mxu0 0
  %3461 = vmatprep.subr.bf16.mxu0 0
  %3462 = vmatpush1.bf16.msra.mxu0 0
  %3463 = vmatprep.subr.bf16.mxu0 0
  %3464 = vmatpush1.bf16.msra.mxu0 0
  %3465 = vmatprep.subr.bf16.mxu0 0
  %3466 = vmatpush1.bf16.msra.mxu0 0
  %3467 = vmatprep.subr.bf16.mxu0 0
  %3468 = vmatpush1.bf16.msra.mxu0 0
  %3469 = vmatprep.subr.bf16.mxu0 0
  %3470 = vmatpush1.bf16.msra.mxu0 0
  %3471 = vmatprep.subr.bf16.mxu0 0
  %3472 = vmatpush1.bf16.msra.mxu0 0
  %3473 = vmatprep.subr.bf16.mxu0 0
  %3474 = vmatpush1.bf16.msra.mxu0 0
  %3475 = vmatprep.subr.bf16.mxu0 0
  %3476 = vmatpush1.bf16.msra.mxu0 0
  %3477 = vmatprep.subr.bf16.mxu0 0
  %3478 = vmatpush1.bf16.msra.mxu0 0
  %3479 = vmatprep.subr.bf16.mxu0 0
  %3480 = vmatpush1.bf16.msra.mxu0 0
  %3481 = vmatprep.subr.bf16.mxu0 0
  %3482 = vmatpush1.bf16.msra.mxu0 0
  %3483 = vmatprep.mubr.bf16.mxu0 0
  %3484 = vmatmul.mubr.bf16.gmra.mrb[0].mxu0 %v413
  %v3485 = vpop.f32.mrb[0].mxu0
  %v3486 = vadd.f32 0.0, %v3485
  %v3487 = vpop.f32.mrb[0].mxu0
  %v3488 = vpop.f32.mrb[0].mxu0
  %v3489 = vadd.f32 0.0, %v3488
  %v3490 = vpop.f32.mrb[0].mxu0
  %3491 = vmatprep.mubr.bf16.mxu0 0
  %3492 = vmatmul.mubr.bf16.gmra.mrb[0].mxu0 %v416
  %v3493 = vpop.f32.mrb[0].mxu0
  %v3494 = vadd.f32 0.0, %v3493
  %v3495 = vpop.f32.mrb[0].mxu0
  %v3496 = vpop.f32.mrb[0].mxu0
  %v3497 = vadd.f32 0.0, %v3496
  %v3498 = vpop.f32.mrb[0].mxu0
  %3499 = vmatprep.mubr.bf16.mxu0 0
  %3500 = vmatmul.mubr.bf16.gmra.mrb[0].mxu0 %v419
  %v3501 = vpop.f32.mrb[0].mxu0
  %v3502 = vadd.f32 0.0, %v3501
  %v3503 = vpop.f32.mrb[0].mxu0
  %v3504 = vpop.f32.mrb[0].mxu0
  %v3505 = vadd.f32 0.0, %v3504
  %v3506 = vpop.f32.mrb[0].mxu0
  %3507 = vmatprep.mubr.bf16.mxu0 0
  %3508 = vmatmul.mubr.bf16.gmra.mrb[0].mxu0 %v422
  %v3509 = vpop.f32.mrb[0].mxu0
  %v3510 = vadd.f32 0.0, %v3509
  %v3511 = vpop.f32.mrb[0].mxu0
  %v3512 = vpop.f32.mrb[0].mxu0
  %v3513 = vadd.f32 0.0, %v3512
  %v3514 = vpop.f32.mrb[0].mxu0
  %3515 = vdwg.mxu0
  %3516 = vmatprep.subr.bf16.mxu0 0
  %3517 = vmatpush1.bf16.msra.mxu0 %v3447
  %3518 = vmatprep.subr.bf16.mxu0 0
  %3519 = vmatpush1.bf16.msra.mxu0 %v3448
  %3520 = vmatprep.subr.bf16.mxu0 0
  %3521 = vmatpush1.bf16.msra.mxu0 0
  %3522 = vmatprep.subr.bf16.mxu0 0
  %3523 = vmatpush1.bf16.msra.mxu0 0
  %3524 = vmatprep.subr.bf16.mxu0 0
  %3525 = vmatpush1.bf16.msra.mxu0 0
  %3526 = vmatprep.subr.bf16.mxu0 0
  %3527 = vmatpush1.bf16.msra.mxu0 0
  %3528 = vmatprep.subr.bf16.mxu0 0
  %3529 = vmatpush1.bf16.msra.mxu0 0
  %3530 = vmatprep.subr.bf16.mxu0 0
  %3531 = vmatpush1.bf16.msra.mxu0 0
  %3532 = vmatprep.subr.bf16.mxu0 0
  %3533 = vmatpush1.bf16.msra.mxu0 0
  %3534 = vmatprep.subr.bf16.mxu0 0
  %3535 = vmatpush1.bf16.msra.mxu0 0
  %3536 = vmatprep.subr.bf16.mxu0 0
  %3537 = vmatpush1.bf16.msra.mxu0 0
  %3538 = vmatprep.subr.bf16.mxu0 0
  %3539 = vmatpush1.bf16.msra.mxu0 0
  %3540 = vmatprep.subr.bf16.mxu0 0
  %3541 = vmatpush1.bf16.msra.mxu0 0
  %3542 = vmatprep.subr.bf16.mxu0 0
  %3543 = vmatpush1.bf16.msra.mxu0 0
  %3544 = vmatprep.subr.bf16.mxu0 0
  %3545 = vmatpush1.bf16.msra.mxu0 0
  %3546 = vmatprep.subr.bf16.mxu0 0
  %3547 = vmatpush1.bf16.msra.mxu0 0
  %3548 = vmatprep.mubr.bf16.mxu0 0
  %3549 = vmatmul.mubr.bf16.gmra.mrb[0].mxu0 %v510
  %v3550 = vpop.f32.mrb[0].mxu0
  %v3551 = vadd.f32 %v3486, %v3550
  %v3552 = vpop.f32.mrb[0].mxu0
  %v3553 = vpop.f32.mrb[0].mxu0
  %v3554 = vadd.f32 %v3489, %v3553
  %v3555 = vpop.f32.mrb[0].mxu0
  %3556 = vmatprep.mubr.bf16.mxu0 0
  %3557 = vmatmul.mubr.bf16.gmra.mrb[0].mxu0 %v513
  %v3558 = vpop.f32.mrb[0].mxu0
  %v3559 = vadd.f32 %v3494, %v3558
  %v3560 = vpop.f32.mrb[0].mxu0
  %v3561 = vpop.f32.mrb[0].mxu0
  %v3562 = vadd.f32 %v3497, %v3561
  %v3563 = vpop.f32.mrb[0].mxu0
  %3564 = vmatprep.mubr.bf16.mxu0 0
  %3565 = vmatmul.mubr.bf16.gmra.mrb[0].mxu0 %v516
  %v3566 = vpop.f32.mrb[0].mxu0
  %v3567 = vadd.f32 %v3502, %v3566
  %v3568 = vpop.f32.mrb[0].mxu0
  %v3569 = vpop.f32.mrb[0].mxu0
  %v3570 = vadd.f32 %v3505, %v3569
  %v3571 = vpop.f32.mrb[0].mxu0
  %3572 = vmatprep.mubr.bf16.mxu0 0
  %3573 = vmatmul.mubr.bf16.gmra.mrb[0].mxu0 %v519
  %v3574 = vpop.f32.mrb[0].mxu0
  %v3575 = vadd.f32 %v3510, %v3574
  %v3576 = vpop.f32.mrb[0].mxu0
  %v3577 = vpop.f32.mrb[0].mxu0
  %v3578 = vadd.f32 %v3513, %v3577
  %v3579 = vpop.f32.mrb[0].mxu0
  %3580 = vdwg.mxu0
  %v3582 = vlaneseq
  %v3583 = vshrl.u32 %v3582, 7
  %v3584 = vsub.s32 0, %v3583
  %v3585 = vrot.slane %v3316, %v3584
  %v3587 = vadd.f32 %v3551, %v3585
  %v3588 = vadd.f32 %v3554, %v3585
  %v3589 = vadd.f32 %v3559, %v3585
  %v3590 = vadd.f32 %v3562, %v3585
  %v3591 = vadd.f32 %v3567, %v3585
  %v3592 = vadd.f32 %v3570, %v3585
  %v3593 = vadd.f32 %v3575, %v3585
  %v3594 = vadd.f32 %v3578, %v3585
  %v3595 = vmax.f32 %v3587, 0.0
  %v3596 = vmax.f32 %v3588, 0.0
  %v3597 = vmax.f32 %v3589, 0.0
  %v3598 = vmax.f32 %v3590, 0.0
  %v3599 = vmax.f32 %v3591, 0.0
  %v3600 = vmax.f32 %v3592, 0.0
  %v3601 = vmax.f32 %v3593, 0.0
  %v3602 = vmax.f32 %v3594, 0.0
  %v3611 = vcombine.high %v3595, %v3595
  %v3613 = vunpack.c.l.s4 1966171168
  %v3614 = vunpack.c.0.s8 %v3613
  %v3615 = vlaneseq
  %v3616 = vshrl.u32 %v3615, 7
  %v3617 = vsub.s32 %v3614, %v3616
  %v3618 = vrot.slane %v3595, %v3617
  %v3620 = vunpack.c.l.s4 1966171168
  %v3621 = vunpack.c.0.s8 %v3620
  %v3622 = vlaneseq
  %v3623 = vshrl.u32 %v3622, 7
  %v3624 = vsub.s32 %v3621, %v3623
  %v3625 = vrot.slane %v3611, %v3624
  %v3626 = vcombine.high %v3618, %v3618
  %v3627 = vcombine.high %v3625, %v3625
  %v3629 = vunpack.c.l.s4 1966171168
  %v3630 = vunpack.c.0.s8 %v3629
  %v3631 = vlaneseq
  %v3632 = vshrl.u32 %v3631, 7
  %v3633 = vsub.s32 %v3630, %v3632
  %v3634 = vrot.slane %v3618, %v3633
  %v3636 = vunpack.c.l.s4 1966171168
  %v3637 = vunpack.c.0.s8 %v3636
  %v3638 = vlaneseq
  %v3639 = vshrl.u32 %v3638, 7
  %v3640 = vsub.s32 %v3637, %v3639
  %v3641 = vrot.slane %v3625, %v3640
  %v3643 = vunpack.c.l.s4 1966171168
  %v3644 = vunpack.c.0.s8 %v3643
  %v3645 = vlaneseq
  %v3646 = vshrl.u32 %v3645, 7
  %v3647 = vsub.s32 %v3644, %v3646
  %v3648 = vrot.slane %v3626, %v3647
  %v3650 = vunpack.c.l.s4 1966171168
  %v3651 = vunpack.c.0.s8 %v3650
  %v3652 = vlaneseq
  %v3653 = vshrl.u32 %v3652, 7
  %v3654 = vsub.s32 %v3651, %v3653
  %v3655 = vrot.slane %v3627, %v3654
  %v3656 = vcombine.high %v3634, %v3634
  %v3657 = vcombine.high %v3641, %v3641
  %v3658 = vcombine.high %v3648, %v3648
  %v3659 = vcombine.high %v3655, %v3655
  %v3660 = vcombine.high %v3596, %v3596
  %v3662 = vunpack.c.l.s4 1966171168
  %v3663 = vunpack.c.0.s8 %v3662
  %v3664 = vlaneseq
  %v3665 = vshrl.u32 %v3664, 7
  %v3666 = vsub.s32 %v3663, %v3665
  %v3667 = vrot.slane %v3596, %v3666
  %v3669 = vunpack.c.l.s4 1966171168
  %v3670 = vunpack.c.0.s8 %v3669
  %v3671 = vlaneseq
  %v3672 = vshrl.u32 %v3671, 7
  %v3673 = vsub.s32 %v3670, %v3672
  %v3674 = vrot.slane %v3660, %v3673
  %v3675 = vcombine.high %v3667, %v3667
  %v3676 = vcombine.high %v3674, %v3674
  %v3678 = vunpack.c.l.s4 1966171168
  %v3679 = vunpack.c.0.s8 %v3678
  %v3680 = vlaneseq
  %v3681 = vshrl.u32 %v3680, 7
  %v3682 = vsub.s32 %v3679, %v3681
  %v3683 = vrot.slane %v3667, %v3682
  %v3685 = vunpack.c.l.s4 1966171168
  %v3686 = vunpack.c.0.s8 %v3685
  %v3687 = vlaneseq
  %v3688 = vshrl.u32 %v3687, 7
  %v3689 = vsub.s32 %v3686, %v3688
  %v3690 = vrot.slane %v3674, %v3689
  %v3692 = vunpack.c.l.s4 1966171168
  %v3693 = vunpack.c.0.s8 %v3692
  %v3694 = vlaneseq
  %v3695 = vshrl.u32 %v3694, 7
  %v3696 = vsub.s32 %v3693, %v3695
  %v3697 = vrot.slane %v3675, %v3696
  %v3699 = vunpack.c.l.s4 1966171168
  %v3700 = vunpack.c.0.s8 %v3699
  %v3701 = vlaneseq
  %v3702 = vshrl.u32 %v3701, 7
  %v3703 = vsub.s32 %v3700, %v3702
  %v3704 = vrot.slane %v3676, %v3703
  %v3705 = vcombine.high %v3683, %v3683
  %v3706 = vcombine.high %v3690, %v3690
  %v3707 = vcombine.high %v3697, %v3697
  %v3708 = vcombine.high %v3704, %v3704
  %v3709 = vcombine.high %v3597, %v3597
  %v3711 = vunpack.c.l.s4 1966171168
  %v3712 = vunpack.c.0.s8 %v3711
  %v3713 = vlaneseq
  %v3714 = vshrl.u32 %v3713, 7
  %v3715 = vsub.s32 %v3712, %v3714
  %v3716 = vrot.slane %v3597, %v3715
  %v3718 = vunpack.c.l.s4 1966171168
  %v3719 = vunpack.c.0.s8 %v3718
  %v3720 = vlaneseq
  %v3721 = vshrl.u32 %v3720, 7
  %v3722 = vsub.s32 %v3719, %v3721
  %v3723 = vrot.slane %v3709, %v3722
  %v3724 = vcombine.high %v3716, %v3716
  %v3725 = vcombine.high %v3723, %v3723
  %v3727 = vunpack.c.l.s4 1966171168
  %v3728 = vunpack.c.0.s8 %v3727
  %v3729 = vlaneseq
  %v3730 = vshrl.u32 %v3729, 7
  %v3731 = vsub.s32 %v3728, %v3730
  %v3732 = vrot.slane %v3716, %v3731
  %v3734 = vunpack.c.l.s4 1966171168
  %v3735 = vunpack.c.0.s8 %v3734
  %v3736 = vlaneseq
  %v3737 = vshrl.u32 %v3736, 7
  %v3738 = vsub.s32 %v3735, %v3737
  %v3739 = vrot.slane %v3723, %v3738
  %v3741 = vunpack.c.l.s4 1966171168
  %v3742 = vunpack.c.0.s8 %v3741
  %v3743 = vlaneseq
  %v3744 = vshrl.u32 %v3743, 7
  %v3745 = vsub.s32 %v3742, %v3744
  %v3746 = vrot.slane %v3724, %v3745
  %v3748 = vunpack.c.l.s4 1966171168
  %v3749 = vunpack.c.0.s8 %v3748
  %v3750 = vlaneseq
  %v3751 = vshrl.u32 %v3750, 7
  %v3752 = vsub.s32 %v3749, %v3751
  %v3753 = vrot.slane %v3725, %v3752
  %v3754 = vcombine.high %v3732, %v3732
  %v3755 = vcombine.high %v3739, %v3739
  %v3756 = vcombine.high %v3746, %v3746
  %v3757 = vcombine.high %v3753, %v3753
  %v3758 = vcombine.high %v3598, %v3598
  %v3760 = vunpack.c.l.s4 1966171168
  %v3761 = vunpack.c.0.s8 %v3760
  %v3762 = vlaneseq
  %v3763 = vshrl.u32 %v3762, 7
  %v3764 = vsub.s32 %v3761, %v3763
  %v3765 = vrot.slane %v3598, %v3764
  %v3767 = vunpack.c.l.s4 1966171168
  %v3768 = vunpack.c.0.s8 %v3767
  %v3769 = vlaneseq
  %v3770 = vshrl.u32 %v3769, 7
  %v3771 = vsub.s32 %v3768, %v3770
  %v3772 = vrot.slane %v3758, %v3771
  %v3773 = vcombine.high %v3765, %v3765
  %v3774 = vcombine.high %v3772, %v3772
  %v3776 = vunpack.c.l.s4 1966171168
  %v3777 = vunpack.c.0.s8 %v3776
  %v3778 = vlaneseq
  %v3779 = vshrl.u32 %v3778, 7
  %v3780 = vsub.s32 %v3777, %v3779
  %v3781 = vrot.slane %v3765, %v3780
  %v3783 = vunpack.c.l.s4 1966171168
  %v3784 = vunpack.c.0.s8 %v3783
  %v3785 = vlaneseq
  %v3786 = vshrl.u32 %v3785, 7
  %v3787 = vsub.s32 %v3784, %v3786
  %v3788 = vrot.slane %v3772, %v3787
  %v3790 = vunpack.c.l.s4 1966171168
  %v3791 = vunpack.c.0.s8 %v3790
  %v3792 = vlaneseq
  %v3793 = vshrl.u32 %v3792, 7
  %v3794 = vsub.s32 %v3791, %v3793
  %v3795 = vrot.slane %v3773, %v3794
  %v3797 = vunpack.c.l.s4 1966171168
  %v3798 = vunpack.c.0.s8 %v3797
  %v3799 = vlaneseq
  %v3800 = vshrl.u32 %v3799, 7
  %v3801 = vsub.s32 %v3798, %v3800
  %v3802 = vrot.slane %v3774, %v3801
  %v3803 = vcombine.high %v3781, %v3781
  %v3804 = vcombine.high %v3788, %v3788
  %v3805 = vcombine.high %v3795, %v3795
  %v3806 = vcombine.high %v3802, %v3802
  %v3807 = vcombine.high %v3599, %v3599
  %v3809 = vunpack.c.l.s4 1966171168
  %v3810 = vunpack.c.0.s8 %v3809
  %v3811 = vlaneseq
  %v3812 = vshrl.u32 %v3811, 7
  %v3813 = vsub.s32 %v3810, %v3812
  %v3814 = vrot.slane %v3599, %v3813
  %v3816 = vunpack.c.l.s4 1966171168
  %v3817 = vunpack.c.0.s8 %v3816
  %v3818 = vlaneseq
  %v3819 = vshrl.u32 %v3818, 7
  %v3820 = vsub.s32 %v3817, %v3819
  %v3821 = vrot.slane %v3807, %v3820
  %v3822 = vcombine.high %v3814, %v3814
  %v3823 = vcombine.high %v3821, %v3821
  %v3825 = vunpack.c.l.s4 1966171168
  %v3826 = vunpack.c.0.s8 %v3825
  %v3827 = vlaneseq
  %v3828 = vshrl.u32 %v3827, 7
  %v3829 = vsub.s32 %v3826, %v3828
  %v3830 = vrot.slane %v3814, %v3829
  %v3832 = vunpack.c.l.s4 1966171168
  %v3833 = vunpack.c.0.s8 %v3832
  %v3834 = vlaneseq
  %v3835 = vshrl.u32 %v3834, 7
  %v3836 = vsub.s32 %v3833, %v3835
  %v3837 = vrot.slane %v3821, %v3836
  %v3839 = vunpack.c.l.s4 1966171168
  %v3840 = vunpack.c.0.s8 %v3839
  %v3841 = vlaneseq
  %v3842 = vshrl.u32 %v3841, 7
  %v3843 = vsub.s32 %v3840, %v3842
  %v3844 = vrot.slane %v3822, %v3843
  %v3846 = vunpack.c.l.s4 1966171168
  %v3847 = vunpack.c.0.s8 %v3846
  %v3848 = vlaneseq
  %v3849 = vshrl.u32 %v3848, 7
  %v3850 = vsub.s32 %v3847, %v3849
  %v3851 = vrot.slane %v3823, %v3850
  %v3852 = vcombine.high %v3830, %v3830
  %v3853 = vcombine.high %v3837, %v3837
  %v3854 = vcombine.high %v3844, %v3844
  %v3855 = vcombine.high %v3851, %v3851
  %v3856 = vcombine.high %v3600, %v3600
  %v3858 = vunpack.c.l.s4 1966171168
  %v3859 = vunpack.c.0.s8 %v3858
  %v3860 = vlaneseq
  %v3861 = vshrl.u32 %v3860, 7
  %v3862 = vsub.s32 %v3859, %v3861
  %v3863 = vrot.slane %v3600, %v3862
  %v3865 = vunpack.c.l.s4 1966171168
  %v3866 = vunpack.c.0.s8 %v3865
  %v3867 = vlaneseq
  %v3868 = vshrl.u32 %v3867, 7
  %v3869 = vsub.s32 %v3866, %v3868
  %v3870 = vrot.slane %v3856, %v3869
  %v3871 = vcombine.high %v3863, %v3863
  %v3872 = vcombine.high %v3870, %v3870
  %v3874 = vunpack.c.l.s4 1966171168
  %v3875 = vunpack.c.0.s8 %v3874
  %v3876 = vlaneseq
  %v3877 = vshrl.u32 %v3876, 7
  %v3878 = vsub.s32 %v3875, %v3877
  %v3879 = vrot.slane %v3863, %v3878
  %v3881 = vunpack.c.l.s4 1966171168
  %v3882 = vunpack.c.0.s8 %v3881
  %v3883 = vlaneseq
  %v3884 = vshrl.u32 %v3883, 7
  %v3885 = vsub.s32 %v3882, %v3884
  %v3886 = vrot.slane %v3870, %v3885
  %v3888 = vunpack.c.l.s4 1966171168
  %v3889 = vunpack.c.0.s8 %v3888
  %v3890 = vlaneseq
  %v3891 = vshrl.u32 %v3890, 7
  %v3892 = vsub.s32 %v3889, %v3891
  %v3893 = vrot.slane %v3871, %v3892
  %v3895 = vunpack.c.l.s4 1966171168
  %v3896 = vunpack.c.0.s8 %v3895
  %v3897 = vlaneseq
  %v3898 = vshrl.u32 %v3897, 7
  %v3899 = vsub.s32 %v3896, %v3898
  %v3900 = vrot.slane %v3872, %v3899
  %v3901 = vcombine.high %v3879, %v3879
  %v3902 = vcombine.high %v3886, %v3886
  %v3903 = vcombine.high %v3893, %v3893
  %v3904 = vcombine.high %v3900, %v3900
  %v3905 = vcombine.high %v3601, %v3601
  %v3907 = vunpack.c.l.s4 1966171168
  %v3908 = vunpack.c.0.s8 %v3907
  %v3909 = vlaneseq
  %v3910 = vshrl.u32 %v3909, 7
  %v3911 = vsub.s32 %v3908, %v3910
  %v3912 = vrot.slane %v3601, %v3911
  %v3914 = vunpack.c.l.s4 1966171168
  %v3915 = vunpack.c.0.s8 %v3914
  %v3916 = vlaneseq
  %v3917 = vshrl.u32 %v3916, 7
  %v3918 = vsub.s32 %v3915, %v3917
  %v3919 = vrot.slane %v3905, %v3918
  %v3920 = vcombine.high %v3912, %v3912
  %v3921 = vcombine.high %v3919, %v3919
  %v3923 = vunpack.c.l.s4 1966171168
  %v3924 = vunpack.c.0.s8 %v3923
  %v3925 = vlaneseq
  %v3926 = vshrl.u32 %v3925, 7
  %v3927 = vsub.s32 %v3924, %v3926
  %v3928 = vrot.slane %v3912, %v3927
  %v3930 = vunpack.c.l.s4 1966171168
  %v3931 = vunpack.c.0.s8 %v3930
  %v3932 = vlaneseq
  %v3933 = vshrl.u32 %v3932, 7
  %v3934 = vsub.s32 %v3931, %v3933
  %v3935 = vrot.slane %v3919, %v3934
  %v3937 = vunpack.c.l.s4 1966171168
  %v3938 = vunpack.c.0.s8 %v3937
  %v3939 = vlaneseq
  %v3940 = vshrl.u32 %v3939, 7
  %v3941 = vsub.s32 %v3938, %v3940
  %v3942 = vrot.slane %v3920, %v3941
  %v3944 = vunpack.c.l.s4 1966171168
  %v3945 = vunpack.c.0.s8 %v3944
  %v3946 = vlaneseq
  %v3947 = vshrl.u32 %v3946, 7
  %v3948 = vsub.s32 %v3945, %v3947
  %v3949 = vrot.slane %v3921, %v3948
  %v3950 = vcombine.high %v3928, %v3928
  %v3951 = vcombine.high %v3935, %v3935
  %v3952 = vcombine.high %v3942, %v3942
  %v3953 = vcombine.high %v3949, %v3949
  %v3954 = vcombine.high %v3602, %v3602
  %v3956 = vunpack.c.l.s4 1966171168
  %v3957 = vunpack.c.0.s8 %v3956
  %v3958 = vlaneseq
  %v3959 = vshrl.u32 %v3958, 7
  %v3960 = vsub.s32 %v3957, %v3959
  %v3961 = vrot.slane %v3602, %v3960
  %v3963 = vunpack.c.l.s4 1966171168
  %v3964 = vunpack.c.0.s8 %v3963
  %v3965 = vlaneseq
  %v3966 = vshrl.u32 %v3965, 7
  %v3967 = vsub.s32 %v3964, %v3966
  %v3968 = vrot.slane %v3954, %v3967
  %v3969 = vcombine.high %v3961, %v3961
  %v3970 = vcombine.high %v3968, %v3968
  %v3972 = vunpack.c.l.s4 1966171168
  %v3973 = vunpack.c.0.s8 %v3972
  %v3974 = vlaneseq
  %v3975 = vshrl.u32 %v3974, 7
  %v3976 = vsub.s32 %v3973, %v3975
  %v3977 = vrot.slane %v3961, %v3976
  %v3979 = vunpack.c.l.s4 1966171168
  %v3980 = vunpack.c.0.s8 %v3979
  %v3981 = vlaneseq
  %v3982 = vshrl.u32 %v3981, 7
  %v3983 = vsub.s32 %v3980, %v3982
  %v3984 = vrot.slane %v3968, %v3983
  %v3986 = vunpack.c.l.s4 1966171168
  %v3987 = vunpack.c.0.s8 %v3986
  %v3988 = vlaneseq
  %v3989 = vshrl.u32 %v3988, 7
  %v3990 = vsub.s32 %v3987, %v3989
  %v3991 = vrot.slane %v3969, %v3990
  %v3993 = vunpack.c.l.s4 1966171168
  %v3994 = vunpack.c.0.s8 %v3993
  %v3995 = vlaneseq
  %v3996 = vshrl.u32 %v3995, 7
  %v3997 = vsub.s32 %v3994, %v3996
  %v3998 = vrot.slane %v3970, %v3997
  %v3999 = vcombine.high %v3977, %v3977
  %v4000 = vcombine.high %v3984, %v3984
  %v4001 = vcombine.high %v3991, %v3991
  %v4002 = vcombine.high %v3998, %v3998
  %v4003 = vlaneseq
  %v4004 = vshrl.u32 %v4003, 7
  %v4005 = vsub.s32 0, %v4004
  %v4006 = vrot.slane %v3634, %v4005
  %v4007 = vlaneseq
  %v4008 = vshrl.u32 %v4007, 7
  %v4009 = vsub.s32 0, %v4008
  %v4010 = vrot.slane %v3648, %v4009
  %v4011 = vlaneseq
  %v4012 = vshrl.u32 %v4011, 7
  %v4013 = vsub.s32 0, %v4012
  %v4014 = vrot.slane %v3656, %v4013
  %v4015 = vlaneseq
  %v4016 = vshrl.u32 %v4015, 7
  %v4017 = vsub.s32 0, %v4016
  %v4018 = vrot.slane %v3658, %v4017
  %v4019 = vlaneseq
  %v4020 = vshrl.u32 %v4019, 7
  %v4021 = vsub.s32 0, %v4020
  %v4022 = vrot.slane %v3641, %v4021
  %v4023 = vlaneseq
  %v4024 = vshrl.u32 %v4023, 7
  %v4025 = vsub.s32 0, %v4024
  %v4026 = vrot.slane %v3655, %v4025
  %v4027 = vlaneseq
  %v4028 = vshrl.u32 %v4027, 7
  %v4029 = vsub.s32 0, %v4028
  %v4030 = vrot.slane %v3657, %v4029
  %v4031 = vlaneseq
  %v4032 = vshrl.u32 %v4031, 7
  %v4033 = vsub.s32 0, %v4032
  %v4034 = vrot.slane %v3659, %v4033
  %v4035 = vlaneseq
  %v4036 = vshrl.u32 %v4035, 7
  %v4037 = vsub.s32 0, %v4036
  %v4038 = vrot.slane %v3683, %v4037
  %v4039 = vlaneseq
  %v4040 = vshrl.u32 %v4039, 7
  %v4041 = vsub.s32 0, %v4040
  %v4042 = vrot.slane %v3697, %v4041
  %v4043 = vlaneseq
  %v4044 = vshrl.u32 %v4043, 7
  %v4045 = vsub.s32 0, %v4044
  %v4046 = vrot.slane %v3705, %v4045
  %v4047 = vlaneseq
  %v4048 = vshrl.u32 %v4047, 7
  %v4049 = vsub.s32 0, %v4048
  %v4050 = vrot.slane %v3707, %v4049
  %v4051 = vlaneseq
  %v4052 = vshrl.u32 %v4051, 7
  %v4053 = vsub.s32 0, %v4052
  %v4054 = vrot.slane %v3690, %v4053
  %v4055 = vlaneseq
  %v4056 = vshrl.u32 %v4055, 7
  %v4057 = vsub.s32 0, %v4056
  %v4058 = vrot.slane %v3704, %v4057
  %v4059 = vlaneseq
  %v4060 = vshrl.u32 %v4059, 7
  %v4061 = vsub.s32 0, %v4060
  %v4062 = vrot.slane %v3706, %v4061
  %v4063 = vlaneseq
  %v4064 = vshrl.u32 %v4063, 7
  %v4065 = vsub.s32 0, %v4064
  %v4066 = vrot.slane %v3708, %v4065
  %v4067 = vlaneseq
  %v4068 = vshrl.u32 %v4067, 7
  %v4069 = vsub.s32 0, %v4068
  %v4070 = vrot.slane %v3732, %v4069
  %v4071 = vlaneseq
  %v4072 = vshrl.u32 %v4071, 7
  %v4073 = vsub.s32 0, %v4072
  %v4074 = vrot.slane %v3746, %v4073
  %v4075 = vlaneseq
  %v4076 = vshrl.u32 %v4075, 7
  %v4077 = vsub.s32 0, %v4076
  %v4078 = vrot.slane %v3754, %v4077
  %v4079 = vlaneseq
  %v4080 = vshrl.u32 %v4079, 7
  %v4081 = vsub.s32 0, %v4080
  %v4082 = vrot.slane %v3756, %v4081
  %v4083 = vlaneseq
  %v4084 = vshrl.u32 %v4083, 7
  %v4085 = vsub.s32 0, %v4084
  %v4086 = vrot.slane %v3739, %v4085
  %v4087 = vlaneseq
  %v4088 = vshrl.u32 %v4087, 7
  %v4089 = vsub.s32 0, %v4088
  %v4090 = vrot.slane %v3753, %v4089
  %v4091 = vlaneseq
  %v4092 = vshrl.u32 %v4091, 7
  %v4093 = vsub.s32 0, %v4092
  %v4094 = vrot.slane %v3755, %v4093
  %v4095 = vlaneseq
  %v4096 = vshrl.u32 %v4095, 7
  %v4097 = vsub.s32 0, %v4096
  %v4098 = vrot.slane %v3757, %v4097
  %v4099 = vlaneseq
  %v4100 = vshrl.u32 %v4099, 7
  %v4101 = vsub.s32 0, %v4100
  %v4102 = vrot.slane %v3781, %v4101
  %v4103 = vlaneseq
  %v4104 = vshrl.u32 %v4103, 7
  %v4105 = vsub.s32 0, %v4104
  %v4106 = vrot.slane %v3795, %v4105
  %v4107 = vlaneseq
  %v4108 = vshrl.u32 %v4107, 7
  %v4109 = vsub.s32 0, %v4108
  %v4110 = vrot.slane %v3803, %v4109
  %v4111 = vlaneseq
  %v4112 = vshrl.u32 %v4111, 7
  %v4113 = vsub.s32 0, %v4112
  %v4114 = vrot.slane %v3805, %v4113
  %v4115 = vlaneseq
  %v4116 = vshrl.u32 %v4115, 7
  %v4117 = vsub.s32 0, %v4116
  %v4118 = vrot.slane %v3788, %v4117
  %v4119 = vlaneseq
  %v4120 = vshrl.u32 %v4119, 7
  %v4121 = vsub.s32 0, %v4120
  %v4122 = vrot.slane %v3802, %v4121
  %v4123 = vlaneseq
  %v4124 = vshrl.u32 %v4123, 7
  %v4125 = vsub.s32 0, %v4124
  %v4126 = vrot.slane %v3804, %v4125
  %v4127 = vlaneseq
  %v4128 = vshrl.u32 %v4127, 7
  %v4129 = vsub.s32 0, %v4128
  %v4130 = vrot.slane %v3806, %v4129
  %v4131 = vlaneseq
  %v4132 = vshrl.u32 %v4131, 7
  %v4133 = vsub.s32 0, %v4132
  %v4134 = vrot.slane %v3830, %v4133
  %v4135 = vlaneseq
  %v4136 = vshrl.u32 %v4135, 7
  %v4137 = vsub.s32 0, %v4136
  %v4138 = vrot.slane %v3844, %v4137
  %v4139 = vlaneseq
  %v4140 = vshrl.u32 %v4139, 7
  %v4141 = vsub.s32 0, %v4140
  %v4142 = vrot.slane %v3852, %v4141
  %v4143 = vlaneseq
  %v4144 = vshrl.u32 %v4143, 7
  %v4145 = vsub.s32 0, %v4144
  %v4146 = vrot.slane %v3854, %v4145
  %v4147 = vlaneseq
  %v4148 = vshrl.u32 %v4147, 7
  %v4149 = vsub.s32 0, %v4148
  %v4150 = vrot.slane %v3837, %v4149
  %v4151 = vlaneseq
  %v4152 = vshrl.u32 %v4151, 7
  %v4153 = vsub.s32 0, %v4152
  %v4154 = vrot.slane %v3851, %v4153
  %v4155 = vlaneseq
  %v4156 = vshrl.u32 %v4155, 7
  %v4157 = vsub.s32 0, %v4156
  %v4158 = vrot.slane %v3853, %v4157
  %v4159 = vlaneseq
  %v4160 = vshrl.u32 %v4159, 7
  %v4161 = vsub.s32 0, %v4160
  %v4162 = vrot.slane %v3855, %v4161
  %v4163 = vlaneseq
  %v4164 = vshrl.u32 %v4163, 7
  %v4165 = vsub.s32 0, %v4164
  %v4166 = vrot.slane %v3879, %v4165
  %v4167 = vlaneseq
  %v4168 = vshrl.u32 %v4167, 7
  %v4169 = vsub.s32 0, %v4168
  %v4170 = vrot.slane %v3893, %v4169
  %v4171 = vlaneseq
  %v4172 = vshrl.u32 %v4171, 7
  %v4173 = vsub.s32 0, %v4172
  %v4174 = vrot.slane %v3901, %v4173
  %v4175 = vlaneseq
  %v4176 = vshrl.u32 %v4175, 7
  %v4177 = vsub.s32 0, %v4176
  %v4178 = vrot.slane %v3903, %v4177
  %v4179 = vlaneseq
  %v4180 = vshrl.u32 %v4179, 7
  %v4181 = vsub.s32 0, %v4180
  %v4182 = vrot.slane %v3886, %v4181
  %v4183 = vlaneseq
  %v4184 = vshrl.u32 %v4183, 7
  %v4185 = vsub.s32 0, %v4184
  %v4186 = vrot.slane %v3900, %v4185
  %v4187 = vlaneseq
  %v4188 = vshrl.u32 %v4187, 7
  %v4189 = vsub.s32 0, %v4188
  %v4190 = vrot.slane %v3902, %v4189
  %v4191 = vlaneseq
  %v4192 = vshrl.u32 %v4191, 7
  %v4193 = vsub.s32 0, %v4192
  %v4194 = vrot.slane %v3904, %v4193
  %v4195 = vlaneseq
  %v4196 = vshrl.u32 %v4195, 7
  %v4197 = vsub.s32 0, %v4196
  %v4198 = vrot.slane %v3928, %v4197
  %v4199 = vlaneseq
  %v4200 = vshrl.u32 %v4199, 7
  %v4201 = vsub.s32 0, %v4200
  %v4202 = vrot.slane %v3942, %v4201
  %v4203 = vlaneseq
  %v4204 = vshrl.u32 %v4203, 7
  %v4205 = vsub.s32 0, %v4204
  %v4206 = vrot.slane %v3950, %v4205
  %v4207 = vlaneseq
  %v4208 = vshrl.u32 %v4207, 7
  %v4209 = vsub.s32 0, %v4208
  %v4210 = vrot.slane %v3952, %v4209
  %v4211 = vlaneseq
  %v4212 = vshrl.u32 %v4211, 7
  %v4213 = vsub.s32 0, %v4212
  %v4214 = vrot.slane %v3935, %v4213
  %v4215 = vlaneseq
  %v4216 = vshrl.u32 %v4215, 7
  %v4217 = vsub.s32 0, %v4216
  %v4218 = vrot.slane %v3949, %v4217
  %v4219 = vlaneseq
  %v4220 = vshrl.u32 %v4219, 7
  %v4221 = vsub.s32 0, %v4220
  %v4222 = vrot.slane %v3951, %v4221
  %v4223 = vlaneseq
  %v4224 = vshrl.u32 %v4223, 7
  %v4225 = vsub.s32 0, %v4224
  %v4226 = vrot.slane %v3953, %v4225
  %v4227 = vlaneseq
  %v4228 = vshrl.u32 %v4227, 7
  %v4229 = vsub.s32 0, %v4228
  %v4230 = vrot.slane %v3977, %v4229
  %v4231 = vlaneseq
  %v4232 = vshrl.u32 %v4231, 7
  %v4233 = vsub.s32 0, %v4232
  %v4234 = vrot.slane %v3991, %v4233
  %v4235 = vlaneseq
  %v4236 = vshrl.u32 %v4235, 7
  %v4237 = vsub.s32 0, %v4236
  %v4238 = vrot.slane %v3999, %v4237
  %v4239 = vlaneseq
  %v4240 = vshrl.u32 %v4239, 7
  %v4241 = vsub.s32 0, %v4240
  %v4242 = vrot.slane %v4001, %v4241
  %v4243 = vlaneseq
  %v4244 = vshrl.u32 %v4243, 7
  %v4245 = vsub.s32 0, %v4244
  %v4246 = vrot.slane %v3984, %v4245
  %v4247 = vlaneseq
  %v4248 = vshrl.u32 %v4247, 7
  %v4249 = vsub.s32 0, %v4248
  %v4250 = vrot.slane %v3998, %v4249
  %v4251 = vlaneseq
  %v4252 = vshrl.u32 %v4251, 7
  %v4253 = vsub.s32 0, %v4252
  %v4254 = vrot.slane %v4000, %v4253
  %v4255 = vlaneseq
  %v4256 = vshrl.u32 %v4255, 7
  %v4257 = vsub.s32 0, %v4256
  %v4258 = vrot.slane %v4002, %v4257
  %v4323 = vmul.f32 %v614, %v4006
  %v4324 = vmul.f32 %v618, %v4006
  %v4325 = vmul.f32 %v622, %v4006
  %v4326 = vmul.f32 %v626, %v4006
  %v4327 = vmul.f32 %v633, %v4010
  %v4328 = vmul.f32 %v637, %v4010
  %v4329 = vmul.f32 %v641, %v4010
  %v4330 = vmul.f32 %v645, %v4010
  %v4331 = vmul.f32 %v652, %v4014
  %v4332 = vmul.f32 %v656, %v4014
  %v4333 = vmul.f32 %v660, %v4014
  %v4334 = vmul.f32 %v664, %v4014
  %v4335 = vmul.f32 %v671, %v4018
  %v4336 = vmul.f32 %v675, %v4018
  %v4337 = vmul.f32 %v679, %v4018
  %v4338 = vmul.f32 %v683, %v4018
  %v4339 = vmul.f32 %v690, %v4022
  %v4340 = vmul.f32 %v694, %v4022
  %v4341 = vmul.f32 %v698, %v4022
  %v4342 = vmul.f32 %v702, %v4022
  %v4343 = vmul.f32 %v709, %v4026
  %v4344 = vmul.f32 %v713, %v4026
  %v4345 = vmul.f32 %v717, %v4026
  %v4346 = vmul.f32 %v721, %v4026
  %v4347 = vmul.f32 %v728, %v4030
  %v4348 = vmul.f32 %v732, %v4030
  %v4349 = vmul.f32 %v736, %v4030
  %v4350 = vmul.f32 %v740, %v4030
  %v4351 = vmul.f32 %v747, %v4034
  %v4352 = vmul.f32 %v751, %v4034
  %v4353 = vmul.f32 %v755, %v4034
  %v4354 = vmul.f32 %v759, %v4034
  %v4355 = vmul.f32 %v766, %v4038
  %v4356 = vmul.f32 %v770, %v4038
  %v4357 = vmul.f32 %v774, %v4038
  %v4358 = vmul.f32 %v778, %v4038
  %v4359 = vmul.f32 %v785, %v4042
  %v4360 = vmul.f32 %v789, %v4042
  %v4361 = vmul.f32 %v793, %v4042
  %v4362 = vmul.f32 %v797, %v4042
  %v4363 = vmul.f32 %v804, %v4046
  %v4364 = vmul.f32 %v808, %v4046
  %v4365 = vmul.f32 %v812, %v4046
  %v4366 = vmul.f32 %v816, %v4046
  %v4367 = vmul.f32 %v823, %v4050
  %v4368 = vmul.f32 %v827, %v4050
  %v4369 = vmul.f32 %v831, %v4050
  %v4370 = vmul.f32 %v835, %v4050
  %v4371 = vmul.f32 %v842, %v4054
  %v4372 = vmul.f32 %v846, %v4054
  %v4373 = vmul.f32 %v850, %v4054
  %v4374 = vmul.f32 %v854, %v4054
  %v4375 = vmul.f32 %v861, %v4058
  %v4376 = vmul.f32 %v865, %v4058
  %v4377 = vmul.f32 %v869, %v4058
  %v4378 = vmul.f32 %v873, %v4058
  %v4379 = vmul.f32 %v880, %v4062
  %v4380 = vmul.f32 %v884, %v4062
  %v4381 = vmul.f32 %v888, %v4062
  %v4382 = vmul.f32 %v892, %v4062
  %v4383 = vmul.f32 %v899, %v4066
  %v4384 = vmul.f32 %v903, %v4066
  %v4385 = vmul.f32 %v907, %v4066
  %v4386 = vmul.f32 %v911, %v4066
  %v4387 = vmul.f32 %v918, %v4070
  %v4388 = vmul.f32 %v922, %v4070
  %v4389 = vmul.f32 %v926, %v4070
  %v4390 = vmul.f32 %v930, %v4070
  %v4391 = vmul.f32 %v937, %v4074
  %v4392 = vmul.f32 %v941, %v4074
  %v4393 = vmul.f32 %v945, %v4074
  %v4394 = vmul.f32 %v949, %v4074
  %v4395 = vmul.f32 %v956, %v4078
  %v4396 = vmul.f32 %v960, %v4078
  %v4397 = vmul.f32 %v964, %v4078
  %v4398 = vmul.f32 %v968, %v4078
  %v4399 = vmul.f32 %v975, %v4082
  %v4400 = vmul.f32 %v979, %v4082
  %v4401 = vmul.f32 %v983, %v4082
  %v4402 = vmul.f32 %v987, %v4082
  %v4403 = vmul.f32 %v994, %v4086
  %v4404 = vmul.f32 %v998, %v4086
  %v4405 = vmul.f32 %v1002, %v4086
  %v4406 = vmul.f32 %v1006, %v4086
  %v4407 = vmul.f32 %v1013, %v4090
  %v4408 = vmul.f32 %v1017, %v4090
  %v4409 = vmul.f32 %v1021, %v4090
  %v4410 = vmul.f32 %v1025, %v4090
  %v4411 = vmul.f32 %v1032, %v4094
  %v4412 = vmul.f32 %v1036, %v4094
  %v4413 = vmul.f32 %v1040, %v4094
  %v4414 = vmul.f32 %v1044, %v4094
  %v4415 = vmul.f32 %v1051, %v4098
  %v4416 = vmul.f32 %v1055, %v4098
  %v4417 = vmul.f32 %v1059, %v4098
  %v4418 = vmul.f32 %v1063, %v4098
  %v4419 = vmul.f32 %v1070, %v4102
  %v4420 = vmul.f32 %v1074, %v4102
  %v4421 = vmul.f32 %v1078, %v4102
  %v4422 = vmul.f32 %v1082, %v4102
  %v4423 = vmul.f32 %v1089, %v4106
  %v4424 = vmul.f32 %v1093, %v4106
  %v4425 = vmul.f32 %v1097, %v4106
  %v4426 = vmul.f32 %v1101, %v4106
  %v4427 = vmul.f32 %v1108, %v4110
  %v4428 = vmul.f32 %v1112, %v4110
  %v4429 = vmul.f32 %v1116, %v4110
  %v4430 = vmul.f32 %v1120, %v4110
  %v4431 = vmul.f32 %v1127, %v4114
  %v4432 = vmul.f32 %v1131, %v4114
  %v4433 = vmul.f32 %v1135, %v4114
  %v4434 = vmul.f32 %v1139, %v4114
  %v4435 = vmul.f32 %v1146, %v4118
  %v4436 = vmul.f32 %v1150, %v4118
  %v4437 = vmul.f32 %v1154, %v4118
  %v4438 = vmul.f32 %v1158, %v4118
  %v4439 = vmul.f32 %v1165, %v4122
  %v4440 = vmul.f32 %v1169, %v4122
  %v4441 = vmul.f32 %v1173, %v4122
  %v4442 = vmul.f32 %v1177, %v4122
  %v4443 = vmul.f32 %v1184, %v4126
  %v4444 = vmul.f32 %v1188, %v4126
  %v4445 = vmul.f32 %v1192, %v4126
  %v4446 = vmul.f32 %v1196, %v4126
  %v4447 = vmul.f32 %v1203, %v4130
  %v4448 = vmul.f32 %v1207, %v4130
  %v4449 = vmul.f32 %v1211, %v4130
  %v4450 = vmul.f32 %v1215, %v4130
  %v4451 = vmul.f32 %v1222, %v4134
  %v4452 = vmul.f32 %v1226, %v4134
  %v4453 = vmul.f32 %v1230, %v4134
  %v4454 = vmul.f32 %v1234, %v4134
  %v4455 = vmul.f32 %v1241, %v4138
  %v4456 = vmul.f32 %v1245, %v4138
  %v4457 = vmul.f32 %v1249, %v4138
  %v4458 = vmul.f32 %v1253, %v4138
  %v4459 = vmul.f32 %v1260, %v4142
  %v4460 = vmul.f32 %v1264, %v4142
  %v4461 = vmul.f32 %v1268, %v4142
  %v4462 = vmul.f32 %v1272, %v4142
  %v4463 = vmul.f32 %v1279, %v4146
  %v4464 = vmul.f32 %v1283, %v4146
  %v4465 = vmul.f32 %v1287, %v4146
  %v4466 = vmul.f32 %v1291, %v4146
  %v4467 = vmul.f32 %v1298, %v4150
  %v4468 = vmul.f32 %v1302, %v4150
  %v4469 = vmul.f32 %v1306, %v4150
  %v4470 = vmul.f32 %v1310, %v4150
  %v4471 = vmul.f32 %v1317, %v4154
  %v4472 = vmul.f32 %v1321, %v4154
  %v4473 = vmul.f32 %v1325, %v4154
  %v4474 = vmul.f32 %v1329, %v4154
  %v4475 = vmul.f32 %v1336, %v4158
  %v4476 = vmul.f32 %v1340, %v4158
  %v4477 = vmul.f32 %v1344, %v4158
  %v4478 = vmul.f32 %v1348, %v4158
  %v4479 = vmul.f32 %v1355, %v4162
  %v4480 = vmul.f32 %v1359, %v4162
  %v4481 = vmul.f32 %v1363, %v4162
  %v4482 = vmul.f32 %v1367, %v4162
  %v4483 = vmul.f32 %v1374, %v4166
  %v4484 = vmul.f32 %v1378, %v4166
  %v4485 = vmul.f32 %v1382, %v4166
  %v4486 = vmul.f32 %v1386, %v4166
  %v4487 = vmul.f32 %v1393, %v4170
  %v4488 = vmul.f32 %v1397, %v4170
  %v4489 = vmul.f32 %v1401, %v4170
  %v4490 = vmul.f32 %v1405, %v4170
  %v4491 = vmul.f32 %v1412, %v4174
  %v4492 = vmul.f32 %v1416, %v4174
  %v4493 = vmul.f32 %v1420, %v4174
  %v4494 = vmul.f32 %v1424, %v4174
  %v4495 = vmul.f32 %v1431, %v4178
  %v4496 = vmul.f32 %v1435, %v4178
  %v4497 = vmul.f32 %v1439, %v4178
  %v4498 = vmul.f32 %v1443, %v4178
  %v4499 = vmul.f32 %v1450, %v4182
  %v4500 = vmul.f32 %v1454, %v4182
  %v4501 = vmul.f32 %v1458, %v4182
  %v4502 = vmul.f32 %v1462, %v4182
  %v4503 = vmul.f32 %v1469, %v4186
  %v4504 = vmul.f32 %v1473, %v4186
  %v4505 = vmul.f32 %v1477, %v4186
  %v4506 = vmul.f32 %v1481, %v4186
  %v4507 = vmul.f32 %v1488, %v4190
  %v4508 = vmul.f32 %v1492, %v4190
  %v4509 = vmul.f32 %v1496, %v4190
  %v4510 = vmul.f32 %v1500, %v4190
  %v4511 = vmul.f32 %v1507, %v4194
  %v4512 = vmul.f32 %v1511, %v4194
  %v4513 = vmul.f32 %v1515, %v4194
  %v4514 = vmul.f32 %v1519, %v4194
  %v4515 = vmul.f32 %v1526, %v4198
  %v4516 = vmul.f32 %v1530, %v4198
  %v4517 = vmul.f32 %v1534, %v4198
  %v4518 = vmul.f32 %v1538, %v4198
  %v4519 = vmul.f32 %v1545, %v4202
  %v4520 = vmul.f32 %v1549, %v4202
  %v4521 = vmul.f32 %v1553, %v4202
  %v4522 = vmul.f32 %v1557, %v4202
  %v4523 = vmul.f32 %v1564, %v4206
  %v4524 = vmul.f32 %v1568, %v4206
  %v4525 = vmul.f32 %v1572, %v4206
  %v4526 = vmul.f32 %v1576, %v4206
  %v4527 = vmul.f32 %v1583, %v4210
  %v4528 = vmul.f32 %v1587, %v4210
  %v4529 = vmul.f32 %v1591, %v4210
  %v4530 = vmul.f32 %v1595, %v4210
  %v4531 = vmul.f32 %v1602, %v4214
  %v4532 = vmul.f32 %v1606, %v4214
  %v4533 = vmul.f32 %v1610, %v4214
  %v4534 = vmul.f32 %v1614, %v4214
  %v4535 = vmul.f32 %v1621, %v4218
  %v4536 = vmul.f32 %v1625, %v4218
  %v4537 = vmul.f32 %v1629, %v4218
  %v4538 = vmul.f32 %v1633, %v4218
  %v4539 = vmul.f32 %v1640, %v4222
  %v4540 = vmul.f32 %v1644, %v4222
  %v4541 = vmul.f32 %v1648, %v4222
  %v4542 = vmul.f32 %v1652, %v4222
  %v4543 = vmul.f32 %v1659, %v4226
  %v4544 = vmul.f32 %v1663, %v4226
  %v4545 = vmul.f32 %v1667, %v4226
  %v4546 = vmul.f32 %v1671, %v4226
  %v4547 = vmul.f32 %v1678, %v4230
  %v4548 = vmul.f32 %v1682, %v4230
  %v4549 = vmul.f32 %v1686, %v4230
  %v4550 = vmul.f32 %v1690, %v4230
  %v4551 = vmul.f32 %v1697, %v4234
  %v4552 = vmul.f32 %v1701, %v4234
  %v4553 = vmul.f32 %v1705, %v4234
  %v4554 = vmul.f32 %v1709, %v4234
  %v4555 = vmul.f32 %v1716, %v4238
  %v4556 = vmul.f32 %v1720, %v4238
  %v4557 = vmul.f32 %v1724, %v4238
  %v4558 = vmul.f32 %v1728, %v4238
  %v4559 = vmul.f32 %v1735, %v4242
  %v4560 = vmul.f32 %v1739, %v4242
  %v4561 = vmul.f32 %v1743, %v4242
  %v4562 = vmul.f32 %v1747, %v4242
  %v4563 = vmul.f32 %v1754, %v4246
  %v4564 = vmul.f32 %v1758, %v4246
  %v4565 = vmul.f32 %v1762, %v4246
  %v4566 = vmul.f32 %v1766, %v4246
  %v4567 = vmul.f32 %v1773, %v4250
  %v4568 = vmul.f32 %v1777, %v4250
  %v4569 = vmul.f32 %v1781, %v4250
  %v4570 = vmul.f32 %v1785, %v4250
  %v4571 = vmul.f32 %v1792, %v4254
  %v4572 = vmul.f32 %v1796, %v4254
  %v4573 = vmul.f32 %v1800, %v4254
  %v4574 = vmul.f32 %v1804, %v4254
  %v4575 = vmul.f32 %v1811, %v4258
  %v4576 = vmul.f32 %v1815, %v4258
  %v4577 = vmul.f32 %v1819, %v4258
  %v4578 = vmul.f32 %v1823, %v4258
  %v4579 = vsel %vm411, %v4323, -inf
  %v4580 = vsel %vm411, %v4327, -inf
  %v4581 = vmax.f32 %v4579, %v4580
  %v4582 = vsel %vm411, %v4331, -inf
  %v4583 = vmax.f32 %v4581, %v4582
  %v4584 = vsel %vm411, %v4335, -inf
  %v4585 = vmax.f32 %v4583, %v4584
  %v4586 = vsel %vm411, %v4339, -inf
  %v4587 = vmax.f32 %v4585, %v4586
  %v4588 = vsel %vm411, %v4343, -inf
  %v4589 = vmax.f32 %v4587, %v4588
  %v4590 = vsel %vm411, %v4347, -inf
  %v4591 = vmax.f32 %v4589, %v4590
  %v4592 = vsel %vm411, %v4351, -inf
  %v4593 = vmax.f32 %v4591, %v4592
  %v4594 = vsel %vm411, %v4355, -inf
  %v4595 = vmax.f32 %v4593, %v4594
  %v4596 = vsel %vm411, %v4359, -inf
  %v4597 = vmax.f32 %v4595, %v4596
  %v4598 = vsel %vm411, %v4363, -inf
  %v4599 = vmax.f32 %v4597, %v4598
  %v4600 = vsel %vm411, %v4367, -inf
  %v4601 = vmax.f32 %v4599, %v4600
  %v4602 = vsel %vm411, %v4371, -inf
  %v4603 = vmax.f32 %v4601, %v4602
  %v4604 = vsel %vm411, %v4375, -inf
  %v4605 = vmax.f32 %v4603, %v4604
  %v4606 = vsel %vm411, %v4379, -inf
  %v4607 = vmax.f32 %v4605, %v4606
  %v4608 = vsel %vm411, %v4383, -inf
  %v4609 = vmax.f32 %v4607, %v4608
  %v4610 = vsel %vm411, %v4387, -inf
  %v4611 = vmax.f32 %v4609, %v4610
  %v4612 = vsel %vm411, %v4391, -inf
  %v4613 = vmax.f32 %v4611, %v4612
  %v4614 = vsel %vm411, %v4395, -inf
  %v4615 = vmax.f32 %v4613, %v4614
  %v4616 = vsel %vm411, %v4399, -inf
  %v4617 = vmax.f32 %v4615, %v4616
  %v4618 = vsel %vm411, %v4403, -inf
  %v4619 = vmax.f32 %v4617, %v4618
  %v4620 = vsel %vm411, %v4407, -inf
  %v4621 = vmax.f32 %v4619, %v4620
  %v4622 = vsel %vm411, %v4411, -inf
  %v4623 = vmax.f32 %v4621, %v4622
  %v4624 = vsel %vm411, %v4415, -inf
  %v4625 = vmax.f32 %v4623, %v4624
  %v4626 = vsel %vm411, %v4419, -inf
  %v4627 = vmax.f32 %v4625, %v4626
  %v4628 = vsel %vm411, %v4423, -inf
  %v4629 = vmax.f32 %v4627, %v4628
  %v4630 = vsel %vm411, %v4427, -inf
  %v4631 = vmax.f32 %v4629, %v4630
  %v4632 = vsel %vm411, %v4431, -inf
  %v4633 = vmax.f32 %v4631, %v4632
  %v4634 = vsel %vm411, %v4435, -inf
  %v4635 = vmax.f32 %v4633, %v4634
  %v4636 = vsel %vm411, %v4439, -inf
  %v4637 = vmax.f32 %v4635, %v4636
  %v4638 = vsel %vm411, %v4443, -inf
  %v4639 = vmax.f32 %v4637, %v4638
  %v4640 = vsel %vm411, %v4447, -inf
  %v4641 = vmax.f32 %v4639, %v4640
  %v4642 = vsel %vm411, %v4451, -inf
  %v4643 = vmax.f32 %v4641, %v4642
  %v4644 = vsel %vm411, %v4455, -inf
  %v4645 = vmax.f32 %v4643, %v4644
  %v4646 = vsel %vm411, %v4459, -inf
  %v4647 = vmax.f32 %v4645, %v4646
  %v4648 = vsel %vm411, %v4463, -inf
  %v4649 = vmax.f32 %v4647, %v4648
  %v4650 = vsel %vm411, %v4467, -inf
  %v4651 = vmax.f32 %v4649, %v4650
  %v4652 = vsel %vm411, %v4471, -inf
  %v4653 = vmax.f32 %v4651, %v4652
  %v4654 = vsel %vm411, %v4475, -inf
  %v4655 = vmax.f32 %v4653, %v4654
  %v4656 = vsel %vm411, %v4479, -inf
  %v4657 = vmax.f32 %v4655, %v4656
  %v4658 = vsel %vm411, %v4483, -inf
  %v4659 = vmax.f32 %v4657, %v4658
  %v4660 = vsel %vm411, %v4487, -inf
  %v4661 = vmax.f32 %v4659, %v4660
  %v4662 = vsel %vm411, %v4491, -inf
  %v4663 = vmax.f32 %v4661, %v4662
  %v4664 = vsel %vm411, %v4495, -inf
  %v4665 = vmax.f32 %v4663, %v4664
  %v4666 = vsel %vm411, %v4499, -inf
  %v4667 = vmax.f32 %v4665, %v4666
  %v4668 = vsel %vm411, %v4503, -inf
  %v4669 = vmax.f32 %v4667, %v4668
  %v4670 = vsel %vm411, %v4507, -inf
  %v4671 = vmax.f32 %v4669, %v4670
  %v4672 = vsel %vm411, %v4511, -inf
  %v4673 = vmax.f32 %v4671, %v4672
  %v4674 = vsel %vm411, %v4515, -inf
  %v4675 = vmax.f32 %v4673, %v4674
  %v4676 = vsel %vm411, %v4519, -inf
  %v4677 = vmax.f32 %v4675, %v4676
  %v4678 = vsel %vm411, %v4523, -inf
  %v4679 = vmax.f32 %v4677, %v4678
  %v4680 = vsel %vm411, %v4527, -inf
  %v4681 = vmax.f32 %v4679, %v4680
  %v4682 = vsel %vm411, %v4531, -inf
  %v4683 = vmax.f32 %v4681, %v4682
  %v4684 = vsel %vm411, %v4535, -inf
  %v4685 = vmax.f32 %v4683, %v4684
  %v4686 = vsel %vm411, %v4539, -inf
  %v4687 = vmax.f32 %v4685, %v4686
  %v4688 = vsel %vm411, %v4543, -inf
  %v4689 = vmax.f32 %v4687, %v4688
  %v4690 = vsel %vm411, %v4547, -inf
  %v4691 = vmax.f32 %v4689, %v4690
  %v4692 = vsel %vm411, %v4551, -inf
  %v4693 = vmax.f32 %v4691, %v4692
  %v4694 = vsel %vm411, %v4555, -inf
  %v4695 = vmax.f32 %v4693, %v4694
  %v4696 = vsel %vm411, %v4559, -inf
  %v4697 = vmax.f32 %v4695, %v4696
  %v4698 = vsel %vm411, %v4563, -inf
  %v4699 = vmax.f32 %v4697, %v4698
  %v4700 = vsel %vm411, %v4567, -inf
  %v4701 = vmax.f32 %v4699, %v4700
  %v4702 = vsel %vm411, %v4571, -inf
  %v4703 = vmax.f32 %v4701, %v4702
  %v4704 = vsel %vm411, %v4575, -inf
  %v4705 = vmax.f32 %v4703, %v4704
  %v4706 = vsel %vm411, %v4324, -inf
  %v4707 = vsel %vm411, %v4328, -inf
  %v4708 = vmax.f32 %v4706, %v4707
  %v4709 = vsel %vm411, %v4332, -inf
  %v4710 = vmax.f32 %v4708, %v4709
  %v4711 = vsel %vm411, %v4336, -inf
  %v4712 = vmax.f32 %v4710, %v4711
  %v4713 = vsel %vm411, %v4340, -inf
  %v4714 = vmax.f32 %v4712, %v4713
  %v4715 = vsel %vm411, %v4344, -inf
  %v4716 = vmax.f32 %v4714, %v4715
  %v4717 = vsel %vm411, %v4348, -inf
  %v4718 = vmax.f32 %v4716, %v4717
  %v4719 = vsel %vm411, %v4352, -inf
  %v4720 = vmax.f32 %v4718, %v4719
  %v4721 = vsel %vm411, %v4356, -inf
  %v4722 = vmax.f32 %v4720, %v4721
  %v4723 = vsel %vm411, %v4360, -inf
  %v4724 = vmax.f32 %v4722, %v4723
  %v4725 = vsel %vm411, %v4364, -inf
  %v4726 = vmax.f32 %v4724, %v4725
  %v4727 = vsel %vm411, %v4368, -inf
  %v4728 = vmax.f32 %v4726, %v4727
  %v4729 = vsel %vm411, %v4372, -inf
  %v4730 = vmax.f32 %v4728, %v4729
  %v4731 = vsel %vm411, %v4376, -inf
  %v4732 = vmax.f32 %v4730, %v4731
  %v4733 = vsel %vm411, %v4380, -inf
  %v4734 = vmax.f32 %v4732, %v4733
  %v4735 = vsel %vm411, %v4384, -inf
  %v4736 = vmax.f32 %v4734, %v4735
  %v4737 = vsel %vm411, %v4388, -inf
  %v4738 = vmax.f32 %v4736, %v4737
  %v4739 = vsel %vm411, %v4392, -inf
  %v4740 = vmax.f32 %v4738, %v4739
  %v4741 = vsel %vm411, %v4396, -inf
  %v4742 = vmax.f32 %v4740, %v4741
  %v4743 = vsel %vm411, %v4400, -inf
  %v4744 = vmax.f32 %v4742, %v4743
  %v4745 = vsel %vm411, %v4404, -inf
  %v4746 = vmax.f32 %v4744, %v4745
  %v4747 = vsel %vm411, %v4408, -inf
  %v4748 = vmax.f32 %v4746, %v4747
  %v4749 = vsel %vm411, %v4412, -inf
  %v4750 = vmax.f32 %v4748, %v4749
  %v4751 = vsel %vm411, %v4416, -inf
  %v4752 = vmax.f32 %v4750, %v4751
  %v4753 = vsel %vm411, %v4420, -inf
  %v4754 = vmax.f32 %v4752, %v4753
  %v4755 = vsel %vm411, %v4424, -inf
  %v4756 = vmax.f32 %v4754, %v4755
  %v4757 = vsel %vm411, %v4428, -inf
  %v4758 = vmax.f32 %v4756, %v4757
  %v4759 = vsel %vm411, %v4432, -inf
  %v4760 = vmax.f32 %v4758, %v4759
  %v4761 = vsel %vm411, %v4436, -inf
  %v4762 = vmax.f32 %v4760, %v4761
  %v4763 = vsel %vm411, %v4440, -inf
  %v4764 = vmax.f32 %v4762, %v4763
  %v4765 = vsel %vm411, %v4444, -inf
  %v4766 = vmax.f32 %v4764, %v4765
  %v4767 = vsel %vm411, %v4448, -inf
  %v4768 = vmax.f32 %v4766, %v4767
  %v4769 = vsel %vm411, %v4452, -inf
  %v4770 = vmax.f32 %v4768, %v4769
  %v4771 = vsel %vm411, %v4456, -inf
  %v4772 = vmax.f32 %v4770, %v4771
  %v4773 = vsel %vm411, %v4460, -inf
  %v4774 = vmax.f32 %v4772, %v4773
  %v4775 = vsel %vm411, %v4464, -inf
  %v4776 = vmax.f32 %v4774, %v4775
  %v4777 = vsel %vm411, %v4468, -inf
  %v4778 = vmax.f32 %v4776, %v4777
  %v4779 = vsel %vm411, %v4472, -inf
  %v4780 = vmax.f32 %v4778, %v4779
  %v4781 = vsel %vm411, %v4476, -inf
  %v4782 = vmax.f32 %v4780, %v4781
  %v4783 = vsel %vm411, %v4480, -inf
  %v4784 = vmax.f32 %v4782, %v4783
  %v4785 = vsel %vm411, %v4484, -inf
  %v4786 = vmax.f32 %v4784, %v4785
  %v4787 = vsel %vm411, %v4488, -inf
  %v4788 = vmax.f32 %v4786, %v4787
  %v4789 = vsel %vm411, %v4492, -inf
  %v4790 = vmax.f32 %v4788, %v4789
  %v4791 = vsel %vm411, %v4496, -inf
  %v4792 = vmax.f32 %v4790, %v4791
  %v4793 = vsel %vm411, %v4500, -inf
  %v4794 = vmax.f32 %v4792, %v4793
  %v4795 = vsel %vm411, %v4504, -inf
  %v4796 = vmax.f32 %v4794, %v4795
  %v4797 = vsel %vm411, %v4508, -inf
  %v4798 = vmax.f32 %v4796, %v4797
  %v4799 = vsel %vm411, %v4512, -inf
  %v4800 = vmax.f32 %v4798, %v4799
  %v4801 = vsel %vm411, %v4516, -inf
  %v4802 = vmax.f32 %v4800, %v4801
  %v4803 = vsel %vm411, %v4520, -inf
  %v4804 = vmax.f32 %v4802, %v4803
  %v4805 = vsel %vm411, %v4524, -inf
  %v4806 = vmax.f32 %v4804, %v4805
  %v4807 = vsel %vm411, %v4528, -inf
  %v4808 = vmax.f32 %v4806, %v4807
  %v4809 = vsel %vm411, %v4532, -inf
  %v4810 = vmax.f32 %v4808, %v4809
  %v4811 = vsel %vm411, %v4536, -inf
  %v4812 = vmax.f32 %v4810, %v4811
  %v4813 = vsel %vm411, %v4540, -inf
  %v4814 = vmax.f32 %v4812, %v4813
  %v4815 = vsel %vm411, %v4544, -inf
  %v4816 = vmax.f32 %v4814, %v4815
  %v4817 = vsel %vm411, %v4548, -inf
  %v4818 = vmax.f32 %v4816, %v4817
  %v4819 = vsel %vm411, %v4552, -inf
  %v4820 = vmax.f32 %v4818, %v4819
  %v4821 = vsel %vm411, %v4556, -inf
  %v4822 = vmax.f32 %v4820, %v4821
  %v4823 = vsel %vm411, %v4560, -inf
  %v4824 = vmax.f32 %v4822, %v4823
  %v4825 = vsel %vm411, %v4564, -inf
  %v4826 = vmax.f32 %v4824, %v4825
  %v4827 = vsel %vm411, %v4568, -inf
  %v4828 = vmax.f32 %v4826, %v4827
  %v4829 = vsel %vm411, %v4572, -inf
  %v4830 = vmax.f32 %v4828, %v4829
  %v4831 = vsel %vm411, %v4576, -inf
  %v4832 = vmax.f32 %v4830, %v4831
  %v4833 = vsel %vm411, %v4325, -inf
  %v4834 = vsel %vm411, %v4329, -inf
  %v4835 = vmax.f32 %v4833, %v4834
  %v4836 = vsel %vm411, %v4333, -inf
  %v4837 = vmax.f32 %v4835, %v4836
  %v4838 = vsel %vm411, %v4337, -inf
  %v4839 = vmax.f32 %v4837, %v4838
  %v4840 = vsel %vm411, %v4341, -inf
  %v4841 = vmax.f32 %v4839, %v4840
  %v4842 = vsel %vm411, %v4345, -inf
  %v4843 = vmax.f32 %v4841, %v4842
  %v4844 = vsel %vm411, %v4349, -inf
  %v4845 = vmax.f32 %v4843, %v4844
  %v4846 = vsel %vm411, %v4353, -inf
  %v4847 = vmax.f32 %v4845, %v4846
  %v4848 = vsel %vm411, %v4357, -inf
  %v4849 = vmax.f32 %v4847, %v4848
  %v4850 = vsel %vm411, %v4361, -inf
  %v4851 = vmax.f32 %v4849, %v4850
  %v4852 = vsel %vm411, %v4365, -inf
  %v4853 = vmax.f32 %v4851, %v4852
  %v4854 = vsel %vm411, %v4369, -inf
  %v4855 = vmax.f32 %v4853, %v4854
  %v4856 = vsel %vm411, %v4373, -inf
  %v4857 = vmax.f32 %v4855, %v4856
  %v4858 = vsel %vm411, %v4377, -inf
  %v4859 = vmax.f32 %v4857, %v4858
  %v4860 = vsel %vm411, %v4381, -inf
  %v4861 = vmax.f32 %v4859, %v4860
  %v4862 = vsel %vm411, %v4385, -inf
  %v4863 = vmax.f32 %v4861, %v4862
  %v4864 = vsel %vm411, %v4389, -inf
  %v4865 = vmax.f32 %v4863, %v4864
  %v4866 = vsel %vm411, %v4393, -inf
  %v4867 = vmax.f32 %v4865, %v4866
  %v4868 = vsel %vm411, %v4397, -inf
  %v4869 = vmax.f32 %v4867, %v4868
  %v4870 = vsel %vm411, %v4401, -inf
  %v4871 = vmax.f32 %v4869, %v4870
  %v4872 = vsel %vm411, %v4405, -inf
  %v4873 = vmax.f32 %v4871, %v4872
  %v4874 = vsel %vm411, %v4409, -inf
  %v4875 = vmax.f32 %v4873, %v4874
  %v4876 = vsel %vm411, %v4413, -inf
  %v4877 = vmax.f32 %v4875, %v4876
  %v4878 = vsel %vm411, %v4417, -inf
  %v4879 = vmax.f32 %v4877, %v4878
  %v4880 = vsel %vm411, %v4421, -inf
  %v4881 = vmax.f32 %v4879, %v4880
  %v4882 = vsel %vm411, %v4425, -inf
  %v4883 = vmax.f32 %v4881, %v4882
  %v4884 = vsel %vm411, %v4429, -inf
  %v4885 = vmax.f32 %v4883, %v4884
  %v4886 = vsel %vm411, %v4433, -inf
  %v4887 = vmax.f32 %v4885, %v4886
  %v4888 = vsel %vm411, %v4437, -inf
  %v4889 = vmax.f32 %v4887, %v4888
  %v4890 = vsel %vm411, %v4441, -inf
  %v4891 = vmax.f32 %v4889, %v4890
  %v4892 = vsel %vm411, %v4445, -inf
  %v4893 = vmax.f32 %v4891, %v4892
  %v4894 = vsel %vm411, %v4449, -inf
  %v4895 = vmax.f32 %v4893, %v4894
  %v4896 = vsel %vm411, %v4453, -inf
  %v4897 = vmax.f32 %v4895, %v4896
  %v4898 = vsel %vm411, %v4457, -inf
  %v4899 = vmax.f32 %v4897, %v4898
  %v4900 = vsel %vm411, %v4461, -inf
  %v4901 = vmax.f32 %v4899, %v4900
  %v4902 = vsel %vm411, %v4465, -inf
  %v4903 = vmax.f32 %v4901, %v4902
  %v4904 = vsel %vm411, %v4469, -inf
  %v4905 = vmax.f32 %v4903, %v4904
  %v4906 = vsel %vm411, %v4473, -inf
  %v4907 = vmax.f32 %v4905, %v4906
  %v4908 = vsel %vm411, %v4477, -inf
  %v4909 = vmax.f32 %v4907, %v4908
  %v4910 = vsel %vm411, %v4481, -inf
  %v4911 = vmax.f32 %v4909, %v4910
  %v4912 = vsel %vm411, %v4485, -inf
  %v4913 = vmax.f32 %v4911, %v4912
  %v4914 = vsel %vm411, %v4489, -inf
  %v4915 = vmax.f32 %v4913, %v4914
  %v4916 = vsel %vm411, %v4493, -inf
  %v4917 = vmax.f32 %v4915, %v4916
  %v4918 = vsel %vm411, %v4497, -inf
  %v4919 = vmax.f32 %v4917, %v4918
  %v4920 = vsel %vm411, %v4501, -inf
  %v4921 = vmax.f32 %v4919, %v4920
  %v4922 = vsel %vm411, %v4505, -inf
  %v4923 = vmax.f32 %v4921, %v4922
  %v4924 = vsel %vm411, %v4509, -inf
  %v4925 = vmax.f32 %v4923, %v4924
  %v4926 = vsel %vm411, %v4513, -inf
  %v4927 = vmax.f32 %v4925, %v4926
  %v4928 = vsel %vm411, %v4517, -inf
  %v4929 = vmax.f32 %v4927, %v4928
  %v4930 = vsel %vm411, %v4521, -inf
  %v4931 = vmax.f32 %v4929, %v4930
  %v4932 = vsel %vm411, %v4525, -inf
  %v4933 = vmax.f32 %v4931, %v4932
  %v4934 = vsel %vm411, %v4529, -inf
  %v4935 = vmax.f32 %v4933, %v4934
  %v4936 = vsel %vm411, %v4533, -inf
  %v4937 = vmax.f32 %v4935, %v4936
  %v4938 = vsel %vm411, %v4537, -inf
  %v4939 = vmax.f32 %v4937, %v4938
  %v4940 = vsel %vm411, %v4541, -inf
  %v4941 = vmax.f32 %v4939, %v4940
  %v4942 = vsel %vm411, %v4545, -inf
  %v4943 = vmax.f32 %v4941, %v4942
  %v4944 = vsel %vm411, %v4549, -inf
  %v4945 = vmax.f32 %v4943, %v4944
  %v4946 = vsel %vm411, %v4553, -inf
  %v4947 = vmax.f32 %v4945, %v4946
  %v4948 = vsel %vm411, %v4557, -inf
  %v4949 = vmax.f32 %v4947, %v4948
  %v4950 = vsel %vm411, %v4561, -inf
  %v4951 = vmax.f32 %v4949, %v4950
  %v4952 = vsel %vm411, %v4565, -inf
  %v4953 = vmax.f32 %v4951, %v4952
  %v4954 = vsel %vm411, %v4569, -inf
  %v4955 = vmax.f32 %v4953, %v4954
  %v4956 = vsel %vm411, %v4573, -inf
  %v4957 = vmax.f32 %v4955, %v4956
  %v4958 = vsel %vm411, %v4577, -inf
  %v4959 = vmax.f32 %v4957, %v4958
  %v4960 = vsel %vm411, %v4326, -inf
  %v4961 = vsel %vm411, %v4330, -inf
  %v4962 = vmax.f32 %v4960, %v4961
  %v4963 = vsel %vm411, %v4334, -inf
  %v4964 = vmax.f32 %v4962, %v4963
  %v4965 = vsel %vm411, %v4338, -inf
  %v4966 = vmax.f32 %v4964, %v4965
  %v4967 = vsel %vm411, %v4342, -inf
  %v4968 = vmax.f32 %v4966, %v4967
  %v4969 = vsel %vm411, %v4346, -inf
  %v4970 = vmax.f32 %v4968, %v4969
  %v4971 = vsel %vm411, %v4350, -inf
  %v4972 = vmax.f32 %v4970, %v4971
  %v4973 = vsel %vm411, %v4354, -inf
  %v4974 = vmax.f32 %v4972, %v4973
  %v4975 = vsel %vm411, %v4358, -inf
  %v4976 = vmax.f32 %v4974, %v4975
  %v4977 = vsel %vm411, %v4362, -inf
  %v4978 = vmax.f32 %v4976, %v4977
  %v4979 = vsel %vm411, %v4366, -inf
  %v4980 = vmax.f32 %v4978, %v4979
  %v4981 = vsel %vm411, %v4370, -inf
  %v4982 = vmax.f32 %v4980, %v4981
  %v4983 = vsel %vm411, %v4374, -inf
  %v4984 = vmax.f32 %v4982, %v4983
  %v4985 = vsel %vm411, %v4378, -inf
  %v4986 = vmax.f32 %v4984, %v4985
  %v4987 = vsel %vm411, %v4382, -inf
  %v4988 = vmax.f32 %v4986, %v4987
  %v4989 = vsel %vm411, %v4386, -inf
  %v4990 = vmax.f32 %v4988, %v4989
  %v4991 = vsel %vm411, %v4390, -inf
  %v4992 = vmax.f32 %v4990, %v4991
  %v4993 = vsel %vm411, %v4394, -inf
  %v4994 = vmax.f32 %v4992, %v4993
  %v4995 = vsel %vm411, %v4398, -inf
  %v4996 = vmax.f32 %v4994, %v4995
  %v4997 = vsel %vm411, %v4402, -inf
  %v4998 = vmax.f32 %v4996, %v4997
  %v4999 = vsel %vm411, %v4406, -inf
  %v5000 = vmax.f32 %v4998, %v4999
  %v5001 = vsel %vm411, %v4410, -inf
  %v5002 = vmax.f32 %v5000, %v5001
  %v5003 = vsel %vm411, %v4414, -inf
  %v5004 = vmax.f32 %v5002, %v5003
  %v5005 = vsel %vm411, %v4418, -inf
  %v5006 = vmax.f32 %v5004, %v5005
  %v5007 = vsel %vm411, %v4422, -inf
  %v5008 = vmax.f32 %v5006, %v5007
  %v5009 = vsel %vm411, %v4426, -inf
  %v5010 = vmax.f32 %v5008, %v5009
  %v5011 = vsel %vm411, %v4430, -inf
  %v5012 = vmax.f32 %v5010, %v5011
  %v5013 = vsel %vm411, %v4434, -inf
  %v5014 = vmax.f32 %v5012, %v5013
  %v5015 = vsel %vm411, %v4438, -inf
  %v5016 = vmax.f32 %v5014, %v5015
  %v5017 = vsel %vm411, %v4442, -inf
  %v5018 = vmax.f32 %v5016, %v5017
  %v5019 = vsel %vm411, %v4446, -inf
  %v5020 = vmax.f32 %v5018, %v5019
  %v5021 = vsel %vm411, %v4450, -inf
  %v5022 = vmax.f32 %v5020, %v5021
  %v5023 = vsel %vm411, %v4454, -inf
  %v5024 = vmax.f32 %v5022, %v5023
  %v5025 = vsel %vm411, %v4458, -inf
  %v5026 = vmax.f32 %v5024, %v5025
  %v5027 = vsel %vm411, %v4462, -inf
  %v5028 = vmax.f32 %v5026, %v5027
  %v5029 = vsel %vm411, %v4466, -inf
  %v5030 = vmax.f32 %v5028, %v5029
  %v5031 = vsel %vm411, %v4470, -inf
  %v5032 = vmax.f32 %v5030, %v5031
  %v5033 = vsel %vm411, %v4474, -inf
  %v5034 = vmax.f32 %v5032, %v5033
  %v5035 = vsel %vm411, %v4478, -inf
  %v5036 = vmax.f32 %v5034, %v5035
  %v5037 = vsel %vm411, %v4482, -inf
  %v5038 = vmax.f32 %v5036, %v5037
  %v5039 = vsel %vm411, %v4486, -inf
  %v5040 = vmax.f32 %v5038, %v5039
  %v5041 = vsel %vm411, %v4490, -inf
  %v5042 = vmax.f32 %v5040, %v5041
  %v5043 = vsel %vm411, %v4494, -inf
  %v5044 = vmax.f32 %v5042, %v5043
  %v5045 = vsel %vm411, %v4498, -inf
  %v5046 = vmax.f32 %v5044, %v5045
  %v5047 = vsel %vm411, %v4502, -inf
  %v5048 = vmax.f32 %v5046, %v5047
  %v5049 = vsel %vm411, %v4506, -inf
  %v5050 = vmax.f32 %v5048, %v5049
  %v5051 = vsel %vm411, %v4510, -inf
  %v5052 = vmax.f32 %v5050, %v5051
  %v5053 = vsel %vm411, %v4514, -inf
  %v5054 = vmax.f32 %v5052, %v5053
  %v5055 = vsel %vm411, %v4518, -inf
  %v5056 = vmax.f32 %v5054, %v5055
  %v5057 = vsel %vm411, %v4522, -inf
  %v5058 = vmax.f32 %v5056, %v5057
  %v5059 = vsel %vm411, %v4526, -inf
  %v5060 = vmax.f32 %v5058, %v5059
  %v5061 = vsel %vm411, %v4530, -inf
  %v5062 = vmax.f32 %v5060, %v5061
  %v5063 = vsel %vm411, %v4534, -inf
  %v5064 = vmax.f32 %v5062, %v5063
  %v5065 = vsel %vm411, %v4538, -inf
  %v5066 = vmax.f32 %v5064, %v5065
  %v5067 = vsel %vm411, %v4542, -inf
  %v5068 = vmax.f32 %v5066, %v5067
  %v5069 = vsel %vm411, %v4546, -inf
  %v5070 = vmax.f32 %v5068, %v5069
  %v5071 = vsel %vm411, %v4550, -inf
  %v5072 = vmax.f32 %v5070, %v5071
  %v5073 = vsel %vm411, %v4554, -inf
  %v5074 = vmax.f32 %v5072, %v5073
  %v5075 = vsel %vm411, %v4558, -inf
  %v5076 = vmax.f32 %v5074, %v5075
  %v5077 = vsel %vm411, %v4562, -inf
  %v5078 = vmax.f32 %v5076, %v5077
  %v5079 = vsel %vm411, %v4566, -inf
  %v5080 = vmax.f32 %v5078, %v5079
  %v5081 = vsel %vm411, %v4570, -inf
  %v5082 = vmax.f32 %v5080, %v5081
  %v5083 = vsel %vm411, %v4574, -inf
  %v5084 = vmax.f32 %v5082, %v5083
  %v5085 = vsel %vm411, %v4578, -inf
  %v5086 = vmax.f32 %v5084, %v5085
  %v5087 = vpack.c.bf16 %v4832, %v4705
  %v5088 = vpack.c.bf16 %v5086, %v4959
  %v5090 = vsel %vm411, %v5087, 0
  %v5093 = vsel %vm411, %v5088, 0
  %5095 = vmatprep.subr.bf16.mxu0 0
  %5096 = vmatpush1.bf16.msra.mxu0 %v3327
  %5097 = vmatprep.subr.bf16.mxu0 0
  %5098 = vmatpush1.bf16.msra.mxu0 %v3328
  %5099 = vmatprep.subr.bf16.mxu0 0
  %5100 = vmatpush1.bf16.msra.mxu0 0
  %5101 = vmatprep.subr.bf16.mxu0 0
  %5102 = vmatpush1.bf16.msra.mxu0 0
  %5103 = vmatprep.subr.bf16.mxu0 0
  %5104 = vmatpush1.bf16.msra.mxu0 0
  %5105 = vmatprep.subr.bf16.mxu0 0
  %5106 = vmatpush1.bf16.msra.mxu0 0
  %5107 = vmatprep.subr.bf16.mxu0 0
  %5108 = vmatpush1.bf16.msra.mxu0 0
  %5109 = vmatprep.subr.bf16.mxu0 0
  %5110 = vmatpush1.bf16.msra.mxu0 0
  %5111 = vmatprep.subr.bf16.mxu0 0
  %5112 = vmatpush1.bf16.msra.mxu0 0
  %5113 = vmatprep.subr.bf16.mxu0 0
  %5114 = vmatpush1.bf16.msra.mxu0 0
  %5115 = vmatprep.subr.bf16.mxu0 0
  %5116 = vmatpush1.bf16.msra.mxu0 0
  %5117 = vmatprep.subr.bf16.mxu0 0
  %5118 = vmatpush1.bf16.msra.mxu0 0
  %5119 = vmatprep.subr.bf16.mxu0 0
  %5120 = vmatpush1.bf16.msra.mxu0 0
  %5121 = vmatprep.subr.bf16.mxu0 0
  %5122 = vmatpush1.bf16.msra.mxu0 0
  %5123 = vmatprep.subr.bf16.mxu0 0
  %5124 = vmatpush1.bf16.msra.mxu0 0
  %5125 = vmatprep.subr.bf16.mxu0 0
  %5126 = vmatpush1.bf16.msra.mxu0 0
  %5127 = vmatprep.mubr.bf16.mxu0 0
  %5128 = vmatmul.mubr.bf16.gmra.mrb[0].mxu0 %v5090
  %v5129 = vpop.f32.mrb[0].mxu0
  %v5130 = vadd.f32 0.0, %v5129
  %v5131 = vpop.f32.mrb[0].mxu0
  %v5132 = vpop.f32.mrb[0].mxu0
  %v5133 = vadd.f32 0.0, %v5132
  %v5134 = vpop.f32.mrb[0].mxu0
  %5135 = vmatprep.mubr.bf16.mxu0 0
  %5136 = vmatmul.mubr.bf16.gmra.mrb[0].mxu0 %v5093
  %v5137 = vpop.f32.mrb[0].mxu0
  %v5138 = vadd.f32 0.0, %v5137
  %v5139 = vpop.f32.mrb[0].mxu0
  %v5140 = vpop.f32.mrb[0].mxu0
  %v5141 = vadd.f32 0.0, %v5140
  %v5142 = vpop.f32.mrb[0].mxu0
  %5143 = vdwg.mxu0
  %5144 = vmatprep.subr.bf16.mxu0 0
  %5145 = vmatpush1.bf16.msra.mxu0 %v3394
  %5146 = vmatprep.subr.bf16.mxu0 0
  %5147 = vmatpush1.bf16.msra.mxu0 %v3395
  %5148 = vmatprep.subr.bf16.mxu0 0
  %5149 = vmatpush1.bf16.msra.mxu0 0
  %5150 = vmatprep.subr.bf16.mxu0 0
  %5151 = vmatpush1.bf16.msra.mxu0 0
  %5152 = vmatprep.subr.bf16.mxu0 0
  %5153 = vmatpush1.bf16.msra.mxu0 0
  %5154 = vmatprep.subr.bf16.mxu0 0
  %5155 = vmatpush1.bf16.msra.mxu0 0
  %5156 = vmatprep.subr.bf16.mxu0 0
  %5157 = vmatpush1.bf16.msra.mxu0 0
  %5158 = vmatprep.subr.bf16.mxu0 0
  %5159 = vmatpush1.bf16.msra.mxu0 0
  %5160 = vmatprep.subr.bf16.mxu0 0
  %5161 = vmatpush1.bf16.msra.mxu0 0
  %5162 = vmatprep.subr.bf16.mxu0 0
  %5163 = vmatpush1.bf16.msra.mxu0 0
  %5164 = vmatprep.subr.bf16.mxu0 0
  %5165 = vmatpush1.bf16.msra.mxu0 0
  %5166 = vmatprep.subr.bf16.mxu0 0
  %5167 = vmatpush1.bf16.msra.mxu0 0
  %5168 = vmatprep.subr.bf16.mxu0 0
  %5169 = vmatpush1.bf16.msra.mxu0 0
  %5170 = vmatprep.subr.bf16.mxu0 0
  %5171 = vmatpush1.bf16.msra.mxu0 0
  %5172 = vmatprep.subr.bf16.mxu0 0
  %5173 = vmatpush1.bf16.msra.mxu0 0
  %5174 = vmatprep.subr.bf16.mxu0 0
  %5175 = vmatpush1.bf16.msra.mxu0 0
  %5176 = vmatprep.mubr.bf16.mxu0 0
  %5177 = vmatmul.mubr.bf16.gmra.mrb[0].mxu0 %v5090
  %v5178 = vpop.f32.mrb[0].mxu0
  %v5179 = vadd.f32 0.0, %v5178
  %v5180 = vpop.f32.mrb[0].mxu0
  %v5181 = vpop.f32.mrb[0].mxu0
  %v5182 = vadd.f32 0.0, %v5181
  %v5183 = vpop.f32.mrb[0].mxu0
  %5184 = vmatprep.mubr.bf16.mxu0 0
  %5185 = vmatmul.mubr.bf16.gmra.mrb[0].mxu0 %v5093
  %v5186 = vpop.f32.mrb[0].mxu0
  %v5187 = vadd.f32 0.0, %v5186
  %v5188 = vpop.f32.mrb[0].mxu0
  %v5189 = vpop.f32.mrb[0].mxu0
  %v5190 = vadd.f32 0.0, %v5189
  %v5191 = vpop.f32.mrb[0].mxu0
  %5192 = vdwg.mxu0
  %v5193 = vpack.c.bf16 %v5133, %v5130
  %v5194 = vpack.c.bf16 %v5141, %v5138
  %v5195 = vpack.c.bf16 %v5182, %v5179
  %v5196 = vpack.c.bf16 %v5190, %v5187
  %5197 = vmatprep.subr.bf16.mxu0 0
  %5198 = vmatpush1.bf16.msra.mxu0 %v5195
  %5199 = vmatprep.subr.bf16.mxu0 0
  %5200 = vmatpush1.bf16.msra.mxu0 %v5196
  %5201 = vmatprep.subr.bf16.mxu0 0
  %5202 = vmatpush1.bf16.msra.mxu0 0
  %5203 = vmatprep.subr.bf16.mxu0 0
  %5204 = vmatpush1.bf16.msra.mxu0 0
  %5205 = vmatprep.subr.bf16.mxu0 0
  %5206 = vmatpush1.bf16.msra.mxu0 0
  %5207 = vmatprep.subr.bf16.mxu0 0
  %5208 = vmatpush1.bf16.msra.mxu0 0
  %5209 = vmatprep.subr.bf16.mxu0 0
  %5210 = vmatpush1.bf16.msra.mxu0 0
  %5211 = vmatprep.subr.bf16.mxu0 0
  %5212 = vmatpush1.bf16.msra.mxu0 0
  %5213 = vmatprep.subr.bf16.mxu0 0
  %5214 = vmatpush1.bf16.msra.mxu0 0
  %5215 = vmatprep.subr.bf16.mxu0 0
  %5216 = vmatpush1.bf16.msra.mxu0 0
  %5217 = vmatprep.subr.bf16.mxu0 0
  %5218 = vmatpush1.bf16.msra.mxu0 0
  %5219 = vmatprep.subr.bf16.mxu0 0
  %5220 = vmatpush1.bf16.msra.mxu0 0
  %5221 = vmatprep.subr.bf16.mxu0 0
  %5222 = vmatpush1.bf16.msra.mxu0 0
  %5223 = vmatprep.subr.bf16.mxu0 0
  %5224 = vmatpush1.bf16.msra.mxu0 0
  %5225 = vmatprep.subr.bf16.mxu0 0
  %5226 = vmatpush1.bf16.msra.mxu0 0
  %5227 = vmatprep.subr.bf16.mxu0 0
  %5228 = vmatpush1.bf16.msra.mxu0 0
  %5229 = vmatprep.mubr.bf16.mxu0 0
  %5230 = vmatmul.mubr.bf16.gmra.mrb[0].mxu0 %v413
  %v5231 = vpop.f32.mrb[0].mxu0
  %v5232 = vadd.f32 0.0, %v5231
  %v5233 = vpop.f32.mrb[0].mxu0
  %v5234 = vpop.f32.mrb[0].mxu0
  %v5235 = vadd.f32 0.0, %v5234
  %v5236 = vpop.f32.mrb[0].mxu0
  %5237 = vmatprep.mubr.bf16.mxu0 0
  %5238 = vmatmul.mubr.bf16.gmra.mrb[0].mxu0 %v416
  %v5239 = vpop.f32.mrb[0].mxu0
  %v5240 = vadd.f32 0.0, %v5239
  %v5241 = vpop.f32.mrb[0].mxu0
  %v5242 = vpop.f32.mrb[0].mxu0
  %v5243 = vadd.f32 0.0, %v5242
  %v5244 = vpop.f32.mrb[0].mxu0
  %5245 = vmatprep.mubr.bf16.mxu0 0
  %5246 = vmatmul.mubr.bf16.gmra.mrb[0].mxu0 %v419
  %v5247 = vpop.f32.mrb[0].mxu0
  %v5248 = vadd.f32 0.0, %v5247
  %v5249 = vpop.f32.mrb[0].mxu0
  %v5250 = vpop.f32.mrb[0].mxu0
  %v5251 = vadd.f32 0.0, %v5250
  %v5252 = vpop.f32.mrb[0].mxu0
  %5253 = vmatprep.mubr.bf16.mxu0 0
  %5254 = vmatmul.mubr.bf16.gmra.mrb[0].mxu0 %v422
  %v5255 = vpop.f32.mrb[0].mxu0
  %v5256 = vadd.f32 0.0, %v5255
  %v5257 = vpop.f32.mrb[0].mxu0
  %v5258 = vpop.f32.mrb[0].mxu0
  %v5259 = vadd.f32 0.0, %v5258
  %v5260 = vpop.f32.mrb[0].mxu0
  %5261 = vdwg.mxu0
  %5262 = vmatprep.subr.bf16.mxu0 0
  %5263 = vmatpush1.bf16.msra.mxu0 %v5193
  %5264 = vmatprep.subr.bf16.mxu0 0
  %5265 = vmatpush1.bf16.msra.mxu0 %v5194
  %5266 = vmatprep.subr.bf16.mxu0 0
  %5267 = vmatpush1.bf16.msra.mxu0 0
  %5268 = vmatprep.subr.bf16.mxu0 0
  %5269 = vmatpush1.bf16.msra.mxu0 0
  %5270 = vmatprep.subr.bf16.mxu0 0
  %5271 = vmatpush1.bf16.msra.mxu0 0
  %5272 = vmatprep.subr.bf16.mxu0 0
  %5273 = vmatpush1.bf16.msra.mxu0 0
  %5274 = vmatprep.subr.bf16.mxu0 0
  %5275 = vmatpush1.bf16.msra.mxu0 0
  %5276 = vmatprep.subr.bf16.mxu0 0
  %5277 = vmatpush1.bf16.msra.mxu0 0
  %5278 = vmatprep.subr.bf16.mxu0 0
  %5279 = vmatpush1.bf16.msra.mxu0 0
  %5280 = vmatprep.subr.bf16.mxu0 0
  %5281 = vmatpush1.bf16.msra.mxu0 0
  %5282 = vmatprep.subr.bf16.mxu0 0
  %5283 = vmatpush1.bf16.msra.mxu0 0
  %5284 = vmatprep.subr.bf16.mxu0 0
  %5285 = vmatpush1.bf16.msra.mxu0 0
  %5286 = vmatprep.subr.bf16.mxu0 0
  %5287 = vmatpush1.bf16.msra.mxu0 0
  %5288 = vmatprep.subr.bf16.mxu0 0
  %5289 = vmatpush1.bf16.msra.mxu0 0
  %5290 = vmatprep.subr.bf16.mxu0 0
  %5291 = vmatpush1.bf16.msra.mxu0 0
  %5292 = vmatprep.subr.bf16.mxu0 0
  %5293 = vmatpush1.bf16.msra.mxu0 0
  %5294 = vmatprep.mubr.bf16.mxu0 0
  %5295 = vmatmul.mubr.bf16.gmra.mrb[0].mxu0 %v510
  %v5296 = vpop.f32.mrb[0].mxu0
  %v5297 = vadd.f32 %v5232, %v5296
  %v5298 = vpop.f32.mrb[0].mxu0
  %v5299 = vpop.f32.mrb[0].mxu0
  %v5300 = vadd.f32 %v5235, %v5299
  %v5301 = vpop.f32.mrb[0].mxu0
  %5302 = vmatprep.mubr.bf16.mxu0 0
  %5303 = vmatmul.mubr.bf16.gmra.mrb[0].mxu0 %v513
  %v5304 = vpop.f32.mrb[0].mxu0
  %v5305 = vadd.f32 %v5240, %v5304
  %v5306 = vpop.f32.mrb[0].mxu0
  %v5307 = vpop.f32.mrb[0].mxu0
  %v5308 = vadd.f32 %v5243, %v5307
  %v5309 = vpop.f32.mrb[0].mxu0
  %5310 = vmatprep.mubr.bf16.mxu0 0
  %5311 = vmatmul.mubr.bf16.gmra.mrb[0].mxu0 %v516
  %v5312 = vpop.f32.mrb[0].mxu0
  %v5313 = vadd.f32 %v5248, %v5312
  %v5314 = vpop.f32.mrb[0].mxu0
  %v5315 = vpop.f32.mrb[0].mxu0
  %v5316 = vadd.f32 %v5251, %v5315
  %v5317 = vpop.f32.mrb[0].mxu0
  %5318 = vmatprep.mubr.bf16.mxu0 0
  %5319 = vmatmul.mubr.bf16.gmra.mrb[0].mxu0 %v519
  %v5320 = vpop.f32.mrb[0].mxu0
  %v5321 = vadd.f32 %v5256, %v5320
  %v5322 = vpop.f32.mrb[0].mxu0
  %v5323 = vpop.f32.mrb[0].mxu0
  %v5324 = vadd.f32 %v5259, %v5323
  %v5325 = vpop.f32.mrb[0].mxu0
  %5326 = vdwg.mxu0
  %v5327 = vadd.f32 %v5297, %v3585
  %v5328 = vadd.f32 %v5300, %v3585
  %v5329 = vadd.f32 %v5305, %v3585
  %v5330 = vadd.f32 %v5308, %v3585
  %v5331 = vadd.f32 %v5313, %v3585
  %v5332 = vadd.f32 %v5316, %v3585
  %v5333 = vadd.f32 %v5321, %v3585
  %v5334 = vadd.f32 %v5324, %v3585
  %v5335 = vmax.f32 %v5327, 0.0
  %v5336 = vmax.f32 %v5328, 0.0
  %v5337 = vmax.f32 %v5329, 0.0
  %v5338 = vmax.f32 %v5330, 0.0
  %v5339 = vmax.f32 %v5331, 0.0
  %v5340 = vmax.f32 %v5332, 0.0
  %v5341 = vmax.f32 %v5333, 0.0
  %v5342 = vmax.f32 %v5334, 0.0
  %v5351 = vcombine.high %v5335, %v5335
  %v5353 = vunpack.c.l.s4 1966171168
  %v5354 = vunpack.c.0.s8 %v5353
  %v5355 = vlaneseq
  %v5356 = vshrl.u32 %v5355, 7
  %v5357 = vsub.s32 %v5354, %v5356
  %v5358 = vrot.slane %v5335, %v5357
  %v5360 = vunpack.c.l.s4 1966171168
  %v5361 = vunpack.c.0.s8 %v5360
  %v5362 = vlaneseq
  %v5363 = vshrl.u32 %v5362, 7
  %v5364 = vsub.s32 %v5361, %v5363
  %v5365 = vrot.slane %v5351, %v5364
  %v5366 = vcombine.high %v5358, %v5358
  %v5367 = vcombine.high %v5365, %v5365
  %v5369 = vunpack.c.l.s4 1966171168
  %v5370 = vunpack.c.0.s8 %v5369
  %v5371 = vlaneseq
  %v5372 = vshrl.u32 %v5371, 7
  %v5373 = vsub.s32 %v5370, %v5372
  %v5374 = vrot.slane %v5358, %v5373
  %v5376 = vunpack.c.l.s4 1966171168
  %v5377 = vunpack.c.0.s8 %v5376
  %v5378 = vlaneseq
  %v5379 = vshrl.u32 %v5378, 7
  %v5380 = vsub.s32 %v5377, %v5379
  %v5381 = vrot.slane %v5365, %v5380
  %v5383 = vunpack.c.l.s4 1966171168
  %v5384 = vunpack.c.0.s8 %v5383
  %v5385 = vlaneseq
  %v5386 = vshrl.u32 %v5385, 7
  %v5387 = vsub.s32 %v5384, %v5386
  %v5388 = vrot.slane %v5366, %v5387
  %v5390 = vunpack.c.l.s4 1966171168
  %v5391 = vunpack.c.0.s8 %v5390
  %v5392 = vlaneseq
  %v5393 = vshrl.u32 %v5392, 7
  %v5394 = vsub.s32 %v5391, %v5393
  %v5395 = vrot.slane %v5367, %v5394
  %v5396 = vcombine.high %v5374, %v5374
  %v5397 = vcombine.high %v5381, %v5381
  %v5398 = vcombine.high %v5388, %v5388
  %v5399 = vcombine.high %v5395, %v5395
  %v5400 = vcombine.high %v5336, %v5336
  %v5402 = vunpack.c.l.s4 1966171168
  %v5403 = vunpack.c.0.s8 %v5402
  %v5404 = vlaneseq
  %v5405 = vshrl.u32 %v5404, 7
  %v5406 = vsub.s32 %v5403, %v5405
  %v5407 = vrot.slane %v5336, %v5406
  %v5409 = vunpack.c.l.s4 1966171168
  %v5410 = vunpack.c.0.s8 %v5409
  %v5411 = vlaneseq
  %v5412 = vshrl.u32 %v5411, 7
  %v5413 = vsub.s32 %v5410, %v5412
  %v5414 = vrot.slane %v5400, %v5413
  %v5415 = vcombine.high %v5407, %v5407
  %v5416 = vcombine.high %v5414, %v5414
  %v5418 = vunpack.c.l.s4 1966171168
  %v5419 = vunpack.c.0.s8 %v5418
  %v5420 = vlaneseq
  %v5421 = vshrl.u32 %v5420, 7
  %v5422 = vsub.s32 %v5419, %v5421
  %v5423 = vrot.slane %v5407, %v5422
  %v5425 = vunpack.c.l.s4 1966171168
  %v5426 = vunpack.c.0.s8 %v5425
  %v5427 = vlaneseq
  %v5428 = vshrl.u32 %v5427, 7
  %v5429 = vsub.s32 %v5426, %v5428
  %v5430 = vrot.slane %v5414, %v5429
  %v5432 = vunpack.c.l.s4 1966171168
  %v5433 = vunpack.c.0.s8 %v5432
  %v5434 = vlaneseq
  %v5435 = vshrl.u32 %v5434, 7
  %v5436 = vsub.s32 %v5433, %v5435
  %v5437 = vrot.slane %v5415, %v5436
  %v5439 = vunpack.c.l.s4 1966171168
  %v5440 = vunpack.c.0.s8 %v5439
  %v5441 = vlaneseq
  %v5442 = vshrl.u32 %v5441, 7
  %v5443 = vsub.s32 %v5440, %v5442
  %v5444 = vrot.slane %v5416, %v5443
  %v5445 = vcombine.high %v5423, %v5423
  %v5446 = vcombine.high %v5430, %v5430
  %v5447 = vcombine.high %v5437, %v5437
  %v5448 = vcombine.high %v5444, %v5444
  %v5449 = vcombine.high %v5337, %v5337
  %v5451 = vunpack.c.l.s4 1966171168
  %v5452 = vunpack.c.0.s8 %v5451
  %v5453 = vlaneseq
  %v5454 = vshrl.u32 %v5453, 7
  %v5455 = vsub.s32 %v5452, %v5454
  %v5456 = vrot.slane %v5337, %v5455
  %v5458 = vunpack.c.l.s4 1966171168
  %v5459 = vunpack.c.0.s8 %v5458
  %v5460 = vlaneseq
  %v5461 = vshrl.u32 %v5460, 7
  %v5462 = vsub.s32 %v5459, %v5461
  %v5463 = vrot.slane %v5449, %v5462
  %v5464 = vcombine.high %v5456, %v5456
  %v5465 = vcombine.high %v5463, %v5463
  %v5467 = vunpack.c.l.s4 1966171168
  %v5468 = vunpack.c.0.s8 %v5467
  %v5469 = vlaneseq
  %v5470 = vshrl.u32 %v5469, 7
  %v5471 = vsub.s32 %v5468, %v5470
  %v5472 = vrot.slane %v5456, %v5471
  %v5474 = vunpack.c.l.s4 1966171168
  %v5475 = vunpack.c.0.s8 %v5474
  %v5476 = vlaneseq
  %v5477 = vshrl.u32 %v5476, 7
  %v5478 = vsub.s32 %v5475, %v5477
  %v5479 = vrot.slane %v5463, %v5478
  %v5481 = vunpack.c.l.s4 1966171168
  %v5482 = vunpack.c.0.s8 %v5481
  %v5483 = vlaneseq
  %v5484 = vshrl.u32 %v5483, 7
  %v5485 = vsub.s32 %v5482, %v5484
  %v5486 = vrot.slane %v5464, %v5485
  %v5488 = vunpack.c.l.s4 1966171168
  %v5489 = vunpack.c.0.s8 %v5488
  %v5490 = vlaneseq
  %v5491 = vshrl.u32 %v5490, 7
  %v5492 = vsub.s32 %v5489, %v5491
  %v5493 = vrot.slane %v5465, %v5492
  %v5494 = vcombine.high %v5472, %v5472
  %v5495 = vcombine.high %v5479, %v5479
  %v5496 = vcombine.high %v5486, %v5486
  %v5497 = vcombine.high %v5493, %v5493
  %v5498 = vcombine.high %v5338, %v5338
  %v5500 = vunpack.c.l.s4 1966171168
  %v5501 = vunpack.c.0.s8 %v5500
  %v5502 = vlaneseq
  %v5503 = vshrl.u32 %v5502, 7
  %v5504 = vsub.s32 %v5501, %v5503
  %v5505 = vrot.slane %v5338, %v5504
  %v5507 = vunpack.c.l.s4 1966171168
  %v5508 = vunpack.c.0.s8 %v5507
  %v5509 = vlaneseq
  %v5510 = vshrl.u32 %v5509, 7
  %v5511 = vsub.s32 %v5508, %v5510
  %v5512 = vrot.slane %v5498, %v5511
  %v5513 = vcombine.high %v5505, %v5505
  %v5514 = vcombine.high %v5512, %v5512
  %v5516 = vunpack.c.l.s4 1966171168
  %v5517 = vunpack.c.0.s8 %v5516
  %v5518 = vlaneseq
  %v5519 = vshrl.u32 %v5518, 7
  %v5520 = vsub.s32 %v5517, %v5519
  %v5521 = vrot.slane %v5505, %v5520
  %v5523 = vunpack.c.l.s4 1966171168
  %v5524 = vunpack.c.0.s8 %v5523
  %v5525 = vlaneseq
  %v5526 = vshrl.u32 %v5525, 7
  %v5527 = vsub.s32 %v5524, %v5526
  %v5528 = vrot.slane %v5512, %v5527
  %v5530 = vunpack.c.l.s4 1966171168
  %v5531 = vunpack.c.0.s8 %v5530
  %v5532 = vlaneseq
  %v5533 = vshrl.u32 %v5532, 7
  %v5534 = vsub.s32 %v5531, %v5533
  %v5535 = vrot.slane %v5513, %v5534
  %v5537 = vunpack.c.l.s4 1966171168
  %v5538 = vunpack.c.0.s8 %v5537
  %v5539 = vlaneseq
  %v5540 = vshrl.u32 %v5539, 7
  %v5541 = vsub.s32 %v5538, %v5540
  %v5542 = vrot.slane %v5514, %v5541
  %v5543 = vcombine.high %v5521, %v5521
  %v5544 = vcombine.high %v5528, %v5528
  %v5545 = vcombine.high %v5535, %v5535
  %v5546 = vcombine.high %v5542, %v5542
  %v5547 = vcombine.high %v5339, %v5339
  %v5549 = vunpack.c.l.s4 1966171168
  %v5550 = vunpack.c.0.s8 %v5549
  %v5551 = vlaneseq
  %v5552 = vshrl.u32 %v5551, 7
  %v5553 = vsub.s32 %v5550, %v5552
  %v5554 = vrot.slane %v5339, %v5553
  %v5556 = vunpack.c.l.s4 1966171168
  %v5557 = vunpack.c.0.s8 %v5556
  %v5558 = vlaneseq
  %v5559 = vshrl.u32 %v5558, 7
  %v5560 = vsub.s32 %v5557, %v5559
  %v5561 = vrot.slane %v5547, %v5560
  %v5562 = vcombine.high %v5554, %v5554
  %v5563 = vcombine.high %v5561, %v5561
  %v5565 = vunpack.c.l.s4 1966171168
  %v5566 = vunpack.c.0.s8 %v5565
  %v5567 = vlaneseq
  %v5568 = vshrl.u32 %v5567, 7
  %v5569 = vsub.s32 %v5566, %v5568
  %v5570 = vrot.slane %v5554, %v5569
  %v5572 = vunpack.c.l.s4 1966171168
  %v5573 = vunpack.c.0.s8 %v5572
  %v5574 = vlaneseq
  %v5575 = vshrl.u32 %v5574, 7
  %v5576 = vsub.s32 %v5573, %v5575
  %v5577 = vrot.slane %v5561, %v5576
  %v5579 = vunpack.c.l.s4 1966171168
  %v5580 = vunpack.c.0.s8 %v5579
  %v5581 = vlaneseq
  %v5582 = vshrl.u32 %v5581, 7
  %v5583 = vsub.s32 %v5580, %v5582
  %v5584 = vrot.slane %v5562, %v5583
  %v5586 = vunpack.c.l.s4 1966171168
  %v5587 = vunpack.c.0.s8 %v5586
  %v5588 = vlaneseq
  %v5589 = vshrl.u32 %v5588, 7
  %v5590 = vsub.s32 %v5587, %v5589
  %v5591 = vrot.slane %v5563, %v5590
  %v5592 = vcombine.high %v5570, %v5570
  %v5593 = vcombine.high %v5577, %v5577
  %v5594 = vcombine.high %v5584, %v5584
  %v5595 = vcombine.high %v5591, %v5591
  %v5596 = vcombine.high %v5340, %v5340
  %v5598 = vunpack.c.l.s4 1966171168
  %v5599 = vunpack.c.0.s8 %v5598
  %v5600 = vlaneseq
  %v5601 = vshrl.u32 %v5600, 7
  %v5602 = vsub.s32 %v5599, %v5601
  %v5603 = vrot.slane %v5340, %v5602
  %v5605 = vunpack.c.l.s4 1966171168
  %v5606 = vunpack.c.0.s8 %v5605
  %v5607 = vlaneseq
  %v5608 = vshrl.u32 %v5607, 7
  %v5609 = vsub.s32 %v5606, %v5608
  %v5610 = vrot.slane %v5596, %v5609
  %v5611 = vcombine.high %v5603, %v5603
  %v5612 = vcombine.high %v5610, %v5610
  %v5614 = vunpack.c.l.s4 1966171168
  %v5615 = vunpack.c.0.s8 %v5614
  %v5616 = vlaneseq
  %v5617 = vshrl.u32 %v5616, 7
  %v5618 = vsub.s32 %v5615, %v5617
  %v5619 = vrot.slane %v5603, %v5618
  %v5621 = vunpack.c.l.s4 1966171168
  %v5622 = vunpack.c.0.s8 %v5621
  %v5623 = vlaneseq
  %v5624 = vshrl.u32 %v5623, 7
  %v5625 = vsub.s32 %v5622, %v5624
  %v5626 = vrot.slane %v5610, %v5625
  %v5628 = vunpack.c.l.s4 1966171168
  %v5629 = vunpack.c.0.s8 %v5628
  %v5630 = vlaneseq
  %v5631 = vshrl.u32 %v5630, 7
  %v5632 = vsub.s32 %v5629, %v5631
  %v5633 = vrot.slane %v5611, %v5632
  %v5635 = vunpack.c.l.s4 1966171168
  %v5636 = vunpack.c.0.s8 %v5635
  %v5637 = vlaneseq
  %v5638 = vshrl.u32 %v5637, 7
  %v5639 = vsub.s32 %v5636, %v5638
  %v5640 = vrot.slane %v5612, %v5639
  %v5641 = vcombine.high %v5619, %v5619
  %v5642 = vcombine.high %v5626, %v5626
  %v5643 = vcombine.high %v5633, %v5633
  %v5644 = vcombine.high %v5640, %v5640
  %v5645 = vcombine.high %v5341, %v5341
  %v5647 = vunpack.c.l.s4 1966171168
  %v5648 = vunpack.c.0.s8 %v5647
  %v5649 = vlaneseq
  %v5650 = vshrl.u32 %v5649, 7
  %v5651 = vsub.s32 %v5648, %v5650
  %v5652 = vrot.slane %v5341, %v5651
  %v5654 = vunpack.c.l.s4 1966171168
  %v5655 = vunpack.c.0.s8 %v5654
  %v5656 = vlaneseq
  %v5657 = vshrl.u32 %v5656, 7
  %v5658 = vsub.s32 %v5655, %v5657
  %v5659 = vrot.slane %v5645, %v5658
  %v5660 = vcombine.high %v5652, %v5652
  %v5661 = vcombine.high %v5659, %v5659
  %v5663 = vunpack.c.l.s4 1966171168
  %v5664 = vunpack.c.0.s8 %v5663
  %v5665 = vlaneseq
  %v5666 = vshrl.u32 %v5665, 7
  %v5667 = vsub.s32 %v5664, %v5666
  %v5668 = vrot.slane %v5652, %v5667
  %v5670 = vunpack.c.l.s4 1966171168
  %v5671 = vunpack.c.0.s8 %v5670
  %v5672 = vlaneseq
  %v5673 = vshrl.u32 %v5672, 7
  %v5674 = vsub.s32 %v5671, %v5673
  %v5675 = vrot.slane %v5659, %v5674
  %v5677 = vunpack.c.l.s4 1966171168
  %v5678 = vunpack.c.0.s8 %v5677
  %v5679 = vlaneseq
  %v5680 = vshrl.u32 %v5679, 7
  %v5681 = vsub.s32 %v5678, %v5680
  %v5682 = vrot.slane %v5660, %v5681
  %v5684 = vunpack.c.l.s4 1966171168
  %v5685 = vunpack.c.0.s8 %v5684
  %v5686 = vlaneseq
  %v5687 = vshrl.u32 %v5686, 7
  %v5688 = vsub.s32 %v5685, %v5687
  %v5689 = vrot.slane %v5661, %v5688
  %v5690 = vcombine.high %v5668, %v5668
  %v5691 = vcombine.high %v5675, %v5675
  %v5692 = vcombine.high %v5682, %v5682
  %v5693 = vcombine.high %v5689, %v5689
  %v5694 = vcombine.high %v5342, %v5342
  %v5696 = vunpack.c.l.s4 1966171168
  %v5697 = vunpack.c.0.s8 %v5696
  %v5698 = vlaneseq
  %v5699 = vshrl.u32 %v5698, 7
  %v5700 = vsub.s32 %v5697, %v5699
  %v5701 = vrot.slane %v5342, %v5700
  %v5703 = vunpack.c.l.s4 1966171168
  %v5704 = vunpack.c.0.s8 %v5703
  %v5705 = vlaneseq
  %v5706 = vshrl.u32 %v5705, 7
  %v5707 = vsub.s32 %v5704, %v5706
  %v5708 = vrot.slane %v5694, %v5707
  %v5709 = vcombine.high %v5701, %v5701
  %v5710 = vcombine.high %v5708, %v5708
  %v5712 = vunpack.c.l.s4 1966171168
  %v5713 = vunpack.c.0.s8 %v5712
  %v5714 = vlaneseq
  %v5715 = vshrl.u32 %v5714, 7
  %v5716 = vsub.s32 %v5713, %v5715
  %v5717 = vrot.slane %v5701, %v5716
  %v5719 = vunpack.c.l.s4 1966171168
  %v5720 = vunpack.c.0.s8 %v5719
  %v5721 = vlaneseq
  %v5722 = vshrl.u32 %v5721, 7
  %v5723 = vsub.s32 %v5720, %v5722
  %v5724 = vrot.slane %v5708, %v5723
  %v5726 = vunpack.c.l.s4 1966171168
  %v5727 = vunpack.c.0.s8 %v5726
  %v5728 = vlaneseq
  %v5729 = vshrl.u32 %v5728, 7
  %v5730 = vsub.s32 %v5727, %v5729
  %v5731 = vrot.slane %v5709, %v5730
  %v5733 = vunpack.c.l.s4 1966171168
  %v5734 = vunpack.c.0.s8 %v5733
  %v5735 = vlaneseq
  %v5736 = vshrl.u32 %v5735, 7
  %v5737 = vsub.s32 %v5734, %v5736
  %v5738 = vrot.slane %v5710, %v5737
  %v5739 = vcombine.high %v5717, %v5717
  %v5740 = vcombine.high %v5724, %v5724
  %v5741 = vcombine.high %v5731, %v5731
  %v5742 = vcombine.high %v5738, %v5738
  %v5743 = vlaneseq
  %v5744 = vshrl.u32 %v5743, 7
  %v5745 = vsub.s32 0, %v5744
  %v5746 = vrot.slane %v5374, %v5745
  %v5747 = vlaneseq
  %v5748 = vshrl.u32 %v5747, 7
  %v5749 = vsub.s32 0, %v5748
  %v5750 = vrot.slane %v5388, %v5749
  %v5751 = vlaneseq
  %v5752 = vshrl.u32 %v5751, 7
  %v5753 = vsub.s32 0, %v5752
  %v5754 = vrot.slane %v5396, %v5753
  %v5755 = vlaneseq
  %v5756 = vshrl.u32 %v5755, 7
  %v5757 = vsub.s32 0, %v5756
  %v5758 = vrot.slane %v5398, %v5757
  %v5759 = vlaneseq
  %v5760 = vshrl.u32 %v5759, 7
  %v5761 = vsub.s32 0, %v5760
  %v5762 = vrot.slane %v5381, %v5761
  %v5763 = vlaneseq
  %v5764 = vshrl.u32 %v5763, 7
  %v5765 = vsub.s32 0, %v5764
  %v5766 = vrot.slane %v5395, %v5765
  %v5767 = vlaneseq
  %v5768 = vshrl.u32 %v5767, 7
  %v5769 = vsub.s32 0, %v5768
  %v5770 = vrot.slane %v5397, %v5769
  %v5771 = vlaneseq
  %v5772 = vshrl.u32 %v5771, 7
  %v5773 = vsub.s32 0, %v5772
  %v5774 = vrot.slane %v5399, %v5773
  %v5775 = vlaneseq
  %v5776 = vshrl.u32 %v5775, 7
  %v5777 = vsub.s32 0, %v5776
  %v5778 = vrot.slane %v5423, %v5777
  %v5779 = vlaneseq
  %v5780 = vshrl.u32 %v5779, 7
  %v5781 = vsub.s32 0, %v5780
  %v5782 = vrot.slane %v5437, %v5781
  %v5783 = vlaneseq
  %v5784 = vshrl.u32 %v5783, 7
  %v5785 = vsub.s32 0, %v5784
  %v5786 = vrot.slane %v5445, %v5785
  %v5787 = vlaneseq
  %v5788 = vshrl.u32 %v5787, 7
  %v5789 = vsub.s32 0, %v5788
  %v5790 = vrot.slane %v5447, %v5789
  %v5791 = vlaneseq
  %v5792 = vshrl.u32 %v5791, 7
  %v5793 = vsub.s32 0, %v5792
  %v5794 = vrot.slane %v5430, %v5793
  %v5795 = vlaneseq
  %v5796 = vshrl.u32 %v5795, 7
  %v5797 = vsub.s32 0, %v5796
  %v5798 = vrot.slane %v5444, %v5797
  %v5799 = vlaneseq
  %v5800 = vshrl.u32 %v5799, 7
  %v5801 = vsub.s32 0, %v5800
  %v5802 = vrot.slane %v5446, %v5801
  %v5803 = vlaneseq
  %v5804 = vshrl.u32 %v5803, 7
  %v5805 = vsub.s32 0, %v5804
  %v5806 = vrot.slane %v5448, %v5805
  %v5807 = vlaneseq
  %v5808 = vshrl.u32 %v5807, 7
  %v5809 = vsub.s32 0, %v5808
  %v5810 = vrot.slane %v5472, %v5809
  %v5811 = vlaneseq
  %v5812 = vshrl.u32 %v5811, 7
  %v5813 = vsub.s32 0, %v5812
  %v5814 = vrot.slane %v5486, %v5813
  %v5815 = vlaneseq
  %v5816 = vshrl.u32 %v5815, 7
  %v5817 = vsub.s32 0, %v5816
  %v5818 = vrot.slane %v5494, %v5817
  %v5819 = vlaneseq
  %v5820 = vshrl.u32 %v5819, 7
  %v5821 = vsub.s32 0, %v5820
  %v5822 = vrot.slane %v5496, %v5821
  %v5823 = vlaneseq
  %v5824 = vshrl.u32 %v5823, 7
  %v5825 = vsub.s32 0, %v5824
  %v5826 = vrot.slane %v5479, %v5825
  %v5827 = vlaneseq
  %v5828 = vshrl.u32 %v5827, 7
  %v5829 = vsub.s32 0, %v5828
  %v5830 = vrot.slane %v5493, %v5829
  %v5831 = vlaneseq
  %v5832 = vshrl.u32 %v5831, 7
  %v5833 = vsub.s32 0, %v5832
  %v5834 = vrot.slane %v5495, %v5833
  %v5835 = vlaneseq
  %v5836 = vshrl.u32 %v5835, 7
  %v5837 = vsub.s32 0, %v5836
  %v5838 = vrot.slane %v5497, %v5837
  %v5839 = vlaneseq
  %v5840 = vshrl.u32 %v5839, 7
  %v5841 = vsub.s32 0, %v5840
  %v5842 = vrot.slane %v5521, %v5841
  %v5843 = vlaneseq
  %v5844 = vshrl.u32 %v5843, 7
  %v5845 = vsub.s32 0, %v5844
  %v5846 = vrot.slane %v5535, %v5845
  %v5847 = vlaneseq
  %v5848 = vshrl.u32 %v5847, 7
  %v5849 = vsub.s32 0, %v5848
  %v5850 = vrot.slane %v5543, %v5849
  %v5851 = vlaneseq
  %v5852 = vshrl.u32 %v5851, 7
  %v5853 = vsub.s32 0, %v5852
  %v5854 = vrot.slane %v5545, %v5853
  %v5855 = vlaneseq
  %v5856 = vshrl.u32 %v5855, 7
  %v5857 = vsub.s32 0, %v5856
  %v5858 = vrot.slane %v5528, %v5857
  %v5859 = vlaneseq
  %v5860 = vshrl.u32 %v5859, 7
  %v5861 = vsub.s32 0, %v5860
  %v5862 = vrot.slane %v5542, %v5861
  %v5863 = vlaneseq
  %v5864 = vshrl.u32 %v5863, 7
  %v5865 = vsub.s32 0, %v5864
  %v5866 = vrot.slane %v5544, %v5865
  %v5867 = vlaneseq
  %v5868 = vshrl.u32 %v5867, 7
  %v5869 = vsub.s32 0, %v5868
  %v5870 = vrot.slane %v5546, %v5869
  %v5871 = vlaneseq
  %v5872 = vshrl.u32 %v5871, 7
  %v5873 = vsub.s32 0, %v5872
  %v5874 = vrot.slane %v5570, %v5873
  %v5875 = vlaneseq
  %v5876 = vshrl.u32 %v5875, 7
  %v5877 = vsub.s32 0, %v5876
  %v5878 = vrot.slane %v5584, %v5877
  %v5879 = vlaneseq
  %v5880 = vshrl.u32 %v5879, 7
  %v5881 = vsub.s32 0, %v5880
  %v5882 = vrot.slane %v5592, %v5881
  %v5883 = vlaneseq
  %v5884 = vshrl.u32 %v5883, 7
  %v5885 = vsub.s32 0, %v5884
  %v5886 = vrot.slane %v5594, %v5885
  %v5887 = vlaneseq
  %v5888 = vshrl.u32 %v5887, 7
  %v5889 = vsub.s32 0, %v5888
  %v5890 = vrot.slane %v5577, %v5889
  %v5891 = vlaneseq
  %v5892 = vshrl.u32 %v5891, 7
  %v5893 = vsub.s32 0, %v5892
  %v5894 = vrot.slane %v5591, %v5893
  %v5895 = vlaneseq
  %v5896 = vshrl.u32 %v5895, 7
  %v5897 = vsub.s32 0, %v5896
  %v5898 = vrot.slane %v5593, %v5897
  %v5899 = vlaneseq
  %v5900 = vshrl.u32 %v5899, 7
  %v5901 = vsub.s32 0, %v5900
  %v5902 = vrot.slane %v5595, %v5901
  %v5903 = vlaneseq
  %v5904 = vshrl.u32 %v5903, 7
  %v5905 = vsub.s32 0, %v5904
  %v5906 = vrot.slane %v5619, %v5905
  %v5907 = vlaneseq
  %v5908 = vshrl.u32 %v5907, 7
  %v5909 = vsub.s32 0, %v5908
  %v5910 = vrot.slane %v5633, %v5909
  %v5911 = vlaneseq
  %v5912 = vshrl.u32 %v5911, 7
  %v5913 = vsub.s32 0, %v5912
  %v5914 = vrot.slane %v5641, %v5913
  %v5915 = vlaneseq
  %v5916 = vshrl.u32 %v5915, 7
  %v5917 = vsub.s32 0, %v5916
  %v5918 = vrot.slane %v5643, %v5917
  %v5919 = vlaneseq
  %v5920 = vshrl.u32 %v5919, 7
  %v5921 = vsub.s32 0, %v5920
  %v5922 = vrot.slane %v5626, %v5921
  %v5923 = vlaneseq
  %v5924 = vshrl.u32 %v5923, 7
  %v5925 = vsub.s32 0, %v5924
  %v5926 = vrot.slane %v5640, %v5925
  %v5927 = vlaneseq
  %v5928 = vshrl.u32 %v5927, 7
  %v5929 = vsub.s32 0, %v5928
  %v5930 = vrot.slane %v5642, %v5929
  %v5931 = vlaneseq
  %v5932 = vshrl.u32 %v5931, 7
  %v5933 = vsub.s32 0, %v5932
  %v5934 = vrot.slane %v5644, %v5933
  %v5935 = vlaneseq
  %v5936 = vshrl.u32 %v5935, 7
  %v5937 = vsub.s32 0, %v5936
  %v5938 = vrot.slane %v5668, %v5937
  %v5939 = vlaneseq
  %v5940 = vshrl.u32 %v5939, 7
  %v5941 = vsub.s32 0, %v5940
  %v5942 = vrot.slane %v5682, %v5941
  %v5943 = vlaneseq
  %v5944 = vshrl.u32 %v5943, 7
  %v5945 = vsub.s32 0, %v5944
  %v5946 = vrot.slane %v5690, %v5945
  %v5947 = vlaneseq
  %v5948 = vshrl.u32 %v5947, 7
  %v5949 = vsub.s32 0, %v5948
  %v5950 = vrot.slane %v5692, %v5949
  %v5951 = vlaneseq
  %v5952 = vshrl.u32 %v5951, 7
  %v5953 = vsub.s32 0, %v5952
  %v5954 = vrot.slane %v5675, %v5953
  %v5955 = vlaneseq
  %v5956 = vshrl.u32 %v5955, 7
  %v5957 = vsub.s32 0, %v5956
  %v5958 = vrot.slane %v5689, %v5957
  %v5959 = vlaneseq
  %v5960 = vshrl.u32 %v5959, 7
  %v5961 = vsub.s32 0, %v5960
  %v5962 = vrot.slane %v5691, %v5961
  %v5963 = vlaneseq
  %v5964 = vshrl.u32 %v5963, 7
  %v5965 = vsub.s32 0, %v5964
  %v5966 = vrot.slane %v5693, %v5965
  %v5967 = vlaneseq
  %v5968 = vshrl.u32 %v5967, 7
  %v5969 = vsub.s32 0, %v5968
  %v5970 = vrot.slane %v5717, %v5969
  %v5971 = vlaneseq
  %v5972 = vshrl.u32 %v5971, 7
  %v5973 = vsub.s32 0, %v5972
  %v5974 = vrot.slane %v5731, %v5973
  %v5975 = vlaneseq
  %v5976 = vshrl.u32 %v5975, 7
  %v5977 = vsub.s32 0, %v5976
  %v5978 = vrot.slane %v5739, %v5977
  %v5979 = vlaneseq
  %v5980 = vshrl.u32 %v5979, 7
  %v5981 = vsub.s32 0, %v5980
  %v5982 = vrot.slane %v5741, %v5981
  %v5983 = vlaneseq
  %v5984 = vshrl.u32 %v5983, 7
  %v5985 = vsub.s32 0, %v5984
  %v5986 = vrot.slane %v5724, %v5985
  %v5987 = vlaneseq
  %v5988 = vshrl.u32 %v5987, 7
  %v5989 = vsub.s32 0, %v5988
  %v5990 = vrot.slane %v5738, %v5989
  %v5991 = vlaneseq
  %v5992 = vshrl.u32 %v5991, 7
  %v5993 = vsub.s32 0, %v5992
  %v5994 = vrot.slane %v5740, %v5993
  %v5995 = vlaneseq
  %v5996 = vshrl.u32 %v5995, 7
  %v5997 = vsub.s32 0, %v5996
  %v5998 = vrot.slane %v5742, %v5997
  %v6063 = vmul.f32 %v614, %v5746
  %v6064 = vmul.f32 %v618, %v5746
  %v6065 = vmul.f32 %v622, %v5746
  %v6066 = vmul.f32 %v626, %v5746
  %v6067 = vmul.f32 %v633, %v5750
  %v6068 = vmul.f32 %v637, %v5750
  %v6069 = vmul.f32 %v641, %v5750
  %v6070 = vmul.f32 %v645, %v5750
  %v6071 = vmul.f32 %v652, %v5754
  %v6072 = vmul.f32 %v656, %v5754
  %v6073 = vmul.f32 %v660, %v5754
  %v6074 = vmul.f32 %v664, %v5754
  %v6075 = vmul.f32 %v671, %v5758
  %v6076 = vmul.f32 %v675, %v5758
  %v6077 = vmul.f32 %v679, %v5758
  %v6078 = vmul.f32 %v683, %v5758
  %v6079 = vmul.f32 %v690, %v5762
  %v6080 = vmul.f32 %v694, %v5762
  %v6081 = vmul.f32 %v698, %v5762
  %v6082 = vmul.f32 %v702, %v5762
  %v6083 = vmul.f32 %v709, %v5766
  %v6084 = vmul.f32 %v713, %v5766
  %v6085 = vmul.f32 %v717, %v5766
  %v6086 = vmul.f32 %v721, %v5766
  %v6087 = vmul.f32 %v728, %v5770
  %v6088 = vmul.f32 %v732, %v5770
  %v6089 = vmul.f32 %v736, %v5770
  %v6090 = vmul.f32 %v740, %v5770
  %v6091 = vmul.f32 %v747, %v5774
  %v6092 = vmul.f32 %v751, %v5774
  %v6093 = vmul.f32 %v755, %v5774
  %v6094 = vmul.f32 %v759, %v5774
  %v6095 = vmul.f32 %v766, %v5778
  %v6096 = vmul.f32 %v770, %v5778
  %v6097 = vmul.f32 %v774, %v5778
  %v6098 = vmul.f32 %v778, %v5778
  %v6099 = vmul.f32 %v785, %v5782
  %v6100 = vmul.f32 %v789, %v5782
  %v6101 = vmul.f32 %v793, %v5782
  %v6102 = vmul.f32 %v797, %v5782
  %v6103 = vmul.f32 %v804, %v5786
  %v6104 = vmul.f32 %v808, %v5786
  %v6105 = vmul.f32 %v812, %v5786
  %v6106 = vmul.f32 %v816, %v5786
  %v6107 = vmul.f32 %v823, %v5790
  %v6108 = vmul.f32 %v827, %v5790
  %v6109 = vmul.f32 %v831, %v5790
  %v6110 = vmul.f32 %v835, %v5790
  %v6111 = vmul.f32 %v842, %v5794
  %v6112 = vmul.f32 %v846, %v5794
  %v6113 = vmul.f32 %v850, %v5794
  %v6114 = vmul.f32 %v854, %v5794
  %v6115 = vmul.f32 %v861, %v5798
  %v6116 = vmul.f32 %v865, %v5798
  %v6117 = vmul.f32 %v869, %v5798
  %v6118 = vmul.f32 %v873, %v5798
  %v6119 = vmul.f32 %v880, %v5802
  %v6120 = vmul.f32 %v884, %v5802
  %v6121 = vmul.f32 %v888, %v5802
  %v6122 = vmul.f32 %v892, %v5802
  %v6123 = vmul.f32 %v899, %v5806
  %v6124 = vmul.f32 %v903, %v5806
  %v6125 = vmul.f32 %v907, %v5806
  %v6126 = vmul.f32 %v911, %v5806
  %v6127 = vmul.f32 %v918, %v5810
  %v6128 = vmul.f32 %v922, %v5810
  %v6129 = vmul.f32 %v926, %v5810
  %v6130 = vmul.f32 %v930, %v5810
  %v6131 = vmul.f32 %v937, %v5814
  %v6132 = vmul.f32 %v941, %v5814
  %v6133 = vmul.f32 %v945, %v5814
  %v6134 = vmul.f32 %v949, %v5814
  %v6135 = vmul.f32 %v956, %v5818
  %v6136 = vmul.f32 %v960, %v5818
  %v6137 = vmul.f32 %v964, %v5818
  %v6138 = vmul.f32 %v968, %v5818
  %v6139 = vmul.f32 %v975, %v5822
  %v6140 = vmul.f32 %v979, %v5822
  %v6141 = vmul.f32 %v983, %v5822
  %v6142 = vmul.f32 %v987, %v5822
  %v6143 = vmul.f32 %v994, %v5826
  %v6144 = vmul.f32 %v998, %v5826
  %v6145 = vmul.f32 %v1002, %v5826
  %v6146 = vmul.f32 %v1006, %v5826
  %v6147 = vmul.f32 %v1013, %v5830
  %v6148 = vmul.f32 %v1017, %v5830
  %v6149 = vmul.f32 %v1021, %v5830
  %v6150 = vmul.f32 %v1025, %v5830
  %v6151 = vmul.f32 %v1032, %v5834
  %v6152 = vmul.f32 %v1036, %v5834
  %v6153 = vmul.f32 %v1040, %v5834
  %v6154 = vmul.f32 %v1044, %v5834
  %v6155 = vmul.f32 %v1051, %v5838
  %v6156 = vmul.f32 %v1055, %v5838
  %v6157 = vmul.f32 %v1059, %v5838
  %v6158 = vmul.f32 %v1063, %v5838
  %v6159 = vmul.f32 %v1070, %v5842
  %v6160 = vmul.f32 %v1074, %v5842
  %v6161 = vmul.f32 %v1078, %v5842
  %v6162 = vmul.f32 %v1082, %v5842
  %v6163 = vmul.f32 %v1089, %v5846
  %v6164 = vmul.f32 %v1093, %v5846
  %v6165 = vmul.f32 %v1097, %v5846
  %v6166 = vmul.f32 %v1101, %v5846
  %v6167 = vmul.f32 %v1108, %v5850
  %v6168 = vmul.f32 %v1112, %v5850
  %v6169 = vmul.f32 %v1116, %v5850
  %v6170 = vmul.f32 %v1120, %v5850
  %v6171 = vmul.f32 %v1127, %v5854
  %v6172 = vmul.f32 %v1131, %v5854
  %v6173 = vmul.f32 %v1135, %v5854
  %v6174 = vmul.f32 %v1139, %v5854
  %v6175 = vmul.f32 %v1146, %v5858
  %v6176 = vmul.f32 %v1150, %v5858
  %v6177 = vmul.f32 %v1154, %v5858
  %v6178 = vmul.f32 %v1158, %v5858
  %v6179 = vmul.f32 %v1165, %v5862
  %v6180 = vmul.f32 %v1169, %v5862
  %v6181 = vmul.f32 %v1173, %v5862
  %v6182 = vmul.f32 %v1177, %v5862
  %v6183 = vmul.f32 %v1184, %v5866
  %v6184 = vmul.f32 %v1188, %v5866
  %v6185 = vmul.f32 %v1192, %v5866
  %v6186 = vmul.f32 %v1196, %v5866
  %v6187 = vmul.f32 %v1203, %v5870
  %v6188 = vmul.f32 %v1207, %v5870
  %v6189 = vmul.f32 %v1211, %v5870
  %v6190 = vmul.f32 %v1215, %v5870
  %v6191 = vmul.f32 %v1222, %v5874
  %v6192 = vmul.f32 %v1226, %v5874
  %v6193 = vmul.f32 %v1230, %v5874
  %v6194 = vmul.f32 %v1234, %v5874
  %v6195 = vmul.f32 %v1241, %v5878
  %v6196 = vmul.f32 %v1245, %v5878
  %v6197 = vmul.f32 %v1249, %v5878
  %v6198 = vmul.f32 %v1253, %v5878
  %v6199 = vmul.f32 %v1260, %v5882
  %v6200 = vmul.f32 %v1264, %v5882
  %v6201 = vmul.f32 %v1268, %v5882
  %v6202 = vmul.f32 %v1272, %v5882
  %v6203 = vmul.f32 %v1279, %v5886
  %v6204 = vmul.f32 %v1283, %v5886
  %v6205 = vmul.f32 %v1287, %v5886
  %v6206 = vmul.f32 %v1291, %v5886
  %v6207 = vmul.f32 %v1298, %v5890
  %v6208 = vmul.f32 %v1302, %v5890
  %v6209 = vmul.f32 %v1306, %v5890
  %v6210 = vmul.f32 %v1310, %v5890
  %v6211 = vmul.f32 %v1317, %v5894
  %v6212 = vmul.f32 %v1321, %v5894
  %v6213 = vmul.f32 %v1325, %v5894
  %v6214 = vmul.f32 %v1329, %v5894
  %v6215 = vmul.f32 %v1336, %v5898
  %v6216 = vmul.f32 %v1340, %v5898
  %v6217 = vmul.f32 %v1344, %v5898
  %v6218 = vmul.f32 %v1348, %v5898
  %v6219 = vmul.f32 %v1355, %v5902
  %v6220 = vmul.f32 %v1359, %v5902
  %v6221 = vmul.f32 %v1363, %v5902
  %v6222 = vmul.f32 %v1367, %v5902
  %v6223 = vmul.f32 %v1374, %v5906
  %v6224 = vmul.f32 %v1378, %v5906
  %v6225 = vmul.f32 %v1382, %v5906
  %v6226 = vmul.f32 %v1386, %v5906
  %v6227 = vmul.f32 %v1393, %v5910
  %v6228 = vmul.f32 %v1397, %v5910
  %v6229 = vmul.f32 %v1401, %v5910
  %v6230 = vmul.f32 %v1405, %v5910
  %v6231 = vmul.f32 %v1412, %v5914
  %v6232 = vmul.f32 %v1416, %v5914
  %v6233 = vmul.f32 %v1420, %v5914
  %v6234 = vmul.f32 %v1424, %v5914
  %v6235 = vmul.f32 %v1431, %v5918
  %v6236 = vmul.f32 %v1435, %v5918
  %v6237 = vmul.f32 %v1439, %v5918
  %v6238 = vmul.f32 %v1443, %v5918
  %v6239 = vmul.f32 %v1450, %v5922
  %v6240 = vmul.f32 %v1454, %v5922
  %v6241 = vmul.f32 %v1458, %v5922
  %v6242 = vmul.f32 %v1462, %v5922
  %v6243 = vmul.f32 %v1469, %v5926
  %v6244 = vmul.f32 %v1473, %v5926
  %v6245 = vmul.f32 %v1477, %v5926
  %v6246 = vmul.f32 %v1481, %v5926
  %v6247 = vmul.f32 %v1488, %v5930
  %v6248 = vmul.f32 %v1492, %v5930
  %v6249 = vmul.f32 %v1496, %v5930
  %v6250 = vmul.f32 %v1500, %v5930
  %v6251 = vmul.f32 %v1507, %v5934
  %v6252 = vmul.f32 %v1511, %v5934
  %v6253 = vmul.f32 %v1515, %v5934
  %v6254 = vmul.f32 %v1519, %v5934
  %v6255 = vmul.f32 %v1526, %v5938
  %v6256 = vmul.f32 %v1530, %v5938
  %v6257 = vmul.f32 %v1534, %v5938
  %v6258 = vmul.f32 %v1538, %v5938
  %v6259 = vmul.f32 %v1545, %v5942
  %v6260 = vmul.f32 %v1549, %v5942
  %v6261 = vmul.f32 %v1553, %v5942
  %v6262 = vmul.f32 %v1557, %v5942
  %v6263 = vmul.f32 %v1564, %v5946
  %v6264 = vmul.f32 %v1568, %v5946
  %v6265 = vmul.f32 %v1572, %v5946
  %v6266 = vmul.f32 %v1576, %v5946
  %v6267 = vmul.f32 %v1583, %v5950
  %v6268 = vmul.f32 %v1587, %v5950
  %v6269 = vmul.f32 %v1591, %v5950
  %v6270 = vmul.f32 %v1595, %v5950
  %v6271 = vmul.f32 %v1602, %v5954
  %v6272 = vmul.f32 %v1606, %v5954
  %v6273 = vmul.f32 %v1610, %v5954
  %v6274 = vmul.f32 %v1614, %v5954
  %v6275 = vmul.f32 %v1621, %v5958
  %v6276 = vmul.f32 %v1625, %v5958
  %v6277 = vmul.f32 %v1629, %v5958
  %v6278 = vmul.f32 %v1633, %v5958
  %v6279 = vmul.f32 %v1640, %v5962
  %v6280 = vmul.f32 %v1644, %v5962
  %v6281 = vmul.f32 %v1648, %v5962
  %v6282 = vmul.f32 %v1652, %v5962
  %v6283 = vmul.f32 %v1659, %v5966
  %v6284 = vmul.f32 %v1663, %v5966
  %v6285 = vmul.f32 %v1667, %v5966
  %v6286 = vmul.f32 %v1671, %v5966
  %v6287 = vmul.f32 %v1678, %v5970
  %v6288 = vmul.f32 %v1682, %v5970
  %v6289 = vmul.f32 %v1686, %v5970
  %v6290 = vmul.f32 %v1690, %v5970
  %v6291 = vmul.f32 %v1697, %v5974
  %v6292 = vmul.f32 %v1701, %v5974
  %v6293 = vmul.f32 %v1705, %v5974
  %v6294 = vmul.f32 %v1709, %v5974
  %v6295 = vmul.f32 %v1716, %v5978
  %v6296 = vmul.f32 %v1720, %v5978
  %v6297 = vmul.f32 %v1724, %v5978
  %v6298 = vmul.f32 %v1728, %v5978
  %v6299 = vmul.f32 %v1735, %v5982
  %v6300 = vmul.f32 %v1739, %v5982
  %v6301 = vmul.f32 %v1743, %v5982
  %v6302 = vmul.f32 %v1747, %v5982
  %v6303 = vmul.f32 %v1754, %v5986
  %v6304 = vmul.f32 %v1758, %v5986
  %v6305 = vmul.f32 %v1762, %v5986
  %v6306 = vmul.f32 %v1766, %v5986
  %v6307 = vmul.f32 %v1773, %v5990
  %v6308 = vmul.f32 %v1777, %v5990
  %v6309 = vmul.f32 %v1781, %v5990
  %v6310 = vmul.f32 %v1785, %v5990
  %v6311 = vmul.f32 %v1792, %v5994
  %v6312 = vmul.f32 %v1796, %v5994
  %v6313 = vmul.f32 %v1800, %v5994
  %v6314 = vmul.f32 %v1804, %v5994
  %v6315 = vmul.f32 %v1811, %v5998
  %v6316 = vmul.f32 %v1815, %v5998
  %v6317 = vmul.f32 %v1819, %v5998
  %v6318 = vmul.f32 %v1823, %v5998
  %v6319 = vsel %vm411, %v6063, -inf
  %v6320 = vsel %vm411, %v6067, -inf
  %v6321 = vmax.f32 %v6319, %v6320
  %v6322 = vsel %vm411, %v6071, -inf
  %v6323 = vmax.f32 %v6321, %v6322
  %v6324 = vsel %vm411, %v6075, -inf
  %v6325 = vmax.f32 %v6323, %v6324
  %v6326 = vsel %vm411, %v6079, -inf
  %v6327 = vmax.f32 %v6325, %v6326
  %v6328 = vsel %vm411, %v6083, -inf
  %v6329 = vmax.f32 %v6327, %v6328
  %v6330 = vsel %vm411, %v6087, -inf
  %v6331 = vmax.f32 %v6329, %v6330
  %v6332 = vsel %vm411, %v6091, -inf
  %v6333 = vmax.f32 %v6331, %v6332
  %v6334 = vsel %vm411, %v6095, -inf
  %v6335 = vmax.f32 %v6333, %v6334
  %v6336 = vsel %vm411, %v6099, -inf
  %v6337 = vmax.f32 %v6335, %v6336
  %v6338 = vsel %vm411, %v6103, -inf
  %v6339 = vmax.f32 %v6337, %v6338
  %v6340 = vsel %vm411, %v6107, -inf
  %v6341 = vmax.f32 %v6339, %v6340
  %v6342 = vsel %vm411, %v6111, -inf
  %v6343 = vmax.f32 %v6341, %v6342
  %v6344 = vsel %vm411, %v6115, -inf
  %v6345 = vmax.f32 %v6343, %v6344
  %v6346 = vsel %vm411, %v6119, -inf
  %v6347 = vmax.f32 %v6345, %v6346
  %v6348 = vsel %vm411, %v6123, -inf
  %v6349 = vmax.f32 %v6347, %v6348
  %v6350 = vsel %vm411, %v6127, -inf
  %v6351 = vmax.f32 %v6349, %v6350
  %v6352 = vsel %vm411, %v6131, -inf
  %v6353 = vmax.f32 %v6351, %v6352
  %v6354 = vsel %vm411, %v6135, -inf
  %v6355 = vmax.f32 %v6353, %v6354
  %v6356 = vsel %vm411, %v6139, -inf
  %v6357 = vmax.f32 %v6355, %v6356
  %v6358 = vsel %vm411, %v6143, -inf
  %v6359 = vmax.f32 %v6357, %v6358
  %v6360 = vsel %vm411, %v6147, -inf
  %v6361 = vmax.f32 %v6359, %v6360
  %v6362 = vsel %vm411, %v6151, -inf
  %v6363 = vmax.f32 %v6361, %v6362
  %v6364 = vsel %vm411, %v6155, -inf
  %v6365 = vmax.f32 %v6363, %v6364
  %v6366 = vsel %vm411, %v6159, -inf
  %v6367 = vmax.f32 %v6365, %v6366
  %v6368 = vsel %vm411, %v6163, -inf
  %v6369 = vmax.f32 %v6367, %v6368
  %v6370 = vsel %vm411, %v6167, -inf
  %v6371 = vmax.f32 %v6369, %v6370
  %v6372 = vsel %vm411, %v6171, -inf
  %v6373 = vmax.f32 %v6371, %v6372
  %v6374 = vsel %vm411, %v6175, -inf
  %v6375 = vmax.f32 %v6373, %v6374
  %v6376 = vsel %vm411, %v6179, -inf
  %v6377 = vmax.f32 %v6375, %v6376
  %v6378 = vsel %vm411, %v6183, -inf
  %v6379 = vmax.f32 %v6377, %v6378
  %v6380 = vsel %vm411, %v6187, -inf
  %v6381 = vmax.f32 %v6379, %v6380
  %v6382 = vsel %vm411, %v6191, -inf
  %v6383 = vmax.f32 %v6381, %v6382
  %v6384 = vsel %vm411, %v6195, -inf
  %v6385 = vmax.f32 %v6383, %v6384
  %v6386 = vsel %vm411, %v6199, -inf
  %v6387 = vmax.f32 %v6385, %v6386
  %v6388 = vsel %vm411, %v6203, -inf
  %v6389 = vmax.f32 %v6387, %v6388
  %v6390 = vsel %vm411, %v6207, -inf
  %v6391 = vmax.f32 %v6389, %v6390
  %v6392 = vsel %vm411, %v6211, -inf
  %v6393 = vmax.f32 %v6391, %v6392
  %v6394 = vsel %vm411, %v6215, -inf
  %v6395 = vmax.f32 %v6393, %v6394
  %v6396 = vsel %vm411, %v6219, -inf
  %v6397 = vmax.f32 %v6395, %v6396
  %v6398 = vsel %vm411, %v6223, -inf
  %v6399 = vmax.f32 %v6397, %v6398
  %v6400 = vsel %vm411, %v6227, -inf
  %v6401 = vmax.f32 %v6399, %v6400
  %v6402 = vsel %vm411, %v6231, -inf
  %v6403 = vmax.f32 %v6401, %v6402
  %v6404 = vsel %vm411, %v6235, -inf
  %v6405 = vmax.f32 %v6403, %v6404
  %v6406 = vsel %vm411, %v6239, -inf
  %v6407 = vmax.f32 %v6405, %v6406
  %v6408 = vsel %vm411, %v6243, -inf
  %v6409 = vmax.f32 %v6407, %v6408
  %v6410 = vsel %vm411, %v6247, -inf
  %v6411 = vmax.f32 %v6409, %v6410
  %v6412 = vsel %vm411, %v6251, -inf
  %v6413 = vmax.f32 %v6411, %v6412
  %v6414 = vsel %vm411, %v6255, -inf
  %v6415 = vmax.f32 %v6413, %v6414
  %v6416 = vsel %vm411, %v6259, -inf
  %v6417 = vmax.f32 %v6415, %v6416
  %v6418 = vsel %vm411, %v6263, -inf
  %v6419 = vmax.f32 %v6417, %v6418
  %v6420 = vsel %vm411, %v6267, -inf
  %v6421 = vmax.f32 %v6419, %v6420
  %v6422 = vsel %vm411, %v6271, -inf
  %v6423 = vmax.f32 %v6421, %v6422
  %v6424 = vsel %vm411, %v6275, -inf
  %v6425 = vmax.f32 %v6423, %v6424
  %v6426 = vsel %vm411, %v6279, -inf
  %v6427 = vmax.f32 %v6425, %v6426
  %v6428 = vsel %vm411, %v6283, -inf
  %v6429 = vmax.f32 %v6427, %v6428
  %v6430 = vsel %vm411, %v6287, -inf
  %v6431 = vmax.f32 %v6429, %v6430
  %v6432 = vsel %vm411, %v6291, -inf
  %v6433 = vmax.f32 %v6431, %v6432
  %v6434 = vsel %vm411, %v6295, -inf
  %v6435 = vmax.f32 %v6433, %v6434
  %v6436 = vsel %vm411, %v6299, -inf
  %v6437 = vmax.f32 %v6435, %v6436
  %v6438 = vsel %vm411, %v6303, -inf
  %v6439 = vmax.f32 %v6437, %v6438
  %v6440 = vsel %vm411, %v6307, -inf
  %v6441 = vmax.f32 %v6439, %v6440
  %v6442 = vsel %vm411, %v6311, -inf
  %v6443 = vmax.f32 %v6441, %v6442
  %v6444 = vsel %vm411, %v6315, -inf
  %v6445 = vmax.f32 %v6443, %v6444
  %v6446 = vsel %vm411, %v6064, -inf
  %v6447 = vsel %vm411, %v6068, -inf
  %v6448 = vmax.f32 %v6446, %v6447
  %v6449 = vsel %vm411, %v6072, -inf
  %v6450 = vmax.f32 %v6448, %v6449
  %v6451 = vsel %vm411, %v6076, -inf
  %v6452 = vmax.f32 %v6450, %v6451
  %v6453 = vsel %vm411, %v6080, -inf
  %v6454 = vmax.f32 %v6452, %v6453
  %v6455 = vsel %vm411, %v6084, -inf
  %v6456 = vmax.f32 %v6454, %v6455
  %v6457 = vsel %vm411, %v6088, -inf
  %v6458 = vmax.f32 %v6456, %v6457
  %v6459 = vsel %vm411, %v6092, -inf
  %v6460 = vmax.f32 %v6458, %v6459
  %v6461 = vsel %vm411, %v6096, -inf
  %v6462 = vmax.f32 %v6460, %v6461
  %v6463 = vsel %vm411, %v6100, -inf
  %v6464 = vmax.f32 %v6462, %v6463
  %v6465 = vsel %vm411, %v6104, -inf
  %v6466 = vmax.f32 %v6464, %v6465
  %v6467 = vsel %vm411, %v6108, -inf
  %v6468 = vmax.f32 %v6466, %v6467
  %v6469 = vsel %vm411, %v6112, -inf
  %v6470 = vmax.f32 %v6468, %v6469
  %v6471 = vsel %vm411, %v6116, -inf
  %v6472 = vmax.f32 %v6470, %v6471
  %v6473 = vsel %vm411, %v6120, -inf
  %v6474 = vmax.f32 %v6472, %v6473
  %v6475 = vsel %vm411, %v6124, -inf
  %v6476 = vmax.f32 %v6474, %v6475
  %v6477 = vsel %vm411, %v6128, -inf
  %v6478 = vmax.f32 %v6476, %v6477
  %v6479 = vsel %vm411, %v6132, -inf
  %v6480 = vmax.f32 %v6478, %v6479
  %v6481 = vsel %vm411, %v6136, -inf
  %v6482 = vmax.f32 %v6480, %v6481
  %v6483 = vsel %vm411, %v6140, -inf
  %v6484 = vmax.f32 %v6482, %v6483
  %v6485 = vsel %vm411, %v6144, -inf
  %v6486 = vmax.f32 %v6484, %v6485
  %v6487 = vsel %vm411, %v6148, -inf
  %v6488 = vmax.f32 %v6486, %v6487
  %v6489 = vsel %vm411, %v6152, -inf
  %v6490 = vmax.f32 %v6488, %v6489
  %v6491 = vsel %vm411, %v6156, -inf
  %v6492 = vmax.f32 %v6490, %v6491
  %v6493 = vsel %vm411, %v6160, -inf
  %v6494 = vmax.f32 %v6492, %v6493
  %v6495 = vsel %vm411, %v6164, -inf
  %v6496 = vmax.f32 %v6494, %v6495
  %v6497 = vsel %vm411, %v6168, -inf
  %v6498 = vmax.f32 %v6496, %v6497
  %v6499 = vsel %vm411, %v6172, -inf
  %v6500 = vmax.f32 %v6498, %v6499
  %v6501 = vsel %vm411, %v6176, -inf
  %v6502 = vmax.f32 %v6500, %v6501
  %v6503 = vsel %vm411, %v6180, -inf
  %v6504 = vmax.f32 %v6502, %v6503
  %v6505 = vsel %vm411, %v6184, -inf
  %v6506 = vmax.f32 %v6504, %v6505
  %v6507 = vsel %vm411, %v6188, -inf
  %v6508 = vmax.f32 %v6506, %v6507
  %v6509 = vsel %vm411, %v6192, -inf
  %v6510 = vmax.f32 %v6508, %v6509
  %v6511 = vsel %vm411, %v6196, -inf
  %v6512 = vmax.f32 %v6510, %v6511
  %v6513 = vsel %vm411, %v6200, -inf
  %v6514 = vmax.f32 %v6512, %v6513
  %v6515 = vsel %vm411, %v6204, -inf
  %v6516 = vmax.f32 %v6514, %v6515
  %v6517 = vsel %vm411, %v6208, -inf
  %v6518 = vmax.f32 %v6516, %v6517
  %v6519 = vsel %vm411, %v6212, -inf
  %v6520 = vmax.f32 %v6518, %v6519
  %v6521 = vsel %vm411, %v6216, -inf
  %v6522 = vmax.f32 %v6520, %v6521
  %v6523 = vsel %vm411, %v6220, -inf
  %v6524 = vmax.f32 %v6522, %v6523
  %v6525 = vsel %vm411, %v6224, -inf
  %v6526 = vmax.f32 %v6524, %v6525
  %v6527 = vsel %vm411, %v6228, -inf
  %v6528 = vmax.f32 %v6526, %v6527
  %v6529 = vsel %vm411, %v6232, -inf
  %v6530 = vmax.f32 %v6528, %v6529
  %v6531 = vsel %vm411, %v6236, -inf
  %v6532 = vmax.f32 %v6530, %v6531
  %v6533 = vsel %vm411, %v6240, -inf
  %v6534 = vmax.f32 %v6532, %v6533
  %v6535 = vsel %vm411, %v6244, -inf
  %v6536 = vmax.f32 %v6534, %v6535
  %v6537 = vsel %vm411, %v6248, -inf
  %v6538 = vmax.f32 %v6536, %v6537
  %v6539 = vsel %vm411, %v6252, -inf
  %v6540 = vmax.f32 %v6538, %v6539
  %v6541 = vsel %vm411, %v6256, -inf
  %v6542 = vmax.f32 %v6540, %v6541
  %v6543 = vsel %vm411, %v6260, -inf
  %v6544 = vmax.f32 %v6542, %v6543
  %v6545 = vsel %vm411, %v6264, -inf
  %v6546 = vmax.f32 %v6544, %v6545
  %v6547 = vsel %vm411, %v6268, -inf
  %v6548 = vmax.f32 %v6546, %v6547
  %v6549 = vsel %vm411, %v6272, -inf
  %v6550 = vmax.f32 %v6548, %v6549
  %v6551 = vsel %vm411, %v6276, -inf
  %v6552 = vmax.f32 %v6550, %v6551
  %v6553 = vsel %vm411, %v6280, -inf
  %v6554 = vmax.f32 %v6552, %v6553
  %v6555 = vsel %vm411, %v6284, -inf
  %v6556 = vmax.f32 %v6554, %v6555
  %v6557 = vsel %vm411, %v6288, -inf
  %v6558 = vmax.f32 %v6556, %v6557
  %v6559 = vsel %vm411, %v6292, -inf
  %v6560 = vmax.f32 %v6558, %v6559
  %v6561 = vsel %vm411, %v6296, -inf
  %v6562 = vmax.f32 %v6560, %v6561
  %v6563 = vsel %vm411, %v6300, -inf
  %v6564 = vmax.f32 %v6562, %v6563
  %v6565 = vsel %vm411, %v6304, -inf
  %v6566 = vmax.f32 %v6564, %v6565
  %v6567 = vsel %vm411, %v6308, -inf
  %v6568 = vmax.f32 %v6566, %v6567
  %v6569 = vsel %vm411, %v6312, -inf
  %v6570 = vmax.f32 %v6568, %v6569
  %v6571 = vsel %vm411, %v6316, -inf
  %v6572 = vmax.f32 %v6570, %v6571
  %v6573 = vsel %vm411, %v6065, -inf
  %v6574 = vsel %vm411, %v6069, -inf
  %v6575 = vmax.f32 %v6573, %v6574
  %v6576 = vsel %vm411, %v6073, -inf
  %v6577 = vmax.f32 %v6575, %v6576
  %v6578 = vsel %vm411, %v6077, -inf
  %v6579 = vmax.f32 %v6577, %v6578
  %v6580 = vsel %vm411, %v6081, -inf
  %v6581 = vmax.f32 %v6579, %v6580
  %v6582 = vsel %vm411, %v6085, -inf
  %v6583 = vmax.f32 %v6581, %v6582
  %v6584 = vsel %vm411, %v6089, -inf
  %v6585 = vmax.f32 %v6583, %v6584
  %v6586 = vsel %vm411, %v6093, -inf
  %v6587 = vmax.f32 %v6585, %v6586
  %v6588 = vsel %vm411, %v6097, -inf
  %v6589 = vmax.f32 %v6587, %v6588
  %v6590 = vsel %vm411, %v6101, -inf
  %v6591 = vmax.f32 %v6589, %v6590
  %v6592 = vsel %vm411, %v6105, -inf
  %v6593 = vmax.f32 %v6591, %v6592
  %v6594 = vsel %vm411, %v6109, -inf
  %v6595 = vmax.f32 %v6593, %v6594
  %v6596 = vsel %vm411, %v6113, -inf
  %v6597 = vmax.f32 %v6595, %v6596
  %v6598 = vsel %vm411, %v6117, -inf
  %v6599 = vmax.f32 %v6597, %v6598
  %v6600 = vsel %vm411, %v6121, -inf
  %v6601 = vmax.f32 %v6599, %v6600
  %v6602 = vsel %vm411, %v6125, -inf
  %v6603 = vmax.f32 %v6601, %v6602
  %v6604 = vsel %vm411, %v6129, -inf
  %v6605 = vmax.f32 %v6603, %v6604
  %v6606 = vsel %vm411, %v6133, -inf
  %v6607 = vmax.f32 %v6605, %v6606
  %v6608 = vsel %vm411, %v6137, -inf
  %v6609 = vmax.f32 %v6607, %v6608
  %v6610 = vsel %vm411, %v6141, -inf
  %v6611 = vmax.f32 %v6609, %v6610
  %v6612 = vsel %vm411, %v6145, -inf
  %v6613 = vmax.f32 %v6611, %v6612
  %v6614 = vsel %vm411, %v6149, -inf
  %v6615 = vmax.f32 %v6613, %v6614
  %v6616 = vsel %vm411, %v6153, -inf
  %v6617 = vmax.f32 %v6615, %v6616
  %v6618 = vsel %vm411, %v6157, -inf
  %v6619 = vmax.f32 %v6617, %v6618
  %v6620 = vsel %vm411, %v6161, -inf
  %v6621 = vmax.f32 %v6619, %v6620
  %v6622 = vsel %vm411, %v6165, -inf
  %v6623 = vmax.f32 %v6621, %v6622
  %v6624 = vsel %vm411, %v6169, -inf
  %v6625 = vmax.f32 %v6623, %v6624
  %v6626 = vsel %vm411, %v6173, -inf
  %v6627 = vmax.f32 %v6625, %v6626
  %v6628 = vsel %vm411, %v6177, -inf
  %v6629 = vmax.f32 %v6627, %v6628
  %v6630 = vsel %vm411, %v6181, -inf
  %v6631 = vmax.f32 %v6629, %v6630
  %v6632 = vsel %vm411, %v6185, -inf
  %v6633 = vmax.f32 %v6631, %v6632
  %v6634 = vsel %vm411, %v6189, -inf
  %v6635 = vmax.f32 %v6633, %v6634
  %v6636 = vsel %vm411, %v6193, -inf
  %v6637 = vmax.f32 %v6635, %v6636
  %v6638 = vsel %vm411, %v6197, -inf
  %v6639 = vmax.f32 %v6637, %v6638
  %v6640 = vsel %vm411, %v6201, -inf
  %v6641 = vmax.f32 %v6639, %v6640
  %v6642 = vsel %vm411, %v6205, -inf
  %v6643 = vmax.f32 %v6641, %v6642
  %v6644 = vsel %vm411, %v6209, -inf
  %v6645 = vmax.f32 %v6643, %v6644
  %v6646 = vsel %vm411, %v6213, -inf
  %v6647 = vmax.f32 %v6645, %v6646
  %v6648 = vsel %vm411, %v6217, -inf
  %v6649 = vmax.f32 %v6647, %v6648
  %v6650 = vsel %vm411, %v6221, -inf
  %v6651 = vmax.f32 %v6649, %v6650
  %v6652 = vsel %vm411, %v6225, -inf
  %v6653 = vmax.f32 %v6651, %v6652
  %v6654 = vsel %vm411, %v6229, -inf
  %v6655 = vmax.f32 %v6653, %v6654
  %v6656 = vsel %vm411, %v6233, -inf
  %v6657 = vmax.f32 %v6655, %v6656
  %v6658 = vsel %vm411, %v6237, -inf
  %v6659 = vmax.f32 %v6657, %v6658
  %v6660 = vsel %vm411, %v6241, -inf
  %v6661 = vmax.f32 %v6659, %v6660
  %v6662 = vsel %vm411, %v6245, -inf
  %v6663 = vmax.f32 %v6661, %v6662
  %v6664 = vsel %vm411, %v6249, -inf
  %v6665 = vmax.f32 %v6663, %v6664
  %v6666 = vsel %vm411, %v6253, -inf
  %v6667 = vmax.f32 %v6665, %v6666
  %v6668 = vsel %vm411, %v6257, -inf
  %v6669 = vmax.f32 %v6667, %v6668
  %v6670 = vsel %vm411, %v6261, -inf
  %v6671 = vmax.f32 %v6669, %v6670
  %v6672 = vsel %vm411, %v6265, -inf
  %v6673 = vmax.f32 %v6671, %v6672
  %v6674 = vsel %vm411, %v6269, -inf
  %v6675 = vmax.f32 %v6673, %v6674
  %v6676 = vsel %vm411, %v6273, -inf
  %v6677 = vmax.f32 %v6675, %v6676
  %v6678 = vsel %vm411, %v6277, -inf
  %v6679 = vmax.f32 %v6677, %v6678
  %v6680 = vsel %vm411, %v6281, -inf
  %v6681 = vmax.f32 %v6679, %v6680
  %v6682 = vsel %vm411, %v6285, -inf
  %v6683 = vmax.f32 %v6681, %v6682
  %v6684 = vsel %vm411, %v6289, -inf
  %v6685 = vmax.f32 %v6683, %v6684
  %v6686 = vsel %vm411, %v6293, -inf
  %v6687 = vmax.f32 %v6685, %v6686
  %v6688 = vsel %vm411, %v6297, -inf
  %v6689 = vmax.f32 %v6687, %v6688
  %v6690 = vsel %vm411, %v6301, -inf
  %v6691 = vmax.f32 %v6689, %v6690
  %v6692 = vsel %vm411, %v6305, -inf
  %v6693 = vmax.f32 %v6691, %v6692
  %v6694 = vsel %vm411, %v6309, -inf
  %v6695 = vmax.f32 %v6693, %v6694
  %v6696 = vsel %vm411, %v6313, -inf
  %v6697 = vmax.f32 %v6695, %v6696
  %v6698 = vsel %vm411, %v6317, -inf
  %v6699 = vmax.f32 %v6697, %v6698
  %v6700 = vsel %vm411, %v6066, -inf
  %v6701 = vsel %vm411, %v6070, -inf
  %v6702 = vmax.f32 %v6700, %v6701
  %v6703 = vsel %vm411, %v6074, -inf
  %v6704 = vmax.f32 %v6702, %v6703
  %v6705 = vsel %vm411, %v6078, -inf
  %v6706 = vmax.f32 %v6704, %v6705
  %v6707 = vsel %vm411, %v6082, -inf
  %v6708 = vmax.f32 %v6706, %v6707
  %v6709 = vsel %vm411, %v6086, -inf
  %v6710 = vmax.f32 %v6708, %v6709
  %v6711 = vsel %vm411, %v6090, -inf
  %v6712 = vmax.f32 %v6710, %v6711
  %v6713 = vsel %vm411, %v6094, -inf
  %v6714 = vmax.f32 %v6712, %v6713
  %v6715 = vsel %vm411, %v6098, -inf
  %v6716 = vmax.f32 %v6714, %v6715
  %v6717 = vsel %vm411, %v6102, -inf
  %v6718 = vmax.f32 %v6716, %v6717
  %v6719 = vsel %vm411, %v6106, -inf
  %v6720 = vmax.f32 %v6718, %v6719
  %v6721 = vsel %vm411, %v6110, -inf
  %v6722 = vmax.f32 %v6720, %v6721
  %v6723 = vsel %vm411, %v6114, -inf
  %v6724 = vmax.f32 %v6722, %v6723
  %v6725 = vsel %vm411, %v6118, -inf
  %v6726 = vmax.f32 %v6724, %v6725
  %v6727 = vsel %vm411, %v6122, -inf
  %v6728 = vmax.f32 %v6726, %v6727
  %v6729 = vsel %vm411, %v6126, -inf
  %v6730 = vmax.f32 %v6728, %v6729
  %v6731 = vsel %vm411, %v6130, -inf
  %v6732 = vmax.f32 %v6730, %v6731
  %v6733 = vsel %vm411, %v6134, -inf
  %v6734 = vmax.f32 %v6732, %v6733
  %v6735 = vsel %vm411, %v6138, -inf
  %v6736 = vmax.f32 %v6734, %v6735
  %v6737 = vsel %vm411, %v6142, -inf
  %v6738 = vmax.f32 %v6736, %v6737
  %v6739 = vsel %vm411, %v6146, -inf
  %v6740 = vmax.f32 %v6738, %v6739
  %v6741 = vsel %vm411, %v6150, -inf
  %v6742 = vmax.f32 %v6740, %v6741
  %v6743 = vsel %vm411, %v6154, -inf
  %v6744 = vmax.f32 %v6742, %v6743
  %v6745 = vsel %vm411, %v6158, -inf
  %v6746 = vmax.f32 %v6744, %v6745
  %v6747 = vsel %vm411, %v6162, -inf
  %v6748 = vmax.f32 %v6746, %v6747
  %v6749 = vsel %vm411, %v6166, -inf
  %v6750 = vmax.f32 %v6748, %v6749
  %v6751 = vsel %vm411, %v6170, -inf
  %v6752 = vmax.f32 %v6750, %v6751
  %v6753 = vsel %vm411, %v6174, -inf
  %v6754 = vmax.f32 %v6752, %v6753
  %v6755 = vsel %vm411, %v6178, -inf
  %v6756 = vmax.f32 %v6754, %v6755
  %v6757 = vsel %vm411, %v6182, -inf
  %v6758 = vmax.f32 %v6756, %v6757
  %v6759 = vsel %vm411, %v6186, -inf
  %v6760 = vmax.f32 %v6758, %v6759
  %v6761 = vsel %vm411, %v6190, -inf
  %v6762 = vmax.f32 %v6760, %v6761
  %v6763 = vsel %vm411, %v6194, -inf
  %v6764 = vmax.f32 %v6762, %v6763
  %v6765 = vsel %vm411, %v6198, -inf
  %v6766 = vmax.f32 %v6764, %v6765
  %v6767 = vsel %vm411, %v6202, -inf
  %v6768 = vmax.f32 %v6766, %v6767
  %v6769 = vsel %vm411, %v6206, -inf
  %v6770 = vmax.f32 %v6768, %v6769
  %v6771 = vsel %vm411, %v6210, -inf
  %v6772 = vmax.f32 %v6770, %v6771
  %v6773 = vsel %vm411, %v6214, -inf
  %v6774 = vmax.f32 %v6772, %v6773
  %v6775 = vsel %vm411, %v6218, -inf
  %v6776 = vmax.f32 %v6774, %v6775
  %v6777 = vsel %vm411, %v6222, -inf
  %v6778 = vmax.f32 %v6776, %v6777
  %v6779 = vsel %vm411, %v6226, -inf
  %v6780 = vmax.f32 %v6778, %v6779
  %v6781 = vsel %vm411, %v6230, -inf
  %v6782 = vmax.f32 %v6780, %v6781
  %v6783 = vsel %vm411, %v6234, -inf
  %v6784 = vmax.f32 %v6782, %v6783
  %v6785 = vsel %vm411, %v6238, -inf
  %v6786 = vmax.f32 %v6784, %v6785
  %v6787 = vsel %vm411, %v6242, -inf
  %v6788 = vmax.f32 %v6786, %v6787
  %v6789 = vsel %vm411, %v6246, -inf
  %v6790 = vmax.f32 %v6788, %v6789
  %v6791 = vsel %vm411, %v6250, -inf
  %v6792 = vmax.f32 %v6790, %v6791
  %v6793 = vsel %vm411, %v6254, -inf
  %v6794 = vmax.f32 %v6792, %v6793
  %v6795 = vsel %vm411, %v6258, -inf
  %v6796 = vmax.f32 %v6794, %v6795
  %v6797 = vsel %vm411, %v6262, -inf
  %v6798 = vmax.f32 %v6796, %v6797
  %v6799 = vsel %vm411, %v6266, -inf
  %v6800 = vmax.f32 %v6798, %v6799
  %v6801 = vsel %vm411, %v6270, -inf
  %v6802 = vmax.f32 %v6800, %v6801
  %v6803 = vsel %vm411, %v6274, -inf
  %v6804 = vmax.f32 %v6802, %v6803
  %v6805 = vsel %vm411, %v6278, -inf
  %v6806 = vmax.f32 %v6804, %v6805
  %v6807 = vsel %vm411, %v6282, -inf
  %v6808 = vmax.f32 %v6806, %v6807
  %v6809 = vsel %vm411, %v6286, -inf
  %v6810 = vmax.f32 %v6808, %v6809
  %v6811 = vsel %vm411, %v6290, -inf
  %v6812 = vmax.f32 %v6810, %v6811
  %v6813 = vsel %vm411, %v6294, -inf
  %v6814 = vmax.f32 %v6812, %v6813
  %v6815 = vsel %vm411, %v6298, -inf
  %v6816 = vmax.f32 %v6814, %v6815
  %v6817 = vsel %vm411, %v6302, -inf
  %v6818 = vmax.f32 %v6816, %v6817
  %v6819 = vsel %vm411, %v6306, -inf
  %v6820 = vmax.f32 %v6818, %v6819
  %v6821 = vsel %vm411, %v6310, -inf
  %v6822 = vmax.f32 %v6820, %v6821
  %v6823 = vsel %vm411, %v6314, -inf
  %v6824 = vmax.f32 %v6822, %v6823
  %v6825 = vsel %vm411, %v6318, -inf
  %v6826 = vmax.f32 %v6824, %v6825
  %v6827 = vadd.f32 %v2926, %v4705
  %v6828 = vadd.f32 %v3053, %v4832
  %v6829 = vadd.f32 %v3180, %v4959
  %v6830 = vadd.f32 %v3307, %v5086
  %v6831 = vadd.f32 %v6827, %v6445
  %v6832 = vadd.f32 %v6828, %v6572
  %v6833 = vadd.f32 %v6829, %v6699
  %v6834 = vadd.f32 %v6830, %v6826
  %v6835 = vld [vmem:[%s12] sm:$0x1]
  %v6836 = vld [vmem:[%s11] sm:$0xf]
  %v6837 = vld [vmem:[%s11 + $0x4] sm:$0xf]
  %v6838 = vld [vmem:[%s11 + $0x8] sm:$0xf]
  %v6839 = vld [vmem:[%s11 + $0xc] sm:$0xf]
  %v6840 = vpack.c.bf16 %v6832, %v6831
  %v6841 = vpack.c.bf16 %v6834, %v6833
  %v6846 = vunpack.c.l.b16 %v6836
  %v6847 = vunpack.c.l.b16 %v6837
  %v6848 = vunpack.c.l.b16 %v6838
  %v6849 = vunpack.c.l.b16 %v6839
  %v6850 = vpack.c.b16 %v6847, %v6846
  %v6851 = vpack.c.b16 %v6849, %v6848
  %v6855 = vsel %vm411, %v6840, 0
  %v6858 = vsel %vm411, %v6841, 0
  %6860 = vmatprep.subr.bf16.mxu0 0
  %6861 = vmatpush1.bf16.msra.mxu0 %v6850
  %6862 = vmatprep.subr.bf16.mxu0 0
  %6863 = vmatpush1.bf16.msra.mxu0 %v6851
  %6864 = vmatprep.subr.bf16.mxu0 0
  %6865 = vmatpush1.bf16.msra.mxu0 0
  %6866 = vmatprep.subr.bf16.mxu0 0
  %6867 = vmatpush1.bf16.msra.mxu0 0
  %6868 = vmatprep.subr.bf16.mxu0 0
  %6869 = vmatpush1.bf16.msra.mxu0 0
  %6870 = vmatprep.subr.bf16.mxu0 0
  %6871 = vmatpush1.bf16.msra.mxu0 0
  %6872 = vmatprep.subr.bf16.mxu0 0
  %6873 = vmatpush1.bf16.msra.mxu0 0
  %6874 = vmatprep.subr.bf16.mxu0 0
  %6875 = vmatpush1.bf16.msra.mxu0 0
  %6876 = vmatprep.subr.bf16.mxu0 0
  %6877 = vmatpush1.bf16.msra.mxu0 0
  %6878 = vmatprep.subr.bf16.mxu0 0
  %6879 = vmatpush1.bf16.msra.mxu0 0
  %6880 = vmatprep.subr.bf16.mxu0 0
  %6881 = vmatpush1.bf16.msra.mxu0 0
  %6882 = vmatprep.subr.bf16.mxu0 0
  %6883 = vmatpush1.bf16.msra.mxu0 0
  %6884 = vmatprep.subr.bf16.mxu0 0
  %6885 = vmatpush1.bf16.msra.mxu0 0
  %6886 = vmatprep.subr.bf16.mxu0 0
  %6887 = vmatpush1.bf16.msra.mxu0 0
  %6888 = vmatprep.subr.bf16.mxu0 0
  %6889 = vmatpush1.bf16.msra.mxu0 0
  %6890 = vmatprep.subr.bf16.mxu0 0
  %6891 = vmatpush1.bf16.msra.mxu0 0
  %6892 = vmatprep.mubr.bf16.mxu0 0
  %6893 = vmatmul.mubr.bf16.gmra.mrb[0].mxu0 %v6855
  %v6894 = vpop.f32.mrb[0].mxu0
  %v6895 = vadd.f32 0.0, %v6894
  %v6896 = vpop.f32.mrb[0].mxu0
  %v6897 = vpop.f32.mrb[0].mxu0
  %v6898 = vadd.f32 0.0, %v6897
  %v6899 = vpop.f32.mrb[0].mxu0
  %6900 = vmatprep.mubr.bf16.mxu0 0
  %6901 = vmatmul.mubr.bf16.gmra.mrb[0].mxu0 %v6858
  %v6902 = vpop.f32.mrb[0].mxu0
  %v6903 = vadd.f32 0.0, %v6902
  %v6904 = vpop.f32.mrb[0].mxu0
  %v6905 = vpop.f32.mrb[0].mxu0
  %v6906 = vadd.f32 0.0, %v6905
  %v6907 = vpop.f32.mrb[0].mxu0
  %6908 = vdwg.mxu0
  %v6909 = vld [vmem:[%s10] sm:$0xf]
  %v6910 = vld [vmem:[%s10 + $0x4] sm:$0xf]
  %v6911 = vld [vmem:[%s10 + $0x8] sm:$0xf]
  %v6912 = vld [vmem:[%s10 + $0xc] sm:$0xf]
  %v6913 = vld [vmem:[%s10 + $0x10] sm:$0xf]
  %v6914 = vld [vmem:[%s10 + $0x14] sm:$0xf]
  %v6915 = vld [vmem:[%s10 + $0x18] sm:$0xf]
  %v6916 = vld [vmem:[%s10 + $0x1c] sm:$0xf]
  %v6917 = vld [vmem:[%s10 + $0x20] sm:$0xf]
  %v6918 = vld [vmem:[%s10 + $0x24] sm:$0xf]
  %v6919 = vld [vmem:[%s10 + $0x28] sm:$0xf]
  %v6920 = vld [vmem:[%s10 + $0x2c] sm:$0xf]
  %v6921 = vld [vmem:[%s10 + $0x30] sm:$0xf]
  %v6922 = vld [vmem:[%s10 + $0x34] sm:$0xf]
  %v6923 = vld [vmem:[%s10 + $0x38] sm:$0xf]
  %v6924 = vld [vmem:[%s10 + $0x3c] sm:$0xf]
  %v6925 = vld [vmem:[%s10 + $0x40] sm:$0xf]
  %v6926 = vld [vmem:[%s10 + $0x44] sm:$0xf]
  %v6927 = vld [vmem:[%s10 + $0x48] sm:$0xf]
  %v6928 = vld [vmem:[%s10 + $0x4c] sm:$0xf]
  %v6929 = vld [vmem:[%s10 + $0x50] sm:$0xf]
  %v6930 = vld [vmem:[%s10 + $0x54] sm:$0xf]
  %v6931 = vld [vmem:[%s10 + $0x58] sm:$0xf]
  %v6932 = vld [vmem:[%s10 + $0x5c] sm:$0xf]
  %v6933 = vld [vmem:[%s10 + $0x60] sm:$0xf]
  %v6934 = vld [vmem:[%s10 + $0x64] sm:$0xf]
  %v6935 = vld [vmem:[%s10 + $0x68] sm:$0xf]
  %v6936 = vld [vmem:[%s10 + $0x6c] sm:$0xf]
  %v6937 = vld [vmem:[%s10 + $0x70] sm:$0xf]
  %v6938 = vld [vmem:[%s10 + $0x74] sm:$0xf]
  %v6939 = vld [vmem:[%s10 + $0x78] sm:$0xf]
  %v6940 = vld [vmem:[%s10 + $0x7c] sm:$0xf]
  %v6941 = vpack.c.bf16 %v6898, %v6895
  %v6942 = vpack.c.bf16 %v6906, %v6903
  %v6975 = vunpack.c.l.b16 %v6909
  %v6976 = vunpack.c.l.b16 %v6910
  %v6977 = vunpack.c.l.b16 %v6911
  %v6978 = vunpack.c.l.b16 %v6912
  %v6979 = vunpack.c.l.b16 %v6913
  %v6980 = vunpack.c.l.b16 %v6914
  %v6981 = vunpack.c.l.b16 %v6915
  %v6982 = vunpack.c.l.b16 %v6916
  %v6983 = vunpack.c.l.b16 %v6917
  %v6984 = vunpack.c.l.b16 %v6918
  %v6985 = vunpack.c.l.b16 %v6919
  %v6986 = vunpack.c.l.b16 %v6920
  %v6987 = vunpack.c.l.b16 %v6921
  %v6988 = vunpack.c.l.b16 %v6922
  %v6989 = vunpack.c.l.b16 %v6923
  %v6990 = vunpack.c.l.b16 %v6924
  %v6991 = vunpack.c.l.b16 %v6925
  %v6992 = vunpack.c.l.b16 %v6926
  %v6993 = vunpack.c.l.b16 %v6927
  %v6994 = vunpack.c.l.b16 %v6928
  %v6995 = vunpack.c.l.b16 %v6929
  %v6996 = vunpack.c.l.b16 %v6930
  %v6997 = vunpack.c.l.b16 %v6931
  %v6998 = vunpack.c.l.b16 %v6932
  %v6999 = vunpack.c.l.b16 %v6933
  %v7000 = vunpack.c.l.b16 %v6934
  %v7001 = vunpack.c.l.b16 %v6935
  %v7002 = vunpack.c.l.b16 %v6936
  %v7003 = vunpack.c.l.b16 %v6937
  %v7004 = vunpack.c.l.b16 %v6938
  %v7005 = vunpack.c.l.b16 %v6939
  %v7006 = vunpack.c.l.b16 %v6940
  %v7007 = vpack.c.b16 %v6976, %v6975
  %v7008 = vpack.c.b16 %v6978, %v6977
  %v7009 = vpack.c.b16 %v6980, %v6979
  %v7010 = vpack.c.b16 %v6982, %v6981
  %v7011 = vpack.c.b16 %v6984, %v6983
  %v7012 = vpack.c.b16 %v6986, %v6985
  %v7013 = vpack.c.b16 %v6988, %v6987
  %v7014 = vpack.c.b16 %v6990, %v6989
  %v7015 = vpack.c.b16 %v6992, %v6991
  %v7016 = vpack.c.b16 %v6994, %v6993
  %v7017 = vpack.c.b16 %v6996, %v6995
  %v7018 = vpack.c.b16 %v6998, %v6997
  %v7019 = vpack.c.b16 %v7000, %v6999
  %v7020 = vpack.c.b16 %v7002, %v7001
  %v7021 = vpack.c.b16 %v7004, %v7003
  %v7022 = vpack.c.b16 %v7006, %v7005
  %v7024 = vsel %vm411, %v7007, 0
  %v7027 = vsel %vm411, %v7008, 0
  %v7030 = vsel %vm411, %v7009, 0
  %v7033 = vsel %vm411, %v7010, 0
  %v7036 = vsel %vm411, %v7011, 0
  %v7039 = vsel %vm411, %v7012, 0
  %v7042 = vsel %vm411, %v7013, 0
  %v7045 = vsel %vm411, %v7014, 0
  %v7048 = vsel %vm411, %v7015, 0
  %v7051 = vsel %vm411, %v7016, 0
  %v7054 = vsel %vm411, %v7017, 0
  %v7057 = vsel %vm411, %v7018, 0
  %v7060 = vsel %vm411, %v7019, 0
  %v7063 = vsel %vm411, %v7020, 0
  %v7066 = vsel %vm411, %v7021, 0
  %v7069 = vsel %vm411, %v7022, 0
  %7071 = vmatprep.subr.bf16.mxu0 0
  %7072 = vmatpush1.bf16.msra.mxu0 %v6941
  %7073 = vmatprep.subr.bf16.mxu0 0
  %7074 = vmatpush1.bf16.msra.mxu0 %v6942
  %7075 = vmatprep.subr.bf16.mxu0 0
  %7076 = vmatpush1.bf16.msra.mxu0 0
  %7077 = vmatprep.subr.bf16.mxu0 0
  %7078 = vmatpush1.bf16.msra.mxu0 0
  %7079 = vmatprep.subr.bf16.mxu0 0
  %7080 = vmatpush1.bf16.msra.mxu0 0
  %7081 = vmatprep.subr.bf16.mxu0 0
  %7082 = vmatpush1.bf16.msra.mxu0 0
  %7083 = vmatprep.subr.bf16.mxu0 0
  %7084 = vmatpush1.bf16.msra.mxu0 0
  %7085 = vmatprep.subr.bf16.mxu0 0
  %7086 = vmatpush1.bf16.msra.mxu0 0
  %7087 = vmatprep.subr.bf16.mxu0 0
  %7088 = vmatpush1.bf16.msra.mxu0 0
  %7089 = vmatprep.subr.bf16.mxu0 0
  %7090 = vmatpush1.bf16.msra.mxu0 0
  %7091 = vmatprep.subr.bf16.mxu0 0
  %7092 = vmatpush1.bf16.msra.mxu0 0
  %7093 = vmatprep.subr.bf16.mxu0 0
  %7094 = vmatpush1.bf16.msra.mxu0 0
  %7095 = vmatprep.subr.bf16.mxu0 0
  %7096 = vmatpush1.bf16.msra.mxu0 0
  %7097 = vmatprep.subr.bf16.mxu0 0
  %7098 = vmatpush1.bf16.msra.mxu0 0
  %7099 = vmatprep.subr.bf16.mxu0 0
  %7100 = vmatpush1.bf16.msra.mxu0 0
  %7101 = vmatprep.subr.bf16.mxu0 0
  %7102 = vmatpush1.bf16.msra.mxu0 0
  %7103 = vmatprep.mubr.bf16.mxu0 0
  %7104 = vmatmul.mubr.bf16.gmra.mrb[0].mxu0 %v7024
  %v7105 = vpop.f32.mrb[0].mxu0
  %v7106 = vadd.f32 0.0, %v7105
  %v7107 = vpop.f32.mrb[0].mxu0
  %v7108 = vpop.f32.mrb[0].mxu0
  %v7109 = vadd.f32 0.0, %v7108
  %v7110 = vpop.f32.mrb[0].mxu0
  %7111 = vmatprep.mubr.bf16.mxu0 0
  %7112 = vmatmul.mubr.bf16.gmra.mrb[0].mxu0 %v7027
  %v7113 = vpop.f32.mrb[0].mxu0
  %v7114 = vadd.f32 0.0, %v7113
  %v7115 = vpop.f32.mrb[0].mxu0
  %v7116 = vpop.f32.mrb[0].mxu0
  %v7117 = vadd.f32 0.0, %v7116
  %v7118 = vpop.f32.mrb[0].mxu0
  %7119 = vmatprep.mubr.bf16.mxu0 0
  %7120 = vmatmul.mubr.bf16.gmra.mrb[0].mxu0 %v7030
  %v7121 = vpop.f32.mrb[0].mxu0
  %v7122 = vadd.f32 0.0, %v7121
  %v7123 = vpop.f32.mrb[0].mxu0
  %v7124 = vpop.f32.mrb[0].mxu0
  %v7125 = vadd.f32 0.0, %v7124
  %v7126 = vpop.f32.mrb[0].mxu0
  %7127 = vmatprep.mubr.bf16.mxu0 0
  %7128 = vmatmul.mubr.bf16.gmra.mrb[0].mxu0 %v7033
  %v7129 = vpop.f32.mrb[0].mxu0
  %v7130 = vadd.f32 0.0, %v7129
  %v7131 = vpop.f32.mrb[0].mxu0
  %v7132 = vpop.f32.mrb[0].mxu0
  %v7133 = vadd.f32 0.0, %v7132
  %v7134 = vpop.f32.mrb[0].mxu0
  %7135 = vmatprep.mubr.bf16.mxu0 0
  %7136 = vmatmul.mubr.bf16.gmra.mrb[0].mxu0 %v7036
  %v7137 = vpop.f32.mrb[0].mxu0
  %v7138 = vadd.f32 0.0, %v7137
  %v7139 = vpop.f32.mrb[0].mxu0
  %v7140 = vpop.f32.mrb[0].mxu0
  %v7141 = vadd.f32 0.0, %v7140
  %v7142 = vpop.f32.mrb[0].mxu0
  %7143 = vmatprep.mubr.bf16.mxu0 0
  %7144 = vmatmul.mubr.bf16.gmra.mrb[0].mxu0 %v7039
  %v7145 = vpop.f32.mrb[0].mxu0
  %v7146 = vadd.f32 0.0, %v7145
  %v7147 = vpop.f32.mrb[0].mxu0
  %v7148 = vpop.f32.mrb[0].mxu0
  %v7149 = vadd.f32 0.0, %v7148
  %v7150 = vpop.f32.mrb[0].mxu0
  %7151 = vmatprep.mubr.bf16.mxu0 0
  %7152 = vmatmul.mubr.bf16.gmra.mrb[0].mxu0 %v7042
  %v7153 = vpop.f32.mrb[0].mxu0
  %v7154 = vadd.f32 0.0, %v7153
  %v7155 = vpop.f32.mrb[0].mxu0
  %v7156 = vpop.f32.mrb[0].mxu0
  %v7157 = vadd.f32 0.0, %v7156
  %v7158 = vpop.f32.mrb[0].mxu0
  %7159 = vmatprep.mubr.bf16.mxu0 0
  %7160 = vmatmul.mubr.bf16.gmra.mrb[0].mxu0 %v7045
  %v7161 = vpop.f32.mrb[0].mxu0
  %v7162 = vadd.f32 0.0, %v7161
  %v7163 = vpop.f32.mrb[0].mxu0
  %v7164 = vpop.f32.mrb[0].mxu0
  %v7165 = vadd.f32 0.0, %v7164
  %v7166 = vpop.f32.mrb[0].mxu0
  %7167 = vmatprep.mubr.bf16.mxu0 0
  %7168 = vmatmul.mubr.bf16.gmra.mrb[0].mxu0 %v7048
  %v7169 = vpop.f32.mrb[0].mxu0
  %v7170 = vadd.f32 0.0, %v7169
  %v7171 = vpop.f32.mrb[0].mxu0
  %v7172 = vpop.f32.mrb[0].mxu0
  %v7173 = vadd.f32 0.0, %v7172
  %v7174 = vpop.f32.mrb[0].mxu0
  %7175 = vmatprep.mubr.bf16.mxu0 0
  %7176 = vmatmul.mubr.bf16.gmra.mrb[0].mxu0 %v7051
  %v7177 = vpop.f32.mrb[0].mxu0
  %v7178 = vadd.f32 0.0, %v7177
  %v7179 = vpop.f32.mrb[0].mxu0
  %v7180 = vpop.f32.mrb[0].mxu0
  %v7181 = vadd.f32 0.0, %v7180
  %v7182 = vpop.f32.mrb[0].mxu0
  %7183 = vmatprep.mubr.bf16.mxu0 0
  %7184 = vmatmul.mubr.bf16.gmra.mrb[0].mxu0 %v7054
  %v7185 = vpop.f32.mrb[0].mxu0
  %v7186 = vadd.f32 0.0, %v7185
  %v7187 = vpop.f32.mrb[0].mxu0
  %v7188 = vpop.f32.mrb[0].mxu0
  %v7189 = vadd.f32 0.0, %v7188
  %v7190 = vpop.f32.mrb[0].mxu0
  %7191 = vmatprep.mubr.bf16.mxu0 0
  %7192 = vmatmul.mubr.bf16.gmra.mrb[0].mxu0 %v7057
  %v7193 = vpop.f32.mrb[0].mxu0
  %v7194 = vadd.f32 0.0, %v7193
  %v7195 = vpop.f32.mrb[0].mxu0
  %v7196 = vpop.f32.mrb[0].mxu0
  %v7197 = vadd.f32 0.0, %v7196
  %v7198 = vpop.f32.mrb[0].mxu0
  %7199 = vmatprep.mubr.bf16.mxu0 0
  %7200 = vmatmul.mubr.bf16.gmra.mrb[0].mxu0 %v7060
  %v7201 = vpop.f32.mrb[0].mxu0
  %v7202 = vadd.f32 0.0, %v7201
  %v7203 = vpop.f32.mrb[0].mxu0
  %v7204 = vpop.f32.mrb[0].mxu0
  %v7205 = vadd.f32 0.0, %v7204
  %v7206 = vpop.f32.mrb[0].mxu0
  %7207 = vmatprep.mubr.bf16.mxu0 0
  %7208 = vmatmul.mubr.bf16.gmra.mrb[0].mxu0 %v7063
  %v7209 = vpop.f32.mrb[0].mxu0
  %v7210 = vadd.f32 0.0, %v7209
  %v7211 = vpop.f32.mrb[0].mxu0
  %v7212 = vpop.f32.mrb[0].mxu0
  %v7213 = vadd.f32 0.0, %v7212
  %v7214 = vpop.f32.mrb[0].mxu0
  %7215 = vmatprep.mubr.bf16.mxu0 0
  %7216 = vmatmul.mubr.bf16.gmra.mrb[0].mxu0 %v7066
  %v7217 = vpop.f32.mrb[0].mxu0
  %v7218 = vadd.f32 0.0, %v7217
  %v7219 = vpop.f32.mrb[0].mxu0
  %v7220 = vpop.f32.mrb[0].mxu0
  %v7221 = vadd.f32 0.0, %v7220
  %v7222 = vpop.f32.mrb[0].mxu0
  %7223 = vmatprep.mubr.bf16.mxu0 0
  %7224 = vmatmul.mubr.bf16.gmra.mrb[0].mxu0 %v7069
  %v7225 = vpop.f32.mrb[0].mxu0
  %v7226 = vadd.f32 0.0, %v7225
  %v7227 = vpop.f32.mrb[0].mxu0
  %v7228 = vpop.f32.mrb[0].mxu0
  %v7229 = vadd.f32 0.0, %v7228
  %v7230 = vpop.f32.mrb[0].mxu0
  %7231 = vdwg.mxu0
  %v7233 = vlaneseq
  %v7234 = vshrl.u32 %v7233, 7
  %v7235 = vsub.s32 0, %v7234
  %v7236 = vrot.slane %v6835, %v7235
  %v7238 = vadd.f32 %v7236, %v7106
  %v7239 = vadd.f32 %v7236, %v7109
  %v7240 = vadd.f32 %v7236, %v7114
  %v7241 = vadd.f32 %v7236, %v7117
  %v7242 = vadd.f32 %v7236, %v7122
  %v7243 = vadd.f32 %v7236, %v7125
  %v7244 = vadd.f32 %v7236, %v7130
  %v7245 = vadd.f32 %v7236, %v7133
  %v7246 = vadd.f32 %v7236, %v7138
  %v7247 = vadd.f32 %v7236, %v7141
  %v7248 = vadd.f32 %v7236, %v7146
  %v7249 = vadd.f32 %v7236, %v7149
  %v7250 = vadd.f32 %v7236, %v7154
  %v7251 = vadd.f32 %v7236, %v7157
  %v7252 = vadd.f32 %v7236, %v7162
  %v7253 = vadd.f32 %v7236, %v7165
  %v7254 = vadd.f32 %v7236, %v7170
  %v7255 = vadd.f32 %v7236, %v7173
  %v7256 = vadd.f32 %v7236, %v7178
  %v7257 = vadd.f32 %v7236, %v7181
  %v7258 = vadd.f32 %v7236, %v7186
  %v7259 = vadd.f32 %v7236, %v7189
  %v7260 = vadd.f32 %v7236, %v7194
  %v7261 = vadd.f32 %v7236, %v7197
  %v7262 = vadd.f32 %v7236, %v7202
  %v7263 = vadd.f32 %v7236, %v7205
  %v7264 = vadd.f32 %v7236, %v7210
  %v7265 = vadd.f32 %v7236, %v7213
  %v7266 = vadd.f32 %v7236, %v7218
  %v7267 = vadd.f32 %v7236, %v7221
  %v7268 = vadd.f32 %v7236, %v7226
  %v7269 = vadd.f32 %v7236, %v7229
  %s7270 = scalar_lea.vmem %s11, 16
  %v7271 = vld [vmem:[%s7270] sm:$0xf]
  %v7272 = vld [vmem:[%s7270 + $0x4] sm:$0xf]
  %v7273 = vld [vmem:[%s7270 + $0x8] sm:$0xf]
  %v7274 = vld [vmem:[%s7270 + $0xc] sm:$0xf]
  %v7279 = vunpack.c.l.b16 %v7271
  %v7280 = vunpack.c.l.b16 %v7272
  %v7281 = vunpack.c.l.b16 %v7273
  %v7282 = vunpack.c.l.b16 %v7274
  %v7283 = vpack.c.b16 %v7280, %v7279
  %v7284 = vpack.c.b16 %v7282, %v7281
  %7287 = vmatprep.subr.bf16.mxu0 0
  %7288 = vmatpush1.bf16.msra.mxu0 %v7283
  %7289 = vmatprep.subr.bf16.mxu0 0
  %7290 = vmatpush1.bf16.msra.mxu0 %v7284
  %7291 = vmatprep.subr.bf16.mxu0 0
  %7292 = vmatpush1.bf16.msra.mxu0 0
  %7293 = vmatprep.subr.bf16.mxu0 0
  %7294 = vmatpush1.bf16.msra.mxu0 0
  %7295 = vmatprep.subr.bf16.mxu0 0
  %7296 = vmatpush1.bf16.msra.mxu0 0
  %7297 = vmatprep.subr.bf16.mxu0 0
  %7298 = vmatpush1.bf16.msra.mxu0 0
  %7299 = vmatprep.subr.bf16.mxu0 0
  %7300 = vmatpush1.bf16.msra.mxu0 0
  %7301 = vmatprep.subr.bf16.mxu0 0
  %7302 = vmatpush1.bf16.msra.mxu0 0
  %7303 = vmatprep.subr.bf16.mxu0 0
  %7304 = vmatpush1.bf16.msra.mxu0 0
  %7305 = vmatprep.subr.bf16.mxu0 0
  %7306 = vmatpush1.bf16.msra.mxu0 0
  %7307 = vmatprep.subr.bf16.mxu0 0
  %7308 = vmatpush1.bf16.msra.mxu0 0
  %7309 = vmatprep.subr.bf16.mxu0 0
  %7310 = vmatpush1.bf16.msra.mxu0 0
  %7311 = vmatprep.subr.bf16.mxu0 0
  %7312 = vmatpush1.bf16.msra.mxu0 0
  %7313 = vmatprep.subr.bf16.mxu0 0
  %7314 = vmatpush1.bf16.msra.mxu0 0
  %7315 = vmatprep.subr.bf16.mxu0 0
  %7316 = vmatpush1.bf16.msra.mxu0 0
  %7317 = vmatprep.subr.bf16.mxu0 0
  %7318 = vmatpush1.bf16.msra.mxu0 0
  %7319 = vmatprep.mubr.bf16.mxu0 0
  %7320 = vmatmul.mubr.bf16.gmra.mrb[0].mxu0 %v6855
  %v7321 = vpop.f32.mrb[0].mxu0
  %v7322 = vadd.f32 0.0, %v7321
  %v7323 = vpop.f32.mrb[0].mxu0
  %v7324 = vpop.f32.mrb[0].mxu0
  %v7325 = vadd.f32 0.0, %v7324
  %v7326 = vpop.f32.mrb[0].mxu0
  %7327 = vmatprep.mubr.bf16.mxu0 0
  %7328 = vmatmul.mubr.bf16.gmra.mrb[0].mxu0 %v6858
  %v7329 = vpop.f32.mrb[0].mxu0
  %v7330 = vadd.f32 0.0, %v7329
  %v7331 = vpop.f32.mrb[0].mxu0
  %v7332 = vpop.f32.mrb[0].mxu0
  %v7333 = vadd.f32 0.0, %v7332
  %v7334 = vpop.f32.mrb[0].mxu0
  %7335 = vdwg.mxu0
  %s7336 = scalar_lea.vmem %s10, 128
  %v7337 = vld [vmem:[%s7336] sm:$0xf]
  %v7338 = vld [vmem:[%s7336 + $0x4] sm:$0xf]
  %v7339 = vld [vmem:[%s7336 + $0x8] sm:$0xf]
  %v7340 = vld [vmem:[%s7336 + $0xc] sm:$0xf]
  %v7341 = vld [vmem:[%s7336 + $0x10] sm:$0xf]
  %v7342 = vld [vmem:[%s7336 + $0x14] sm:$0xf]
  %v7343 = vld [vmem:[%s7336 + $0x18] sm:$0xf]
  %v7344 = vld [vmem:[%s7336 + $0x1c] sm:$0xf]
  %v7345 = vld [vmem:[%s7336 + $0x20] sm:$0xf]
  %v7346 = vld [vmem:[%s7336 + $0x24] sm:$0xf]
  %v7347 = vld [vmem:[%s7336 + $0x28] sm:$0xf]
  %v7348 = vld [vmem:[%s7336 + $0x2c] sm:$0xf]
  %v7349 = vld [vmem:[%s7336 + $0x30] sm:$0xf]
  %v7350 = vld [vmem:[%s7336 + $0x34] sm:$0xf]
  %v7351 = vld [vmem:[%s7336 + $0x38] sm:$0xf]
  %v7352 = vld [vmem:[%s7336 + $0x3c] sm:$0xf]
  %v7353 = vld [vmem:[%s7336 + $0x40] sm:$0xf]
  %v7354 = vld [vmem:[%s7336 + $0x44] sm:$0xf]
  %v7355 = vld [vmem:[%s7336 + $0x48] sm:$0xf]
  %v7356 = vld [vmem:[%s7336 + $0x4c] sm:$0xf]
  %v7357 = vld [vmem:[%s7336 + $0x50] sm:$0xf]
  %v7358 = vld [vmem:[%s7336 + $0x54] sm:$0xf]
  %v7359 = vld [vmem:[%s7336 + $0x58] sm:$0xf]
  %v7360 = vld [vmem:[%s7336 + $0x5c] sm:$0xf]
  %v7361 = vld [vmem:[%s7336 + $0x60] sm:$0xf]
  %v7362 = vld [vmem:[%s7336 + $0x64] sm:$0xf]
  %v7363 = vld [vmem:[%s7336 + $0x68] sm:$0xf]
  %v7364 = vld [vmem:[%s7336 + $0x6c] sm:$0xf]
  %v7365 = vld [vmem:[%s7336 + $0x70] sm:$0xf]
  %v7366 = vld [vmem:[%s7336 + $0x74] sm:$0xf]
  %v7367 = vld [vmem:[%s7336 + $0x78] sm:$0xf]
  %v7368 = vld [vmem:[%s7336 + $0x7c] sm:$0xf]
  %v7369 = vpack.c.bf16 %v7325, %v7322
  %v7370 = vpack.c.bf16 %v7333, %v7330
  %v7403 = vunpack.c.l.b16 %v7337
  %v7404 = vunpack.c.l.b16 %v7338
  %v7405 = vunpack.c.l.b16 %v7339
  %v7406 = vunpack.c.l.b16 %v7340
  %v7407 = vunpack.c.l.b16 %v7341
  %v7408 = vunpack.c.l.b16 %v7342
  %v7409 = vunpack.c.l.b16 %v7343
  %v7410 = vunpack.c.l.b16 %v7344
  %v7411 = vunpack.c.l.b16 %v7345
  %v7412 = vunpack.c.l.b16 %v7346
  %v7413 = vunpack.c.l.b16 %v7347
  %v7414 = vunpack.c.l.b16 %v7348
  %v7415 = vunpack.c.l.b16 %v7349
  %v7416 = vunpack.c.l.b16 %v7350
  %v7417 = vunpack.c.l.b16 %v7351
  %v7418 = vunpack.c.l.b16 %v7352
  %v7419 = vunpack.c.l.b16 %v7353
  %v7420 = vunpack.c.l.b16 %v7354
  %v7421 = vunpack.c.l.b16 %v7355
  %v7422 = vunpack.c.l.b16 %v7356
  %v7423 = vunpack.c.l.b16 %v7357
  %v7424 = vunpack.c.l.b16 %v7358
  %v7425 = vunpack.c.l.b16 %v7359
  %v7426 = vunpack.c.l.b16 %v7360
  %v7427 = vunpack.c.l.b16 %v7361
  %v7428 = vunpack.c.l.b16 %v7362
  %v7429 = vunpack.c.l.b16 %v7363
  %v7430 = vunpack.c.l.b16 %v7364
  %v7431 = vunpack.c.l.b16 %v7365
  %v7432 = vunpack.c.l.b16 %v7366
  %v7433 = vunpack.c.l.b16 %v7367
  %v7434 = vunpack.c.l.b16 %v7368
  %v7435 = vpack.c.b16 %v7404, %v7403
  %v7436 = vpack.c.b16 %v7406, %v7405
  %v7437 = vpack.c.b16 %v7408, %v7407
  %v7438 = vpack.c.b16 %v7410, %v7409
  %v7439 = vpack.c.b16 %v7412, %v7411
  %v7440 = vpack.c.b16 %v7414, %v7413
  %v7441 = vpack.c.b16 %v7416, %v7415
  %v7442 = vpack.c.b16 %v7418, %v7417
  %v7443 = vpack.c.b16 %v7420, %v7419
  %v7444 = vpack.c.b16 %v7422, %v7421
  %v7445 = vpack.c.b16 %v7424, %v7423
  %v7446 = vpack.c.b16 %v7426, %v7425
  %v7447 = vpack.c.b16 %v7428, %v7427
  %v7448 = vpack.c.b16 %v7430, %v7429
  %v7449 = vpack.c.b16 %v7432, %v7431
  %v7450 = vpack.c.b16 %v7434, %v7433
  %v7452 = vsel %vm411, %v7435, 0
  %v7455 = vsel %vm411, %v7436, 0
  %v7458 = vsel %vm411, %v7437, 0
  %v7461 = vsel %vm411, %v7438, 0
  %v7464 = vsel %vm411, %v7439, 0
  %v7467 = vsel %vm411, %v7440, 0
  %v7470 = vsel %vm411, %v7441, 0
  %v7473 = vsel %vm411, %v7442, 0
  %v7476 = vsel %vm411, %v7443, 0
  %v7479 = vsel %vm411, %v7444, 0
  %v7482 = vsel %vm411, %v7445, 0
  %v7485 = vsel %vm411, %v7446, 0
  %v7488 = vsel %vm411, %v7447, 0
  %v7491 = vsel %vm411, %v7448, 0
  %v7494 = vsel %vm411, %v7449, 0
  %v7497 = vsel %vm411, %v7450, 0
  %7499 = vmatprep.subr.bf16.mxu0 0
  %7500 = vmatpush1.bf16.msra.mxu0 %v7369
  %7501 = vmatprep.subr.bf16.mxu0 0
  %7502 = vmatpush1.bf16.msra.mxu0 %v7370
  %7503 = vmatprep.subr.bf16.mxu0 0
  %7504 = vmatpush1.bf16.msra.mxu0 0
  %7505 = vmatprep.subr.bf16.mxu0 0
  %7506 = vmatpush1.bf16.msra.mxu0 0
  %7507 = vmatprep.subr.bf16.mxu0 0
  %7508 = vmatpush1.bf16.msra.mxu0 0
  %7509 = vmatprep.subr.bf16.mxu0 0
  %7510 = vmatpush1.bf16.msra.mxu0 0
  %7511 = vmatprep.subr.bf16.mxu0 0
  %7512 = vmatpush1.bf16.msra.mxu0 0
  %7513 = vmatprep.subr.bf16.mxu0 0
  %7514 = vmatpush1.bf16.msra.mxu0 0
  %7515 = vmatprep.subr.bf16.mxu0 0
  %7516 = vmatpush1.bf16.msra.mxu0 0
  %7517 = vmatprep.subr.bf16.mxu0 0
  %7518 = vmatpush1.bf16.msra.mxu0 0
  %7519 = vmatprep.subr.bf16.mxu0 0
  %7520 = vmatpush1.bf16.msra.mxu0 0
  %7521 = vmatprep.subr.bf16.mxu0 0
  %7522 = vmatpush1.bf16.msra.mxu0 0
  %7523 = vmatprep.subr.bf16.mxu0 0
  %7524 = vmatpush1.bf16.msra.mxu0 0
  %7525 = vmatprep.subr.bf16.mxu0 0
  %7526 = vmatpush1.bf16.msra.mxu0 0
  %7527 = vmatprep.subr.bf16.mxu0 0
  %7528 = vmatpush1.bf16.msra.mxu0 0
  %7529 = vmatprep.subr.bf16.mxu0 0
  %7530 = vmatpush1.bf16.msra.mxu0 0
  %7531 = vmatprep.mubr.bf16.mxu0 0
  %7532 = vmatmul.mubr.bf16.gmra.mrb[0].mxu0 %v7452
  %v7533 = vpop.f32.mrb[0].mxu0
  %v7534 = vadd.f32 0.0, %v7533
  %v7535 = vpop.f32.mrb[0].mxu0
  %v7536 = vpop.f32.mrb[0].mxu0
  %v7537 = vadd.f32 0.0, %v7536
  %v7538 = vpop.f32.mrb[0].mxu0
  %7539 = vmatprep.mubr.bf16.mxu0 0
  %7540 = vmatmul.mubr.bf16.gmra.mrb[0].mxu0 %v7455
  %v7541 = vpop.f32.mrb[0].mxu0
  %v7542 = vadd.f32 0.0, %v7541
  %v7543 = vpop.f32.mrb[0].mxu0
  %v7544 = vpop.f32.mrb[0].mxu0
  %v7545 = vadd.f32 0.0, %v7544
  %v7546 = vpop.f32.mrb[0].mxu0
  %7547 = vmatprep.mubr.bf16.mxu0 0
  %7548 = vmatmul.mubr.bf16.gmra.mrb[0].mxu0 %v7458
  %v7549 = vpop.f32.mrb[0].mxu0
  %v7550 = vadd.f32 0.0, %v7549
  %v7551 = vpop.f32.mrb[0].mxu0
  %v7552 = vpop.f32.mrb[0].mxu0
  %v7553 = vadd.f32 0.0, %v7552
  %v7554 = vpop.f32.mrb[0].mxu0
  %7555 = vmatprep.mubr.bf16.mxu0 0
  %7556 = vmatmul.mubr.bf16.gmra.mrb[0].mxu0 %v7461
  %v7557 = vpop.f32.mrb[0].mxu0
  %v7558 = vadd.f32 0.0, %v7557
  %v7559 = vpop.f32.mrb[0].mxu0
  %v7560 = vpop.f32.mrb[0].mxu0
  %v7561 = vadd.f32 0.0, %v7560
  %v7562 = vpop.f32.mrb[0].mxu0
  %7563 = vmatprep.mubr.bf16.mxu0 0
  %7564 = vmatmul.mubr.bf16.gmra.mrb[0].mxu0 %v7464
  %v7565 = vpop.f32.mrb[0].mxu0
  %v7566 = vadd.f32 0.0, %v7565
  %v7567 = vpop.f32.mrb[0].mxu0
  %v7568 = vpop.f32.mrb[0].mxu0
  %v7569 = vadd.f32 0.0, %v7568
  %v7570 = vpop.f32.mrb[0].mxu0
  %7571 = vmatprep.mubr.bf16.mxu0 0
  %7572 = vmatmul.mubr.bf16.gmra.mrb[0].mxu0 %v7467
  %v7573 = vpop.f32.mrb[0].mxu0
  %v7574 = vadd.f32 0.0, %v7573
  %v7575 = vpop.f32.mrb[0].mxu0
  %v7576 = vpop.f32.mrb[0].mxu0
  %v7577 = vadd.f32 0.0, %v7576
  %v7578 = vpop.f32.mrb[0].mxu0
  %7579 = vmatprep.mubr.bf16.mxu0 0
  %7580 = vmatmul.mubr.bf16.gmra.mrb[0].mxu0 %v7470
  %v7581 = vpop.f32.mrb[0].mxu0
  %v7582 = vadd.f32 0.0, %v7581
  %v7583 = vpop.f32.mrb[0].mxu0
  %v7584 = vpop.f32.mrb[0].mxu0
  %v7585 = vadd.f32 0.0, %v7584
  %v7586 = vpop.f32.mrb[0].mxu0
  %7587 = vmatprep.mubr.bf16.mxu0 0
  %7588 = vmatmul.mubr.bf16.gmra.mrb[0].mxu0 %v7473
  %v7589 = vpop.f32.mrb[0].mxu0
  %v7590 = vadd.f32 0.0, %v7589
  %v7591 = vpop.f32.mrb[0].mxu0
  %v7592 = vpop.f32.mrb[0].mxu0
  %v7593 = vadd.f32 0.0, %v7592
  %v7594 = vpop.f32.mrb[0].mxu0
  %7595 = vmatprep.mubr.bf16.mxu0 0
  %7596 = vmatmul.mubr.bf16.gmra.mrb[0].mxu0 %v7476
  %v7597 = vpop.f32.mrb[0].mxu0
  %v7598 = vadd.f32 0.0, %v7597
  %v7599 = vpop.f32.mrb[0].mxu0
  %v7600 = vpop.f32.mrb[0].mxu0
  %v7601 = vadd.f32 0.0, %v7600
  %v7602 = vpop.f32.mrb[0].mxu0
  %7603 = vmatprep.mubr.bf16.mxu0 0
  %7604 = vmatmul.mubr.bf16.gmra.mrb[0].mxu0 %v7479
  %v7605 = vpop.f32.mrb[0].mxu0
  %v7606 = vadd.f32 0.0, %v7605
  %v7607 = vpop.f32.mrb[0].mxu0
  %v7608 = vpop.f32.mrb[0].mxu0
  %v7609 = vadd.f32 0.0, %v7608
  %v7610 = vpop.f32.mrb[0].mxu0
  %7611 = vmatprep.mubr.bf16.mxu0 0
  %7612 = vmatmul.mubr.bf16.gmra.mrb[0].mxu0 %v7482
  %v7613 = vpop.f32.mrb[0].mxu0
  %v7614 = vadd.f32 0.0, %v7613
  %v7615 = vpop.f32.mrb[0].mxu0
  %v7616 = vpop.f32.mrb[0].mxu0
  %v7617 = vadd.f32 0.0, %v7616
  %v7618 = vpop.f32.mrb[0].mxu0
  %7619 = vmatprep.mubr.bf16.mxu0 0
  %7620 = vmatmul.mubr.bf16.gmra.mrb[0].mxu0 %v7485
  %v7621 = vpop.f32.mrb[0].mxu0
  %v7622 = vadd.f32 0.0, %v7621
  %v7623 = vpop.f32.mrb[0].mxu0
  %v7624 = vpop.f32.mrb[0].mxu0
  %v7625 = vadd.f32 0.0, %v7624
  %v7626 = vpop.f32.mrb[0].mxu0
  %7627 = vmatprep.mubr.bf16.mxu0 0
  %7628 = vmatmul.mubr.bf16.gmra.mrb[0].mxu0 %v7488
  %v7629 = vpop.f32.mrb[0].mxu0
  %v7630 = vadd.f32 0.0, %v7629
  %v7631 = vpop.f32.mrb[0].mxu0
  %v7632 = vpop.f32.mrb[0].mxu0
  %v7633 = vadd.f32 0.0, %v7632
  %v7634 = vpop.f32.mrb[0].mxu0
  %7635 = vmatprep.mubr.bf16.mxu0 0
  %7636 = vmatmul.mubr.bf16.gmra.mrb[0].mxu0 %v7491
  %v7637 = vpop.f32.mrb[0].mxu0
  %v7638 = vadd.f32 0.0, %v7637
  %v7639 = vpop.f32.mrb[0].mxu0
  %v7640 = vpop.f32.mrb[0].mxu0
  %v7641 = vadd.f32 0.0, %v7640
  %v7642 = vpop.f32.mrb[0].mxu0
  %7643 = vmatprep.mubr.bf16.mxu0 0
  %7644 = vmatmul.mubr.bf16.gmra.mrb[0].mxu0 %v7494
  %v7645 = vpop.f32.mrb[0].mxu0
  %v7646 = vadd.f32 0.0, %v7645
  %v7647 = vpop.f32.mrb[0].mxu0
  %v7648 = vpop.f32.mrb[0].mxu0
  %v7649 = vadd.f32 0.0, %v7648
  %v7650 = vpop.f32.mrb[0].mxu0
  %7651 = vmatprep.mubr.bf16.mxu0 0
  %7652 = vmatmul.mubr.bf16.gmra.mrb[0].mxu0 %v7497
  %v7653 = vpop.f32.mrb[0].mxu0
  %v7654 = vadd.f32 0.0, %v7653
  %v7655 = vpop.f32.mrb[0].mxu0
  %v7656 = vpop.f32.mrb[0].mxu0
  %v7657 = vadd.f32 0.0, %v7656
  %v7658 = vpop.f32.mrb[0].mxu0
  %7659 = vdwg.mxu0
  %v7660 = vadd.f32 %v7238, %v7534
  %v7661 = vadd.f32 %v7239, %v7537
  %v7662 = vadd.f32 %v7240, %v7542
  %v7663 = vadd.f32 %v7241, %v7545
  %v7664 = vadd.f32 %v7242, %v7550
  %v7665 = vadd.f32 %v7243, %v7553
  %v7666 = vadd.f32 %v7244, %v7558
  %v7667 = vadd.f32 %v7245, %v7561
  %v7668 = vadd.f32 %v7246, %v7566
  %v7669 = vadd.f32 %v7247, %v7569
  %v7670 = vadd.f32 %v7248, %v7574
  %v7671 = vadd.f32 %v7249, %v7577
  %v7672 = vadd.f32 %v7250, %v7582
  %v7673 = vadd.f32 %v7251, %v7585
  %v7674 = vadd.f32 %v7252, %v7590
  %v7675 = vadd.f32 %v7253, %v7593
  %v7676 = vadd.f32 %v7254, %v7598
  %v7677 = vadd.f32 %v7255, %v7601
  %v7678 = vadd.f32 %v7256, %v7606
  %v7679 = vadd.f32 %v7257, %v7609
  %v7680 = vadd.f32 %v7258, %v7614
  %v7681 = vadd.f32 %v7259, %v7617
  %v7682 = vadd.f32 %v7260, %v7622
  %v7683 = vadd.f32 %v7261, %v7625
  %v7684 = vadd.f32 %v7262, %v7630
  %v7685 = vadd.f32 %v7263, %v7633
  %v7686 = vadd.f32 %v7264, %v7638
  %v7687 = vadd.f32 %v7265, %v7641
  %v7688 = vadd.f32 %v7266, %v7646
  %v7689 = vadd.f32 %v7267, %v7649
  %v7690 = vadd.f32 %v7268, %v7654
  %v7691 = vadd.f32 %v7269, %v7657
  %s7692 = scalar_lea.vmem %s11, 32
  %v7693 = vld [vmem:[%s7692] sm:$0xf]
  %v7694 = vld [vmem:[%s7692 + $0x4] sm:$0xf]
  %v7695 = vld [vmem:[%s7692 + $0x8] sm:$0xf]
  %v7696 = vld [vmem:[%s7692 + $0xc] sm:$0xf]
  %v7701 = vunpack.c.l.b16 %v7693
  %v7702 = vunpack.c.l.b16 %v7694
  %v7703 = vunpack.c.l.b16 %v7695
  %v7704 = vunpack.c.l.b16 %v7696
  %v7705 = vpack.c.b16 %v7702, %v7701
  %v7706 = vpack.c.b16 %v7704, %v7703
  %7709 = vmatprep.subr.bf16.mxu0 0
  %7710 = vmatpush1.bf16.msra.mxu0 %v7705
  %7711 = vmatprep.subr.bf16.mxu0 0
  %7712 = vmatpush1.bf16.msra.mxu0 %v7706
  %7713 = vmatprep.subr.bf16.mxu0 0
  %7714 = vmatpush1.bf16.msra.mxu0 0
  %7715 = vmatprep.subr.bf16.mxu0 0
  %7716 = vmatpush1.bf16.msra.mxu0 0
  %7717 = vmatprep.subr.bf16.mxu0 0
  %7718 = vmatpush1.bf16.msra.mxu0 0
  %7719 = vmatprep.subr.bf16.mxu0 0
  %7720 = vmatpush1.bf16.msra.mxu0 0
  %7721 = vmatprep.subr.bf16.mxu0 0
  %7722 = vmatpush1.bf16.msra.mxu0 0
  %7723 = vmatprep.subr.bf16.mxu0 0
  %7724 = vmatpush1.bf16.msra.mxu0 0
  %7725 = vmatprep.subr.bf16.mxu0 0
  %7726 = vmatpush1.bf16.msra.mxu0 0
  %7727 = vmatprep.subr.bf16.mxu0 0
  %7728 = vmatpush1.bf16.msra.mxu0 0
  %7729 = vmatprep.subr.bf16.mxu0 0
  %7730 = vmatpush1.bf16.msra.mxu0 0
  %7731 = vmatprep.subr.bf16.mxu0 0
  %7732 = vmatpush1.bf16.msra.mxu0 0
  %7733 = vmatprep.subr.bf16.mxu0 0
  %7734 = vmatpush1.bf16.msra.mxu0 0
  %7735 = vmatprep.subr.bf16.mxu0 0
  %7736 = vmatpush1.bf16.msra.mxu0 0
  %7737 = vmatprep.subr.bf16.mxu0 0
  %7738 = vmatpush1.bf16.msra.mxu0 0
  %7739 = vmatprep.subr.bf16.mxu0 0
  %7740 = vmatpush1.bf16.msra.mxu0 0
  %7741 = vmatprep.mubr.bf16.mxu0 0
  %7742 = vmatmul.mubr.bf16.gmra.mrb[0].mxu0 %v6855
  %v7743 = vpop.f32.mrb[0].mxu0
  %v7744 = vadd.f32 0.0, %v7743
  %v7745 = vpop.f32.mrb[0].mxu0
  %v7746 = vpop.f32.mrb[0].mxu0
  %v7747 = vadd.f32 0.0, %v7746
  %v7748 = vpop.f32.mrb[0].mxu0
  %7749 = vmatprep.mubr.bf16.mxu0 0
  %7750 = vmatmul.mubr.bf16.gmra.mrb[0].mxu0 %v6858
  %v7751 = vpop.f32.mrb[0].mxu0
  %v7752 = vadd.f32 0.0, %v7751
  %v7753 = vpop.f32.mrb[0].mxu0
  %v7754 = vpop.f32.mrb[0].mxu0
  %v7755 = vadd.f32 0.0, %v7754
  %v7756 = vpop.f32.mrb[0].mxu0
  %7757 = vdwg.mxu0
  %s7758 = scalar_lea.vmem %s10, 256
  %v7759 = vld [vmem:[%s7758] sm:$0xf]
  %v7760 = vld [vmem:[%s7758 + $0x4] sm:$0xf]
  %v7761 = vld [vmem:[%s7758 + $0x8] sm:$0xf]
  %v7762 = vld [vmem:[%s7758 + $0xc] sm:$0xf]
  %v7763 = vld [vmem:[%s7758 + $0x10] sm:$0xf]
  %v7764 = vld [vmem:[%s7758 + $0x14] sm:$0xf]
  %v7765 = vld [vmem:[%s7758 + $0x18] sm:$0xf]
  %v7766 = vld [vmem:[%s7758 + $0x1c] sm:$0xf]
  %v7767 = vld [vmem:[%s7758 + $0x20] sm:$0xf]
  %v7768 = vld [vmem:[%s7758 + $0x24] sm:$0xf]
  %v7769 = vld [vmem:[%s7758 + $0x28] sm:$0xf]
  %v7770 = vld [vmem:[%s7758 + $0x2c] sm:$0xf]
  %v7771 = vld [vmem:[%s7758 + $0x30] sm:$0xf]
  %v7772 = vld [vmem:[%s7758 + $0x34] sm:$0xf]
  %v7773 = vld [vmem:[%s7758 + $0x38] sm:$0xf]
  %v7774 = vld [vmem:[%s7758 + $0x3c] sm:$0xf]
  %v7775 = vld [vmem:[%s7758 + $0x40] sm:$0xf]
  %v7776 = vld [vmem:[%s7758 + $0x44] sm:$0xf]
  %v7777 = vld [vmem:[%s7758 + $0x48] sm:$0xf]
  %v7778 = vld [vmem:[%s7758 + $0x4c] sm:$0xf]
  %v7779 = vld [vmem:[%s7758 + $0x50] sm:$0xf]
  %v7780 = vld [vmem:[%s7758 + $0x54] sm:$0xf]
  %v7781 = vld [vmem:[%s7758 + $0x58] sm:$0xf]
  %v7782 = vld [vmem:[%s7758 + $0x5c] sm:$0xf]
  %v7783 = vld [vmem:[%s7758 + $0x60] sm:$0xf]
  %v7784 = vld [vmem:[%s7758 + $0x64] sm:$0xf]
  %v7785 = vld [vmem:[%s7758 + $0x68] sm:$0xf]
  %v7786 = vld [vmem:[%s7758 + $0x6c] sm:$0xf]
  %v7787 = vld [vmem:[%s7758 + $0x70] sm:$0xf]
  %v7788 = vld [vmem:[%s7758 + $0x74] sm:$0xf]
  %v7789 = vld [vmem:[%s7758 + $0x78] sm:$0xf]
  %v7790 = vld [vmem:[%s7758 + $0x7c] sm:$0xf]
  %v7791 = vpack.c.bf16 %v7747, %v7744
  %v7792 = vpack.c.bf16 %v7755, %v7752
  %v7825 = vunpack.c.l.b16 %v7759
  %v7826 = vunpack.c.l.b16 %v7760
  %v7827 = vunpack.c.l.b16 %v7761
  %v7828 = vunpack.c.l.b16 %v7762
  %v7829 = vunpack.c.l.b16 %v7763
  %v7830 = vunpack.c.l.b16 %v7764
  %v7831 = vunpack.c.l.b16 %v7765
  %v7832 = vunpack.c.l.b16 %v7766
  %v7833 = vunpack.c.l.b16 %v7767
  %v7834 = vunpack.c.l.b16 %v7768
  %v7835 = vunpack.c.l.b16 %v7769
  %v7836 = vunpack.c.l.b16 %v7770
  %v7837 = vunpack.c.l.b16 %v7771
  %v7838 = vunpack.c.l.b16 %v7772
  %v7839 = vunpack.c.l.b16 %v7773
  %v7840 = vunpack.c.l.b16 %v7774
  %v7841 = vunpack.c.l.b16 %v7775
  %v7842 = vunpack.c.l.b16 %v7776
  %v7843 = vunpack.c.l.b16 %v7777
  %v7844 = vunpack.c.l.b16 %v7778
  %v7845 = vunpack.c.l.b16 %v7779
  %v7846 = vunpack.c.l.b16 %v7780
  %v7847 = vunpack.c.l.b16 %v7781
  %v7848 = vunpack.c.l.b16 %v7782
  %v7849 = vunpack.c.l.b16 %v7783
  %v7850 = vunpack.c.l.b16 %v7784
  %v7851 = vunpack.c.l.b16 %v7785
  %v7852 = vunpack.c.l.b16 %v7786
  %v7853 = vunpack.c.l.b16 %v7787
  %v7854 = vunpack.c.l.b16 %v7788
  %v7855 = vunpack.c.l.b16 %v7789
  %v7856 = vunpack.c.l.b16 %v7790
  %v7857 = vpack.c.b16 %v7826, %v7825
  %v7858 = vpack.c.b16 %v7828, %v7827
  %v7859 = vpack.c.b16 %v7830, %v7829
  %v7860 = vpack.c.b16 %v7832, %v7831
  %v7861 = vpack.c.b16 %v7834, %v7833
  %v7862 = vpack.c.b16 %v7836, %v7835
  %v7863 = vpack.c.b16 %v7838, %v7837
  %v7864 = vpack.c.b16 %v7840, %v7839
  %v7865 = vpack.c.b16 %v7842, %v7841
  %v7866 = vpack.c.b16 %v7844, %v7843
  %v7867 = vpack.c.b16 %v7846, %v7845
  %v7868 = vpack.c.b16 %v7848, %v7847
  %v7869 = vpack.c.b16 %v7850, %v7849
  %v7870 = vpack.c.b16 %v7852, %v7851
  %v7871 = vpack.c.b16 %v7854, %v7853
  %v7872 = vpack.c.b16 %v7856, %v7855
  %v7874 = vsel %vm411, %v7857, 0
  %v7877 = vsel %vm411, %v7858, 0
  %v7880 = vsel %vm411, %v7859, 0
  %v7883 = vsel %vm411, %v7860, 0
  %v7886 = vsel %vm411, %v7861, 0
  %v7889 = vsel %vm411, %v7862, 0
  %v7892 = vsel %vm411, %v7863, 0
  %v7895 = vsel %vm411, %v7864, 0
  %v7898 = vsel %vm411, %v7865, 0
  %v7901 = vsel %vm411, %v7866, 0
  %v7904 = vsel %vm411, %v7867, 0
  %v7907 = vsel %vm411, %v7868, 0
  %v7910 = vsel %vm411, %v7869, 0
  %v7913 = vsel %vm411, %v7870, 0
  %v7916 = vsel %vm411, %v7871, 0
  %v7919 = vsel %vm411, %v7872, 0
  %7921 = vmatprep.subr.bf16.mxu0 0
  %7922 = vmatpush1.bf16.msra.mxu0 %v7791
  %7923 = vmatprep.subr.bf16.mxu0 0
  %7924 = vmatpush1.bf16.msra.mxu0 %v7792
  %7925 = vmatprep.subr.bf16.mxu0 0
  %7926 = vmatpush1.bf16.msra.mxu0 0
  %7927 = vmatprep.subr.bf16.mxu0 0
  %7928 = vmatpush1.bf16.msra.mxu0 0
  %7929 = vmatprep.subr.bf16.mxu0 0
  %7930 = vmatpush1.bf16.msra.mxu0 0
  %7931 = vmatprep.subr.bf16.mxu0 0
  %7932 = vmatpush1.bf16.msra.mxu0 0
  %7933 = vmatprep.subr.bf16.mxu0 0
  %7934 = vmatpush1.bf16.msra.mxu0 0
  %7935 = vmatprep.subr.bf16.mxu0 0
  %7936 = vmatpush1.bf16.msra.mxu0 0
  %7937 = vmatprep.subr.bf16.mxu0 0
  %7938 = vmatpush1.bf16.msra.mxu0 0
  %7939 = vmatprep.subr.bf16.mxu0 0
  %7940 = vmatpush1.bf16.msra.mxu0 0
  %7941 = vmatprep.subr.bf16.mxu0 0
  %7942 = vmatpush1.bf16.msra.mxu0 0
  %7943 = vmatprep.subr.bf16.mxu0 0
  %7944 = vmatpush1.bf16.msra.mxu0 0
  %7945 = vmatprep.subr.bf16.mxu0 0
  %7946 = vmatpush1.bf16.msra.mxu0 0
  %7947 = vmatprep.subr.bf16.mxu0 0
  %7948 = vmatpush1.bf16.msra.mxu0 0
  %7949 = vmatprep.subr.bf16.mxu0 0
  %7950 = vmatpush1.bf16.msra.mxu0 0
  %7951 = vmatprep.subr.bf16.mxu0 0
  %7952 = vmatpush1.bf16.msra.mxu0 0
  %7953 = vmatprep.mubr.bf16.mxu0 0
  %7954 = vmatmul.mubr.bf16.gmra.mrb[0].mxu0 %v7874
  %v7955 = vpop.f32.mrb[0].mxu0
  %v7956 = vadd.f32 0.0, %v7955
  %v7957 = vpop.f32.mrb[0].mxu0
  %v7958 = vpop.f32.mrb[0].mxu0
  %v7959 = vadd.f32 0.0, %v7958
  %v7960 = vpop.f32.mrb[0].mxu0
  %7961 = vmatprep.mubr.bf16.mxu0 0
  %7962 = vmatmul.mubr.bf16.gmra.mrb[0].mxu0 %v7877
  %v7963 = vpop.f32.mrb[0].mxu0
  %v7964 = vadd.f32 0.0, %v7963
  %v7965 = vpop.f32.mrb[0].mxu0
  %v7966 = vpop.f32.mrb[0].mxu0
  %v7967 = vadd.f32 0.0, %v7966
  %v7968 = vpop.f32.mrb[0].mxu0
  %7969 = vmatprep.mubr.bf16.mxu0 0
  %7970 = vmatmul.mubr.bf16.gmra.mrb[0].mxu0 %v7880
  %v7971 = vpop.f32.mrb[0].mxu0
  %v7972 = vadd.f32 0.0, %v7971
  %v7973 = vpop.f32.mrb[0].mxu0
  %v7974 = vpop.f32.mrb[0].mxu0
  %v7975 = vadd.f32 0.0, %v7974
  %v7976 = vpop.f32.mrb[0].mxu0
  %7977 = vmatprep.mubr.bf16.mxu0 0
  %7978 = vmatmul.mubr.bf16.gmra.mrb[0].mxu0 %v7883
  %v7979 = vpop.f32.mrb[0].mxu0
  %v7980 = vadd.f32 0.0, %v7979
  %v7981 = vpop.f32.mrb[0].mxu0
  %v7982 = vpop.f32.mrb[0].mxu0
  %v7983 = vadd.f32 0.0, %v7982
  %v7984 = vpop.f32.mrb[0].mxu0
  %7985 = vmatprep.mubr.bf16.mxu0 0
  %7986 = vmatmul.mubr.bf16.gmra.mrb[0].mxu0 %v7886
  %v7987 = vpop.f32.mrb[0].mxu0
  %v7988 = vadd.f32 0.0, %v7987
  %v7989 = vpop.f32.mrb[0].mxu0
  %v7990 = vpop.f32.mrb[0].mxu0
  %v7991 = vadd.f32 0.0, %v7990
  %v7992 = vpop.f32.mrb[0].mxu0
  %7993 = vmatprep.mubr.bf16.mxu0 0
  %7994 = vmatmul.mubr.bf16.gmra.mrb[0].mxu0 %v7889
  %v7995 = vpop.f32.mrb[0].mxu0
  %v7996 = vadd.f32 0.0, %v7995
  %v7997 = vpop.f32.mrb[0].mxu0
  %v7998 = vpop.f32.mrb[0].mxu0
  %v7999 = vadd.f32 0.0, %v7998
  %v8000 = vpop.f32.mrb[0].mxu0
  %8001 = vmatprep.mubr.bf16.mxu0 0
  %8002 = vmatmul.mubr.bf16.gmra.mrb[0].mxu0 %v7892
  %v8003 = vpop.f32.mrb[0].mxu0
  %v8004 = vadd.f32 0.0, %v8003
  %v8005 = vpop.f32.mrb[0].mxu0
  %v8006 = vpop.f32.mrb[0].mxu0
  %v8007 = vadd.f32 0.0, %v8006
  %v8008 = vpop.f32.mrb[0].mxu0
  %8009 = vmatprep.mubr.bf16.mxu0 0
  %8010 = vmatmul.mubr.bf16.gmra.mrb[0].mxu0 %v7895
  %v8011 = vpop.f32.mrb[0].mxu0
  %v8012 = vadd.f32 0.0, %v8011
  %v8013 = vpop.f32.mrb[0].mxu0
  %v8014 = vpop.f32.mrb[0].mxu0
  %v8015 = vadd.f32 0.0, %v8014
  %v8016 = vpop.f32.mrb[0].mxu0
  %8017 = vmatprep.mubr.bf16.mxu0 0
  %8018 = vmatmul.mubr.bf16.gmra.mrb[0].mxu0 %v7898
  %v8019 = vpop.f32.mrb[0].mxu0
  %v8020 = vadd.f32 0.0, %v8019
  %v8021 = vpop.f32.mrb[0].mxu0
  %v8022 = vpop.f32.mrb[0].mxu0
  %v8023 = vadd.f32 0.0, %v8022
  %v8024 = vpop.f32.mrb[0].mxu0
  %8025 = vmatprep.mubr.bf16.mxu0 0
  %8026 = vmatmul.mubr.bf16.gmra.mrb[0].mxu0 %v7901
  %v8027 = vpop.f32.mrb[0].mxu0
  %v8028 = vadd.f32 0.0, %v8027
  %v8029 = vpop.f32.mrb[0].mxu0
  %v8030 = vpop.f32.mrb[0].mxu0
  %v8031 = vadd.f32 0.0, %v8030
  %v8032 = vpop.f32.mrb[0].mxu0
  %8033 = vmatprep.mubr.bf16.mxu0 0
  %8034 = vmatmul.mubr.bf16.gmra.mrb[0].mxu0 %v7904
  %v8035 = vpop.f32.mrb[0].mxu0
  %v8036 = vadd.f32 0.0, %v8035
  %v8037 = vpop.f32.mrb[0].mxu0
  %v8038 = vpop.f32.mrb[0].mxu0
  %v8039 = vadd.f32 0.0, %v8038
  %v8040 = vpop.f32.mrb[0].mxu0
  %8041 = vmatprep.mubr.bf16.mxu0 0
  %8042 = vmatmul.mubr.bf16.gmra.mrb[0].mxu0 %v7907
  %v8043 = vpop.f32.mrb[0].mxu0
  %v8044 = vadd.f32 0.0, %v8043
  %v8045 = vpop.f32.mrb[0].mxu0
  %v8046 = vpop.f32.mrb[0].mxu0
  %v8047 = vadd.f32 0.0, %v8046
  %v8048 = vpop.f32.mrb[0].mxu0
  %8049 = vmatprep.mubr.bf16.mxu0 0
  %8050 = vmatmul.mubr.bf16.gmra.mrb[0].mxu0 %v7910
  %v8051 = vpop.f32.mrb[0].mxu0
  %v8052 = vadd.f32 0.0, %v8051
  %v8053 = vpop.f32.mrb[0].mxu0
  %v8054 = vpop.f32.mrb[0].mxu0
  %v8055 = vadd.f32 0.0, %v8054
  %v8056 = vpop.f32.mrb[0].mxu0
  %8057 = vmatprep.mubr.bf16.mxu0 0
  %8058 = vmatmul.mubr.bf16.gmra.mrb[0].mxu0 %v7913
  %v8059 = vpop.f32.mrb[0].mxu0
  %v8060 = vadd.f32 0.0, %v8059
  %v8061 = vpop.f32.mrb[0].mxu0
  %v8062 = vpop.f32.mrb[0].mxu0
  %v8063 = vadd.f32 0.0, %v8062
  %v8064 = vpop.f32.mrb[0].mxu0
  %8065 = vmatprep.mubr.bf16.mxu0 0
  %8066 = vmatmul.mubr.bf16.gmra.mrb[0].mxu0 %v7916
  %v8067 = vpop.f32.mrb[0].mxu0
  %v8068 = vadd.f32 0.0, %v8067
  %v8069 = vpop.f32.mrb[0].mxu0
  %v8070 = vpop.f32.mrb[0].mxu0
  %v8071 = vadd.f32 0.0, %v8070
  %v8072 = vpop.f32.mrb[0].mxu0
  %8073 = vmatprep.mubr.bf16.mxu0 0
  %8074 = vmatmul.mubr.bf16.gmra.mrb[0].mxu0 %v7919
  %v8075 = vpop.f32.mrb[0].mxu0
  %v8076 = vadd.f32 0.0, %v8075
  %v8077 = vpop.f32.mrb[0].mxu0
  %v8078 = vpop.f32.mrb[0].mxu0
  %v8079 = vadd.f32 0.0, %v8078
  %v8080 = vpop.f32.mrb[0].mxu0
  %8081 = vdwg.mxu0
  %v8082 = vadd.f32 %v7660, %v7956
  %v8083 = vadd.f32 %v7661, %v7959
  %v8084 = vadd.f32 %v7662, %v7964
  %v8085 = vadd.f32 %v7663, %v7967
  %v8086 = vadd.f32 %v7664, %v7972
  %v8087 = vadd.f32 %v7665, %v7975
  %v8088 = vadd.f32 %v7666, %v7980
  %v8089 = vadd.f32 %v7667, %v7983
  %v8090 = vadd.f32 %v7668, %v7988
  %v8091 = vadd.f32 %v7669, %v7991
  %v8092 = vadd.f32 %v7670, %v7996
  %v8093 = vadd.f32 %v7671, %v7999
  %v8094 = vadd.f32 %v7672, %v8004
  %v8095 = vadd.f32 %v7673, %v8007
  %v8096 = vadd.f32 %v7674, %v8012
  %v8097 = vadd.f32 %v7675, %v8015
  %v8098 = vadd.f32 %v7676, %v8020
  %v8099 = vadd.f32 %v7677, %v8023
  %v8100 = vadd.f32 %v7678, %v8028
  %v8101 = vadd.f32 %v7679, %v8031
  %v8102 = vadd.f32 %v7680, %v8036
  %v8103 = vadd.f32 %v7681, %v8039
  %v8104 = vadd.f32 %v7682, %v8044
  %v8105 = vadd.f32 %v7683, %v8047
  %v8106 = vadd.f32 %v7684, %v8052
  %v8107 = vadd.f32 %v7685, %v8055
  %v8108 = vadd.f32 %v7686, %v8060
  %v8109 = vadd.f32 %v7687, %v8063
  %v8110 = vadd.f32 %v7688, %v8068
  %v8111 = vadd.f32 %v7689, %v8071
  %v8112 = vadd.f32 %v7690, %v8076
  %v8113 = vadd.f32 %v7691, %v8079
  %s8114 = scalar_lea.vmem %s11, 48
  %v8115 = vld [vmem:[%s8114] sm:$0xf]
  %v8116 = vld [vmem:[%s8114 + $0x4] sm:$0xf]
  %v8117 = vld [vmem:[%s8114 + $0x8] sm:$0xf]
  %v8118 = vld [vmem:[%s8114 + $0xc] sm:$0xf]
  %v8123 = vunpack.c.l.b16 %v8115
  %v8124 = vunpack.c.l.b16 %v8116
  %v8125 = vunpack.c.l.b16 %v8117
  %v8126 = vunpack.c.l.b16 %v8118
  %v8127 = vpack.c.b16 %v8124, %v8123
  %v8128 = vpack.c.b16 %v8126, %v8125
  %8131 = vmatprep.subr.bf16.mxu0 0
  %8132 = vmatpush1.bf16.msra.mxu0 %v8127
  %8133 = vmatprep.subr.bf16.mxu0 0
  %8134 = vmatpush1.bf16.msra.mxu0 %v8128
  %8135 = vmatprep.subr.bf16.mxu0 0
  %8136 = vmatpush1.bf16.msra.mxu0 0
  %8137 = vmatprep.subr.bf16.mxu0 0
  %8138 = vmatpush1.bf16.msra.mxu0 0
  %8139 = vmatprep.subr.bf16.mxu0 0
  %8140 = vmatpush1.bf16.msra.mxu0 0
  %8141 = vmatprep.subr.bf16.mxu0 0
  %8142 = vmatpush1.bf16.msra.mxu0 0
  %8143 = vmatprep.subr.bf16.mxu0 0
  %8144 = vmatpush1.bf16.msra.mxu0 0
  %8145 = vmatprep.subr.bf16.mxu0 0
  %8146 = vmatpush1.bf16.msra.mxu0 0
  %8147 = vmatprep.subr.bf16.mxu0 0
  %8148 = vmatpush1.bf16.msra.mxu0 0
  %8149 = vmatprep.subr.bf16.mxu0 0
  %8150 = vmatpush1.bf16.msra.mxu0 0
  %8151 = vmatprep.subr.bf16.mxu0 0
  %8152 = vmatpush1.bf16.msra.mxu0 0
  %8153 = vmatprep.subr.bf16.mxu0 0
  %8154 = vmatpush1.bf16.msra.mxu0 0
  %8155 = vmatprep.subr.bf16.mxu0 0
  %8156 = vmatpush1.bf16.msra.mxu0 0
  %8157 = vmatprep.subr.bf16.mxu0 0
  %8158 = vmatpush1.bf16.msra.mxu0 0
  %8159 = vmatprep.subr.bf16.mxu0 0
  %8160 = vmatpush1.bf16.msra.mxu0 0
  %8161 = vmatprep.subr.bf16.mxu0 0
  %8162 = vmatpush1.bf16.msra.mxu0 0
  %8163 = vmatprep.mubr.bf16.mxu0 0
  %8164 = vmatmul.mubr.bf16.gmra.mrb[0].mxu0 %v6855
  %v8165 = vpop.f32.mrb[0].mxu0
  %v8166 = vadd.f32 0.0, %v8165
  %v8167 = vpop.f32.mrb[0].mxu0
  %v8168 = vpop.f32.mrb[0].mxu0
  %v8169 = vadd.f32 0.0, %v8168
  %v8170 = vpop.f32.mrb[0].mxu0
  %8171 = vmatprep.mubr.bf16.mxu0 0
  %8172 = vmatmul.mubr.bf16.gmra.mrb[0].mxu0 %v6858
  %v8173 = vpop.f32.mrb[0].mxu0
  %v8174 = vadd.f32 0.0, %v8173
  %v8175 = vpop.f32.mrb[0].mxu0
  %v8176 = vpop.f32.mrb[0].mxu0
  %v8177 = vadd.f32 0.0, %v8176
  %v8178 = vpop.f32.mrb[0].mxu0
  %8179 = vdwg.mxu0
  %s8180 = scalar_lea.vmem %s10, 384
  %v8181 = vld [vmem:[%s8180] sm:$0xf]
  %v8182 = vld [vmem:[%s8180 + $0x4] sm:$0xf]
  %v8183 = vld [vmem:[%s8180 + $0x8] sm:$0xf]
  %v8184 = vld [vmem:[%s8180 + $0xc] sm:$0xf]
  %v8185 = vld [vmem:[%s8180 + $0x10] sm:$0xf]
  %v8186 = vld [vmem:[%s8180 + $0x14] sm:$0xf]
  %v8187 = vld [vmem:[%s8180 + $0x18] sm:$0xf]
  %v8188 = vld [vmem:[%s8180 + $0x1c] sm:$0xf]
  %v8189 = vld [vmem:[%s8180 + $0x20] sm:$0xf]
  %v8190 = vld [vmem:[%s8180 + $0x24] sm:$0xf]
  %v8191 = vld [vmem:[%s8180 + $0x28] sm:$0xf]
  %v8192 = vld [vmem:[%s8180 + $0x2c] sm:$0xf]
  %v8193 = vld [vmem:[%s8180 + $0x30] sm:$0xf]
  %v8194 = vld [vmem:[%s8180 + $0x34] sm:$0xf]
  %v8195 = vld [vmem:[%s8180 + $0x38] sm:$0xf]
  %v8196 = vld [vmem:[%s8180 + $0x3c] sm:$0xf]
  %v8197 = vld [vmem:[%s8180 + $0x40] sm:$0xf]
  %v8198 = vld [vmem:[%s8180 + $0x44] sm:$0xf]
  %v8199 = vld [vmem:[%s8180 + $0x48] sm:$0xf]
  %v8200 = vld [vmem:[%s8180 + $0x4c] sm:$0xf]
  %v8201 = vld [vmem:[%s8180 + $0x50] sm:$0xf]
  %v8202 = vld [vmem:[%s8180 + $0x54] sm:$0xf]
  %v8203 = vld [vmem:[%s8180 + $0x58] sm:$0xf]
  %v8204 = vld [vmem:[%s8180 + $0x5c] sm:$0xf]
  %v8205 = vld [vmem:[%s8180 + $0x60] sm:$0xf]
  %v8206 = vld [vmem:[%s8180 + $0x64] sm:$0xf]
  %v8207 = vld [vmem:[%s8180 + $0x68] sm:$0xf]
  %v8208 = vld [vmem:[%s8180 + $0x6c] sm:$0xf]
  %v8209 = vld [vmem:[%s8180 + $0x70] sm:$0xf]
  %v8210 = vld [vmem:[%s8180 + $0x74] sm:$0xf]
  %v8211 = vld [vmem:[%s8180 + $0x78] sm:$0xf]
  %v8212 = vld [vmem:[%s8180 + $0x7c] sm:$0xf]
  %v8213 = vpack.c.bf16 %v8169, %v8166
  %v8214 = vpack.c.bf16 %v8177, %v8174
  %v8247 = vunpack.c.l.b16 %v8181
  %v8248 = vunpack.c.l.b16 %v8182
  %v8249 = vunpack.c.l.b16 %v8183
  %v8250 = vunpack.c.l.b16 %v8184
  %v8251 = vunpack.c.l.b16 %v8185
  %v8252 = vunpack.c.l.b16 %v8186
  %v8253 = vunpack.c.l.b16 %v8187
  %v8254 = vunpack.c.l.b16 %v8188
  %v8255 = vunpack.c.l.b16 %v8189
  %v8256 = vunpack.c.l.b16 %v8190
  %v8257 = vunpack.c.l.b16 %v8191
  %v8258 = vunpack.c.l.b16 %v8192
  %v8259 = vunpack.c.l.b16 %v8193
  %v8260 = vunpack.c.l.b16 %v8194
  %v8261 = vunpack.c.l.b16 %v8195
  %v8262 = vunpack.c.l.b16 %v8196
  %v8263 = vunpack.c.l.b16 %v8197
  %v8264 = vunpack.c.l.b16 %v8198
  %v8265 = vunpack.c.l.b16 %v8199
  %v8266 = vunpack.c.l.b16 %v8200
  %v8267 = vunpack.c.l.b16 %v8201
  %v8268 = vunpack.c.l.b16 %v8202
  %v8269 = vunpack.c.l.b16 %v8203
  %v8270 = vunpack.c.l.b16 %v8204
  %v8271 = vunpack.c.l.b16 %v8205
  %v8272 = vunpack.c.l.b16 %v8206
  %v8273 = vunpack.c.l.b16 %v8207
  %v8274 = vunpack.c.l.b16 %v8208
  %v8275 = vunpack.c.l.b16 %v8209
  %v8276 = vunpack.c.l.b16 %v8210
  %v8277 = vunpack.c.l.b16 %v8211
  %v8278 = vunpack.c.l.b16 %v8212
  %v8279 = vpack.c.b16 %v8248, %v8247
  %v8280 = vpack.c.b16 %v8250, %v8249
  %v8281 = vpack.c.b16 %v8252, %v8251
  %v8282 = vpack.c.b16 %v8254, %v8253
  %v8283 = vpack.c.b16 %v8256, %v8255
  %v8284 = vpack.c.b16 %v8258, %v8257
  %v8285 = vpack.c.b16 %v8260, %v8259
  %v8286 = vpack.c.b16 %v8262, %v8261
  %v8287 = vpack.c.b16 %v8264, %v8263
  %v8288 = vpack.c.b16 %v8266, %v8265
  %v8289 = vpack.c.b16 %v8268, %v8267
  %v8290 = vpack.c.b16 %v8270, %v8269
  %v8291 = vpack.c.b16 %v8272, %v8271
  %v8292 = vpack.c.b16 %v8274, %v8273
  %v8293 = vpack.c.b16 %v8276, %v8275
  %v8294 = vpack.c.b16 %v8278, %v8277
  %v8296 = vsel %vm411, %v8279, 0
  %v8299 = vsel %vm411, %v8280, 0
  %v8302 = vsel %vm411, %v8281, 0
  %v8305 = vsel %vm411, %v8282, 0
  %v8308 = vsel %vm411, %v8283, 0
  %v8311 = vsel %vm411, %v8284, 0
  %v8314 = vsel %vm411, %v8285, 0
  %v8317 = vsel %vm411, %v8286, 0
  %v8320 = vsel %vm411, %v8287, 0
  %v8323 = vsel %vm411, %v8288, 0
  %v8326 = vsel %vm411, %v8289, 0
  %v8329 = vsel %vm411, %v8290, 0
  %v8332 = vsel %vm411, %v8291, 0
  %v8335 = vsel %vm411, %v8292, 0
  %v8338 = vsel %vm411, %v8293, 0
  %v8341 = vsel %vm411, %v8294, 0
  %8343 = vmatprep.subr.bf16.mxu0 0
  %8344 = vmatpush1.bf16.msra.mxu0 %v8213
  %8345 = vmatprep.subr.bf16.mxu0 0
  %8346 = vmatpush1.bf16.msra.mxu0 %v8214
  %8347 = vmatprep.subr.bf16.mxu0 0
  %8348 = vmatpush1.bf16.msra.mxu0 0
  %8349 = vmatprep.subr.bf16.mxu0 0
  %8350 = vmatpush1.bf16.msra.mxu0 0
  %8351 = vmatprep.subr.bf16.mxu0 0
  %8352 = vmatpush1.bf16.msra.mxu0 0
  %8353 = vmatprep.subr.bf16.mxu0 0
  %8354 = vmatpush1.bf16.msra.mxu0 0
  %8355 = vmatprep.subr.bf16.mxu0 0
  %8356 = vmatpush1.bf16.msra.mxu0 0
  %8357 = vmatprep.subr.bf16.mxu0 0
  %8358 = vmatpush1.bf16.msra.mxu0 0
  %8359 = vmatprep.subr.bf16.mxu0 0
  %8360 = vmatpush1.bf16.msra.mxu0 0
  %8361 = vmatprep.subr.bf16.mxu0 0
  %8362 = vmatpush1.bf16.msra.mxu0 0
  %8363 = vmatprep.subr.bf16.mxu0 0
  %8364 = vmatpush1.bf16.msra.mxu0 0
  %8365 = vmatprep.subr.bf16.mxu0 0
  %8366 = vmatpush1.bf16.msra.mxu0 0
  %8367 = vmatprep.subr.bf16.mxu0 0
  %8368 = vmatpush1.bf16.msra.mxu0 0
  %8369 = vmatprep.subr.bf16.mxu0 0
  %8370 = vmatpush1.bf16.msra.mxu0 0
  %8371 = vmatprep.subr.bf16.mxu0 0
  %8372 = vmatpush1.bf16.msra.mxu0 0
  %8373 = vmatprep.subr.bf16.mxu0 0
  %8374 = vmatpush1.bf16.msra.mxu0 0
  %8375 = vmatprep.mubr.bf16.mxu0 0
  %8376 = vmatmul.mubr.bf16.gmra.mrb[0].mxu0 %v8296
  %v8377 = vpop.f32.mrb[0].mxu0
  %v8378 = vadd.f32 0.0, %v8377
  %v8379 = vpop.f32.mrb[0].mxu0
  %v8380 = vpop.f32.mrb[0].mxu0
  %v8381 = vadd.f32 0.0, %v8380
  %v8382 = vpop.f32.mrb[0].mxu0
  %8383 = vmatprep.mubr.bf16.mxu0 0
  %8384 = vmatmul.mubr.bf16.gmra.mrb[0].mxu0 %v8299
  %v8385 = vpop.f32.mrb[0].mxu0
  %v8386 = vadd.f32 0.0, %v8385
  %v8387 = vpop.f32.mrb[0].mxu0
  %v8388 = vpop.f32.mrb[0].mxu0
  %v8389 = vadd.f32 0.0, %v8388
  %v8390 = vpop.f32.mrb[0].mxu0
  %8391 = vmatprep.mubr.bf16.mxu0 0
  %8392 = vmatmul.mubr.bf16.gmra.mrb[0].mxu0 %v8302
  %v8393 = vpop.f32.mrb[0].mxu0
  %v8394 = vadd.f32 0.0, %v8393
  %v8395 = vpop.f32.mrb[0].mxu0
  %v8396 = vpop.f32.mrb[0].mxu0
  %v8397 = vadd.f32 0.0, %v8396
  %v8398 = vpop.f32.mrb[0].mxu0
  %8399 = vmatprep.mubr.bf16.mxu0 0
  %8400 = vmatmul.mubr.bf16.gmra.mrb[0].mxu0 %v8305
  %v8401 = vpop.f32.mrb[0].mxu0
  %v8402 = vadd.f32 0.0, %v8401
  %v8403 = vpop.f32.mrb[0].mxu0
  %v8404 = vpop.f32.mrb[0].mxu0
  %v8405 = vadd.f32 0.0, %v8404
  %v8406 = vpop.f32.mrb[0].mxu0
  %8407 = vmatprep.mubr.bf16.mxu0 0
  %8408 = vmatmul.mubr.bf16.gmra.mrb[0].mxu0 %v8308
  %v8409 = vpop.f32.mrb[0].mxu0
  %v8410 = vadd.f32 0.0, %v8409
  %v8411 = vpop.f32.mrb[0].mxu0
  %v8412 = vpop.f32.mrb[0].mxu0
  %v8413 = vadd.f32 0.0, %v8412
  %v8414 = vpop.f32.mrb[0].mxu0
  %8415 = vmatprep.mubr.bf16.mxu0 0
  %8416 = vmatmul.mubr.bf16.gmra.mrb[0].mxu0 %v8311
  %v8417 = vpop.f32.mrb[0].mxu0
  %v8418 = vadd.f32 0.0, %v8417
  %v8419 = vpop.f32.mrb[0].mxu0
  %v8420 = vpop.f32.mrb[0].mxu0
  %v8421 = vadd.f32 0.0, %v8420
  %v8422 = vpop.f32.mrb[0].mxu0
  %8423 = vmatprep.mubr.bf16.mxu0 0
  %8424 = vmatmul.mubr.bf16.gmra.mrb[0].mxu0 %v8314
  %v8425 = vpop.f32.mrb[0].mxu0
  %v8426 = vadd.f32 0.0, %v8425
  %v8427 = vpop.f32.mrb[0].mxu0
  %v8428 = vpop.f32.mrb[0].mxu0
  %v8429 = vadd.f32 0.0, %v8428
  %v8430 = vpop.f32.mrb[0].mxu0
  %8431 = vmatprep.mubr.bf16.mxu0 0
  %8432 = vmatmul.mubr.bf16.gmra.mrb[0].mxu0 %v8317
  %v8433 = vpop.f32.mrb[0].mxu0
  %v8434 = vadd.f32 0.0, %v8433
  %v8435 = vpop.f32.mrb[0].mxu0
  %v8436 = vpop.f32.mrb[0].mxu0
  %v8437 = vadd.f32 0.0, %v8436
  %v8438 = vpop.f32.mrb[0].mxu0
  %8439 = vmatprep.mubr.bf16.mxu0 0
  %8440 = vmatmul.mubr.bf16.gmra.mrb[0].mxu0 %v8320
  %v8441 = vpop.f32.mrb[0].mxu0
  %v8442 = vadd.f32 0.0, %v8441
  %v8443 = vpop.f32.mrb[0].mxu0
  %v8444 = vpop.f32.mrb[0].mxu0
  %v8445 = vadd.f32 0.0, %v8444
  %v8446 = vpop.f32.mrb[0].mxu0
  %8447 = vmatprep.mubr.bf16.mxu0 0
  %8448 = vmatmul.mubr.bf16.gmra.mrb[0].mxu0 %v8323
  %v8449 = vpop.f32.mrb[0].mxu0
  %v8450 = vadd.f32 0.0, %v8449
  %v8451 = vpop.f32.mrb[0].mxu0
  %v8452 = vpop.f32.mrb[0].mxu0
  %v8453 = vadd.f32 0.0, %v8452
  %v8454 = vpop.f32.mrb[0].mxu0
  %8455 = vmatprep.mubr.bf16.mxu0 0
  %8456 = vmatmul.mubr.bf16.gmra.mrb[0].mxu0 %v8326
  %v8457 = vpop.f32.mrb[0].mxu0
  %v8458 = vadd.f32 0.0, %v8457
  %v8459 = vpop.f32.mrb[0].mxu0
  %v8460 = vpop.f32.mrb[0].mxu0
  %v8461 = vadd.f32 0.0, %v8460
  %v8462 = vpop.f32.mrb[0].mxu0
  %8463 = vmatprep.mubr.bf16.mxu0 0
  %8464 = vmatmul.mubr.bf16.gmra.mrb[0].mxu0 %v8329
  %v8465 = vpop.f32.mrb[0].mxu0
  %v8466 = vadd.f32 0.0, %v8465
  %v8467 = vpop.f32.mrb[0].mxu0
  %v8468 = vpop.f32.mrb[0].mxu0
  %v8469 = vadd.f32 0.0, %v8468
  %v8470 = vpop.f32.mrb[0].mxu0
  %8471 = vmatprep.mubr.bf16.mxu0 0
  %8472 = vmatmul.mubr.bf16.gmra.mrb[0].mxu0 %v8332
  %v8473 = vpop.f32.mrb[0].mxu0
  %v8474 = vadd.f32 0.0, %v8473
  %v8475 = vpop.f32.mrb[0].mxu0
  %v8476 = vpop.f32.mrb[0].mxu0
  %v8477 = vadd.f32 0.0, %v8476
  %v8478 = vpop.f32.mrb[0].mxu0
  %8479 = vmatprep.mubr.bf16.mxu0 0
  %8480 = vmatmul.mubr.bf16.gmra.mrb[0].mxu0 %v8335
  %v8481 = vpop.f32.mrb[0].mxu0
  %v8482 = vadd.f32 0.0, %v8481
  %v8483 = vpop.f32.mrb[0].mxu0
  %v8484 = vpop.f32.mrb[0].mxu0
  %v8485 = vadd.f32 0.0, %v8484
  %v8486 = vpop.f32.mrb[0].mxu0
  %8487 = vmatprep.mubr.bf16.mxu0 0
  %8488 = vmatmul.mubr.bf16.gmra.mrb[0].mxu0 %v8338
  %v8489 = vpop.f32.mrb[0].mxu0
  %v8490 = vadd.f32 0.0, %v8489
  %v8491 = vpop.f32.mrb[0].mxu0
  %v8492 = vpop.f32.mrb[0].mxu0
  %v8493 = vadd.f32 0.0, %v8492
  %v8494 = vpop.f32.mrb[0].mxu0
  %8495 = vmatprep.mubr.bf16.mxu0 0
  %8496 = vmatmul.mubr.bf16.gmra.mrb[0].mxu0 %v8341
  %v8497 = vpop.f32.mrb[0].mxu0
  %v8498 = vadd.f32 0.0, %v8497
  %v8499 = vpop.f32.mrb[0].mxu0
  %v8500 = vpop.f32.mrb[0].mxu0
  %v8501 = vadd.f32 0.0, %v8500
  %v8502 = vpop.f32.mrb[0].mxu0
  %8503 = vdwg.mxu0
  %v8504 = vadd.f32 %v8082, %v8378
  %v8505 = vadd.f32 %v8083, %v8381
  %v8506 = vadd.f32 %v8084, %v8386
  %v8507 = vadd.f32 %v8085, %v8389
  %v8508 = vadd.f32 %v8086, %v8394
  %v8509 = vadd.f32 %v8087, %v8397
  %v8510 = vadd.f32 %v8088, %v8402
  %v8511 = vadd.f32 %v8089, %v8405
  %v8512 = vadd.f32 %v8090, %v8410
  %v8513 = vadd.f32 %v8091, %v8413
  %v8514 = vadd.f32 %v8092, %v8418
  %v8515 = vadd.f32 %v8093, %v8421
  %v8516 = vadd.f32 %v8094, %v8426
  %v8517 = vadd.f32 %v8095, %v8429
  %v8518 = vadd.f32 %v8096, %v8434
  %v8519 = vadd.f32 %v8097, %v8437
  %v8520 = vadd.f32 %v8098, %v8442
  %v8521 = vadd.f32 %v8099, %v8445
  %v8522 = vadd.f32 %v8100, %v8450
  %v8523 = vadd.f32 %v8101, %v8453
  %v8524 = vadd.f32 %v8102, %v8458
  %v8525 = vadd.f32 %v8103, %v8461
  %v8526 = vadd.f32 %v8104, %v8466
  %v8527 = vadd.f32 %v8105, %v8469
  %v8528 = vadd.f32 %v8106, %v8474
  %v8529 = vadd.f32 %v8107, %v8477
  %v8530 = vadd.f32 %v8108, %v8482
  %v8531 = vadd.f32 %v8109, %v8485
  %v8532 = vadd.f32 %v8110, %v8490
  %v8533 = vadd.f32 %v8111, %v8493
  %v8534 = vadd.f32 %v8112, %v8498
  %v8535 = vadd.f32 %v8113, %v8501
  %s8536 = scalar_lea.vmem %s11, 64
  %v8537 = vld [vmem:[%s8536] sm:$0xf]
  %v8538 = vld [vmem:[%s8536 + $0x4] sm:$0xf]
  %v8539 = vld [vmem:[%s8536 + $0x8] sm:$0xf]
  %v8540 = vld [vmem:[%s8536 + $0xc] sm:$0xf]
  %v8545 = vunpack.c.l.b16 %v8537
  %v8546 = vunpack.c.l.b16 %v8538
  %v8547 = vunpack.c.l.b16 %v8539
  %v8548 = vunpack.c.l.b16 %v8540
  %v8549 = vpack.c.b16 %v8546, %v8545
  %v8550 = vpack.c.b16 %v8548, %v8547
  %8553 = vmatprep.subr.bf16.mxu0 0
  %8554 = vmatpush1.bf16.msra.mxu0 %v8549
  %8555 = vmatprep.subr.bf16.mxu0 0
  %8556 = vmatpush1.bf16.msra.mxu0 %v8550
  %8557 = vmatprep.subr.bf16.mxu0 0
  %8558 = vmatpush1.bf16.msra.mxu0 0
  %8559 = vmatprep.subr.bf16.mxu0 0
  %8560 = vmatpush1.bf16.msra.mxu0 0
  %8561 = vmatprep.subr.bf16.mxu0 0
  %8562 = vmatpush1.bf16.msra.mxu0 0
  %8563 = vmatprep.subr.bf16.mxu0 0
  %8564 = vmatpush1.bf16.msra.mxu0 0
  %8565 = vmatprep.subr.bf16.mxu0 0
  %8566 = vmatpush1.bf16.msra.mxu0 0
  %8567 = vmatprep.subr.bf16.mxu0 0
  %8568 = vmatpush1.bf16.msra.mxu0 0
  %8569 = vmatprep.subr.bf16.mxu0 0
  %8570 = vmatpush1.bf16.msra.mxu0 0
  %8571 = vmatprep.subr.bf16.mxu0 0
  %8572 = vmatpush1.bf16.msra.mxu0 0
  %8573 = vmatprep.subr.bf16.mxu0 0
  %8574 = vmatpush1.bf16.msra.mxu0 0
  %8575 = vmatprep.subr.bf16.mxu0 0
  %8576 = vmatpush1.bf16.msra.mxu0 0
  %8577 = vmatprep.subr.bf16.mxu0 0
  %8578 = vmatpush1.bf16.msra.mxu0 0
  %8579 = vmatprep.subr.bf16.mxu0 0
  %8580 = vmatpush1.bf16.msra.mxu0 0
  %8581 = vmatprep.subr.bf16.mxu0 0
  %8582 = vmatpush1.bf16.msra.mxu0 0
  %8583 = vmatprep.subr.bf16.mxu0 0
  %8584 = vmatpush1.bf16.msra.mxu0 0
  %8585 = vmatprep.mubr.bf16.mxu0 0
  %8586 = vmatmul.mubr.bf16.gmra.mrb[0].mxu0 %v6855
  %v8587 = vpop.f32.mrb[0].mxu0
  %v8588 = vadd.f32 0.0, %v8587
  %v8589 = vpop.f32.mrb[0].mxu0
  %v8590 = vpop.f32.mrb[0].mxu0
  %v8591 = vadd.f32 0.0, %v8590
  %v8592 = vpop.f32.mrb[0].mxu0
  %8593 = vmatprep.mubr.bf16.mxu0 0
  %8594 = vmatmul.mubr.bf16.gmra.mrb[0].mxu0 %v6858
  %v8595 = vpop.f32.mrb[0].mxu0
  %v8596 = vadd.f32 0.0, %v8595
  %v8597 = vpop.f32.mrb[0].mxu0
  %v8598 = vpop.f32.mrb[0].mxu0
  %v8599 = vadd.f32 0.0, %v8598
  %v8600 = vpop.f32.mrb[0].mxu0
  %8601 = vdwg.mxu0
  %s8602 = scalar_lea.vmem %s10, 512
  %v8603 = vld [vmem:[%s8602] sm:$0xf]
  %v8604 = vld [vmem:[%s8602 + $0x4] sm:$0xf]
  %v8605 = vld [vmem:[%s8602 + $0x8] sm:$0xf]
  %v8606 = vld [vmem:[%s8602 + $0xc] sm:$0xf]
  %v8607 = vld [vmem:[%s8602 + $0x10] sm:$0xf]
  %v8608 = vld [vmem:[%s8602 + $0x14] sm:$0xf]
  %v8609 = vld [vmem:[%s8602 + $0x18] sm:$0xf]
  %v8610 = vld [vmem:[%s8602 + $0x1c] sm:$0xf]
  %v8611 = vld [vmem:[%s8602 + $0x20] sm:$0xf]
  %v8612 = vld [vmem:[%s8602 + $0x24] sm:$0xf]
  %v8613 = vld [vmem:[%s8602 + $0x28] sm:$0xf]
  %v8614 = vld [vmem:[%s8602 + $0x2c] sm:$0xf]
  %v8615 = vld [vmem:[%s8602 + $0x30] sm:$0xf]
  %v8616 = vld [vmem:[%s8602 + $0x34] sm:$0xf]
  %v8617 = vld [vmem:[%s8602 + $0x38] sm:$0xf]
  %v8618 = vld [vmem:[%s8602 + $0x3c] sm:$0xf]
  %v8619 = vld [vmem:[%s8602 + $0x40] sm:$0xf]
  %v8620 = vld [vmem:[%s8602 + $0x44] sm:$0xf]
  %v8621 = vld [vmem:[%s8602 + $0x48] sm:$0xf]
  %v8622 = vld [vmem:[%s8602 + $0x4c] sm:$0xf]
  %v8623 = vld [vmem:[%s8602 + $0x50] sm:$0xf]
  %v8624 = vld [vmem:[%s8602 + $0x54] sm:$0xf]
  %v8625 = vld [vmem:[%s8602 + $0x58] sm:$0xf]
  %v8626 = vld [vmem:[%s8602 + $0x5c] sm:$0xf]
  %v8627 = vld [vmem:[%s8602 + $0x60] sm:$0xf]
  %v8628 = vld [vmem:[%s8602 + $0x64] sm:$0xf]
  %v8629 = vld [vmem:[%s8602 + $0x68] sm:$0xf]
  %v8630 = vld [vmem:[%s8602 + $0x6c] sm:$0xf]
  %v8631 = vld [vmem:[%s8602 + $0x70] sm:$0xf]
  %v8632 = vld [vmem:[%s8602 + $0x74] sm:$0xf]
  %v8633 = vld [vmem:[%s8602 + $0x78] sm:$0xf]
  %v8634 = vld [vmem:[%s8602 + $0x7c] sm:$0xf]
  %v8635 = vpack.c.bf16 %v8591, %v8588
  %v8636 = vpack.c.bf16 %v8599, %v8596
  %v8669 = vunpack.c.l.b16 %v8603
  %v8670 = vunpack.c.l.b16 %v8604
  %v8671 = vunpack.c.l.b16 %v8605
  %v8672 = vunpack.c.l.b16 %v8606
  %v8673 = vunpack.c.l.b16 %v8607
  %v8674 = vunpack.c.l.b16 %v8608
  %v8675 = vunpack.c.l.b16 %v8609
  %v8676 = vunpack.c.l.b16 %v8610
  %v8677 = vunpack.c.l.b16 %v8611
  %v8678 = vunpack.c.l.b16 %v8612
  %v8679 = vunpack.c.l.b16 %v8613
  %v8680 = vunpack.c.l.b16 %v8614
  %v8681 = vunpack.c.l.b16 %v8615
  %v8682 = vunpack.c.l.b16 %v8616
  %v8683 = vunpack.c.l.b16 %v8617
  %v8684 = vunpack.c.l.b16 %v8618
  %v8685 = vunpack.c.l.b16 %v8619
  %v8686 = vunpack.c.l.b16 %v8620
  %v8687 = vunpack.c.l.b16 %v8621
  %v8688 = vunpack.c.l.b16 %v8622
  %v8689 = vunpack.c.l.b16 %v8623
  %v8690 = vunpack.c.l.b16 %v8624
  %v8691 = vunpack.c.l.b16 %v8625
  %v8692 = vunpack.c.l.b16 %v8626
  %v8693 = vunpack.c.l.b16 %v8627
  %v8694 = vunpack.c.l.b16 %v8628
  %v8695 = vunpack.c.l.b16 %v8629
  %v8696 = vunpack.c.l.b16 %v8630
  %v8697 = vunpack.c.l.b16 %v8631
  %v8698 = vunpack.c.l.b16 %v8632
  %v8699 = vunpack.c.l.b16 %v8633
  %v8700 = vunpack.c.l.b16 %v8634
  %v8701 = vpack.c.b16 %v8670, %v8669
  %v8702 = vpack.c.b16 %v8672, %v8671
  %v8703 = vpack.c.b16 %v8674, %v8673
  %v8704 = vpack.c.b16 %v8676, %v8675
  %v8705 = vpack.c.b16 %v8678, %v8677
  %v8706 = vpack.c.b16 %v8680, %v8679
  %v8707 = vpack.c.b16 %v8682, %v8681
  %v8708 = vpack.c.b16 %v8684, %v8683
  %v8709 = vpack.c.b16 %v8686, %v8685
  %v8710 = vpack.c.b16 %v8688, %v8687
  %v8711 = vpack.c.b16 %v8690, %v8689
  %v8712 = vpack.c.b16 %v8692, %v8691
  %v8713 = vpack.c.b16 %v8694, %v8693
  %v8714 = vpack.c.b16 %v8696, %v8695
  %v8715 = vpack.c.b16 %v8698, %v8697
  %v8716 = vpack.c.b16 %v8700, %v8699
  %v8718 = vsel %vm411, %v8701, 0
  %v8721 = vsel %vm411, %v8702, 0
  %v8724 = vsel %vm411, %v8703, 0
  %v8727 = vsel %vm411, %v8704, 0
  %v8730 = vsel %vm411, %v8705, 0
  %v8733 = vsel %vm411, %v8706, 0
  %v8736 = vsel %vm411, %v8707, 0
  %v8739 = vsel %vm411, %v8708, 0
  %v8742 = vsel %vm411, %v8709, 0
  %v8745 = vsel %vm411, %v8710, 0
  %v8748 = vsel %vm411, %v8711, 0
  %v8751 = vsel %vm411, %v8712, 0
  %v8754 = vsel %vm411, %v8713, 0
  %v8757 = vsel %vm411, %v8714, 0
  %v8760 = vsel %vm411, %v8715, 0
  %v8763 = vsel %vm411, %v8716, 0
  %8765 = vmatprep.subr.bf16.mxu0 0
  %8766 = vmatpush1.bf16.msra.mxu0 %v8635
  %8767 = vmatprep.subr.bf16.mxu0 0
  %8768 = vmatpush1.bf16.msra.mxu0 %v8636
  %8769 = vmatprep.subr.bf16.mxu0 0
  %8770 = vmatpush1.bf16.msra.mxu0 0
  %8771 = vmatprep.subr.bf16.mxu0 0
  %8772 = vmatpush1.bf16.msra.mxu0 0
  %8773 = vmatprep.subr.bf16.mxu0 0
  %8774 = vmatpush1.bf16.msra.mxu0 0
  %8775 = vmatprep.subr.bf16.mxu0 0
  %8776 = vmatpush1.bf16.msra.mxu0 0
  %8777 = vmatprep.subr.bf16.mxu0 0
  %8778 = vmatpush1.bf16.msra.mxu0 0
  %8779 = vmatprep.subr.bf16.mxu0 0
  %8780 = vmatpush1.bf16.msra.mxu0 0
  %8781 = vmatprep.subr.bf16.mxu0 0
  %8782 = vmatpush1.bf16.msra.mxu0 0
  %8783 = vmatprep.subr.bf16.mxu0 0
  %8784 = vmatpush1.bf16.msra.mxu0 0
  %8785 = vmatprep.subr.bf16.mxu0 0
  %8786 = vmatpush1.bf16.msra.mxu0 0
  %8787 = vmatprep.subr.bf16.mxu0 0
  %8788 = vmatpush1.bf16.msra.mxu0 0
  %8789 = vmatprep.subr.bf16.mxu0 0
  %8790 = vmatpush1.bf16.msra.mxu0 0
  %8791 = vmatprep.subr.bf16.mxu0 0
  %8792 = vmatpush1.bf16.msra.mxu0 0
  %8793 = vmatprep.subr.bf16.mxu0 0
  %8794 = vmatpush1.bf16.msra.mxu0 0
  %8795 = vmatprep.subr.bf16.mxu0 0
  %8796 = vmatpush1.bf16.msra.mxu0 0
  %8797 = vmatprep.mubr.bf16.mxu0 0
  %8798 = vmatmul.mubr.bf16.gmra.mrb[0].mxu0 %v8718
  %v8799 = vpop.f32.mrb[0].mxu0
  %v8800 = vadd.f32 0.0, %v8799
  %v8801 = vpop.f32.mrb[0].mxu0
  %v8802 = vpop.f32.mrb[0].mxu0
  %v8803 = vadd.f32 0.0, %v8802
  %v8804 = vpop.f32.mrb[0].mxu0
  %8805 = vmatprep.mubr.bf16.mxu0 0
  %8806 = vmatmul.mubr.bf16.gmra.mrb[0].mxu0 %v8721
  %v8807 = vpop.f32.mrb[0].mxu0
  %v8808 = vadd.f32 0.0, %v8807
  %v8809 = vpop.f32.mrb[0].mxu0
  %v8810 = vpop.f32.mrb[0].mxu0
  %v8811 = vadd.f32 0.0, %v8810
  %v8812 = vpop.f32.mrb[0].mxu0
  %8813 = vmatprep.mubr.bf16.mxu0 0
  %8814 = vmatmul.mubr.bf16.gmra.mrb[0].mxu0 %v8724
  %v8815 = vpop.f32.mrb[0].mxu0
  %v8816 = vadd.f32 0.0, %v8815
  %v8817 = vpop.f32.mrb[0].mxu0
  %v8818 = vpop.f32.mrb[0].mxu0
  %v8819 = vadd.f32 0.0, %v8818
  %v8820 = vpop.f32.mrb[0].mxu0
  %8821 = vmatprep.mubr.bf16.mxu0 0
  %8822 = vmatmul.mubr.bf16.gmra.mrb[0].mxu0 %v8727
  %v8823 = vpop.f32.mrb[0].mxu0
  %v8824 = vadd.f32 0.0, %v8823
  %v8825 = vpop.f32.mrb[0].mxu0
  %v8826 = vpop.f32.mrb[0].mxu0
  %v8827 = vadd.f32 0.0, %v8826
  %v8828 = vpop.f32.mrb[0].mxu0
  %8829 = vmatprep.mubr.bf16.mxu0 0
  %8830 = vmatmul.mubr.bf16.gmra.mrb[0].mxu0 %v8730
  %v8831 = vpop.f32.mrb[0].mxu0
  %v8832 = vadd.f32 0.0, %v8831
  %v8833 = vpop.f32.mrb[0].mxu0
  %v8834 = vpop.f32.mrb[0].mxu0
  %v8835 = vadd.f32 0.0, %v8834
  %v8836 = vpop.f32.mrb[0].mxu0
  %8837 = vmatprep.mubr.bf16.mxu0 0
  %8838 = vmatmul.mubr.bf16.gmra.mrb[0].mxu0 %v8733
  %v8839 = vpop.f32.mrb[0].mxu0
  %v8840 = vadd.f32 0.0, %v8839
  %v8841 = vpop.f32.mrb[0].mxu0
  %v8842 = vpop.f32.mrb[0].mxu0
  %v8843 = vadd.f32 0.0, %v8842
  %v8844 = vpop.f32.mrb[0].mxu0
  %8845 = vmatprep.mubr.bf16.mxu0 0
  %8846 = vmatmul.mubr.bf16.gmra.mrb[0].mxu0 %v8736
  %v8847 = vpop.f32.mrb[0].mxu0
  %v8848 = vadd.f32 0.0, %v8847
  %v8849 = vpop.f32.mrb[0].mxu0
  %v8850 = vpop.f32.mrb[0].mxu0
  %v8851 = vadd.f32 0.0, %v8850
  %v8852 = vpop.f32.mrb[0].mxu0
  %8853 = vmatprep.mubr.bf16.mxu0 0
  %8854 = vmatmul.mubr.bf16.gmra.mrb[0].mxu0 %v8739
  %v8855 = vpop.f32.mrb[0].mxu0
  %v8856 = vadd.f32 0.0, %v8855
  %v8857 = vpop.f32.mrb[0].mxu0
  %v8858 = vpop.f32.mrb[0].mxu0
  %v8859 = vadd.f32 0.0, %v8858
  %v8860 = vpop.f32.mrb[0].mxu0
  %8861 = vmatprep.mubr.bf16.mxu0 0
  %8862 = vmatmul.mubr.bf16.gmra.mrb[0].mxu0 %v8742
  %v8863 = vpop.f32.mrb[0].mxu0
  %v8864 = vadd.f32 0.0, %v8863
  %v8865 = vpop.f32.mrb[0].mxu0
  %v8866 = vpop.f32.mrb[0].mxu0
  %v8867 = vadd.f32 0.0, %v8866
  %v8868 = vpop.f32.mrb[0].mxu0
  %8869 = vmatprep.mubr.bf16.mxu0 0
  %8870 = vmatmul.mubr.bf16.gmra.mrb[0].mxu0 %v8745
  %v8871 = vpop.f32.mrb[0].mxu0
  %v8872 = vadd.f32 0.0, %v8871
  %v8873 = vpop.f32.mrb[0].mxu0
  %v8874 = vpop.f32.mrb[0].mxu0
  %v8875 = vadd.f32 0.0, %v8874
  %v8876 = vpop.f32.mrb[0].mxu0
  %8877 = vmatprep.mubr.bf16.mxu0 0
  %8878 = vmatmul.mubr.bf16.gmra.mrb[0].mxu0 %v8748
  %v8879 = vpop.f32.mrb[0].mxu0
  %v8880 = vadd.f32 0.0, %v8879
  %v8881 = vpop.f32.mrb[0].mxu0
  %v8882 = vpop.f32.mrb[0].mxu0
  %v8883 = vadd.f32 0.0, %v8882
  %v8884 = vpop.f32.mrb[0].mxu0
  %8885 = vmatprep.mubr.bf16.mxu0 0
  %8886 = vmatmul.mubr.bf16.gmra.mrb[0].mxu0 %v8751
  %v8887 = vpop.f32.mrb[0].mxu0
  %v8888 = vadd.f32 0.0, %v8887
  %v8889 = vpop.f32.mrb[0].mxu0
  %v8890 = vpop.f32.mrb[0].mxu0
  %v8891 = vadd.f32 0.0, %v8890
  %v8892 = vpop.f32.mrb[0].mxu0
  %8893 = vmatprep.mubr.bf16.mxu0 0
  %8894 = vmatmul.mubr.bf16.gmra.mrb[0].mxu0 %v8754
  %v8895 = vpop.f32.mrb[0].mxu0
  %v8896 = vadd.f32 0.0, %v8895
  %v8897 = vpop.f32.mrb[0].mxu0
  %v8898 = vpop.f32.mrb[0].mxu0
  %v8899 = vadd.f32 0.0, %v8898
  %v8900 = vpop.f32.mrb[0].mxu0
  %8901 = vmatprep.mubr.bf16.mxu0 0
  %8902 = vmatmul.mubr.bf16.gmra.mrb[0].mxu0 %v8757
  %v8903 = vpop.f32.mrb[0].mxu0
  %v8904 = vadd.f32 0.0, %v8903
  %v8905 = vpop.f32.mrb[0].mxu0
  %v8906 = vpop.f32.mrb[0].mxu0
  %v8907 = vadd.f32 0.0, %v8906
  %v8908 = vpop.f32.mrb[0].mxu0
  %8909 = vmatprep.mubr.bf16.mxu0 0
  %8910 = vmatmul.mubr.bf16.gmra.mrb[0].mxu0 %v8760
  %v8911 = vpop.f32.mrb[0].mxu0
  %v8912 = vadd.f32 0.0, %v8911
  %v8913 = vpop.f32.mrb[0].mxu0
  %v8914 = vpop.f32.mrb[0].mxu0
  %v8915 = vadd.f32 0.0, %v8914
  %v8916 = vpop.f32.mrb[0].mxu0
  %8917 = vmatprep.mubr.bf16.mxu0 0
  %8918 = vmatmul.mubr.bf16.gmra.mrb[0].mxu0 %v8763
  %v8919 = vpop.f32.mrb[0].mxu0
  %v8920 = vadd.f32 0.0, %v8919
  %v8921 = vpop.f32.mrb[0].mxu0
  %v8922 = vpop.f32.mrb[0].mxu0
  %v8923 = vadd.f32 0.0, %v8922
  %v8924 = vpop.f32.mrb[0].mxu0
  %8925 = vdwg.mxu0
  %v8926 = vadd.f32 %v8504, %v8800
  %v8927 = vadd.f32 %v8505, %v8803
  %v8928 = vadd.f32 %v8506, %v8808
  %v8929 = vadd.f32 %v8507, %v8811
  %v8930 = vadd.f32 %v8508, %v8816
  %v8931 = vadd.f32 %v8509, %v8819
  %v8932 = vadd.f32 %v8510, %v8824
  %v8933 = vadd.f32 %v8511, %v8827
  %v8934 = vadd.f32 %v8512, %v8832
  %v8935 = vadd.f32 %v8513, %v8835
  %v8936 = vadd.f32 %v8514, %v8840
  %v8937 = vadd.f32 %v8515, %v8843
  %v8938 = vadd.f32 %v8516, %v8848
  %v8939 = vadd.f32 %v8517, %v8851
  %v8940 = vadd.f32 %v8518, %v8856
  %v8941 = vadd.f32 %v8519, %v8859
  %v8942 = vadd.f32 %v8520, %v8864
  %v8943 = vadd.f32 %v8521, %v8867
  %v8944 = vadd.f32 %v8522, %v8872
  %v8945 = vadd.f32 %v8523, %v8875
  %v8946 = vadd.f32 %v8524, %v8880
  %v8947 = vadd.f32 %v8525, %v8883
  %v8948 = vadd.f32 %v8526, %v8888
  %v8949 = vadd.f32 %v8527, %v8891
  %v8950 = vadd.f32 %v8528, %v8896
  %v8951 = vadd.f32 %v8529, %v8899
  %v8952 = vadd.f32 %v8530, %v8904
  %v8953 = vadd.f32 %v8531, %v8907
  %v8954 = vadd.f32 %v8532, %v8912
  %v8955 = vadd.f32 %v8533, %v8915
  %v8956 = vadd.f32 %v8534, %v8920
  %v8957 = vadd.f32 %v8535, %v8923
  %s8958 = scalar_lea.vmem %s11, 80
  %v8959 = vld [vmem:[%s8958] sm:$0xf]
  %v8960 = vld [vmem:[%s8958 + $0x4] sm:$0xf]
  %v8961 = vld [vmem:[%s8958 + $0x8] sm:$0xf]
  %v8962 = vld [vmem:[%s8958 + $0xc] sm:$0xf]
  %v8967 = vunpack.c.l.b16 %v8959
  %v8968 = vunpack.c.l.b16 %v8960
  %v8969 = vunpack.c.l.b16 %v8961
  %v8970 = vunpack.c.l.b16 %v8962
  %v8971 = vpack.c.b16 %v8968, %v8967
  %v8972 = vpack.c.b16 %v8970, %v8969
  %8975 = vmatprep.subr.bf16.mxu0 0
  %8976 = vmatpush1.bf16.msra.mxu0 %v8971
  %8977 = vmatprep.subr.bf16.mxu0 0
  %8978 = vmatpush1.bf16.msra.mxu0 %v8972
  %8979 = vmatprep.subr.bf16.mxu0 0
  %8980 = vmatpush1.bf16.msra.mxu0 0
  %8981 = vmatprep.subr.bf16.mxu0 0
  %8982 = vmatpush1.bf16.msra.mxu0 0
  %8983 = vmatprep.subr.bf16.mxu0 0
  %8984 = vmatpush1.bf16.msra.mxu0 0
  %8985 = vmatprep.subr.bf16.mxu0 0
  %8986 = vmatpush1.bf16.msra.mxu0 0
  %8987 = vmatprep.subr.bf16.mxu0 0
  %8988 = vmatpush1.bf16.msra.mxu0 0
  %8989 = vmatprep.subr.bf16.mxu0 0
  %8990 = vmatpush1.bf16.msra.mxu0 0
  %8991 = vmatprep.subr.bf16.mxu0 0
  %8992 = vmatpush1.bf16.msra.mxu0 0
  %8993 = vmatprep.subr.bf16.mxu0 0
  %8994 = vmatpush1.bf16.msra.mxu0 0
  %8995 = vmatprep.subr.bf16.mxu0 0
  %8996 = vmatpush1.bf16.msra.mxu0 0
  %8997 = vmatprep.subr.bf16.mxu0 0
  %8998 = vmatpush1.bf16.msra.mxu0 0
  %8999 = vmatprep.subr.bf16.mxu0 0
  %9000 = vmatpush1.bf16.msra.mxu0 0
  %9001 = vmatprep.subr.bf16.mxu0 0
  %9002 = vmatpush1.bf16.msra.mxu0 0
  %9003 = vmatprep.subr.bf16.mxu0 0
  %9004 = vmatpush1.bf16.msra.mxu0 0
  %9005 = vmatprep.subr.bf16.mxu0 0
  %9006 = vmatpush1.bf16.msra.mxu0 0
  %9007 = vmatprep.mubr.bf16.mxu0 0
  %9008 = vmatmul.mubr.bf16.gmra.mrb[0].mxu0 %v6855
  %v9009 = vpop.f32.mrb[0].mxu0
  %v9010 = vadd.f32 0.0, %v9009
  %v9011 = vpop.f32.mrb[0].mxu0
  %v9012 = vpop.f32.mrb[0].mxu0
  %v9013 = vadd.f32 0.0, %v9012
  %v9014 = vpop.f32.mrb[0].mxu0
  %9015 = vmatprep.mubr.bf16.mxu0 0
  %9016 = vmatmul.mubr.bf16.gmra.mrb[0].mxu0 %v6858
  %v9017 = vpop.f32.mrb[0].mxu0
  %v9018 = vadd.f32 0.0, %v9017
  %v9019 = vpop.f32.mrb[0].mxu0
  %v9020 = vpop.f32.mrb[0].mxu0
  %v9021 = vadd.f32 0.0, %v9020
  %v9022 = vpop.f32.mrb[0].mxu0
  %9023 = vdwg.mxu0
  %s9024 = scalar_lea.vmem %s10, 640
  %v9025 = vld [vmem:[%s9024] sm:$0xf]
  %v9026 = vld [vmem:[%s9024 + $0x4] sm:$0xf]
  %v9027 = vld [vmem:[%s9024 + $0x8] sm:$0xf]
  %v9028 = vld [vmem:[%s9024 + $0xc] sm:$0xf]
  %v9029 = vld [vmem:[%s9024 + $0x10] sm:$0xf]
  %v9030 = vld [vmem:[%s9024 + $0x14] sm:$0xf]
  %v9031 = vld [vmem:[%s9024 + $0x18] sm:$0xf]
  %v9032 = vld [vmem:[%s9024 + $0x1c] sm:$0xf]
  %v9033 = vld [vmem:[%s9024 + $0x20] sm:$0xf]
  %v9034 = vld [vmem:[%s9024 + $0x24] sm:$0xf]
  %v9035 = vld [vmem:[%s9024 + $0x28] sm:$0xf]
  %v9036 = vld [vmem:[%s9024 + $0x2c] sm:$0xf]
  %v9037 = vld [vmem:[%s9024 + $0x30] sm:$0xf]
  %v9038 = vld [vmem:[%s9024 + $0x34] sm:$0xf]
  %v9039 = vld [vmem:[%s9024 + $0x38] sm:$0xf]
  %v9040 = vld [vmem:[%s9024 + $0x3c] sm:$0xf]
  %v9041 = vld [vmem:[%s9024 + $0x40] sm:$0xf]
  %v9042 = vld [vmem:[%s9024 + $0x44] sm:$0xf]
  %v9043 = vld [vmem:[%s9024 + $0x48] sm:$0xf]
  %v9044 = vld [vmem:[%s9024 + $0x4c] sm:$0xf]
  %v9045 = vld [vmem:[%s9024 + $0x50] sm:$0xf]
  %v9046 = vld [vmem:[%s9024 + $0x54] sm:$0xf]
  %v9047 = vld [vmem:[%s9024 + $0x58] sm:$0xf]
  %v9048 = vld [vmem:[%s9024 + $0x5c] sm:$0xf]
  %v9049 = vld [vmem:[%s9024 + $0x60] sm:$0xf]
  %v9050 = vld [vmem:[%s9024 + $0x64] sm:$0xf]
  %v9051 = vld [vmem:[%s9024 + $0x68] sm:$0xf]
  %v9052 = vld [vmem:[%s9024 + $0x6c] sm:$0xf]
  %v9053 = vld [vmem:[%s9024 + $0x70] sm:$0xf]
  %v9054 = vld [vmem:[%s9024 + $0x74] sm:$0xf]
  %v9055 = vld [vmem:[%s9024 + $0x78] sm:$0xf]
  %v9056 = vld [vmem:[%s9024 + $0x7c] sm:$0xf]
  %v9057 = vpack.c.bf16 %v9013, %v9010
  %v9058 = vpack.c.bf16 %v9021, %v9018
  %v9091 = vunpack.c.l.b16 %v9025
  %v9092 = vunpack.c.l.b16 %v9026
  %v9093 = vunpack.c.l.b16 %v9027
  %v9094 = vunpack.c.l.b16 %v9028
  %v9095 = vunpack.c.l.b16 %v9029
  %v9096 = vunpack.c.l.b16 %v9030
  %v9097 = vunpack.c.l.b16 %v9031
  %v9098 = vunpack.c.l.b16 %v9032
  %v9099 = vunpack.c.l.b16 %v9033
  %v9100 = vunpack.c.l.b16 %v9034
  %v9101 = vunpack.c.l.b16 %v9035
  %v9102 = vunpack.c.l.b16 %v9036
  %v9103 = vunpack.c.l.b16 %v9037
  %v9104 = vunpack.c.l.b16 %v9038
  %v9105 = vunpack.c.l.b16 %v9039
  %v9106 = vunpack.c.l.b16 %v9040
  %v9107 = vunpack.c.l.b16 %v9041
  %v9108 = vunpack.c.l.b16 %v9042
  %v9109 = vunpack.c.l.b16 %v9043
  %v9110 = vunpack.c.l.b16 %v9044
  %v9111 = vunpack.c.l.b16 %v9045
  %v9112 = vunpack.c.l.b16 %v9046
  %v9113 = vunpack.c.l.b16 %v9047
  %v9114 = vunpack.c.l.b16 %v9048
  %v9115 = vunpack.c.l.b16 %v9049
  %v9116 = vunpack.c.l.b16 %v9050
  %v9117 = vunpack.c.l.b16 %v9051
  %v9118 = vunpack.c.l.b16 %v9052
  %v9119 = vunpack.c.l.b16 %v9053
  %v9120 = vunpack.c.l.b16 %v9054
  %v9121 = vunpack.c.l.b16 %v9055
  %v9122 = vunpack.c.l.b16 %v9056
  %v9123 = vpack.c.b16 %v9092, %v9091
  %v9124 = vpack.c.b16 %v9094, %v9093
  %v9125 = vpack.c.b16 %v9096, %v9095
  %v9126 = vpack.c.b16 %v9098, %v9097
  %v9127 = vpack.c.b16 %v9100, %v9099
  %v9128 = vpack.c.b16 %v9102, %v9101
  %v9129 = vpack.c.b16 %v9104, %v9103
  %v9130 = vpack.c.b16 %v9106, %v9105
  %v9131 = vpack.c.b16 %v9108, %v9107
  %v9132 = vpack.c.b16 %v9110, %v9109
  %v9133 = vpack.c.b16 %v9112, %v9111
  %v9134 = vpack.c.b16 %v9114, %v9113
  %v9135 = vpack.c.b16 %v9116, %v9115
  %v9136 = vpack.c.b16 %v9118, %v9117
  %v9137 = vpack.c.b16 %v9120, %v9119
  %v9138 = vpack.c.b16 %v9122, %v9121
  %v9140 = vsel %vm411, %v9123, 0
  %v9143 = vsel %vm411, %v9124, 0
  %v9146 = vsel %vm411, %v9125, 0
  %v9149 = vsel %vm411, %v9126, 0
  %v9152 = vsel %vm411, %v9127, 0
  %v9155 = vsel %vm411, %v9128, 0
  %v9158 = vsel %vm411, %v9129, 0
  %v9161 = vsel %vm411, %v9130, 0
  %v9164 = vsel %vm411, %v9131, 0
  %v9167 = vsel %vm411, %v9132, 0
  %v9170 = vsel %vm411, %v9133, 0
  %v9173 = vsel %vm411, %v9134, 0
  %v9176 = vsel %vm411, %v9135, 0
  %v9179 = vsel %vm411, %v9136, 0
  %v9182 = vsel %vm411, %v9137, 0
  %v9185 = vsel %vm411, %v9138, 0
  %9187 = vmatprep.subr.bf16.mxu0 0
  %9188 = vmatpush1.bf16.msra.mxu0 %v9057
  %9189 = vmatprep.subr.bf16.mxu0 0
  %9190 = vmatpush1.bf16.msra.mxu0 %v9058
  %9191 = vmatprep.subr.bf16.mxu0 0
  %9192 = vmatpush1.bf16.msra.mxu0 0
  %9193 = vmatprep.subr.bf16.mxu0 0
  %9194 = vmatpush1.bf16.msra.mxu0 0
  %9195 = vmatprep.subr.bf16.mxu0 0
  %9196 = vmatpush1.bf16.msra.mxu0 0
  %9197 = vmatprep.subr.bf16.mxu0 0
  %9198 = vmatpush1.bf16.msra.mxu0 0
  %9199 = vmatprep.subr.bf16.mxu0 0
  %9200 = vmatpush1.bf16.msra.mxu0 0
  %9201 = vmatprep.subr.bf16.mxu0 0
  %9202 = vmatpush1.bf16.msra.mxu0 0
  %9203 = vmatprep.subr.bf16.mxu0 0
  %9204 = vmatpush1.bf16.msra.mxu0 0
  %9205 = vmatprep.subr.bf16.mxu0 0
  %9206 = vmatpush1.bf16.msra.mxu0 0
  %9207 = vmatprep.subr.bf16.mxu0 0
  %9208 = vmatpush1.bf16.msra.mxu0 0
  %9209 = vmatprep.subr.bf16.mxu0 0
  %9210 = vmatpush1.bf16.msra.mxu0 0
  %9211 = vmatprep.subr.bf16.mxu0 0
  %9212 = vmatpush1.bf16.msra.mxu0 0
  %9213 = vmatprep.subr.bf16.mxu0 0
  %9214 = vmatpush1.bf16.msra.mxu0 0
  %9215 = vmatprep.subr.bf16.mxu0 0
  %9216 = vmatpush1.bf16.msra.mxu0 0
  %9217 = vmatprep.subr.bf16.mxu0 0
  %9218 = vmatpush1.bf16.msra.mxu0 0
  %9219 = vmatprep.mubr.bf16.mxu0 0
  %9220 = vmatmul.mubr.bf16.gmra.mrb[0].mxu0 %v9140
  %v9221 = vpop.f32.mrb[0].mxu0
  %v9222 = vadd.f32 0.0, %v9221
  %v9223 = vpop.f32.mrb[0].mxu0
  %v9224 = vpop.f32.mrb[0].mxu0
  %v9225 = vadd.f32 0.0, %v9224
  %v9226 = vpop.f32.mrb[0].mxu0
  %9227 = vmatprep.mubr.bf16.mxu0 0
  %9228 = vmatmul.mubr.bf16.gmra.mrb[0].mxu0 %v9143
  %v9229 = vpop.f32.mrb[0].mxu0
  %v9230 = vadd.f32 0.0, %v9229
  %v9231 = vpop.f32.mrb[0].mxu0
  %v9232 = vpop.f32.mrb[0].mxu0
  %v9233 = vadd.f32 0.0, %v9232
  %v9234 = vpop.f32.mrb[0].mxu0
  %9235 = vmatprep.mubr.bf16.mxu0 0
  %9236 = vmatmul.mubr.bf16.gmra.mrb[0].mxu0 %v9146
  %v9237 = vpop.f32.mrb[0].mxu0
  %v9238 = vadd.f32 0.0, %v9237
  %v9239 = vpop.f32.mrb[0].mxu0
  %v9240 = vpop.f32.mrb[0].mxu0
  %v9241 = vadd.f32 0.0, %v9240
  %v9242 = vpop.f32.mrb[0].mxu0
  %9243 = vmatprep.mubr.bf16.mxu0 0
  %9244 = vmatmul.mubr.bf16.gmra.mrb[0].mxu0 %v9149
  %v9245 = vpop.f32.mrb[0].mxu0
  %v9246 = vadd.f32 0.0, %v9245
  %v9247 = vpop.f32.mrb[0].mxu0
  %v9248 = vpop.f32.mrb[0].mxu0
  %v9249 = vadd.f32 0.0, %v9248
  %v9250 = vpop.f32.mrb[0].mxu0
  %9251 = vmatprep.mubr.bf16.mxu0 0
  %9252 = vmatmul.mubr.bf16.gmra.mrb[0].mxu0 %v9152
  %v9253 = vpop.f32.mrb[0].mxu0
  %v9254 = vadd.f32 0.0, %v9253
  %v9255 = vpop.f32.mrb[0].mxu0
  %v9256 = vpop.f32.mrb[0].mxu0
  %v9257 = vadd.f32 0.0, %v9256
  %v9258 = vpop.f32.mrb[0].mxu0
  %9259 = vmatprep.mubr.bf16.mxu0 0
  %9260 = vmatmul.mubr.bf16.gmra.mrb[0].mxu0 %v9155
  %v9261 = vpop.f32.mrb[0].mxu0
  %v9262 = vadd.f32 0.0, %v9261
  %v9263 = vpop.f32.mrb[0].mxu0
  %v9264 = vpop.f32.mrb[0].mxu0
  %v9265 = vadd.f32 0.0, %v9264
  %v9266 = vpop.f32.mrb[0].mxu0
  %9267 = vmatprep.mubr.bf16.mxu0 0
  %9268 = vmatmul.mubr.bf16.gmra.mrb[0].mxu0 %v9158
  %v9269 = vpop.f32.mrb[0].mxu0
  %v9270 = vadd.f32 0.0, %v9269
  %v9271 = vpop.f32.mrb[0].mxu0
  %v9272 = vpop.f32.mrb[0].mxu0
  %v9273 = vadd.f32 0.0, %v9272
  %v9274 = vpop.f32.mrb[0].mxu0
  %9275 = vmatprep.mubr.bf16.mxu0 0
  %9276 = vmatmul.mubr.bf16.gmra.mrb[0].mxu0 %v9161
  %v9277 = vpop.f32.mrb[0].mxu0
  %v9278 = vadd.f32 0.0, %v9277
  %v9279 = vpop.f32.mrb[0].mxu0
  %v9280 = vpop.f32.mrb[0].mxu0
  %v9281 = vadd.f32 0.0, %v9280
  %v9282 = vpop.f32.mrb[0].mxu0
  %9283 = vmatprep.mubr.bf16.mxu0 0
  %9284 = vmatmul.mubr.bf16.gmra.mrb[0].mxu0 %v9164
  %v9285 = vpop.f32.mrb[0].mxu0
  %v9286 = vadd.f32 0.0, %v9285
  %v9287 = vpop.f32.mrb[0].mxu0
  %v9288 = vpop.f32.mrb[0].mxu0
  %v9289 = vadd.f32 0.0, %v9288
  %v9290 = vpop.f32.mrb[0].mxu0
  %9291 = vmatprep.mubr.bf16.mxu0 0
  %9292 = vmatmul.mubr.bf16.gmra.mrb[0].mxu0 %v9167
  %v9293 = vpop.f32.mrb[0].mxu0
  %v9294 = vadd.f32 0.0, %v9293
  %v9295 = vpop.f32.mrb[0].mxu0
  %v9296 = vpop.f32.mrb[0].mxu0
  %v9297 = vadd.f32 0.0, %v9296
  %v9298 = vpop.f32.mrb[0].mxu0
  %9299 = vmatprep.mubr.bf16.mxu0 0
  %9300 = vmatmul.mubr.bf16.gmra.mrb[0].mxu0 %v9170
  %v9301 = vpop.f32.mrb[0].mxu0
  %v9302 = vadd.f32 0.0, %v9301
  %v9303 = vpop.f32.mrb[0].mxu0
  %v9304 = vpop.f32.mrb[0].mxu0
  %v9305 = vadd.f32 0.0, %v9304
  %v9306 = vpop.f32.mrb[0].mxu0
  %9307 = vmatprep.mubr.bf16.mxu0 0
  %9308 = vmatmul.mubr.bf16.gmra.mrb[0].mxu0 %v9173
  %v9309 = vpop.f32.mrb[0].mxu0
  %v9310 = vadd.f32 0.0, %v9309
  %v9311 = vpop.f32.mrb[0].mxu0
  %v9312 = vpop.f32.mrb[0].mxu0
  %v9313 = vadd.f32 0.0, %v9312
  %v9314 = vpop.f32.mrb[0].mxu0
  %9315 = vmatprep.mubr.bf16.mxu0 0
  %9316 = vmatmul.mubr.bf16.gmra.mrb[0].mxu0 %v9176
  %v9317 = vpop.f32.mrb[0].mxu0
  %v9318 = vadd.f32 0.0, %v9317
  %v9319 = vpop.f32.mrb[0].mxu0
  %v9320 = vpop.f32.mrb[0].mxu0
  %v9321 = vadd.f32 0.0, %v9320
  %v9322 = vpop.f32.mrb[0].mxu0
  %9323 = vmatprep.mubr.bf16.mxu0 0
  %9324 = vmatmul.mubr.bf16.gmra.mrb[0].mxu0 %v9179
  %v9325 = vpop.f32.mrb[0].mxu0
  %v9326 = vadd.f32 0.0, %v9325
  %v9327 = vpop.f32.mrb[0].mxu0
  %v9328 = vpop.f32.mrb[0].mxu0
  %v9329 = vadd.f32 0.0, %v9328
  %v9330 = vpop.f32.mrb[0].mxu0
  %9331 = vmatprep.mubr.bf16.mxu0 0
  %9332 = vmatmul.mubr.bf16.gmra.mrb[0].mxu0 %v9182
  %v9333 = vpop.f32.mrb[0].mxu0
  %v9334 = vadd.f32 0.0, %v9333
  %v9335 = vpop.f32.mrb[0].mxu0
  %v9336 = vpop.f32.mrb[0].mxu0
  %v9337 = vadd.f32 0.0, %v9336
  %v9338 = vpop.f32.mrb[0].mxu0
  %9339 = vmatprep.mubr.bf16.mxu0 0
  %9340 = vmatmul.mubr.bf16.gmra.mrb[0].mxu0 %v9185
  %v9341 = vpop.f32.mrb[0].mxu0
  %v9342 = vadd.f32 0.0, %v9341
  %v9343 = vpop.f32.mrb[0].mxu0
  %v9344 = vpop.f32.mrb[0].mxu0
  %v9345 = vadd.f32 0.0, %v9344
  %v9346 = vpop.f32.mrb[0].mxu0
  %9347 = vdwg.mxu0
  %v9348 = vadd.f32 %v8926, %v9222
  %v9349 = vadd.f32 %v8927, %v9225
  %v9350 = vadd.f32 %v8928, %v9230
  %v9351 = vadd.f32 %v8929, %v9233
  %v9352 = vadd.f32 %v8930, %v9238
  %v9353 = vadd.f32 %v8931, %v9241
  %v9354 = vadd.f32 %v8932, %v9246
  %v9355 = vadd.f32 %v8933, %v9249
  %v9356 = vadd.f32 %v8934, %v9254
  %v9357 = vadd.f32 %v8935, %v9257
  %v9358 = vadd.f32 %v8936, %v9262
  %v9359 = vadd.f32 %v8937, %v9265
  %v9360 = vadd.f32 %v8938, %v9270
  %v9361 = vadd.f32 %v8939, %v9273
  %v9362 = vadd.f32 %v8940, %v9278
  %v9363 = vadd.f32 %v8941, %v9281
  %v9364 = vadd.f32 %v8942, %v9286
  %v9365 = vadd.f32 %v8943, %v9289
  %v9366 = vadd.f32 %v8944, %v9294
  %v9367 = vadd.f32 %v8945, %v9297
  %v9368 = vadd.f32 %v8946, %v9302
  %v9369 = vadd.f32 %v8947, %v9305
  %v9370 = vadd.f32 %v8948, %v9310
  %v9371 = vadd.f32 %v8949, %v9313
  %v9372 = vadd.f32 %v8950, %v9318
  %v9373 = vadd.f32 %v8951, %v9321
  %v9374 = vadd.f32 %v8952, %v9326
  %v9375 = vadd.f32 %v8953, %v9329
  %v9376 = vadd.f32 %v8954, %v9334
  %v9377 = vadd.f32 %v8955, %v9337
  %v9378 = vadd.f32 %v8956, %v9342
  %v9379 = vadd.f32 %v8957, %v9345
  %s9380 = scalar_lea.vmem %s11, 96
  %v9381 = vld [vmem:[%s9380] sm:$0xf]
  %v9382 = vld [vmem:[%s9380 + $0x4] sm:$0xf]
  %v9383 = vld [vmem:[%s9380 + $0x8] sm:$0xf]
  %v9384 = vld [vmem:[%s9380 + $0xc] sm:$0xf]
  %v9389 = vunpack.c.l.b16 %v9381
  %v9390 = vunpack.c.l.b16 %v9382
  %v9391 = vunpack.c.l.b16 %v9383
  %v9392 = vunpack.c.l.b16 %v9384
  %v9393 = vpack.c.b16 %v9390, %v9389
  %v9394 = vpack.c.b16 %v9392, %v9391
  %9397 = vmatprep.subr.bf16.mxu0 0
  %9398 = vmatpush1.bf16.msra.mxu0 %v9393
  %9399 = vmatprep.subr.bf16.mxu0 0
  %9400 = vmatpush1.bf16.msra.mxu0 %v9394
  %9401 = vmatprep.subr.bf16.mxu0 0
  %9402 = vmatpush1.bf16.msra.mxu0 0
  %9403 = vmatprep.subr.bf16.mxu0 0
  %9404 = vmatpush1.bf16.msra.mxu0 0
  %9405 = vmatprep.subr.bf16.mxu0 0
  %9406 = vmatpush1.bf16.msra.mxu0 0
  %9407 = vmatprep.subr.bf16.mxu0 0
  %9408 = vmatpush1.bf16.msra.mxu0 0
  %9409 = vmatprep.subr.bf16.mxu0 0
  %9410 = vmatpush1.bf16.msra.mxu0 0
  %9411 = vmatprep.subr.bf16.mxu0 0
  %9412 = vmatpush1.bf16.msra.mxu0 0
  %9413 = vmatprep.subr.bf16.mxu0 0
  %9414 = vmatpush1.bf16.msra.mxu0 0
  %9415 = vmatprep.subr.bf16.mxu0 0
  %9416 = vmatpush1.bf16.msra.mxu0 0
  %9417 = vmatprep.subr.bf16.mxu0 0
  %9418 = vmatpush1.bf16.msra.mxu0 0
  %9419 = vmatprep.subr.bf16.mxu0 0
  %9420 = vmatpush1.bf16.msra.mxu0 0
  %9421 = vmatprep.subr.bf16.mxu0 0
  %9422 = vmatpush1.bf16.msra.mxu0 0
  %9423 = vmatprep.subr.bf16.mxu0 0
  %9424 = vmatpush1.bf16.msra.mxu0 0
  %9425 = vmatprep.subr.bf16.mxu0 0
  %9426 = vmatpush1.bf16.msra.mxu0 0
  %9427 = vmatprep.subr.bf16.mxu0 0
  %9428 = vmatpush1.bf16.msra.mxu0 0
  %9429 = vmatprep.mubr.bf16.mxu0 0
  %9430 = vmatmul.mubr.bf16.gmra.mrb[0].mxu0 %v6855
  %v9431 = vpop.f32.mrb[0].mxu0
  %v9432 = vadd.f32 0.0, %v9431
  %v9433 = vpop.f32.mrb[0].mxu0
  %v9434 = vpop.f32.mrb[0].mxu0
  %v9435 = vadd.f32 0.0, %v9434
  %v9436 = vpop.f32.mrb[0].mxu0
  %9437 = vmatprep.mubr.bf16.mxu0 0
  %9438 = vmatmul.mubr.bf16.gmra.mrb[0].mxu0 %v6858
  %v9439 = vpop.f32.mrb[0].mxu0
  %v9440 = vadd.f32 0.0, %v9439
  %v9441 = vpop.f32.mrb[0].mxu0
  %v9442 = vpop.f32.mrb[0].mxu0
  %v9443 = vadd.f32 0.0, %v9442
  %v9444 = vpop.f32.mrb[0].mxu0
  %9445 = vdwg.mxu0
  %s9446 = scalar_lea.vmem %s10, 768
  %v9447 = vld [vmem:[%s9446] sm:$0xf]
  %v9448 = vld [vmem:[%s9446 + $0x4] sm:$0xf]
  %v9449 = vld [vmem:[%s9446 + $0x8] sm:$0xf]
  %v9450 = vld [vmem:[%s9446 + $0xc] sm:$0xf]
  %v9451 = vld [vmem:[%s9446 + $0x10] sm:$0xf]
  %v9452 = vld [vmem:[%s9446 + $0x14] sm:$0xf]
  %v9453 = vld [vmem:[%s9446 + $0x18] sm:$0xf]
  %v9454 = vld [vmem:[%s9446 + $0x1c] sm:$0xf]
  %v9455 = vld [vmem:[%s9446 + $0x20] sm:$0xf]
  %v9456 = vld [vmem:[%s9446 + $0x24] sm:$0xf]
  %v9457 = vld [vmem:[%s9446 + $0x28] sm:$0xf]
  %v9458 = vld [vmem:[%s9446 + $0x2c] sm:$0xf]
  %v9459 = vld [vmem:[%s9446 + $0x30] sm:$0xf]
  %v9460 = vld [vmem:[%s9446 + $0x34] sm:$0xf]
  %v9461 = vld [vmem:[%s9446 + $0x38] sm:$0xf]
  %v9462 = vld [vmem:[%s9446 + $0x3c] sm:$0xf]
  %v9463 = vld [vmem:[%s9446 + $0x40] sm:$0xf]
  %v9464 = vld [vmem:[%s9446 + $0x44] sm:$0xf]
  %v9465 = vld [vmem:[%s9446 + $0x48] sm:$0xf]
  %v9466 = vld [vmem:[%s9446 + $0x4c] sm:$0xf]
  %v9467 = vld [vmem:[%s9446 + $0x50] sm:$0xf]
  %v9468 = vld [vmem:[%s9446 + $0x54] sm:$0xf]
  %v9469 = vld [vmem:[%s9446 + $0x58] sm:$0xf]
  %v9470 = vld [vmem:[%s9446 + $0x5c] sm:$0xf]
  %v9471 = vld [vmem:[%s9446 + $0x60] sm:$0xf]
  %v9472 = vld [vmem:[%s9446 + $0x64] sm:$0xf]
  %v9473 = vld [vmem:[%s9446 + $0x68] sm:$0xf]
  %v9474 = vld [vmem:[%s9446 + $0x6c] sm:$0xf]
  %v9475 = vld [vmem:[%s9446 + $0x70] sm:$0xf]
  %v9476 = vld [vmem:[%s9446 + $0x74] sm:$0xf]
  %v9477 = vld [vmem:[%s9446 + $0x78] sm:$0xf]
  %v9478 = vld [vmem:[%s9446 + $0x7c] sm:$0xf]
  %v9479 = vpack.c.bf16 %v9435, %v9432
  %v9480 = vpack.c.bf16 %v9443, %v9440
  %v9513 = vunpack.c.l.b16 %v9447
  %v9514 = vunpack.c.l.b16 %v9448
  %v9515 = vunpack.c.l.b16 %v9449
  %v9516 = vunpack.c.l.b16 %v9450
  %v9517 = vunpack.c.l.b16 %v9451
  %v9518 = vunpack.c.l.b16 %v9452
  %v9519 = vunpack.c.l.b16 %v9453
  %v9520 = vunpack.c.l.b16 %v9454
  %v9521 = vunpack.c.l.b16 %v9455
  %v9522 = vunpack.c.l.b16 %v9456
  %v9523 = vunpack.c.l.b16 %v9457
  %v9524 = vunpack.c.l.b16 %v9458
  %v9525 = vunpack.c.l.b16 %v9459
  %v9526 = vunpack.c.l.b16 %v9460
  %v9527 = vunpack.c.l.b16 %v9461
  %v9528 = vunpack.c.l.b16 %v9462
  %v9529 = vunpack.c.l.b16 %v9463
  %v9530 = vunpack.c.l.b16 %v9464
  %v9531 = vunpack.c.l.b16 %v9465
  %v9532 = vunpack.c.l.b16 %v9466
  %v9533 = vunpack.c.l.b16 %v9467
  %v9534 = vunpack.c.l.b16 %v9468
  %v9535 = vunpack.c.l.b16 %v9469
  %v9536 = vunpack.c.l.b16 %v9470
  %v9537 = vunpack.c.l.b16 %v9471
  %v9538 = vunpack.c.l.b16 %v9472
  %v9539 = vunpack.c.l.b16 %v9473
  %v9540 = vunpack.c.l.b16 %v9474
  %v9541 = vunpack.c.l.b16 %v9475
  %v9542 = vunpack.c.l.b16 %v9476
  %v9543 = vunpack.c.l.b16 %v9477
  %v9544 = vunpack.c.l.b16 %v9478
  %v9545 = vpack.c.b16 %v9514, %v9513
  %v9546 = vpack.c.b16 %v9516, %v9515
  %v9547 = vpack.c.b16 %v9518, %v9517
  %v9548 = vpack.c.b16 %v9520, %v9519
  %v9549 = vpack.c.b16 %v9522, %v9521
  %v9550 = vpack.c.b16 %v9524, %v9523
  %v9551 = vpack.c.b16 %v9526, %v9525
  %v9552 = vpack.c.b16 %v9528, %v9527
  %v9553 = vpack.c.b16 %v9530, %v9529
  %v9554 = vpack.c.b16 %v9532, %v9531
  %v9555 = vpack.c.b16 %v9534, %v9533
  %v9556 = vpack.c.b16 %v9536, %v9535
  %v9557 = vpack.c.b16 %v9538, %v9537
  %v9558 = vpack.c.b16 %v9540, %v9539
  %v9559 = vpack.c.b16 %v9542, %v9541
  %v9560 = vpack.c.b16 %v9544, %v9543
  %v9562 = vsel %vm411, %v9545, 0
  %v9565 = vsel %vm411, %v9546, 0
  %v9568 = vsel %vm411, %v9547, 0
  %v9571 = vsel %vm411, %v9548, 0
  %v9574 = vsel %vm411, %v9549, 0
  %v9577 = vsel %vm411, %v9550, 0
  %v9580 = vsel %vm411, %v9551, 0
  %v9583 = vsel %vm411, %v9552, 0
  %v9586 = vsel %vm411, %v9553, 0
  %v9589 = vsel %vm411, %v9554, 0
  %v9592 = vsel %vm411, %v9555, 0
  %v9595 = vsel %vm411, %v9556, 0
  %v9598 = vsel %vm411, %v9557, 0
  %v9601 = vsel %vm411, %v9558, 0
  %v9604 = vsel %vm411, %v9559, 0
  %v9607 = vsel %vm411, %v9560, 0
  %9609 = vmatprep.subr.bf16.mxu0 0
  %9610 = vmatpush1.bf16.msra.mxu0 %v9479
  %9611 = vmatprep.subr.bf16.mxu0 0
  %9612 = vmatpush1.bf16.msra.mxu0 %v9480
  %9613 = vmatprep.subr.bf16.mxu0 0
  %9614 = vmatpush1.bf16.msra.mxu0 0
  %9615 = vmatprep.subr.bf16.mxu0 0
  %9616 = vmatpush1.bf16.msra.mxu0 0
  %9617 = vmatprep.subr.bf16.mxu0 0
  %9618 = vmatpush1.bf16.msra.mxu0 0
  %9619 = vmatprep.subr.bf16.mxu0 0
  %9620 = vmatpush1.bf16.msra.mxu0 0
  %9621 = vmatprep.subr.bf16.mxu0 0
  %9622 = vmatpush1.bf16.msra.mxu0 0
  %9623 = vmatprep.subr.bf16.mxu0 0
  %9624 = vmatpush1.bf16.msra.mxu0 0
  %9625 = vmatprep.subr.bf16.mxu0 0
  %9626 = vmatpush1.bf16.msra.mxu0 0
  %9627 = vmatprep.subr.bf16.mxu0 0
  %9628 = vmatpush1.bf16.msra.mxu0 0
  %9629 = vmatprep.subr.bf16.mxu0 0
  %9630 = vmatpush1.bf16.msra.mxu0 0
  %9631 = vmatprep.subr.bf16.mxu0 0
  %9632 = vmatpush1.bf16.msra.mxu0 0
  %9633 = vmatprep.subr.bf16.mxu0 0
  %9634 = vmatpush1.bf16.msra.mxu0 0
  %9635 = vmatprep.subr.bf16.mxu0 0
  %9636 = vmatpush1.bf16.msra.mxu0 0
  %9637 = vmatprep.subr.bf16.mxu0 0
  %9638 = vmatpush1.bf16.msra.mxu0 0
  %9639 = vmatprep.subr.bf16.mxu0 0
  %9640 = vmatpush1.bf16.msra.mxu0 0
  %9641 = vmatprep.mubr.bf16.mxu0 0
  %9642 = vmatmul.mubr.bf16.gmra.mrb[0].mxu0 %v9562
  %v9643 = vpop.f32.mrb[0].mxu0
  %v9644 = vadd.f32 0.0, %v9643
  %v9645 = vpop.f32.mrb[0].mxu0
  %v9646 = vpop.f32.mrb[0].mxu0
  %v9647 = vadd.f32 0.0, %v9646
  %v9648 = vpop.f32.mrb[0].mxu0
  %9649 = vmatprep.mubr.bf16.mxu0 0
  %9650 = vmatmul.mubr.bf16.gmra.mrb[0].mxu0 %v9565
  %v9651 = vpop.f32.mrb[0].mxu0
  %v9652 = vadd.f32 0.0, %v9651
  %v9653 = vpop.f32.mrb[0].mxu0
  %v9654 = vpop.f32.mrb[0].mxu0
  %v9655 = vadd.f32 0.0, %v9654
  %v9656 = vpop.f32.mrb[0].mxu0
  %9657 = vmatprep.mubr.bf16.mxu0 0
  %9658 = vmatmul.mubr.bf16.gmra.mrb[0].mxu0 %v9568
  %v9659 = vpop.f32.mrb[0].mxu0
  %v9660 = vadd.f32 0.0, %v9659
  %v9661 = vpop.f32.mrb[0].mxu0
  %v9662 = vpop.f32.mrb[0].mxu0
  %v9663 = vadd.f32 0.0, %v9662
  %v9664 = vpop.f32.mrb[0].mxu0
  %9665 = vmatprep.mubr.bf16.mxu0 0
  %9666 = vmatmul.mubr.bf16.gmra.mrb[0].mxu0 %v9571
  %v9667 = vpop.f32.mrb[0].mxu0
  %v9668 = vadd.f32 0.0, %v9667
  %v9669 = vpop.f32.mrb[0].mxu0
  %v9670 = vpop.f32.mrb[0].mxu0
  %v9671 = vadd.f32 0.0, %v9670
  %v9672 = vpop.f32.mrb[0].mxu0
  %9673 = vmatprep.mubr.bf16.mxu0 0
  %9674 = vmatmul.mubr.bf16.gmra.mrb[0].mxu0 %v9574
  %v9675 = vpop.f32.mrb[0].mxu0
  %v9676 = vadd.f32 0.0, %v9675
  %v9677 = vpop.f32.mrb[0].mxu0
  %v9678 = vpop.f32.mrb[0].mxu0
  %v9679 = vadd.f32 0.0, %v9678
  %v9680 = vpop.f32.mrb[0].mxu0
  %9681 = vmatprep.mubr.bf16.mxu0 0
  %9682 = vmatmul.mubr.bf16.gmra.mrb[0].mxu0 %v9577
  %v9683 = vpop.f32.mrb[0].mxu0
  %v9684 = vadd.f32 0.0, %v9683
  %v9685 = vpop.f32.mrb[0].mxu0
  %v9686 = vpop.f32.mrb[0].mxu0
  %v9687 = vadd.f32 0.0, %v9686
  %v9688 = vpop.f32.mrb[0].mxu0
  %9689 = vmatprep.mubr.bf16.mxu0 0
  %9690 = vmatmul.mubr.bf16.gmra.mrb[0].mxu0 %v9580
  %v9691 = vpop.f32.mrb[0].mxu0
  %v9692 = vadd.f32 0.0, %v9691
  %v9693 = vpop.f32.mrb[0].mxu0
  %v9694 = vpop.f32.mrb[0].mxu0
  %v9695 = vadd.f32 0.0, %v9694
  %v9696 = vpop.f32.mrb[0].mxu0
  %9697 = vmatprep.mubr.bf16.mxu0 0
  %9698 = vmatmul.mubr.bf16.gmra.mrb[0].mxu0 %v9583
  %v9699 = vpop.f32.mrb[0].mxu0
  %v9700 = vadd.f32 0.0, %v9699
  %v9701 = vpop.f32.mrb[0].mxu0
  %v9702 = vpop.f32.mrb[0].mxu0
  %v9703 = vadd.f32 0.0, %v9702
  %v9704 = vpop.f32.mrb[0].mxu0
  %9705 = vmatprep.mubr.bf16.mxu0 0
  %9706 = vmatmul.mubr.bf16.gmra.mrb[0].mxu0 %v9586
  %v9707 = vpop.f32.mrb[0].mxu0
  %v9708 = vadd.f32 0.0, %v9707
  %v9709 = vpop.f32.mrb[0].mxu0
  %v9710 = vpop.f32.mrb[0].mxu0
  %v9711 = vadd.f32 0.0, %v9710
  %v9712 = vpop.f32.mrb[0].mxu0
  %9713 = vmatprep.mubr.bf16.mxu0 0
  %9714 = vmatmul.mubr.bf16.gmra.mrb[0].mxu0 %v9589
  %v9715 = vpop.f32.mrb[0].mxu0
  %v9716 = vadd.f32 0.0, %v9715
  %v9717 = vpop.f32.mrb[0].mxu0
  %v9718 = vpop.f32.mrb[0].mxu0
  %v9719 = vadd.f32 0.0, %v9718
  %v9720 = vpop.f32.mrb[0].mxu0
  %9721 = vmatprep.mubr.bf16.mxu0 0
  %9722 = vmatmul.mubr.bf16.gmra.mrb[0].mxu0 %v9592
  %v9723 = vpop.f32.mrb[0].mxu0
  %v9724 = vadd.f32 0.0, %v9723
  %v9725 = vpop.f32.mrb[0].mxu0
  %v9726 = vpop.f32.mrb[0].mxu0
  %v9727 = vadd.f32 0.0, %v9726
  %v9728 = vpop.f32.mrb[0].mxu0
  %9729 = vmatprep.mubr.bf16.mxu0 0
  %9730 = vmatmul.mubr.bf16.gmra.mrb[0].mxu0 %v9595
  %v9731 = vpop.f32.mrb[0].mxu0
  %v9732 = vadd.f32 0.0, %v9731
  %v9733 = vpop.f32.mrb[0].mxu0
  %v9734 = vpop.f32.mrb[0].mxu0
  %v9735 = vadd.f32 0.0, %v9734
  %v9736 = vpop.f32.mrb[0].mxu0
  %9737 = vmatprep.mubr.bf16.mxu0 0
  %9738 = vmatmul.mubr.bf16.gmra.mrb[0].mxu0 %v9598
  %v9739 = vpop.f32.mrb[0].mxu0
  %v9740 = vadd.f32 0.0, %v9739
  %v9741 = vpop.f32.mrb[0].mxu0
  %v9742 = vpop.f32.mrb[0].mxu0
  %v9743 = vadd.f32 0.0, %v9742
  %v9744 = vpop.f32.mrb[0].mxu0
  %9745 = vmatprep.mubr.bf16.mxu0 0
  %9746 = vmatmul.mubr.bf16.gmra.mrb[0].mxu0 %v9601
  %v9747 = vpop.f32.mrb[0].mxu0
  %v9748 = vadd.f32 0.0, %v9747
  %v9749 = vpop.f32.mrb[0].mxu0
  %v9750 = vpop.f32.mrb[0].mxu0
  %v9751 = vadd.f32 0.0, %v9750
  %v9752 = vpop.f32.mrb[0].mxu0
  %9753 = vmatprep.mubr.bf16.mxu0 0
  %9754 = vmatmul.mubr.bf16.gmra.mrb[0].mxu0 %v9604
  %v9755 = vpop.f32.mrb[0].mxu0
  %v9756 = vadd.f32 0.0, %v9755
  %v9757 = vpop.f32.mrb[0].mxu0
  %v9758 = vpop.f32.mrb[0].mxu0
  %v9759 = vadd.f32 0.0, %v9758
  %v9760 = vpop.f32.mrb[0].mxu0
  %9761 = vmatprep.mubr.bf16.mxu0 0
  %9762 = vmatmul.mubr.bf16.gmra.mrb[0].mxu0 %v9607
  %v9763 = vpop.f32.mrb[0].mxu0
  %v9764 = vadd.f32 0.0, %v9763
  %v9765 = vpop.f32.mrb[0].mxu0
  %v9766 = vpop.f32.mrb[0].mxu0
  %v9767 = vadd.f32 0.0, %v9766
  %v9768 = vpop.f32.mrb[0].mxu0
  %9769 = vdwg.mxu0
  %v9770 = vadd.f32 %v9348, %v9644
  %v9771 = vadd.f32 %v9349, %v9647
  %v9772 = vadd.f32 %v9350, %v9652
  %v9773 = vadd.f32 %v9351, %v9655
  %v9774 = vadd.f32 %v9352, %v9660
  %v9775 = vadd.f32 %v9353, %v9663
  %v9776 = vadd.f32 %v9354, %v9668
  %v9777 = vadd.f32 %v9355, %v9671
  %v9778 = vadd.f32 %v9356, %v9676
  %v9779 = vadd.f32 %v9357, %v9679
  %v9780 = vadd.f32 %v9358, %v9684
  %v9781 = vadd.f32 %v9359, %v9687
  %v9782 = vadd.f32 %v9360, %v9692
  %v9783 = vadd.f32 %v9361, %v9695
  %v9784 = vadd.f32 %v9362, %v9700
  %v9785 = vadd.f32 %v9363, %v9703
  %v9786 = vadd.f32 %v9364, %v9708
  %v9787 = vadd.f32 %v9365, %v9711
  %v9788 = vadd.f32 %v9366, %v9716
  %v9789 = vadd.f32 %v9367, %v9719
  %v9790 = vadd.f32 %v9368, %v9724
  %v9791 = vadd.f32 %v9369, %v9727
  %v9792 = vadd.f32 %v9370, %v9732
  %v9793 = vadd.f32 %v9371, %v9735
  %v9794 = vadd.f32 %v9372, %v9740
  %v9795 = vadd.f32 %v9373, %v9743
  %v9796 = vadd.f32 %v9374, %v9748
  %v9797 = vadd.f32 %v9375, %v9751
  %v9798 = vadd.f32 %v9376, %v9756
  %v9799 = vadd.f32 %v9377, %v9759
  %v9800 = vadd.f32 %v9378, %v9764
  %v9801 = vadd.f32 %v9379, %v9767
  %s9802 = scalar_lea.vmem %s11, 112
  %v9803 = vld [vmem:[%s9802] sm:$0xf]
  %v9804 = vld [vmem:[%s9802 + $0x4] sm:$0xf]
  %v9805 = vld [vmem:[%s9802 + $0x8] sm:$0xf]
  %v9806 = vld [vmem:[%s9802 + $0xc] sm:$0xf]
  %v9811 = vunpack.c.l.b16 %v9803
  %v9812 = vunpack.c.l.b16 %v9804
  %v9813 = vunpack.c.l.b16 %v9805
  %v9814 = vunpack.c.l.b16 %v9806
  %v9815 = vpack.c.b16 %v9812, %v9811
  %v9816 = vpack.c.b16 %v9814, %v9813
  %9819 = vmatprep.subr.bf16.mxu0 0
  %9820 = vmatpush1.bf16.msra.mxu0 %v9815
  %9821 = vmatprep.subr.bf16.mxu0 0
  %9822 = vmatpush1.bf16.msra.mxu0 %v9816
  %9823 = vmatprep.subr.bf16.mxu0 0
  %9824 = vmatpush1.bf16.msra.mxu0 0
  %9825 = vmatprep.subr.bf16.mxu0 0
  %9826 = vmatpush1.bf16.msra.mxu0 0
  %9827 = vmatprep.subr.bf16.mxu0 0
  %9828 = vmatpush1.bf16.msra.mxu0 0
  %9829 = vmatprep.subr.bf16.mxu0 0
  %9830 = vmatpush1.bf16.msra.mxu0 0
  %9831 = vmatprep.subr.bf16.mxu0 0
  %9832 = vmatpush1.bf16.msra.mxu0 0
  %9833 = vmatprep.subr.bf16.mxu0 0
  %9834 = vmatpush1.bf16.msra.mxu0 0
  %9835 = vmatprep.subr.bf16.mxu0 0
  %9836 = vmatpush1.bf16.msra.mxu0 0
  %9837 = vmatprep.subr.bf16.mxu0 0
  %9838 = vmatpush1.bf16.msra.mxu0 0
  %9839 = vmatprep.subr.bf16.mxu0 0
  %9840 = vmatpush1.bf16.msra.mxu0 0
  %9841 = vmatprep.subr.bf16.mxu0 0
  %9842 = vmatpush1.bf16.msra.mxu0 0
  %9843 = vmatprep.subr.bf16.mxu0 0
  %9844 = vmatpush1.bf16.msra.mxu0 0
  %9845 = vmatprep.subr.bf16.mxu0 0
  %9846 = vmatpush1.bf16.msra.mxu0 0
  %9847 = vmatprep.subr.bf16.mxu0 0
  %9848 = vmatpush1.bf16.msra.mxu0 0
  %9849 = vmatprep.subr.bf16.mxu0 0
  %9850 = vmatpush1.bf16.msra.mxu0 0
  %9851 = vmatprep.mubr.bf16.mxu0 0
  %9852 = vmatmul.mubr.bf16.gmra.mrb[0].mxu0 %v6855
  %v9853 = vpop.f32.mrb[0].mxu0
  %v9854 = vadd.f32 0.0, %v9853
  %v9855 = vpop.f32.mrb[0].mxu0
  %v9856 = vpop.f32.mrb[0].mxu0
  %v9857 = vadd.f32 0.0, %v9856
  %v9858 = vpop.f32.mrb[0].mxu0
  %9859 = vmatprep.mubr.bf16.mxu0 0
  %9860 = vmatmul.mubr.bf16.gmra.mrb[0].mxu0 %v6858
  %v9861 = vpop.f32.mrb[0].mxu0
  %v9862 = vadd.f32 0.0, %v9861
  %v9863 = vpop.f32.mrb[0].mxu0
  %v9864 = vpop.f32.mrb[0].mxu0
  %v9865 = vadd.f32 0.0, %v9864
  %v9866 = vpop.f32.mrb[0].mxu0
  %9867 = vdwg.mxu0
  %s9868 = scalar_lea.vmem %s10, 896
  %v9869 = vld [vmem:[%s9868] sm:$0xf]
  %v9870 = vld [vmem:[%s9868 + $0x4] sm:$0xf]
  %v9871 = vld [vmem:[%s9868 + $0x8] sm:$0xf]
  %v9872 = vld [vmem:[%s9868 + $0xc] sm:$0xf]
  %v9873 = vld [vmem:[%s9868 + $0x10] sm:$0xf]
  %v9874 = vld [vmem:[%s9868 + $0x14] sm:$0xf]
  %v9875 = vld [vmem:[%s9868 + $0x18] sm:$0xf]
  %v9876 = vld [vmem:[%s9868 + $0x1c] sm:$0xf]
  %v9877 = vld [vmem:[%s9868 + $0x20] sm:$0xf]
  %v9878 = vld [vmem:[%s9868 + $0x24] sm:$0xf]
  %v9879 = vld [vmem:[%s9868 + $0x28] sm:$0xf]
  %v9880 = vld [vmem:[%s9868 + $0x2c] sm:$0xf]
  %v9881 = vld [vmem:[%s9868 + $0x30] sm:$0xf]
  %v9882 = vld [vmem:[%s9868 + $0x34] sm:$0xf]
  %v9883 = vld [vmem:[%s9868 + $0x38] sm:$0xf]
  %v9884 = vld [vmem:[%s9868 + $0x3c] sm:$0xf]
  %v9885 = vld [vmem:[%s9868 + $0x40] sm:$0xf]
  %v9886 = vld [vmem:[%s9868 + $0x44] sm:$0xf]
  %v9887 = vld [vmem:[%s9868 + $0x48] sm:$0xf]
  %v9888 = vld [vmem:[%s9868 + $0x4c] sm:$0xf]
  %v9889 = vld [vmem:[%s9868 + $0x50] sm:$0xf]
  %v9890 = vld [vmem:[%s9868 + $0x54] sm:$0xf]
  %v9891 = vld [vmem:[%s9868 + $0x58] sm:$0xf]
  %v9892 = vld [vmem:[%s9868 + $0x5c] sm:$0xf]
  %v9893 = vld [vmem:[%s9868 + $0x60] sm:$0xf]
  %v9894 = vld [vmem:[%s9868 + $0x64] sm:$0xf]
  %v9895 = vld [vmem:[%s9868 + $0x68] sm:$0xf]
  %v9896 = vld [vmem:[%s9868 + $0x6c] sm:$0xf]
  %v9897 = vld [vmem:[%s9868 + $0x70] sm:$0xf]
  %v9898 = vld [vmem:[%s9868 + $0x74] sm:$0xf]
  %v9899 = vld [vmem:[%s9868 + $0x78] sm:$0xf]
  %v9900 = vld [vmem:[%s9868 + $0x7c] sm:$0xf]
  %v9901 = vpack.c.bf16 %v9857, %v9854
  %v9902 = vpack.c.bf16 %v9865, %v9862
  %v9935 = vunpack.c.l.b16 %v9869
  %v9936 = vunpack.c.l.b16 %v9870
  %v9937 = vunpack.c.l.b16 %v9871
  %v9938 = vunpack.c.l.b16 %v9872
  %v9939 = vunpack.c.l.b16 %v9873
  %v9940 = vunpack.c.l.b16 %v9874
  %v9941 = vunpack.c.l.b16 %v9875
  %v9942 = vunpack.c.l.b16 %v9876
  %v9943 = vunpack.c.l.b16 %v9877
  %v9944 = vunpack.c.l.b16 %v9878
  %v9945 = vunpack.c.l.b16 %v9879
  %v9946 = vunpack.c.l.b16 %v9880
  %v9947 = vunpack.c.l.b16 %v9881
  %v9948 = vunpack.c.l.b16 %v9882
  %v9949 = vunpack.c.l.b16 %v9883
  %v9950 = vunpack.c.l.b16 %v9884
  %v9951 = vunpack.c.l.b16 %v9885
  %v9952 = vunpack.c.l.b16 %v9886
  %v9953 = vunpack.c.l.b16 %v9887
  %v9954 = vunpack.c.l.b16 %v9888
  %v9955 = vunpack.c.l.b16 %v9889
  %v9956 = vunpack.c.l.b16 %v9890
  %v9957 = vunpack.c.l.b16 %v9891
  %v9958 = vunpack.c.l.b16 %v9892
  %v9959 = vunpack.c.l.b16 %v9893
  %v9960 = vunpack.c.l.b16 %v9894
  %v9961 = vunpack.c.l.b16 %v9895
  %v9962 = vunpack.c.l.b16 %v9896
  %v9963 = vunpack.c.l.b16 %v9897
  %v9964 = vunpack.c.l.b16 %v9898
  %v9965 = vunpack.c.l.b16 %v9899
  %v9966 = vunpack.c.l.b16 %v9900
  %v9967 = vpack.c.b16 %v9936, %v9935
  %v9968 = vpack.c.b16 %v9938, %v9937
  %v9969 = vpack.c.b16 %v9940, %v9939
  %v9970 = vpack.c.b16 %v9942, %v9941
  %v9971 = vpack.c.b16 %v9944, %v9943
  %v9972 = vpack.c.b16 %v9946, %v9945
  %v9973 = vpack.c.b16 %v9948, %v9947
  %v9974 = vpack.c.b16 %v9950, %v9949
  %v9975 = vpack.c.b16 %v9952, %v9951
  %v9976 = vpack.c.b16 %v9954, %v9953
  %v9977 = vpack.c.b16 %v9956, %v9955
  %v9978 = vpack.c.b16 %v9958, %v9957
  %v9979 = vpack.c.b16 %v9960, %v9959
  %v9980 = vpack.c.b16 %v9962, %v9961
  %v9981 = vpack.c.b16 %v9964, %v9963
  %v9982 = vpack.c.b16 %v9966, %v9965
  %v9984 = vsel %vm411, %v9967, 0
  %v9987 = vsel %vm411, %v9968, 0
  %v9990 = vsel %vm411, %v9969, 0
  %v9993 = vsel %vm411, %v9970, 0
  %v9996 = vsel %vm411, %v9971, 0
  %v9999 = vsel %vm411, %v9972, 0
  %v10002 = vsel %vm411, %v9973, 0
  %v10005 = vsel %vm411, %v9974, 0
  %v10008 = vsel %vm411, %v9975, 0
  %v10011 = vsel %vm411, %v9976, 0
  %v10014 = vsel %vm411, %v9977, 0
  %v10017 = vsel %vm411, %v9978, 0
  %v10020 = vsel %vm411, %v9979, 0
  %v10023 = vsel %vm411, %v9980, 0
  %v10026 = vsel %vm411, %v9981, 0
  %v10029 = vsel %vm411, %v9982, 0
  %10031 = vmatprep.subr.bf16.mxu0 0
  %10032 = vmatpush1.bf16.msra.mxu0 %v9901
  %10033 = vmatprep.subr.bf16.mxu0 0
  %10034 = vmatpush1.bf16.msra.mxu0 %v9902
  %10035 = vmatprep.subr.bf16.mxu0 0
  %10036 = vmatpush1.bf16.msra.mxu0 0
  %10037 = vmatprep.subr.bf16.mxu0 0
  %10038 = vmatpush1.bf16.msra.mxu0 0
  %10039 = vmatprep.subr.bf16.mxu0 0
  %10040 = vmatpush1.bf16.msra.mxu0 0
  %10041 = vmatprep.subr.bf16.mxu0 0
  %10042 = vmatpush1.bf16.msra.mxu0 0
  %10043 = vmatprep.subr.bf16.mxu0 0
  %10044 = vmatpush1.bf16.msra.mxu0 0
  %10045 = vmatprep.subr.bf16.mxu0 0
  %10046 = vmatpush1.bf16.msra.mxu0 0
  %10047 = vmatprep.subr.bf16.mxu0 0
  %10048 = vmatpush1.bf16.msra.mxu0 0
  %10049 = vmatprep.subr.bf16.mxu0 0
  %10050 = vmatpush1.bf16.msra.mxu0 0
  %10051 = vmatprep.subr.bf16.mxu0 0
  %10052 = vmatpush1.bf16.msra.mxu0 0
  %10053 = vmatprep.subr.bf16.mxu0 0
  %10054 = vmatpush1.bf16.msra.mxu0 0
  %10055 = vmatprep.subr.bf16.mxu0 0
  %10056 = vmatpush1.bf16.msra.mxu0 0
  %10057 = vmatprep.subr.bf16.mxu0 0
  %10058 = vmatpush1.bf16.msra.mxu0 0
  %10059 = vmatprep.subr.bf16.mxu0 0
  %10060 = vmatpush1.bf16.msra.mxu0 0
  %10061 = vmatprep.subr.bf16.mxu0 0
  %10062 = vmatpush1.bf16.msra.mxu0 0
  %10063 = vmatprep.mubr.bf16.mxu0 0
  %10064 = vmatmul.mubr.bf16.gmra.mrb[0].mxu0 %v9984
  %v10065 = vpop.f32.mrb[0].mxu0
  %v10066 = vadd.f32 0.0, %v10065
  %v10067 = vpop.f32.mrb[0].mxu0
  %v10068 = vpop.f32.mrb[0].mxu0
  %v10069 = vadd.f32 0.0, %v10068
  %v10070 = vpop.f32.mrb[0].mxu0
  %10071 = vmatprep.mubr.bf16.mxu0 0
  %10072 = vmatmul.mubr.bf16.gmra.mrb[0].mxu0 %v9987
  %v10073 = vpop.f32.mrb[0].mxu0
  %v10074 = vadd.f32 0.0, %v10073
  %v10075 = vpop.f32.mrb[0].mxu0
  %v10076 = vpop.f32.mrb[0].mxu0
  %v10077 = vadd.f32 0.0, %v10076
  %v10078 = vpop.f32.mrb[0].mxu0
  %10079 = vmatprep.mubr.bf16.mxu0 0
  %10080 = vmatmul.mubr.bf16.gmra.mrb[0].mxu0 %v9990
  %v10081 = vpop.f32.mrb[0].mxu0
  %v10082 = vadd.f32 0.0, %v10081
  %v10083 = vpop.f32.mrb[0].mxu0
  %v10084 = vpop.f32.mrb[0].mxu0
  %v10085 = vadd.f32 0.0, %v10084
  %v10086 = vpop.f32.mrb[0].mxu0
  %10087 = vmatprep.mubr.bf16.mxu0 0
  %10088 = vmatmul.mubr.bf16.gmra.mrb[0].mxu0 %v9993
  %v10089 = vpop.f32.mrb[0].mxu0
  %v10090 = vadd.f32 0.0, %v10089
  %v10091 = vpop.f32.mrb[0].mxu0
  %v10092 = vpop.f32.mrb[0].mxu0
  %v10093 = vadd.f32 0.0, %v10092
  %v10094 = vpop.f32.mrb[0].mxu0
  %10095 = vmatprep.mubr.bf16.mxu0 0
  %10096 = vmatmul.mubr.bf16.gmra.mrb[0].mxu0 %v9996
  %v10097 = vpop.f32.mrb[0].mxu0
  %v10098 = vadd.f32 0.0, %v10097
  %v10099 = vpop.f32.mrb[0].mxu0
  %v10100 = vpop.f32.mrb[0].mxu0
  %v10101 = vadd.f32 0.0, %v10100
  %v10102 = vpop.f32.mrb[0].mxu0
  %10103 = vmatprep.mubr.bf16.mxu0 0
  %10104 = vmatmul.mubr.bf16.gmra.mrb[0].mxu0 %v9999
  %v10105 = vpop.f32.mrb[0].mxu0
  %v10106 = vadd.f32 0.0, %v10105
  %v10107 = vpop.f32.mrb[0].mxu0
  %v10108 = vpop.f32.mrb[0].mxu0
  %v10109 = vadd.f32 0.0, %v10108
  %v10110 = vpop.f32.mrb[0].mxu0
  %10111 = vmatprep.mubr.bf16.mxu0 0
  %10112 = vmatmul.mubr.bf16.gmra.mrb[0].mxu0 %v10002
  %v10113 = vpop.f32.mrb[0].mxu0
  %v10114 = vadd.f32 0.0, %v10113
  %v10115 = vpop.f32.mrb[0].mxu0
  %v10116 = vpop.f32.mrb[0].mxu0
  %v10117 = vadd.f32 0.0, %v10116
  %v10118 = vpop.f32.mrb[0].mxu0
  %10119 = vmatprep.mubr.bf16.mxu0 0
  %10120 = vmatmul.mubr.bf16.gmra.mrb[0].mxu0 %v10005
  %v10121 = vpop.f32.mrb[0].mxu0
  %v10122 = vadd.f32 0.0, %v10121
  %v10123 = vpop.f32.mrb[0].mxu0
  %v10124 = vpop.f32.mrb[0].mxu0
  %v10125 = vadd.f32 0.0, %v10124
  %v10126 = vpop.f32.mrb[0].mxu0
  %10127 = vmatprep.mubr.bf16.mxu0 0
  %10128 = vmatmul.mubr.bf16.gmra.mrb[0].mxu0 %v10008
  %v10129 = vpop.f32.mrb[0].mxu0
  %v10130 = vadd.f32 0.0, %v10129
  %v10131 = vpop.f32.mrb[0].mxu0
  %v10132 = vpop.f32.mrb[0].mxu0
  %v10133 = vadd.f32 0.0, %v10132
  %v10134 = vpop.f32.mrb[0].mxu0
  %10135 = vmatprep.mubr.bf16.mxu0 0
  %10136 = vmatmul.mubr.bf16.gmra.mrb[0].mxu0 %v10011
  %v10137 = vpop.f32.mrb[0].mxu0
  %v10138 = vadd.f32 0.0, %v10137
  %v10139 = vpop.f32.mrb[0].mxu0
  %v10140 = vpop.f32.mrb[0].mxu0
  %v10141 = vadd.f32 0.0, %v10140
  %v10142 = vpop.f32.mrb[0].mxu0
  %10143 = vmatprep.mubr.bf16.mxu0 0
  %10144 = vmatmul.mubr.bf16.gmra.mrb[0].mxu0 %v10014
  %v10145 = vpop.f32.mrb[0].mxu0
  %v10146 = vadd.f32 0.0, %v10145
  %v10147 = vpop.f32.mrb[0].mxu0
  %v10148 = vpop.f32.mrb[0].mxu0
  %v10149 = vadd.f32 0.0, %v10148
  %v10150 = vpop.f32.mrb[0].mxu0
  %10151 = vmatprep.mubr.bf16.mxu0 0
  %10152 = vmatmul.mubr.bf16.gmra.mrb[0].mxu0 %v10017
  %v10153 = vpop.f32.mrb[0].mxu0
  %v10154 = vadd.f32 0.0, %v10153
  %v10155 = vpop.f32.mrb[0].mxu0
  %v10156 = vpop.f32.mrb[0].mxu0
  %v10157 = vadd.f32 0.0, %v10156
  %v10158 = vpop.f32.mrb[0].mxu0
  %10159 = vmatprep.mubr.bf16.mxu0 0
  %10160 = vmatmul.mubr.bf16.gmra.mrb[0].mxu0 %v10020
  %v10161 = vpop.f32.mrb[0].mxu0
  %v10162 = vadd.f32 0.0, %v10161
  %v10163 = vpop.f32.mrb[0].mxu0
  %v10164 = vpop.f32.mrb[0].mxu0
  %v10165 = vadd.f32 0.0, %v10164
  %v10166 = vpop.f32.mrb[0].mxu0
  %10167 = vmatprep.mubr.bf16.mxu0 0
  %10168 = vmatmul.mubr.bf16.gmra.mrb[0].mxu0 %v10023
  %v10169 = vpop.f32.mrb[0].mxu0
  %v10170 = vadd.f32 0.0, %v10169
  %v10171 = vpop.f32.mrb[0].mxu0
  %v10172 = vpop.f32.mrb[0].mxu0
  %v10173 = vadd.f32 0.0, %v10172
  %v10174 = vpop.f32.mrb[0].mxu0
  %10175 = vmatprep.mubr.bf16.mxu0 0
  %10176 = vmatmul.mubr.bf16.gmra.mrb[0].mxu0 %v10026
  %v10177 = vpop.f32.mrb[0].mxu0
  %v10178 = vadd.f32 0.0, %v10177
  %v10179 = vpop.f32.mrb[0].mxu0
  %v10180 = vpop.f32.mrb[0].mxu0
  %v10181 = vadd.f32 0.0, %v10180
  %v10182 = vpop.f32.mrb[0].mxu0
  %10183 = vmatprep.mubr.bf16.mxu0 0
  %10184 = vmatmul.mubr.bf16.gmra.mrb[0].mxu0 %v10029
  %v10185 = vpop.f32.mrb[0].mxu0
  %v10186 = vadd.f32 0.0, %v10185
  %v10187 = vpop.f32.mrb[0].mxu0
  %v10188 = vpop.f32.mrb[0].mxu0
  %v10189 = vadd.f32 0.0, %v10188
  %v10190 = vpop.f32.mrb[0].mxu0
  %10191 = vdwg.mxu0
  %v10192 = vadd.f32 %v9770, %v10066
  %v10193 = vadd.f32 %v9771, %v10069
  %v10194 = vadd.f32 %v9772, %v10074
  %v10195 = vadd.f32 %v9773, %v10077
  %v10196 = vadd.f32 %v9774, %v10082
  %v10197 = vadd.f32 %v9775, %v10085
  %v10198 = vadd.f32 %v9776, %v10090
  %v10199 = vadd.f32 %v9777, %v10093
  %v10200 = vadd.f32 %v9778, %v10098
  %v10201 = vadd.f32 %v9779, %v10101
  %v10202 = vadd.f32 %v9780, %v10106
  %v10203 = vadd.f32 %v9781, %v10109
  %v10204 = vadd.f32 %v9782, %v10114
  %v10205 = vadd.f32 %v9783, %v10117
  %v10206 = vadd.f32 %v9784, %v10122
  %v10207 = vadd.f32 %v9785, %v10125
  %v10208 = vadd.f32 %v9786, %v10130
  %v10209 = vadd.f32 %v9787, %v10133
  %v10210 = vadd.f32 %v9788, %v10138
  %v10211 = vadd.f32 %v9789, %v10141
  %v10212 = vadd.f32 %v9790, %v10146
  %v10213 = vadd.f32 %v9791, %v10149
  %v10214 = vadd.f32 %v9792, %v10154
  %v10215 = vadd.f32 %v9793, %v10157
  %v10216 = vadd.f32 %v9794, %v10162
  %v10217 = vadd.f32 %v9795, %v10165
  %v10218 = vadd.f32 %v9796, %v10170
  %v10219 = vadd.f32 %v9797, %v10173
  %v10220 = vadd.f32 %v9798, %v10178
  %v10221 = vadd.f32 %v9799, %v10181
  %v10222 = vadd.f32 %v9800, %v10186
  %v10223 = vadd.f32 %v9801, %v10189
  %s10224 = scalar_lea.vmem %s11, 128
  %v10225 = vld [vmem:[%s10224] sm:$0xf]
  %v10226 = vld [vmem:[%s10224 + $0x4] sm:$0xf]
  %v10227 = vld [vmem:[%s10224 + $0x8] sm:$0xf]
  %v10228 = vld [vmem:[%s10224 + $0xc] sm:$0xf]
  %v10233 = vunpack.c.l.b16 %v10225
  %v10234 = vunpack.c.l.b16 %v10226
  %v10235 = vunpack.c.l.b16 %v10227
  %v10236 = vunpack.c.l.b16 %v10228
  %v10237 = vpack.c.b16 %v10234, %v10233
  %v10238 = vpack.c.b16 %v10236, %v10235
  %10241 = vmatprep.subr.bf16.mxu0 0
  %10242 = vmatpush1.bf16.msra.mxu0 %v10237
  %10243 = vmatprep.subr.bf16.mxu0 0
  %10244 = vmatpush1.bf16.msra.mxu0 %v10238
  %10245 = vmatprep.subr.bf16.mxu0 0
  %10246 = vmatpush1.bf16.msra.mxu0 0
  %10247 = vmatprep.subr.bf16.mxu0 0
  %10248 = vmatpush1.bf16.msra.mxu0 0
  %10249 = vmatprep.subr.bf16.mxu0 0
  %10250 = vmatpush1.bf16.msra.mxu0 0
  %10251 = vmatprep.subr.bf16.mxu0 0
  %10252 = vmatpush1.bf16.msra.mxu0 0
  %10253 = vmatprep.subr.bf16.mxu0 0
  %10254 = vmatpush1.bf16.msra.mxu0 0
  %10255 = vmatprep.subr.bf16.mxu0 0
  %10256 = vmatpush1.bf16.msra.mxu0 0
  %10257 = vmatprep.subr.bf16.mxu0 0
  %10258 = vmatpush1.bf16.msra.mxu0 0
  %10259 = vmatprep.subr.bf16.mxu0 0
  %10260 = vmatpush1.bf16.msra.mxu0 0
  %10261 = vmatprep.subr.bf16.mxu0 0
  %10262 = vmatpush1.bf16.msra.mxu0 0
  %10263 = vmatprep.subr.bf16.mxu0 0
  %10264 = vmatpush1.bf16.msra.mxu0 0
  %10265 = vmatprep.subr.bf16.mxu0 0
  %10266 = vmatpush1.bf16.msra.mxu0 0
  %10267 = vmatprep.subr.bf16.mxu0 0
  %10268 = vmatpush1.bf16.msra.mxu0 0
  %10269 = vmatprep.subr.bf16.mxu0 0
  %10270 = vmatpush1.bf16.msra.mxu0 0
  %10271 = vmatprep.subr.bf16.mxu0 0
  %10272 = vmatpush1.bf16.msra.mxu0 0
  %10273 = vmatprep.mubr.bf16.mxu0 0
  %10274 = vmatmul.mubr.bf16.gmra.mrb[0].mxu0 %v6855
  %v10275 = vpop.f32.mrb[0].mxu0
  %v10276 = vadd.f32 0.0, %v10275
  %v10277 = vpop.f32.mrb[0].mxu0
  %v10278 = vpop.f32.mrb[0].mxu0
  %v10279 = vadd.f32 0.0, %v10278
  %v10280 = vpop.f32.mrb[0].mxu0
  %10281 = vmatprep.mubr.bf16.mxu0 0
  %10282 = vmatmul.mubr.bf16.gmra.mrb[0].mxu0 %v6858
  %v10283 = vpop.f32.mrb[0].mxu0
  %v10284 = vadd.f32 0.0, %v10283
  %v10285 = vpop.f32.mrb[0].mxu0
  %v10286 = vpop.f32.mrb[0].mxu0
  %v10287 = vadd.f32 0.0, %v10286
  %v10288 = vpop.f32.mrb[0].mxu0
  %10289 = vdwg.mxu0
  %s10290 = scalar_lea.vmem %s10, 1024
  %v10291 = vld [vmem:[%s10290] sm:$0xf]
  %v10292 = vld [vmem:[%s10290 + $0x4] sm:$0xf]
  %v10293 = vld [vmem:[%s10290 + $0x8] sm:$0xf]
  %v10294 = vld [vmem:[%s10290 + $0xc] sm:$0xf]
  %v10295 = vld [vmem:[%s10290 + $0x10] sm:$0xf]
  %v10296 = vld [vmem:[%s10290 + $0x14] sm:$0xf]
  %v10297 = vld [vmem:[%s10290 + $0x18] sm:$0xf]
  %v10298 = vld [vmem:[%s10290 + $0x1c] sm:$0xf]
  %v10299 = vld [vmem:[%s10290 + $0x20] sm:$0xf]
  %v10300 = vld [vmem:[%s10290 + $0x24] sm:$0xf]
  %v10301 = vld [vmem:[%s10290 + $0x28] sm:$0xf]
  %v10302 = vld [vmem:[%s10290 + $0x2c] sm:$0xf]
  %v10303 = vld [vmem:[%s10290 + $0x30] sm:$0xf]
  %v10304 = vld [vmem:[%s10290 + $0x34] sm:$0xf]
  %v10305 = vld [vmem:[%s10290 + $0x38] sm:$0xf]
  %v10306 = vld [vmem:[%s10290 + $0x3c] sm:$0xf]
  %v10307 = vld [vmem:[%s10290 + $0x40] sm:$0xf]
  %v10308 = vld [vmem:[%s10290 + $0x44] sm:$0xf]
  %v10309 = vld [vmem:[%s10290 + $0x48] sm:$0xf]
  %v10310 = vld [vmem:[%s10290 + $0x4c] sm:$0xf]
  %v10311 = vld [vmem:[%s10290 + $0x50] sm:$0xf]
  %v10312 = vld [vmem:[%s10290 + $0x54] sm:$0xf]
  %v10313 = vld [vmem:[%s10290 + $0x58] sm:$0xf]
  %v10314 = vld [vmem:[%s10290 + $0x5c] sm:$0xf]
  %v10315 = vld [vmem:[%s10290 + $0x60] sm:$0xf]
  %v10316 = vld [vmem:[%s10290 + $0x64] sm:$0xf]
  %v10317 = vld [vmem:[%s10290 + $0x68] sm:$0xf]
  %v10318 = vld [vmem:[%s10290 + $0x6c] sm:$0xf]
  %v10319 = vld [vmem:[%s10290 + $0x70] sm:$0xf]
  %v10320 = vld [vmem:[%s10290 + $0x74] sm:$0xf]
  %v10321 = vld [vmem:[%s10290 + $0x78] sm:$0xf]
  %v10322 = vld [vmem:[%s10290 + $0x7c] sm:$0xf]
  %v10323 = vpack.c.bf16 %v10279, %v10276
  %v10324 = vpack.c.bf16 %v10287, %v10284
  %v10357 = vunpack.c.l.b16 %v10291
  %v10358 = vunpack.c.l.b16 %v10292
  %v10359 = vunpack.c.l.b16 %v10293
  %v10360 = vunpack.c.l.b16 %v10294
  %v10361 = vunpack.c.l.b16 %v10295
  %v10362 = vunpack.c.l.b16 %v10296
  %v10363 = vunpack.c.l.b16 %v10297
  %v10364 = vunpack.c.l.b16 %v10298
  %v10365 = vunpack.c.l.b16 %v10299
  %v10366 = vunpack.c.l.b16 %v10300
  %v10367 = vunpack.c.l.b16 %v10301
  %v10368 = vunpack.c.l.b16 %v10302
  %v10369 = vunpack.c.l.b16 %v10303
  %v10370 = vunpack.c.l.b16 %v10304
  %v10371 = vunpack.c.l.b16 %v10305
  %v10372 = vunpack.c.l.b16 %v10306
  %v10373 = vunpack.c.l.b16 %v10307
  %v10374 = vunpack.c.l.b16 %v10308
  %v10375 = vunpack.c.l.b16 %v10309
  %v10376 = vunpack.c.l.b16 %v10310
  %v10377 = vunpack.c.l.b16 %v10311
  %v10378 = vunpack.c.l.b16 %v10312
  %v10379 = vunpack.c.l.b16 %v10313
  %v10380 = vunpack.c.l.b16 %v10314
  %v10381 = vunpack.c.l.b16 %v10315
  %v10382 = vunpack.c.l.b16 %v10316
  %v10383 = vunpack.c.l.b16 %v10317
  %v10384 = vunpack.c.l.b16 %v10318
  %v10385 = vunpack.c.l.b16 %v10319
  %v10386 = vunpack.c.l.b16 %v10320
  %v10387 = vunpack.c.l.b16 %v10321
  %v10388 = vunpack.c.l.b16 %v10322
  %v10389 = vpack.c.b16 %v10358, %v10357
  %v10390 = vpack.c.b16 %v10360, %v10359
  %v10391 = vpack.c.b16 %v10362, %v10361
  %v10392 = vpack.c.b16 %v10364, %v10363
  %v10393 = vpack.c.b16 %v10366, %v10365
  %v10394 = vpack.c.b16 %v10368, %v10367
  %v10395 = vpack.c.b16 %v10370, %v10369
  %v10396 = vpack.c.b16 %v10372, %v10371
  %v10397 = vpack.c.b16 %v10374, %v10373
  %v10398 = vpack.c.b16 %v10376, %v10375
  %v10399 = vpack.c.b16 %v10378, %v10377
  %v10400 = vpack.c.b16 %v10380, %v10379
  %v10401 = vpack.c.b16 %v10382, %v10381
  %v10402 = vpack.c.b16 %v10384, %v10383
  %v10403 = vpack.c.b16 %v10386, %v10385
  %v10404 = vpack.c.b16 %v10388, %v10387
  %v10406 = vsel %vm411, %v10389, 0
  %v10409 = vsel %vm411, %v10390, 0
  %v10412 = vsel %vm411, %v10391, 0
  %v10415 = vsel %vm411, %v10392, 0
  %v10418 = vsel %vm411, %v10393, 0
  %v10421 = vsel %vm411, %v10394, 0
  %v10424 = vsel %vm411, %v10395, 0
  %v10427 = vsel %vm411, %v10396, 0
  %v10430 = vsel %vm411, %v10397, 0
  %v10433 = vsel %vm411, %v10398, 0
  %v10436 = vsel %vm411, %v10399, 0
  %v10439 = vsel %vm411, %v10400, 0
  %v10442 = vsel %vm411, %v10401, 0
  %v10445 = vsel %vm411, %v10402, 0
  %v10448 = vsel %vm411, %v10403, 0
  %v10451 = vsel %vm411, %v10404, 0
  %10453 = vmatprep.subr.bf16.mxu0 0
  %10454 = vmatpush1.bf16.msra.mxu0 %v10323
  %10455 = vmatprep.subr.bf16.mxu0 0
  %10456 = vmatpush1.bf16.msra.mxu0 %v10324
  %10457 = vmatprep.subr.bf16.mxu0 0
  %10458 = vmatpush1.bf16.msra.mxu0 0
  %10459 = vmatprep.subr.bf16.mxu0 0
  %10460 = vmatpush1.bf16.msra.mxu0 0
  %10461 = vmatprep.subr.bf16.mxu0 0
  %10462 = vmatpush1.bf16.msra.mxu0 0
  %10463 = vmatprep.subr.bf16.mxu0 0
  %10464 = vmatpush1.bf16.msra.mxu0 0
  %10465 = vmatprep.subr.bf16.mxu0 0
  %10466 = vmatpush1.bf16.msra.mxu0 0
  %10467 = vmatprep.subr.bf16.mxu0 0
  %10468 = vmatpush1.bf16.msra.mxu0 0
  %10469 = vmatprep.subr.bf16.mxu0 0
  %10470 = vmatpush1.bf16.msra.mxu0 0
  %10471 = vmatprep.subr.bf16.mxu0 0
  %10472 = vmatpush1.bf16.msra.mxu0 0
  %10473 = vmatprep.subr.bf16.mxu0 0
  %10474 = vmatpush1.bf16.msra.mxu0 0
  %10475 = vmatprep.subr.bf16.mxu0 0
  %10476 = vmatpush1.bf16.msra.mxu0 0
  %10477 = vmatprep.subr.bf16.mxu0 0
  %10478 = vmatpush1.bf16.msra.mxu0 0
  %10479 = vmatprep.subr.bf16.mxu0 0
  %10480 = vmatpush1.bf16.msra.mxu0 0
  %10481 = vmatprep.subr.bf16.mxu0 0
  %10482 = vmatpush1.bf16.msra.mxu0 0
  %10483 = vmatprep.subr.bf16.mxu0 0
  %10484 = vmatpush1.bf16.msra.mxu0 0
  %10485 = vmatprep.mubr.bf16.mxu0 0
  %10486 = vmatmul.mubr.bf16.gmra.mrb[0].mxu0 %v10406
  %v10487 = vpop.f32.mrb[0].mxu0
  %v10488 = vadd.f32 0.0, %v10487
  %v10489 = vpop.f32.mrb[0].mxu0
  %v10490 = vpop.f32.mrb[0].mxu0
  %v10491 = vadd.f32 0.0, %v10490
  %v10492 = vpop.f32.mrb[0].mxu0
  %10493 = vmatprep.mubr.bf16.mxu0 0
  %10494 = vmatmul.mubr.bf16.gmra.mrb[0].mxu0 %v10409
  %v10495 = vpop.f32.mrb[0].mxu0
  %v10496 = vadd.f32 0.0, %v10495
  %v10497 = vpop.f32.mrb[0].mxu0
  %v10498 = vpop.f32.mrb[0].mxu0
  %v10499 = vadd.f32 0.0, %v10498
  %v10500 = vpop.f32.mrb[0].mxu0
  %10501 = vmatprep.mubr.bf16.mxu0 0
  %10502 = vmatmul.mubr.bf16.gmra.mrb[0].mxu0 %v10412
  %v10503 = vpop.f32.mrb[0].mxu0
  %v10504 = vadd.f32 0.0, %v10503
  %v10505 = vpop.f32.mrb[0].mxu0
  %v10506 = vpop.f32.mrb[0].mxu0
  %v10507 = vadd.f32 0.0, %v10506
  %v10508 = vpop.f32.mrb[0].mxu0
  %10509 = vmatprep.mubr.bf16.mxu0 0
  %10510 = vmatmul.mubr.bf16.gmra.mrb[0].mxu0 %v10415
  %v10511 = vpop.f32.mrb[0].mxu0
  %v10512 = vadd.f32 0.0, %v10511
  %v10513 = vpop.f32.mrb[0].mxu0
  %v10514 = vpop.f32.mrb[0].mxu0
  %v10515 = vadd.f32 0.0, %v10514
  %v10516 = vpop.f32.mrb[0].mxu0
  %10517 = vmatprep.mubr.bf16.mxu0 0
  %10518 = vmatmul.mubr.bf16.gmra.mrb[0].mxu0 %v10418
  %v10519 = vpop.f32.mrb[0].mxu0
  %v10520 = vadd.f32 0.0, %v10519
  %v10521 = vpop.f32.mrb[0].mxu0
  %v10522 = vpop.f32.mrb[0].mxu0
  %v10523 = vadd.f32 0.0, %v10522
  %v10524 = vpop.f32.mrb[0].mxu0
  %10525 = vmatprep.mubr.bf16.mxu0 0
  %10526 = vmatmul.mubr.bf16.gmra.mrb[0].mxu0 %v10421
  %v10527 = vpop.f32.mrb[0].mxu0
  %v10528 = vadd.f32 0.0, %v10527
  %v10529 = vpop.f32.mrb[0].mxu0
  %v10530 = vpop.f32.mrb[0].mxu0
  %v10531 = vadd.f32 0.0, %v10530
  %v10532 = vpop.f32.mrb[0].mxu0
  %10533 = vmatprep.mubr.bf16.mxu0 0
  %10534 = vmatmul.mubr.bf16.gmra.mrb[0].mxu0 %v10424
  %v10535 = vpop.f32.mrb[0].mxu0
  %v10536 = vadd.f32 0.0, %v10535
  %v10537 = vpop.f32.mrb[0].mxu0
  %v10538 = vpop.f32.mrb[0].mxu0
  %v10539 = vadd.f32 0.0, %v10538
  %v10540 = vpop.f32.mrb[0].mxu0
  %10541 = vmatprep.mubr.bf16.mxu0 0
  %10542 = vmatmul.mubr.bf16.gmra.mrb[0].mxu0 %v10427
  %v10543 = vpop.f32.mrb[0].mxu0
  %v10544 = vadd.f32 0.0, %v10543
  %v10545 = vpop.f32.mrb[0].mxu0
  %v10546 = vpop.f32.mrb[0].mxu0
  %v10547 = vadd.f32 0.0, %v10546
  %v10548 = vpop.f32.mrb[0].mxu0
  %10549 = vmatprep.mubr.bf16.mxu0 0
  %10550 = vmatmul.mubr.bf16.gmra.mrb[0].mxu0 %v10430
  %v10551 = vpop.f32.mrb[0].mxu0
  %v10552 = vadd.f32 0.0, %v10551
  %v10553 = vpop.f32.mrb[0].mxu0
  %v10554 = vpop.f32.mrb[0].mxu0
  %v10555 = vadd.f32 0.0, %v10554
  %v10556 = vpop.f32.mrb[0].mxu0
  %10557 = vmatprep.mubr.bf16.mxu0 0
  %10558 = vmatmul.mubr.bf16.gmra.mrb[0].mxu0 %v10433
  %v10559 = vpop.f32.mrb[0].mxu0
  %v10560 = vadd.f32 0.0, %v10559
  %v10561 = vpop.f32.mrb[0].mxu0
  %v10562 = vpop.f32.mrb[0].mxu0
  %v10563 = vadd.f32 0.0, %v10562
  %v10564 = vpop.f32.mrb[0].mxu0
  %10565 = vmatprep.mubr.bf16.mxu0 0
  %10566 = vmatmul.mubr.bf16.gmra.mrb[0].mxu0 %v10436
  %v10567 = vpop.f32.mrb[0].mxu0
  %v10568 = vadd.f32 0.0, %v10567
  %v10569 = vpop.f32.mrb[0].mxu0
  %v10570 = vpop.f32.mrb[0].mxu0
  %v10571 = vadd.f32 0.0, %v10570
  %v10572 = vpop.f32.mrb[0].mxu0
  %10573 = vmatprep.mubr.bf16.mxu0 0
  %10574 = vmatmul.mubr.bf16.gmra.mrb[0].mxu0 %v10439
  %v10575 = vpop.f32.mrb[0].mxu0
  %v10576 = vadd.f32 0.0, %v10575
  %v10577 = vpop.f32.mrb[0].mxu0
  %v10578 = vpop.f32.mrb[0].mxu0
  %v10579 = vadd.f32 0.0, %v10578
  %v10580 = vpop.f32.mrb[0].mxu0
  %10581 = vmatprep.mubr.bf16.mxu0 0
  %10582 = vmatmul.mubr.bf16.gmra.mrb[0].mxu0 %v10442
  %v10583 = vpop.f32.mrb[0].mxu0
  %v10584 = vadd.f32 0.0, %v10583
  %v10585 = vpop.f32.mrb[0].mxu0
  %v10586 = vpop.f32.mrb[0].mxu0
  %v10587 = vadd.f32 0.0, %v10586
  %v10588 = vpop.f32.mrb[0].mxu0
  %10589 = vmatprep.mubr.bf16.mxu0 0
  %10590 = vmatmul.mubr.bf16.gmra.mrb[0].mxu0 %v10445
  %v10591 = vpop.f32.mrb[0].mxu0
  %v10592 = vadd.f32 0.0, %v10591
  %v10593 = vpop.f32.mrb[0].mxu0
  %v10594 = vpop.f32.mrb[0].mxu0
  %v10595 = vadd.f32 0.0, %v10594
  %v10596 = vpop.f32.mrb[0].mxu0
  %10597 = vmatprep.mubr.bf16.mxu0 0
  %10598 = vmatmul.mubr.bf16.gmra.mrb[0].mxu0 %v10448
  %v10599 = vpop.f32.mrb[0].mxu0
  %v10600 = vadd.f32 0.0, %v10599
  %v10601 = vpop.f32.mrb[0].mxu0
  %v10602 = vpop.f32.mrb[0].mxu0
  %v10603 = vadd.f32 0.0, %v10602
  %v10604 = vpop.f32.mrb[0].mxu0
  %10605 = vmatprep.mubr.bf16.mxu0 0
  %10606 = vmatmul.mubr.bf16.gmra.mrb[0].mxu0 %v10451
  %v10607 = vpop.f32.mrb[0].mxu0
  %v10608 = vadd.f32 0.0, %v10607
  %v10609 = vpop.f32.mrb[0].mxu0
  %v10610 = vpop.f32.mrb[0].mxu0
  %v10611 = vadd.f32 0.0, %v10610
  %v10612 = vpop.f32.mrb[0].mxu0
  %10613 = vdwg.mxu0
  %v10614 = vadd.f32 %v10192, %v10488
  %v10615 = vadd.f32 %v10193, %v10491
  %v10616 = vadd.f32 %v10194, %v10496
  %v10617 = vadd.f32 %v10195, %v10499
  %v10618 = vadd.f32 %v10196, %v10504
  %v10619 = vadd.f32 %v10197, %v10507
  %v10620 = vadd.f32 %v10198, %v10512
  %v10621 = vadd.f32 %v10199, %v10515
  %v10622 = vadd.f32 %v10200, %v10520
  %v10623 = vadd.f32 %v10201, %v10523
  %v10624 = vadd.f32 %v10202, %v10528
  %v10625 = vadd.f32 %v10203, %v10531
  %v10626 = vadd.f32 %v10204, %v10536
  %v10627 = vadd.f32 %v10205, %v10539
  %v10628 = vadd.f32 %v10206, %v10544
  %v10629 = vadd.f32 %v10207, %v10547
  %v10630 = vadd.f32 %v10208, %v10552
  %v10631 = vadd.f32 %v10209, %v10555
  %v10632 = vadd.f32 %v10210, %v10560
  %v10633 = vadd.f32 %v10211, %v10563
  %v10634 = vadd.f32 %v10212, %v10568
  %v10635 = vadd.f32 %v10213, %v10571
  %v10636 = vadd.f32 %v10214, %v10576
  %v10637 = vadd.f32 %v10215, %v10579
  %v10638 = vadd.f32 %v10216, %v10584
  %v10639 = vadd.f32 %v10217, %v10587
  %v10640 = vadd.f32 %v10218, %v10592
  %v10641 = vadd.f32 %v10219, %v10595
  %v10642 = vadd.f32 %v10220, %v10600
  %v10643 = vadd.f32 %v10221, %v10603
  %v10644 = vadd.f32 %v10222, %v10608
  %v10645 = vadd.f32 %v10223, %v10611
  %10646 = vst [vmem:[%s13] sm:$0xff] %v10614
  %10647 = vst [vmem:[%s13 + $0x8] sm:$0xff] %v10615
  %10648 = vst [vmem:[%s13 + $0x10] sm:$0xff] %v10616
  %10649 = vst [vmem:[%s13 + $0x18] sm:$0xff] %v10617
  %10650 = vst [vmem:[%s13 + $0x20] sm:$0xff] %v10618
  %10651 = vst [vmem:[%s13 + $0x28] sm:$0xff] %v10619
  %10652 = vst [vmem:[%s13 + $0x30] sm:$0xff] %v10620
  %10653 = vst [vmem:[%s13 + $0x38] sm:$0xff] %v10621
  %10654 = vst [vmem:[%s13 + $0x40] sm:$0xff] %v10622
  %10655 = vst [vmem:[%s13 + $0x48] sm:$0xff] %v10623
  %10656 = vst [vmem:[%s13 + $0x50] sm:$0xff] %v10624
  %10657 = vst [vmem:[%s13 + $0x58] sm:$0xff] %v10625
  %10658 = vst [vmem:[%s13 + $0x60] sm:$0xff] %v10626
  %10659 = vst [vmem:[%s13 + $0x68] sm:$0xff] %v10627
  %10660 = vst [vmem:[%s13 + $0x70] sm:$0xff] %v10628
  %10661 = vst [vmem:[%s13 + $0x78] sm:$0xff] %v10629
  %10662 = vst [vmem:[%s13 + $0x80] sm:$0xff] %v10630
  %10663 = vst [vmem:[%s13 + $0x88] sm:$0xff] %v10631
  %10664 = vst [vmem:[%s13 + $0x90] sm:$0xff] %v10632
  %10665 = vst [vmem:[%s13 + $0x98] sm:$0xff] %v10633
  %10666 = vst [vmem:[%s13 + $0xa0] sm:$0xff] %v10634
  %10667 = vst [vmem:[%s13 + $0xa8] sm:$0xff] %v10635
  %10668 = vst [vmem:[%s13 + $0xb0] sm:$0xff] %v10636
  %10669 = vst [vmem:[%s13 + $0xb8] sm:$0xff] %v10637
  %10670 = vst [vmem:[%s13 + $0xc0] sm:$0xff] %v10638
  %10671 = vst [vmem:[%s13 + $0xc8] sm:$0xff] %v10639
  %10672 = vst [vmem:[%s13 + $0xd0] sm:$0xff] %v10640
  %10673 = vst [vmem:[%s13 + $0xd8] sm:$0xff] %v10641
  %10674 = vst [vmem:[%s13 + $0xe0] sm:$0xff] %v10642
  %10675 = vst [vmem:[%s13 + $0xe8] sm:$0xff] %v10643
  %10676 = vst [vmem:[%s13 + $0xf0] sm:$0xff] %v10644
  %10677 = vst [vmem:[%s13 + $0xf8] sm:$0xff] %v10645
  // Predicated region
  $region54: #{egnn_forward.1} parent=0 // pred_check
    _
  $region55: #{egnn_forward.1} parent=0 // pred_check_branch
    %10679 = sbr.rel (0) target = $region57
  $region56: #{egnn_forward.1} parent=0 // pred_region
    _
  $region57: #{egnn_forward.1} parent=0 // pred_fallthru
    _
  // Predicated region
  $region58: #{egnn_forward.1} parent=0 // pred_check
    _
  $region59: #{egnn_forward.1} parent=0 // pred_check_branch
    %10681 = sbr.rel (0) target = $region61
  $region60: #{egnn_forward.1} parent=0 // pred_region
    _
  $region61: #{egnn_forward.1} parent=0 // pred_fallthru
    _

</llo_original>
